<compile_context>
chip_gen: v6e
topology: v6e:2x2x1
jax: 0.10.0
libtpu: 0.0.40
codegen_flags: <defaults>
</compile_context>

<pallas_src>
import functools

import jax
import jax.numpy as jnp
from jax.experimental import pallas as pl
from jax.experimental.pallas import tpu as pltpu

# Original MLP dims (from Default_Net.__init__)
DIMS = [784, 520, 320, 240, 120, 47]
# Lane-padded dims (multiples of 128, except the raw 784 input which is left as-is so
# the caller's x needs no feature padding; 784 is the full array dim for that BlockSpec).
PADDED = [784, 640, 384, 256, 128, 128]

DEFAULT_BATCH_TILE = 512  # multiple of 256 -> full MXU M dimension on all generations


def mlp_kernel(x_ref,
               w1_ref, b1_ref,
               w2_ref, b2_ref,
               w3_ref, b3_ref,
               w4_ref, b4_ref,
               w5_ref, b5_ref,
               o_ref):
    # bf16 matmuls on the MXU with fp32 accumulation; bias add + ReLU in fp32 on the VPU.
    h = x_ref[...]  # fp32 (batch_tile, 784)
    for w_ref, b_ref in ((w1_ref, b1_ref), (w2_ref, b2_ref),
                         (w3_ref, b3_ref), (w4_ref, b4_ref)):
        acc = jnp.dot(h.astype(jnp.bfloat16), w_ref[...],
                      preferred_element_type=jnp.float32)
        h = jnp.maximum(acc + b_ref[...], 0.0)
    # Final layer: no activation.
    o_ref[...] = (jnp.dot(h.astype(jnp.bfloat16), w5_ref[...],
                          preferred_element_type=jnp.float32)
                  + b5_ref[...]).astype(o_ref.dtype)


@functools.partial(jax.jit, static_argnames=("batch_tile",))
def _padded_forward(x2, flat_params, batch_tile):
    """x2: (Bp, 784) fp32 with Bp a multiple of batch_tile. Returns (Bp, 128) fp32."""
    Bp = x2.shape[0]
    grid = (Bp // batch_tile,)

    x_spec = pl.BlockSpec((batch_tile, PADDED[0]), lambda i: (i, 0))
    wb_specs = []
    for pin, pout in zip(PADDED[:-1], PADDED[1:]):
        wb_specs.append(pl.BlockSpec((pin, pout), lambda i: (0, 0)))  # weight (bf16)
        wb_specs.append(pl.BlockSpec((1, pout), lambda i: (0, 0)))    # bias (fp32)
    out_spec = pl.BlockSpec((batch_tile, PADDED[-1]), lambda i: (i, 0))

    flops = 2 * Bp * sum(pin * pout for pin, pout in zip(PADDED[:-1], PADDED[1:]))
    weight_bytes = sum(pin * pout * 2 + pout * 4
                       for pin, pout in zip(PADDED[:-1], PADDED[1:]))
    bytes_accessed = Bp * PADDED[0] * 4 + Bp * PADDED[-1] * 4 + weight_bytes

    return pl.pallas_call(
        mlp_kernel,
        out_shape=jax.ShapeDtypeStruct((Bp, PADDED[-1]), jnp.float32),
        grid_spec=pltpu.PrefetchScalarGridSpec(
            num_scalar_prefetch=0,
            grid=grid,
            in_specs=[x_spec] + wb_specs,
            out_specs=out_spec,
        ),
        compiler_params=pltpu.CompilerParams(
            dimension_semantics=("parallel",),      # lets v7x shard batch across 2 TCs
            vmem_limit_bytes=48 * 1024 * 1024,
        ),
        cost_estimate=pl.CostEstimate(
            flops=flops, transcendentals=0, bytes_accessed=bytes_accessed),
    )(x2, *flat_params)


def default_net_forward(x, flat_params, batch_tile=DEFAULT_BATCH_TILE):
    """Equivalent of Default_Net.forward: x.view(-1, 784) -> 5-layer MLP -> (B, 47)."""
    x2 = x.reshape(-1, DIMS[0]).astype(jnp.float32)
    B = x2.shape[0]
    Bp = ((B + batch_tile - 1) // batch_tile) * batch_tile
    if Bp != B:
        x2 = jnp.pad(x2, ((0, Bp - B), (0, 0)))     # zero-pad batch instead of asserting
    out_padded = _padded_forward(x2, flat_params, batch_tile)
    return out_padded[:B, :DIMS[-1]]                # strip batch + lane padding


def init_params(key):
    """Deterministic init mimicking nn.Linear's U(-1/sqrt(fan_in), 1/sqrt(fan_in))."""
    params = []
    for din, dout in zip(DIMS[:-1], DIMS[1:]):
        key, kw, kb = jax.random.split(key, 3)
        bound = 1.0 / jnp.sqrt(jnp.float32(din))
        w = jax.random.uniform(kw, (din, dout), jnp.float32, -bound, bound)
        b = jax.random.uniform(kb, (1, dout), jnp.float32, -bound, bound)
        params.append((w, b))
    return params


def prepare_params(params):
    """Zero-pad weights/biases to lane-aligned shapes; weights bf16, biases fp32."""
    flat = []
    for li, (w, b) in enumerate(params):
        din, dout = DIMS[li], DIMS[li + 1]
        pin, pout = PADDED[li], PADDED[li + 1]
        w_p = jnp.zeros((pin, pout), jnp.bfloat16).at[:din, :dout].set(
            w.astype(jnp.bfloat16))
        b_p = jnp.zeros((1, pout), jnp.float32).at[:, :dout].set(
            b.reshape(1, dout).astype(jnp.float32))
        flat += [w_p, b_p]
    return flat


def reference_forward(x, params, matmul_dtype=jnp.float32):
    """Pure-JAX reference. matmul_dtype=bf16 mirrors the kernel's MXU precision."""
    h = x.reshape(-1, DIMS[0]).astype(jnp.float32)
    for i, (w, b) in enumerate(params):
        acc = jnp.dot(h.astype(matmul_dtype), w.astype(matmul_dtype),
                      preferred_element_type=jnp.float32)
        h = acc + b.reshape(1, -1).astype(jnp.float32)
        if i < len(params) - 1:
            h = jnp.maximum(h, 0.0)
    return h


if __name__ == "__main__":
    key = jax.random.PRNGKey(0)
    kx, kp = jax.random.split(key)

    # MNIST-like small batch: (B, 1, 28, 28) -> view(-1, 784)
    B = 8
    x = jax.random.normal(kx, (B, 1, 28, 28), dtype=jnp.float32)
    params = init_params(kp)
    flat_params = prepare_params(params)

    out = default_net_forward(x, flat_params)
    out = jax.block_until_ready(out)
    assert out.shape == (B, DIMS[-1]), out.shape

    # Tight check against a reference using the same bf16-matmul / fp32-accumulate math.
    ref_bf16 = reference_forward(x, params, matmul_dtype=jnp.bfloat16)
    err_bf16 = float(jnp.max(jnp.abs(out - ref_bf16)))
    assert jnp.allclose(out, ref_bf16, atol=1e-3, rtol=1e-3), err_bf16

    # Loose sanity check against the full-fp32 reference (bf16 rounding only).
    ref_f32 = reference_forward(x, params, matmul_dtype=jnp.float32)
    err_f32 = float(jnp.max(jnp.abs(out - ref_f32)))
    assert jnp.allclose(out, ref_f32, atol=5e-2, rtol=5e-2), err_f32

    print("KERNEL_OK")
</pallas_src>

<mosaic_0001>
module attributes {stable_mosaic.version = 11 : i64} {
  func.func @mlp_kernel(%arg0: i32, %arg1: memref<512x784xf32, #tpu.memory_space<vmem>>, %arg2: memref<784x640xbf16, #tpu.memory_space<vmem>>, %arg3: memref<1x640xf32, #tpu.memory_space<vmem>>, %arg4: memref<640x384xbf16, #tpu.memory_space<vmem>>, %arg5: memref<1x384xf32, #tpu.memory_space<vmem>>, %arg6: memref<384x256xbf16, #tpu.memory_space<vmem>>, %arg7: memref<1x256xf32, #tpu.memory_space<vmem>>, %arg8: memref<256x128xbf16, #tpu.memory_space<vmem>>, %arg9: memref<1x128xf32, #tpu.memory_space<vmem>>, %arg10: memref<128x128xbf16, #tpu.memory_space<vmem>>, %arg11: memref<1x128xf32, #tpu.memory_space<vmem>>, %arg12: memref<512x128xf32, #tpu.memory_space<vmem>>) attributes {dimension_semantics = [#tpu.dimension_semantics<parallel>], iteration_bounds = array<i64: 1>, scalar_prefetch = 0 : i64, scratch_operands = 0 : i64, tpu.core_type = #tpu.core_type<tc>, window_params = [{transform_indices = @transform_0, window_bounds = array<i64: 512, 784>}, {pipeline_mode = #tpu.pipeline_mode<synchronous>, transform_indices = @transform_1, window_bounds = array<i64: 784, 640>}, {pipeline_mode = #tpu.pipeline_mode<synchronous>, transform_indices = @transform_2, window_bounds = array<i64: 1, 640>}, {pipeline_mode = #tpu.pipeline_mode<synchronous>, transform_indices = @transform_3, window_bounds = array<i64: 640, 384>}, {pipeline_mode = #tpu.pipeline_mode<synchronous>, transform_indices = @transform_4, window_bounds = array<i64: 1, 384>}, {pipeline_mode = #tpu.pipeline_mode<synchronous>, transform_indices = @transform_5, window_bounds = array<i64: 384, 256>}, {pipeline_mode = #tpu.pipeline_mode<synchronous>, transform_indices = @transform_6, window_bounds = array<i64: 1, 256>}, {pipeline_mode = #tpu.pipeline_mode<synchronous>, transform_indices = @transform_7, window_bounds = array<i64: 256, 128>}, {pipeline_mode = #tpu.pipeline_mode<synchronous>, transform_indices = @transform_8, window_bounds = array<i64: 1, 128>}, {pipeline_mode = #tpu.pipeline_mode<synchronous>, transform_indices = @transform_9, window_bounds = array<i64: 128, 128>}, {pipeline_mode = #tpu.pipeline_mode<synchronous>, transform_indices = @transform_10, window_bounds = array<i64: 1, 128>}, {transform_indices = @transform_11, window_bounds = array<i64: 512, 128>}]} {
    %c0 = arith.constant 0 : index
    %c0_0 = arith.constant 0 : index
    %0 = vector.load %arg1[%c0, %c0_0] : memref<512x784xf32, #tpu.memory_space<vmem>>, vector<512x784xf32>
    %1 = arith.truncf %0 : vector<512x784xf32> to vector<512x784xbf16>
    %c0_1 = arith.constant 0 : index
    %c0_2 = arith.constant 0 : index
    %2 = vector.load %arg2[%c0_1, %c0_2] : memref<784x640xbf16, #tpu.memory_space<vmem>>, vector<784x640xbf16>
    %cst = arith.constant dense<0.000000e+00> : vector<512x640xf32>
    %3 = tpu.matmul %1, %2, %cst {dimension_numbers = #tpu.dot_dimension_numbers<[1], [0], [0], [1], [0, 0, 1, 1], [], []>} : vector<512x784xbf16>, vector<784x640xbf16>, vector<512x640xf32> -> vector<512x640xf32>
    %c0_3 = arith.constant 0 : index
    %c0_4 = arith.constant 0 : index
    %4 = vector.load %arg3[%c0_3, %c0_4] : memref<1x640xf32, #tpu.memory_space<vmem>>, vector<1x640xf32>
    %5 = vector.broadcast %4 : vector<1x640xf32> to vector<512x640xf32>
    %6 = arith.addf %3, %5 : vector<512x640xf32>
    %cst_5 = arith.constant 0.000000e+00 : f32
    %7 = vector.broadcast %cst_5 : f32 to vector<512x640xf32>
    %8 = arith.maximumf %6, %7 : vector<512x640xf32>
    %9 = arith.truncf %8 : vector<512x640xf32> to vector<512x640xbf16>
    %c0_6 = arith.constant 0 : index
    %c0_7 = arith.constant 0 : index
    %10 = vector.load %arg4[%c0_6, %c0_7] : memref<640x384xbf16, #tpu.memory_space<vmem>>, vector<640x384xbf16>
    %cst_8 = arith.constant dense<0.000000e+00> : vector<512x384xf32>
    %11 = tpu.matmul %9, %10, %cst_8 {dimension_numbers = #tpu.dot_dimension_numbers<[1], [0], [0], [1], [0, 0, 1, 1], [], []>} : vector<512x640xbf16>, vector<640x384xbf16>, vector<512x384xf32> -> vector<512x384xf32>
    %c0_9 = arith.constant 0 : index
    %c0_10 = arith.constant 0 : index
    %12 = vector.load %arg5[%c0_9, %c0_10] : memref<1x384xf32, #tpu.memory_space<vmem>>, vector<1x384xf32>
    %13 = vector.broadcast %12 : vector<1x384xf32> to vector<512x384xf32>
    %14 = arith.addf %11, %13 : vector<512x384xf32>
    %cst_11 = arith.constant 0.000000e+00 : f32
    %15 = vector.broadcast %cst_11 : f32 to vector<512x384xf32>
    %16 = arith.maximumf %14, %15 : vector<512x384xf32>
    %17 = arith.truncf %16 : vector<512x384xf32> to vector<512x384xbf16>
    %c0_12 = arith.constant 0 : index
    %c0_13 = arith.constant 0 : index
    %18 = vector.load %arg6[%c0_12, %c0_13] : memref<384x256xbf16, #tpu.memory_space<vmem>>, vector<384x256xbf16>
    %cst_14 = arith.constant dense<0.000000e+00> : vector<512x256xf32>
    %19 = tpu.matmul %17, %18, %cst_14 {dimension_numbers = #tpu.dot_dimension_numbers<[1], [0], [0], [1], [0, 0, 1, 1], [], []>} : vector<512x384xbf16>, vector<384x256xbf16>, vector<512x256xf32> -> vector<512x256xf32>
    %c0_15 = arith.constant 0 : index
    %c0_16 = arith.constant 0 : index
    %20 = vector.load %arg7[%c0_15, %c0_16] : memref<1x256xf32, #tpu.memory_space<vmem>>, vector<1x256xf32>
    %21 = vector.broadcast %20 : vector<1x256xf32> to vector<512x256xf32>
    %22 = arith.addf %19, %21 : vector<512x256xf32>
    %cst_17 = arith.constant 0.000000e+00 : f32
    %23 = vector.broadcast %cst_17 : f32 to vector<512x256xf32>
    %24 = arith.maximumf %22, %23 : vector<512x256xf32>
    %25 = arith.truncf %24 : vector<512x256xf32> to vector<512x256xbf16>
    %c0_18 = arith.constant 0 : index
    %c0_19 = arith.constant 0 : index
    %26 = vector.load %arg8[%c0_18, %c0_19] : memref<256x128xbf16, #tpu.memory_space<vmem>>, vector<256x128xbf16>
    %cst_20 = arith.constant dense<0.000000e+00> : vector<512x128xf32>
    %27 = tpu.matmul %25, %26, %cst_20 {dimension_numbers = #tpu.dot_dimension_numbers<[1], [0], [0], [1], [0, 0, 1, 1], [], []>} : vector<512x256xbf16>, vector<256x128xbf16>, vector<512x128xf32> -> vector<512x128xf32>
    %c0_21 = arith.constant 0 : index
    %c0_22 = arith.constant 0 : index
    %28 = vector.load %arg9[%c0_21, %c0_22] : memref<1x128xf32, #tpu.memory_space<vmem>>, vector<1x128xf32>
    %29 = vector.broadcast %28 : vector<1x128xf32> to vector<512x128xf32>
    %30 = arith.addf %27, %29 : vector<512x128xf32>
    %cst_23 = arith.constant 0.000000e+00 : f32
    %31 = vector.broadcast %cst_23 : f32 to vector<512x128xf32>
    %32 = arith.maximumf %30, %31 : vector<512x128xf32>
    %33 = arith.truncf %32 : vector<512x128xf32> to vector<512x128xbf16>
    %c0_24 = arith.constant 0 : index
    %c0_25 = arith.constant 0 : index
    %34 = vector.load %arg10[%c0_24, %c0_25] : memref<128x128xbf16, #tpu.memory_space<vmem>>, vector<128x128xbf16>
    %cst_26 = arith.constant dense<0.000000e+00> : vector<512x128xf32>
    %35 = tpu.matmul %33, %34, %cst_26 {dimension_numbers = #tpu.dot_dimension_numbers<[1], [0], [0], [1], [0, 0, 1, 1], [], []>} : vector<512x128xbf16>, vector<128x128xbf16>, vector<512x128xf32> -> vector<512x128xf32>
    %c0_27 = arith.constant 0 : index
    %c0_28 = arith.constant 0 : index
    %36 = vector.load %arg11[%c0_27, %c0_28] : memref<1x128xf32, #tpu.memory_space<vmem>>, vector<1x128xf32>
    %37 = vector.broadcast %36 : vector<1x128xf32> to vector<512x128xf32>
    %38 = arith.addf %35, %37 : vector<512x128xf32>
    %c0_29 = arith.constant 0 : index
    %c0_30 = arith.constant 0 : index
    %39 = vector.load %arg12[%c0_29, %c0_30] : memref<512x128xf32, #tpu.memory_space<vmem>>, vector<512x128xf32>
    tpu.vector_store %arg12[%c0_29, %c0_30], %38 {strides = array<i32>} : memref<512x128xf32, #tpu.memory_space<vmem>>, vector<512x128xf32>,
    return
  }
  func.func @transform_0(%arg0: i32) -> (i32, i32) {
    %c0_i32 = arith.constant 0 : i32
    %c0_i32_0 = arith.constant 0 : i32
    return %arg0, %c0_i32 : i32, i32
  }
  func.func @transform_1(%arg0: i32) -> (i32, i32) {
    %c0_i32 = arith.constant 0 : i32
    %c0_i32_0 = arith.constant 0 : i32
    %c0_i32_1 = arith.constant 0 : i32
    return %c0_i32, %c0_i32_0 : i32, i32
  }
  func.func @transform_2(%arg0: i32) -> (i32, i32) {
    %c0_i32 = arith.constant 0 : i32
    %c0_i32_0 = arith.constant 0 : i32
    %c0_i32_1 = arith.constant 0 : i32
    return %c0_i32, %c0_i32_0 : i32, i32
  }
  func.func @transform_3(%arg0: i32) -> (i32, i32) {
    %c0_i32 = arith.constant 0 : i32
    %c0_i32_0 = arith.constant 0 : i32
    %c0_i32_1 = arith.constant 0 : i32
    return %c0_i32, %c0_i32_0 : i32, i32
  }
  func.func @transform_4(%arg0: i32) -> (i32, i32) {
    %c0_i32 = arith.constant 0 : i32
    %c0_i32_0 = arith.constant 0 : i32
    %c0_i32_1 = arith.constant 0 : i32
    return %c0_i32, %c0_i32_0 : i32, i32
  }
  func.func @transform_5(%arg0: i32) -> (i32, i32) {
    %c0_i32 = arith.constant 0 : i32
    %c0_i32_0 = arith.constant 0 : i32
    %c0_i32_1 = arith.constant 0 : i32
    return %c0_i32, %c0_i32_0 : i32, i32
  }
  func.func @transform_6(%arg0: i32) -> (i32, i32) {
    %c0_i32 = arith.constant 0 : i32
    %c0_i32_0 = arith.constant 0 : i32
    %c0_i32_1 = arith.constant 0 : i32
    return %c0_i32, %c0_i32_0 : i32, i32
  }
  func.func @transform_7(%arg0: i32) -> (i32, i32) {
    %c0_i32 = arith.constant 0 : i32
    %c0_i32_0 = arith.constant 0 : i32
    %c0_i32_1 = arith.constant 0 : i32
    return %c0_i32, %c0_i32_0 : i32, i32
  }
  func.func @transform_8(%arg0: i32) -> (i32, i32) {
    %c0_i32 = arith.constant 0 : i32
    %c0_i32_0 = arith.constant 0 : i32
    %c0_i32_1 = arith.constant 0 : i32
    return %c0_i32, %c0_i32_0 : i32, i32
  }
  func.func @transform_9(%arg0: i32) -> (i32, i32) {
    %c0_i32 = arith.constant 0 : i32
    %c0_i32_0 = arith.constant 0 : i32
    %c0_i32_1 = arith.constant 0 : i32
    return %c0_i32, %c0_i32_0 : i32, i32
  }
  func.func @transform_10(%arg0: i32) -> (i32, i32) {
    %c0_i32 = arith.constant 0 : i32
    %c0_i32_0 = arith.constant 0 : i32
    %c0_i32_1 = arith.constant 0 : i32
    return %c0_i32, %c0_i32_0 : i32, i32
  }
  func.func @transform_11(%arg0: i32) -> (i32, i32) {
    %c0_i32 = arith.constant 0 : i32
    %c0_i32_0 = arith.constant 0 : i32
    return %arg0, %c0_i32 : i32, i32
  }
}

</mosaic_0001>

<llo_original>
// kernel: _padded_forward.1
$region0: #{_padded_forward.1}
  #allocation0 [shape = 'u32[]', space=smem, size = 0x4, offset = 0x4, fixed_abs, tag = 'smem constant byte address 0x4 - core index']
  #allocation1 [shape = 'u32[144,128]{1,0:T(1,128)}', space=vmem, size = 0x12000, scoped, tag = 'internal scratch']
  %s0 = inlined_call_operand.vmem [shape: f32[512,784], index: 0, kind: input, shape index: {}]
  %s1 = inlined_call_operand.vmem [shape: bf16[784,640], index: 1, kind: input, shape index: {}]
  %s2 = inlined_call_operand.vmem [shape: f32[1,640], index: 2, kind: input, shape index: {}]
  %s3 = inlined_call_operand.vmem [shape: bf16[640,384], index: 3, kind: input, shape index: {}]
  %s4 = inlined_call_operand.vmem [shape: f32[1,384], index: 4, kind: input, shape index: {}]
  %s5 = inlined_call_operand.vmem [shape: bf16[384,256], index: 5, kind: input, shape index: {}]
  %s6 = inlined_call_operand.vmem [shape: f32[1,256], index: 6, kind: input, shape index: {}]
  %s7 = inlined_call_operand.vmem [shape: bf16[256,128], index: 7, kind: input, shape index: {}]
  %s8 = inlined_call_operand.vmem [shape: f32[1,128], index: 8, kind: input, shape index: {}]
  %s9 = inlined_call_operand.vmem [shape: bf16[128,128], index: 9, kind: input, shape index: {}]
  %s10 = inlined_call_operand.vmem [shape: f32[1,128], index: 10, kind: input, shape index: {}]
  %s11 = inlined_call_operand.hbm [shape: f32[512,128], index: 11, kind: output, shape index: {}]
  %s12 = sld [smem:[#allocation0]]
  $region54: #{_padded_forward.1} parent=0
    _
  %s14 = ssub.s32 1, %s12
  %s15 = scalar_select 0, %s14, %s12
  $region1: #{_padded_forward.1} parent=0
    #allocation2 [shape = 'u8[262144]{0}', space=vmem, size = 0x40000, scoped, tag = 'output window, operand 0, single buffered']
    #allocation3 [shape = 's32[1]{0}', space=sflag, size = 0x4, scoped, tag = 'scoped memory for _padded_forward.1']
    %16 = vsyncpa [#allocation3], 0
    // Predicated region
    $region2: #{_padded_forward.1} parent=1 // pred_check
      _
    $region3: #{_padded_forward.1} parent=1 // pred_check_branch
      %18 = sbr.rel (0) target = $region5
    $region4: #{_padded_forward.1} parent=1 // pred_region
      _
    $region5: #{_padded_forward.1} parent=1 // pred_fallthru
      _
    // Predicated region
    $region6: #{_padded_forward.1} parent=1 // pred_check
      _
    $region7: #{_padded_forward.1} parent=1 // pred_check_branch
      %20 = sbr.rel (0) target = $region9
    $region8: #{_padded_forward.1} parent=1 // pred_region
      _
    $region9: #{_padded_forward.1} parent=1 // pred_fallthru
      _
    // Predicated region
    $region10: #{_padded_forward.1} parent=1 // pred_check
      _
    $region11: #{_padded_forward.1} parent=1 // pred_check_branch
      %22 = sbr.rel (0) target = $region13
    $region12: #{_padded_forward.1} parent=1 // pred_region
      _
    $region13: #{_padded_forward.1} parent=1 // pred_fallthru
      _
    // Predicated region
    $region14: #{_padded_forward.1} parent=1 // pred_check
      _
    $region15: #{_padded_forward.1} parent=1 // pred_check_branch
      %24 = sbr.rel (0) target = $region17
    $region16: #{_padded_forward.1} parent=1 // pred_region
      _
    $region17: #{_padded_forward.1} parent=1 // pred_fallthru
      _
    // Predicated region
    $region18: #{_padded_forward.1} parent=1 // pred_check
      _
    $region19: #{_padded_forward.1} parent=1 // pred_check_branch
      %26 = sbr.rel (0) target = $region21
    $region20: #{_padded_forward.1} parent=1 // pred_region
      _
    $region21: #{_padded_forward.1} parent=1 // pred_fallthru
      _
    // Predicated region
    $region22: #{_padded_forward.1} parent=1 // pred_check
      _
    $region23: #{_padded_forward.1} parent=1 // pred_check_branch
      %28 = sbr.rel (0) target = $region25
    $region24: #{_padded_forward.1} parent=1 // pred_region
      _
    $region25: #{_padded_forward.1} parent=1 // pred_fallthru
      _
    // Predicated region
    $region26: #{_padded_forward.1} parent=1 // pred_check
      _
    $region27: #{_padded_forward.1} parent=1 // pred_check_branch
      %30 = sbr.rel (0) target = $region29
    $region28: #{_padded_forward.1} parent=1 // pred_region
      _
    $region29: #{_padded_forward.1} parent=1 // pred_fallthru
      _
    // Predicated region
    $region30: #{_padded_forward.1} parent=1 // pred_check
      _
    $region31: #{_padded_forward.1} parent=1 // pred_check_branch
      %32 = sbr.rel (0) target = $region33
    $region32: #{_padded_forward.1} parent=1 // pred_region
      _
    $region33: #{_padded_forward.1} parent=1 // pred_fallthru
      _
    // Predicated region
    $region34: #{_padded_forward.1} parent=1 // pred_check
      _
    $region35: #{_padded_forward.1} parent=1 // pred_check_branch
      %34 = sbr.rel (0) target = $region37
    $region36: #{_padded_forward.1} parent=1 // pred_region
      _
    $region37: #{_padded_forward.1} parent=1 // pred_fallthru
      _
    // Predicated region
    $region38: #{_padded_forward.1} parent=1 // pred_check
      _
    $region39: #{_padded_forward.1} parent=1 // pred_check_branch
      %36 = sbr.rel (0) target = $region41
    $region40: #{_padded_forward.1} parent=1 // pred_region
      _
    $region41: #{_padded_forward.1} parent=1 // pred_fallthru
      _
    // Predicated region
    $region42: #{_padded_forward.1} parent=1 // pred_check
      _
    $region43: #{_padded_forward.1} parent=1 // pred_check_branch
      %38 = sbr.rel (0) target = $region45
    $region44: #{_padded_forward.1} parent=1 // pred_region
      _
    $region45: #{_padded_forward.1} parent=1 // pred_fallthru
      _
    %v40 = vld [vmem:[%s0] sm:$0xff]
    %v41 = vld [vmem:[%s0 + $0x8] sm:$0xff]
    %v42 = vld [vmem:[%s0 + $0x10] sm:$0xff]
    %v43 = vld [vmem:[%s0 + $0x18] sm:$0xff]
    %v44 = vld [vmem:[%s0 + $0x20] sm:$0xff]
    %v45 = vld [vmem:[%s0 + $0x28] sm:$0xff]
    %v46 = vld [vmem:[%s0 + $0x30] sm:$0xff]
    %v47 = vld [vmem:[%s0 + $0x38] sm:$0xff]
    %v48 = vld [vmem:[%s0 + $0x40] sm:$0xff]
    %v49 = vld [vmem:[%s0 + $0x48] sm:$0xff]
    %v50 = vld [vmem:[%s0 + $0x50] sm:$0xff]
    %v51 = vld [vmem:[%s0 + $0x58] sm:$0xff]
    %v52 = vld [vmem:[%s0 + $0x60] sm:$0xff]
    %v53 = vld [vmem:[%s0 + $0x68] sm:$0xff]
    %v54 = vld [vmem:[%s0 + $0x70] sm:$0xff]
    %v55 = vld [vmem:[%s0 + $0x78] sm:$0xff]
    %v56 = vld [vmem:[%s0 + $0x80] sm:$0xff]
    %v57 = vld [vmem:[%s0 + $0x88] sm:$0xff]
    %v58 = vld [vmem:[%s0 + $0x90] sm:$0xff]
    %v59 = vld [vmem:[%s0 + $0x98] sm:$0xff]
    %v60 = vld [vmem:[%s0 + $0xa0] sm:$0xff]
    %v61 = vld [vmem:[%s0 + $0xa8] sm:$0xff]
    %v62 = vld [vmem:[%s0 + $0xb0] sm:$0xff]
    %v63 = vld [vmem:[%s0 + $0xb8] sm:$0xff]
    %v64 = vld [vmem:[%s0 + $0xc0] sm:$0xff]
    %v65 = vld [vmem:[%s0 + $0xc8] sm:$0xff]
    %v66 = vld [vmem:[%s0 + $0xd0] sm:$0xff]
    %v67 = vld [vmem:[%s0 + $0xd8] sm:$0xff]
    %v68 = vld [vmem:[%s0 + $0xe0] sm:$0xff]
    %v69 = vld [vmem:[%s0 + $0xe8] sm:$0xff]
    %v70 = vld [vmem:[%s0 + $0xf0] sm:$0xff]
    %v71 = vld [vmem:[%s0 + $0xf8] sm:$0xff]
    %v72 = vld [vmem:[%s0 + $0x100] sm:$0xff]
    %v73 = vld [vmem:[%s0 + $0x108] sm:$0xff]
    %v74 = vld [vmem:[%s0 + $0x110] sm:$0xff]
    %v75 = vld [vmem:[%s0 + $0x118] sm:$0xff]
    %v76 = vld [vmem:[%s0 + $0x120] sm:$0xff]
    %v77 = vld [vmem:[%s0 + $0x128] sm:$0xff]
    %v78 = vld [vmem:[%s0 + $0x130] sm:$0xff]
    %v79 = vld [vmem:[%s0 + $0x138] sm:$0xff]
    %v80 = vld [vmem:[%s0 + $0x140] sm:$0xff]
    %v81 = vld [vmem:[%s0 + $0x148] sm:$0xff]
    %v82 = vld [vmem:[%s0 + $0x150] sm:$0xff]
    %v83 = vld [vmem:[%s0 + $0x158] sm:$0xff]
    %v84 = vld [vmem:[%s0 + $0x160] sm:$0xff]
    %v85 = vld [vmem:[%s0 + $0x168] sm:$0xff]
    %v86 = vld [vmem:[%s0 + $0x170] sm:$0xff]
    %v87 = vld [vmem:[%s0 + $0x178] sm:$0xff]
    %v88 = vld [vmem:[%s0 + $0x180] sm:$0xff]
    %v89 = vld [vmem:[%s0 + $0x188] sm:$0xff]
    %v90 = vld [vmem:[%s0 + $0x190] sm:$0xff]
    %v91 = vld [vmem:[%s0 + $0x198] sm:$0xff]
    %v92 = vld [vmem:[%s0 + $0x1a0] sm:$0xff]
    %v93 = vld [vmem:[%s0 + $0x1a8] sm:$0xff]
    %v94 = vld [vmem:[%s0 + $0x1b0] sm:$0xff]
    %v95 = vld [vmem:[%s0 + $0x1b8] sm:$0xff]
    %v96 = vld [vmem:[%s0 + $0x1c0] sm:$0xff]
    %v97 = vld [vmem:[%s0 + $0x1c8] sm:$0xff]
    %v98 = vld [vmem:[%s0 + $0x1d0] sm:$0xff]
    %v99 = vld [vmem:[%s0 + $0x1d8] sm:$0xff]
    %v100 = vld [vmem:[%s0 + $0x1e0] sm:$0xff]
    %v101 = vld [vmem:[%s0 + $0x1e8] sm:$0xff]
    %v102 = vld [vmem:[%s0 + $0x1f0] sm:$0xff]
    %v103 = vld [vmem:[%s0 + $0x1f8] sm:$0xff]
    %v104 = vld [vmem:[%s0 + $0x200] sm:$0xff]
    %v105 = vld [vmem:[%s0 + $0x208] sm:$0xff]
    %v106 = vld [vmem:[%s0 + $0x210] sm:$0xff]
    %v107 = vld [vmem:[%s0 + $0x218] sm:$0xff]
    %v108 = vld [vmem:[%s0 + $0x220] sm:$0xff]
    %v109 = vld [vmem:[%s0 + $0x228] sm:$0xff]
    %v110 = vld [vmem:[%s0 + $0x230] sm:$0xff]
    %v111 = vld [vmem:[%s0 + $0x238] sm:$0xff]
    %v112 = vld [vmem:[%s0 + $0x240] sm:$0xff]
    %v113 = vld [vmem:[%s0 + $0x248] sm:$0xff]
    %v114 = vld [vmem:[%s0 + $0x250] sm:$0xff]
    %v115 = vld [vmem:[%s0 + $0x258] sm:$0xff]
    %v116 = vld [vmem:[%s0 + $0x260] sm:$0xff]
    %v117 = vld [vmem:[%s0 + $0x268] sm:$0xff]
    %v118 = vld [vmem:[%s0 + $0x270] sm:$0xff]
    %v119 = vld [vmem:[%s0 + $0x278] sm:$0xff]
    %v120 = vld [vmem:[%s0 + $0x280] sm:$0xff]
    %v121 = vld [vmem:[%s0 + $0x288] sm:$0xff]
    %v122 = vld [vmem:[%s0 + $0x290] sm:$0xff]
    %v123 = vld [vmem:[%s0 + $0x298] sm:$0xff]
    %v124 = vld [vmem:[%s0 + $0x2a0] sm:$0xff]
    %v125 = vld [vmem:[%s0 + $0x2a8] sm:$0xff]
    %v126 = vld [vmem:[%s0 + $0x2b0] sm:$0xff]
    %v127 = vld [vmem:[%s0 + $0x2b8] sm:$0xff]
    %v128 = vld [vmem:[%s0 + $0x2c0] sm:$0xff]
    %v129 = vld [vmem:[%s0 + $0x2c8] sm:$0xff]
    %v130 = vld [vmem:[%s0 + $0x2d0] sm:$0xff]
    %v131 = vld [vmem:[%s0 + $0x2d8] sm:$0xff]
    %v132 = vld [vmem:[%s0 + $0x2e0] sm:$0xff]
    %v133 = vld [vmem:[%s0 + $0x2e8] sm:$0xff]
    %v134 = vld [vmem:[%s0 + $0x2f0] sm:$0xff]
    %v135 = vld [vmem:[%s0 + $0x2f8] sm:$0xff]
    %v136 = vld [vmem:[%s0 + $0x300] sm:$0xff]
    %v137 = vld [vmem:[%s0 + $0x308] sm:$0xff]
    %v138 = vld [vmem:[%s0 + $0x310] sm:$0xff]
    %v139 = vld [vmem:[%s0 + $0x318] sm:$0xff]
    %v140 = vld [vmem:[%s0 + $0x320] sm:$0xff]
    %v141 = vld [vmem:[%s0 + $0x328] sm:$0xff]
    %v142 = vld [vmem:[%s0 + $0x330] sm:$0xff]
    %v143 = vld [vmem:[%s0 + $0x338] sm:$0xff]
    %v144 = vld [vmem:[%s0 + $0x340] sm:$0xff]
    %v145 = vld [vmem:[%s0 + $0x348] sm:$0xff]
    %v146 = vld [vmem:[%s0 + $0x350] sm:$0xff]
    %v147 = vld [vmem:[%s0 + $0x358] sm:$0xff]
    %v148 = vld [vmem:[%s0 + $0x360] sm:$0xff]
    %v149 = vld [vmem:[%s0 + $0x368] sm:$0xff]
    %v150 = vld [vmem:[%s0 + $0x370] sm:$0xff]
    %v151 = vld [vmem:[%s0 + $0x378] sm:$0xff]
    %v152 = vld [vmem:[%s0 + $0x380] sm:$0xff]
    %v153 = vld [vmem:[%s0 + $0x388] sm:$0xff]
    %v154 = vld [vmem:[%s0 + $0x390] sm:$0xff]
    %v155 = vld [vmem:[%s0 + $0x398] sm:$0xff]
    %v156 = vld [vmem:[%s0 + $0x3a0] sm:$0xff]
    %v157 = vld [vmem:[%s0 + $0x3a8] sm:$0xff]
    %v158 = vld [vmem:[%s0 + $0x3b0] sm:$0xff]
    %v159 = vld [vmem:[%s0 + $0x3b8] sm:$0xff]
    %v160 = vld [vmem:[%s0 + $0x3c0] sm:$0xff]
    %v161 = vld [vmem:[%s0 + $0x3c8] sm:$0xff]
    %v162 = vld [vmem:[%s0 + $0x3d0] sm:$0xff]
    %v163 = vld [vmem:[%s0 + $0x3d8] sm:$0xff]
    %v164 = vld [vmem:[%s0 + $0x3e0] sm:$0xff]
    %v165 = vld [vmem:[%s0 + $0x3e8] sm:$0xff]
    %v166 = vld [vmem:[%s0 + $0x3f0] sm:$0xff]
    %v167 = vld [vmem:[%s0 + $0x3f8] sm:$0xff]
    %v168 = vld [vmem:[%s0 + $0x400] sm:$0xff]
    %v169 = vld [vmem:[%s0 + $0x408] sm:$0xff]
    %v170 = vld [vmem:[%s0 + $0x410] sm:$0xff]
    %v171 = vld [vmem:[%s0 + $0x418] sm:$0xff]
    %v172 = vld [vmem:[%s0 + $0x420] sm:$0xff]
    %v173 = vld [vmem:[%s0 + $0x428] sm:$0xff]
    %v174 = vld [vmem:[%s0 + $0x430] sm:$0xff]
    %v175 = vld [vmem:[%s0 + $0x438] sm:$0xff]
    %v176 = vld [vmem:[%s0 + $0x440] sm:$0xff]
    %v177 = vld [vmem:[%s0 + $0x448] sm:$0xff]
    %v178 = vld [vmem:[%s0 + $0x450] sm:$0xff]
    %v179 = vld [vmem:[%s0 + $0x458] sm:$0xff]
    %v180 = vld [vmem:[%s0 + $0x460] sm:$0xff]
    %v181 = vld [vmem:[%s0 + $0x468] sm:$0xff]
    %v182 = vld [vmem:[%s0 + $0x470] sm:$0xff]
    %v183 = vld [vmem:[%s0 + $0x478] sm:$0xff]
    %v184 = vld [vmem:[%s0 + $0x480] sm:$0xff]
    %v185 = vld [vmem:[%s0 + $0x488] sm:$0xff]
    %v186 = vld [vmem:[%s0 + $0x490] sm:$0xff]
    %v187 = vld [vmem:[%s0 + $0x498] sm:$0xff]
    %v188 = vld [vmem:[%s0 + $0x4a0] sm:$0xff]
    %v189 = vld [vmem:[%s0 + $0x4a8] sm:$0xff]
    %v190 = vld [vmem:[%s0 + $0x4b0] sm:$0xff]
    %v191 = vld [vmem:[%s0 + $0x4b8] sm:$0xff]
    %v192 = vld [vmem:[%s0 + $0x4c0] sm:$0xff]
    %v193 = vld [vmem:[%s0 + $0x4c8] sm:$0xff]
    %v194 = vld [vmem:[%s0 + $0x4d0] sm:$0xff]
    %v195 = vld [vmem:[%s0 + $0x4d8] sm:$0xff]
    %v196 = vld [vmem:[%s0 + $0x4e0] sm:$0xff]
    %v197 = vld [vmem:[%s0 + $0x4e8] sm:$0xff]
    %v198 = vld [vmem:[%s0 + $0x4f0] sm:$0xff]
    %v199 = vld [vmem:[%s0 + $0x4f8] sm:$0xff]
    %v200 = vld [vmem:[%s0 + $0x500] sm:$0xff]
    %v201 = vld [vmem:[%s0 + $0x508] sm:$0xff]
    %v202 = vld [vmem:[%s0 + $0x510] sm:$0xff]
    %v203 = vld [vmem:[%s0 + $0x518] sm:$0xff]
    %v204 = vld [vmem:[%s0 + $0x520] sm:$0xff]
    %v205 = vld [vmem:[%s0 + $0x528] sm:$0xff]
    %v206 = vld [vmem:[%s0 + $0x530] sm:$0xff]
    %v207 = vld [vmem:[%s0 + $0x538] sm:$0xff]
    %v208 = vld [vmem:[%s0 + $0x540] sm:$0xff]
    %v209 = vld [vmem:[%s0 + $0x548] sm:$0xff]
    %v210 = vld [vmem:[%s0 + $0x550] sm:$0xff]
    %v211 = vld [vmem:[%s0 + $0x558] sm:$0xff]
    %v212 = vld [vmem:[%s0 + $0x560] sm:$0xff]
    %v213 = vld [vmem:[%s0 + $0x568] sm:$0xff]
    %v214 = vld [vmem:[%s0 + $0x570] sm:$0xff]
    %v215 = vld [vmem:[%s0 + $0x578] sm:$0xff]
    %v216 = vld [vmem:[%s0 + $0x580] sm:$0xff]
    %v217 = vld [vmem:[%s0 + $0x588] sm:$0xff]
    %v218 = vld [vmem:[%s0 + $0x590] sm:$0xff]
    %v219 = vld [vmem:[%s0 + $0x598] sm:$0xff]
    %v220 = vld [vmem:[%s0 + $0x5a0] sm:$0xff]
    %v221 = vld [vmem:[%s0 + $0x5a8] sm:$0xff]
    %v222 = vld [vmem:[%s0 + $0x5b0] sm:$0xff]
    %v223 = vld [vmem:[%s0 + $0x5b8] sm:$0xff]
    %v224 = vld [vmem:[%s0 + $0x5c0] sm:$0xff]
    %v225 = vld [vmem:[%s0 + $0x5c8] sm:$0xff]
    %v226 = vld [vmem:[%s0 + $0x5d0] sm:$0xff]
    %v227 = vld [vmem:[%s0 + $0x5d8] sm:$0xff]
    %v228 = vld [vmem:[%s0 + $0x5e0] sm:$0xff]
    %v229 = vld [vmem:[%s0 + $0x5e8] sm:$0xff]
    %v230 = vld [vmem:[%s0 + $0x5f0] sm:$0xff]
    %v231 = vld [vmem:[%s0 + $0x5f8] sm:$0xff]
    %v232 = vld [vmem:[%s0 + $0x600] sm:$0xff]
    %v233 = vld [vmem:[%s0 + $0x608] sm:$0xff]
    %v234 = vld [vmem:[%s0 + $0x610] sm:$0xff]
    %v235 = vld [vmem:[%s0 + $0x618] sm:$0xff]
    %v236 = vld [vmem:[%s0 + $0x620] sm:$0xff]
    %v237 = vld [vmem:[%s0 + $0x628] sm:$0xff]
    %v238 = vld [vmem:[%s0 + $0x630] sm:$0xff]
    %v239 = vld [vmem:[%s0 + $0x638] sm:$0xff]
    %v240 = vld [vmem:[%s0 + $0x640] sm:$0xff]
    %v241 = vld [vmem:[%s0 + $0x648] sm:$0xff]
    %v242 = vld [vmem:[%s0 + $0x650] sm:$0xff]
    %v243 = vld [vmem:[%s0 + $0x658] sm:$0xff]
    %v244 = vld [vmem:[%s0 + $0x660] sm:$0xff]
    %v245 = vld [vmem:[%s0 + $0x668] sm:$0xff]
    %v246 = vld [vmem:[%s0 + $0x670] sm:$0xff]
    %v247 = vld [vmem:[%s0 + $0x678] sm:$0xff]
    %v248 = vld [vmem:[%s0 + $0x680] sm:$0xff]
    %v249 = vld [vmem:[%s0 + $0x688] sm:$0xff]
    %v250 = vld [vmem:[%s0 + $0x690] sm:$0xff]
    %v251 = vld [vmem:[%s0 + $0x698] sm:$0xff]
    %v252 = vld [vmem:[%s0 + $0x6a0] sm:$0xff]
    %v253 = vld [vmem:[%s0 + $0x6a8] sm:$0xff]
    %v254 = vld [vmem:[%s0 + $0x6b0] sm:$0xff]
    %v255 = vld [vmem:[%s0 + $0x6b8] sm:$0xff]
    %v256 = vld [vmem:[%s0 + $0x6c0] sm:$0xff]
    %v257 = vld [vmem:[%s0 + $0x6c8] sm:$0xff]
    %v258 = vld [vmem:[%s0 + $0x6d0] sm:$0xff]
    %v259 = vld [vmem:[%s0 + $0x6d8] sm:$0xff]
    %v260 = vld [vmem:[%s0 + $0x6e0] sm:$0xff]
    %v261 = vld [vmem:[%s0 + $0x6e8] sm:$0xff]
    %v262 = vld [vmem:[%s0 + $0x6f0] sm:$0xff]
    %v263 = vld [vmem:[%s0 + $0x6f8] sm:$0xff]
    %v264 = vld [vmem:[%s0 + $0x700] sm:$0xff]
    %v265 = vld [vmem:[%s0 + $0x708] sm:$0xff]
    %v266 = vld [vmem:[%s0 + $0x710] sm:$0xff]
    %v267 = vld [vmem:[%s0 + $0x718] sm:$0xff]
    %v268 = vld [vmem:[%s0 + $0x720] sm:$0xff]
    %v269 = vld [vmem:[%s0 + $0x728] sm:$0xff]
    %v270 = vld [vmem:[%s0 + $0x730] sm:$0xff]
    %v271 = vld [vmem:[%s0 + $0x738] sm:$0xff]
    %v272 = vld [vmem:[%s0 + $0x740] sm:$0xff]
    %v273 = vld [vmem:[%s0 + $0x748] sm:$0xff]
    %v274 = vld [vmem:[%s0 + $0x750] sm:$0xff]
    %v275 = vld [vmem:[%s0 + $0x758] sm:$0xff]
    %v276 = vld [vmem:[%s0 + $0x760] sm:$0xff]
    %v277 = vld [vmem:[%s0 + $0x768] sm:$0xff]
    %v278 = vld [vmem:[%s0 + $0x770] sm:$0xff]
    %v279 = vld [vmem:[%s0 + $0x778] sm:$0xff]
    %v280 = vld [vmem:[%s0 + $0x780] sm:$0xff]
    %v281 = vld [vmem:[%s0 + $0x788] sm:$0xff]
    %v282 = vld [vmem:[%s0 + $0x790] sm:$0xff]
    %v283 = vld [vmem:[%s0 + $0x798] sm:$0xff]
    %v284 = vld [vmem:[%s0 + $0x7a0] sm:$0xff]
    %v285 = vld [vmem:[%s0 + $0x7a8] sm:$0xff]
    %v286 = vld [vmem:[%s0 + $0x7b0] sm:$0xff]
    %v287 = vld [vmem:[%s0 + $0x7b8] sm:$0xff]
    %v288 = vld [vmem:[%s0 + $0x7c0] sm:$0xff]
    %v289 = vld [vmem:[%s0 + $0x7c8] sm:$0xff]
    %v290 = vld [vmem:[%s0 + $0x7d0] sm:$0xff]
    %v291 = vld [vmem:[%s0 + $0x7d8] sm:$0xff]
    %v292 = vld [vmem:[%s0 + $0x7e0] sm:$0xff]
    %v293 = vld [vmem:[%s0 + $0x7e8] sm:$0xff]
    %v294 = vld [vmem:[%s0 + $0x7f0] sm:$0xff]
    %v295 = vld [vmem:[%s0 + $0x7f8] sm:$0xff]
    %v296 = vld [vmem:[%s0 + $0x800] sm:$0xff]
    %v297 = vld [vmem:[%s0 + $0x808] sm:$0xff]
    %v298 = vld [vmem:[%s0 + $0x810] sm:$0xff]
    %v299 = vld [vmem:[%s0 + $0x818] sm:$0xff]
    %v300 = vld [vmem:[%s0 + $0x820] sm:$0xff]
    %v301 = vld [vmem:[%s0 + $0x828] sm:$0xff]
    %v302 = vld [vmem:[%s0 + $0x830] sm:$0xff]
    %v303 = vld [vmem:[%s0 + $0x838] sm:$0xff]
    %v304 = vld [vmem:[%s0 + $0x840] sm:$0xff]
    %v305 = vld [vmem:[%s0 + $0x848] sm:$0xff]
    %v306 = vld [vmem:[%s0 + $0x850] sm:$0xff]
    %v307 = vld [vmem:[%s0 + $0x858] sm:$0xff]
    %v308 = vld [vmem:[%s0 + $0x860] sm:$0xff]
    %v309 = vld [vmem:[%s0 + $0x868] sm:$0xff]
    %v310 = vld [vmem:[%s0 + $0x870] sm:$0xff]
    %v311 = vld [vmem:[%s0 + $0x878] sm:$0xff]
    %v312 = vld [vmem:[%s0 + $0x880] sm:$0xff]
    %v313 = vld [vmem:[%s0 + $0x888] sm:$0xff]
    %v314 = vld [vmem:[%s0 + $0x890] sm:$0xff]
    %v315 = vld [vmem:[%s0 + $0x898] sm:$0xff]
    %v316 = vld [vmem:[%s0 + $0x8a0] sm:$0xff]
    %v317 = vld [vmem:[%s0 + $0x8a8] sm:$0xff]
    %v318 = vld [vmem:[%s0 + $0x8b0] sm:$0xff]
    %v319 = vld [vmem:[%s0 + $0x8b8] sm:$0xff]
    %v320 = vld [vmem:[%s0 + $0x8c0] sm:$0xff]
    %v321 = vld [vmem:[%s0 + $0x8c8] sm:$0xff]
    %v322 = vld [vmem:[%s0 + $0x8d0] sm:$0xff]
    %v323 = vld [vmem:[%s0 + $0x8d8] sm:$0xff]
    %v324 = vld [vmem:[%s0 + $0x8e0] sm:$0xff]
    %v325 = vld [vmem:[%s0 + $0x8e8] sm:$0xff]
    %v326 = vld [vmem:[%s0 + $0x8f0] sm:$0xff]
    %v327 = vld [vmem:[%s0 + $0x8f8] sm:$0xff]
    %v328 = vld [vmem:[%s0 + $0x900] sm:$0xff]
    %v329 = vld [vmem:[%s0 + $0x908] sm:$0xff]
    %v330 = vld [vmem:[%s0 + $0x910] sm:$0xff]
    %v331 = vld [vmem:[%s0 + $0x918] sm:$0xff]
    %v332 = vld [vmem:[%s0 + $0x920] sm:$0xff]
    %v333 = vld [vmem:[%s0 + $0x928] sm:$0xff]
    %v334 = vld [vmem:[%s0 + $0x930] sm:$0xff]
    %v335 = vld [vmem:[%s0 + $0x938] sm:$0xff]
    %v336 = vld [vmem:[%s0 + $0x940] sm:$0xff]
    %v337 = vld [vmem:[%s0 + $0x948] sm:$0xff]
    %v338 = vld [vmem:[%s0 + $0x950] sm:$0xff]
    %v339 = vld [vmem:[%s0 + $0x958] sm:$0xff]
    %v340 = vld [vmem:[%s0 + $0x960] sm:$0xff]
    %v341 = vld [vmem:[%s0 + $0x968] sm:$0xff]
    %v342 = vld [vmem:[%s0 + $0x970] sm:$0xff]
    %v343 = vld [vmem:[%s0 + $0x978] sm:$0xff]
    %v344 = vld [vmem:[%s0 + $0x980] sm:$0xff]
    %v345 = vld [vmem:[%s0 + $0x988] sm:$0xff]
    %v346 = vld [vmem:[%s0 + $0x990] sm:$0xff]
    %v347 = vld [vmem:[%s0 + $0x998] sm:$0xff]
    %v348 = vld [vmem:[%s0 + $0x9a0] sm:$0xff]
    %v349 = vld [vmem:[%s0 + $0x9a8] sm:$0xff]
    %v350 = vld [vmem:[%s0 + $0x9b0] sm:$0xff]
    %v351 = vld [vmem:[%s0 + $0x9b8] sm:$0xff]
    %v352 = vld [vmem:[%s0 + $0x9c0] sm:$0xff]
    %v353 = vld [vmem:[%s0 + $0x9c8] sm:$0xff]
    %v354 = vld [vmem:[%s0 + $0x9d0] sm:$0xff]
    %v355 = vld [vmem:[%s0 + $0x9d8] sm:$0xff]
    %v356 = vld [vmem:[%s0 + $0x9e0] sm:$0xff]
    %v357 = vld [vmem:[%s0 + $0x9e8] sm:$0xff]
    %v358 = vld [vmem:[%s0 + $0x9f0] sm:$0xff]
    %v359 = vld [vmem:[%s0 + $0x9f8] sm:$0xff]
    %v360 = vld [vmem:[%s0 + $0xa00] sm:$0xff]
    %v361 = vld [vmem:[%s0 + $0xa08] sm:$0xff]
    %v362 = vld [vmem:[%s0 + $0xa10] sm:$0xff]
    %v363 = vld [vmem:[%s0 + $0xa18] sm:$0xff]
    %v364 = vld [vmem:[%s0 + $0xa20] sm:$0xff]
    %v365 = vld [vmem:[%s0 + $0xa28] sm:$0xff]
    %v366 = vld [vmem:[%s0 + $0xa30] sm:$0xff]
    %v367 = vld [vmem:[%s0 + $0xa38] sm:$0xff]
    %v368 = vld [vmem:[%s0 + $0xa40] sm:$0xff]
    %v369 = vld [vmem:[%s0 + $0xa48] sm:$0xff]
    %v370 = vld [vmem:[%s0 + $0xa50] sm:$0xff]
    %v371 = vld [vmem:[%s0 + $0xa58] sm:$0xff]
    %v372 = vld [vmem:[%s0 + $0xa60] sm:$0xff]
    %v373 = vld [vmem:[%s0 + $0xa68] sm:$0xff]
    %v374 = vld [vmem:[%s0 + $0xa70] sm:$0xff]
    %v375 = vld [vmem:[%s0 + $0xa78] sm:$0xff]
    %v376 = vld [vmem:[%s0 + $0xa80] sm:$0xff]
    %v377 = vld [vmem:[%s0 + $0xa88] sm:$0xff]
    %v378 = vld [vmem:[%s0 + $0xa90] sm:$0xff]
    %v379 = vld [vmem:[%s0 + $0xa98] sm:$0xff]
    %v380 = vld [vmem:[%s0 + $0xaa0] sm:$0xff]
    %v381 = vld [vmem:[%s0 + $0xaa8] sm:$0xff]
    %v382 = vld [vmem:[%s0 + $0xab0] sm:$0xff]
    %v383 = vld [vmem:[%s0 + $0xab8] sm:$0xff]
    %v384 = vld [vmem:[%s0 + $0xac0] sm:$0xff]
    %v385 = vld [vmem:[%s0 + $0xac8] sm:$0xff]
    %v386 = vld [vmem:[%s0 + $0xad0] sm:$0xff]
    %v387 = vld [vmem:[%s0 + $0xad8] sm:$0xff]
    %v388 = vld [vmem:[%s0 + $0xae0] sm:$0xff]
    %v389 = vld [vmem:[%s0 + $0xae8] sm:$0xff]
    %v390 = vld [vmem:[%s0 + $0xaf0] sm:$0xff]
    %v391 = vld [vmem:[%s0 + $0xaf8] sm:$0xff]
    %v392 = vld [vmem:[%s0 + $0xb00] sm:$0xff]
    %v393 = vld [vmem:[%s0 + $0xb08] sm:$0xff]
    %v394 = vld [vmem:[%s0 + $0xb10] sm:$0xff]
    %v395 = vld [vmem:[%s0 + $0xb18] sm:$0xff]
    %v396 = vld [vmem:[%s0 + $0xb20] sm:$0xff]
    %v397 = vld [vmem:[%s0 + $0xb28] sm:$0xff]
    %v398 = vld [vmem:[%s0 + $0xb30] sm:$0xff]
    %v399 = vld [vmem:[%s0 + $0xb38] sm:$0xff]
    %v400 = vld [vmem:[%s0 + $0xb40] sm:$0xff]
    %v401 = vld [vmem:[%s0 + $0xb48] sm:$0xff]
    %v402 = vld [vmem:[%s0 + $0xb50] sm:$0xff]
    %v403 = vld [vmem:[%s0 + $0xb58] sm:$0xff]
    %v404 = vld [vmem:[%s0 + $0xb60] sm:$0xff]
    %v405 = vld [vmem:[%s0 + $0xb68] sm:$0xff]
    %v406 = vld [vmem:[%s0 + $0xb70] sm:$0xff]
    %v407 = vld [vmem:[%s0 + $0xb78] sm:$0xff]
    %v408 = vld [vmem:[%s0 + $0xb80] sm:$0xff]
    %v409 = vld [vmem:[%s0 + $0xb88] sm:$0xff]
    %v410 = vld [vmem:[%s0 + $0xb90] sm:$0xff]
    %v411 = vld [vmem:[%s0 + $0xb98] sm:$0xff]
    %v412 = vld [vmem:[%s0 + $0xba0] sm:$0xff]
    %v413 = vld [vmem:[%s0 + $0xba8] sm:$0xff]
    %v414 = vld [vmem:[%s0 + $0xbb0] sm:$0xff]
    %v415 = vld [vmem:[%s0 + $0xbb8] sm:$0xff]
    %v416 = vld [vmem:[%s0 + $0xbc0] sm:$0xff]
    %v417 = vld [vmem:[%s0 + $0xbc8] sm:$0xff]
    %v418 = vld [vmem:[%s0 + $0xbd0] sm:$0xff]
    %v419 = vld [vmem:[%s0 + $0xbd8] sm:$0xff]
    %v420 = vld [vmem:[%s0 + $0xbe0] sm:$0xff]
    %v421 = vld [vmem:[%s0 + $0xbe8] sm:$0xff]
    %v422 = vld [vmem:[%s0 + $0xbf0] sm:$0xff]
    %v423 = vld [vmem:[%s0 + $0xbf8] sm:$0xff]
    %v424 = vld [vmem:[%s0 + $0xc00] sm:$0xff]
    %v425 = vld [vmem:[%s0 + $0xc08] sm:$0xff]
    %v426 = vld [vmem:[%s0 + $0xc10] sm:$0xff]
    %v427 = vld [vmem:[%s0 + $0xc18] sm:$0xff]
    %v428 = vld [vmem:[%s0 + $0xc20] sm:$0xff]
    %v429 = vld [vmem:[%s0 + $0xc28] sm:$0xff]
    %v430 = vld [vmem:[%s0 + $0xc30] sm:$0xff]
    %v431 = vld [vmem:[%s0 + $0xc38] sm:$0xff]
    %v432 = vld [vmem:[%s0 + $0xc40] sm:$0xff]
    %v433 = vld [vmem:[%s0 + $0xc48] sm:$0xff]
    %v434 = vld [vmem:[%s0 + $0xc50] sm:$0xff]
    %v435 = vld [vmem:[%s0 + $0xc58] sm:$0xff]
    %v436 = vld [vmem:[%s0 + $0xc60] sm:$0xff]
    %v437 = vld [vmem:[%s0 + $0xc68] sm:$0xff]
    %v438 = vld [vmem:[%s0 + $0xc70] sm:$0xff]
    %v439 = vld [vmem:[%s0 + $0xc78] sm:$0xff]
    %v440 = vld [vmem:[%s0 + $0xc80] sm:$0xff]
    %v441 = vld [vmem:[%s0 + $0xc88] sm:$0xff]
    %v442 = vld [vmem:[%s0 + $0xc90] sm:$0xff]
    %v443 = vld [vmem:[%s0 + $0xc98] sm:$0xff]
    %v444 = vld [vmem:[%s0 + $0xca0] sm:$0xff]
    %v445 = vld [vmem:[%s0 + $0xca8] sm:$0xff]
    %v446 = vld [vmem:[%s0 + $0xcb0] sm:$0xff]
    %v447 = vld [vmem:[%s0 + $0xcb8] sm:$0xff]
    %v448 = vld [vmem:[%s0 + $0xcc0] sm:$0xff]
    %v449 = vld [vmem:[%s0 + $0xcc8] sm:$0xff]
    %v450 = vld [vmem:[%s0 + $0xcd0] sm:$0xff]
    %v451 = vld [vmem:[%s0 + $0xcd8] sm:$0xff]
    %v452 = vld [vmem:[%s0 + $0xce0] sm:$0xff]
    %v453 = vld [vmem:[%s0 + $0xce8] sm:$0xff]
    %v454 = vld [vmem:[%s0 + $0xcf0] sm:$0xff]
    %v455 = vld [vmem:[%s0 + $0xcf8] sm:$0xff]
    %v456 = vld [vmem:[%s0 + $0xd00] sm:$0xff]
    %v457 = vld [vmem:[%s0 + $0xd08] sm:$0xff]
    %v458 = vld [vmem:[%s0 + $0xd10] sm:$0xff]
    %v459 = vld [vmem:[%s0 + $0xd18] sm:$0xff]
    %v460 = vld [vmem:[%s0 + $0xd20] sm:$0xff]
    %v461 = vld [vmem:[%s0 + $0xd28] sm:$0xff]
    %v462 = vld [vmem:[%s0 + $0xd30] sm:$0xff]
    %v463 = vld [vmem:[%s0 + $0xd38] sm:$0xff]
    %v464 = vld [vmem:[%s0 + $0xd40] sm:$0xff]
    %v465 = vld [vmem:[%s0 + $0xd48] sm:$0xff]
    %v466 = vld [vmem:[%s0 + $0xd50] sm:$0xff]
    %v467 = vld [vmem:[%s0 + $0xd58] sm:$0xff]
    %v468 = vld [vmem:[%s0 + $0xd60] sm:$0xff]
    %v469 = vld [vmem:[%s0 + $0xd68] sm:$0xff]
    %v470 = vld [vmem:[%s0 + $0xd70] sm:$0xff]
    %v471 = vld [vmem:[%s0 + $0xd78] sm:$0xff]
    %v472 = vld [vmem:[%s0 + $0xd80] sm:$0xff]
    %v473 = vld [vmem:[%s0 + $0xd88] sm:$0xff]
    %v474 = vld [vmem:[%s0 + $0xd90] sm:$0xff]
    %v475 = vld [vmem:[%s0 + $0xd98] sm:$0xff]
    %v476 = vld [vmem:[%s0 + $0xda0] sm:$0xff]
    %v477 = vld [vmem:[%s0 + $0xda8] sm:$0xff]
    %v478 = vld [vmem:[%s0 + $0xdb0] sm:$0xff]
    %v479 = vld [vmem:[%s0 + $0xdb8] sm:$0xff]
    %v480 = vld [vmem:[%s0 + $0xdc0] sm:$0xff]
    %v481 = vld [vmem:[%s0 + $0xdc8] sm:$0xff]
    %v482 = vld [vmem:[%s0 + $0xdd0] sm:$0xff]
    %v483 = vld [vmem:[%s0 + $0xdd8] sm:$0xff]
    %v484 = vld [vmem:[%s0 + $0xde0] sm:$0xff]
    %v485 = vld [vmem:[%s0 + $0xde8] sm:$0xff]
    %v486 = vld [vmem:[%s0 + $0xdf0] sm:$0xff]
    %v487 = vld [vmem:[%s0 + $0xdf8] sm:$0xff]
    %v488 = vpack.c.bf16 %v47, %v40
    %v489 = vpack.c.bf16 %v48, %v41
    %v490 = vpack.c.bf16 %v49, %v42
    %v491 = vpack.c.bf16 %v50, %v43
    %v492 = vpack.c.bf16 %v51, %v44
    %v493 = vpack.c.bf16 %v52, %v45
    %v494 = vpack.c.bf16 %v53, %v46
    %v495 = vpack.c.bf16 %v61, %v54
    %v496 = vpack.c.bf16 %v62, %v55
    %v497 = vpack.c.bf16 %v63, %v56
    %v498 = vpack.c.bf16 %v64, %v57
    %v499 = vpack.c.bf16 %v65, %v58
    %v500 = vpack.c.bf16 %v66, %v59
    %v501 = vpack.c.bf16 %v67, %v60
    %v502 = vpack.c.bf16 %v75, %v68
    %v503 = vpack.c.bf16 %v76, %v69
    %v504 = vpack.c.bf16 %v77, %v70
    %v505 = vpack.c.bf16 %v78, %v71
    %v506 = vpack.c.bf16 %v79, %v72
    %v507 = vpack.c.bf16 %v80, %v73
    %v508 = vpack.c.bf16 %v81, %v74
    %v509 = vpack.c.bf16 %v89, %v82
    %v510 = vpack.c.bf16 %v90, %v83
    %v511 = vpack.c.bf16 %v91, %v84
    %v512 = vpack.c.bf16 %v92, %v85
    %v513 = vpack.c.bf16 %v93, %v86
    %v514 = vpack.c.bf16 %v94, %v87
    %v515 = vpack.c.bf16 %v95, %v88
    %v516 = vpack.c.bf16 %v103, %v96
    %v517 = vpack.c.bf16 %v104, %v97
    %v518 = vpack.c.bf16 %v105, %v98
    %v519 = vpack.c.bf16 %v106, %v99
    %v520 = vpack.c.bf16 %v107, %v100
    %v521 = vpack.c.bf16 %v108, %v101
    %v522 = vpack.c.bf16 %v109, %v102
    %v523 = vpack.c.bf16 %v117, %v110
    %v524 = vpack.c.bf16 %v118, %v111
    %v525 = vpack.c.bf16 %v119, %v112
    %v526 = vpack.c.bf16 %v120, %v113
    %v527 = vpack.c.bf16 %v121, %v114
    %v528 = vpack.c.bf16 %v122, %v115
    %v529 = vpack.c.bf16 %v123, %v116
    %v530 = vpack.c.bf16 %v131, %v124
    %v531 = vpack.c.bf16 %v132, %v125
    %v532 = vpack.c.bf16 %v133, %v126
    %v533 = vpack.c.bf16 %v134, %v127
    %v534 = vpack.c.bf16 %v135, %v128
    %v535 = vpack.c.bf16 %v136, %v129
    %v536 = vpack.c.bf16 %v137, %v130
    %v537 = vpack.c.bf16 %v145, %v138
    %v538 = vpack.c.bf16 %v146, %v139
    %v539 = vpack.c.bf16 %v147, %v140
    %v540 = vpack.c.bf16 %v148, %v141
    %v541 = vpack.c.bf16 %v149, %v142
    %v542 = vpack.c.bf16 %v150, %v143
    %v543 = vpack.c.bf16 %v151, %v144
    %v544 = vpack.c.bf16 %v159, %v152
    %v545 = vpack.c.bf16 %v160, %v153
    %v546 = vpack.c.bf16 %v161, %v154
    %v547 = vpack.c.bf16 %v162, %v155
    %v548 = vpack.c.bf16 %v163, %v156
    %v549 = vpack.c.bf16 %v164, %v157
    %v550 = vpack.c.bf16 %v165, %v158
    %v551 = vpack.c.bf16 %v173, %v166
    %v552 = vpack.c.bf16 %v174, %v167
    %v553 = vpack.c.bf16 %v175, %v168
    %v554 = vpack.c.bf16 %v176, %v169
    %v555 = vpack.c.bf16 %v177, %v170
    %v556 = vpack.c.bf16 %v178, %v171
    %v557 = vpack.c.bf16 %v179, %v172
    %v558 = vpack.c.bf16 %v187, %v180
    %v559 = vpack.c.bf16 %v188, %v181
    %v560 = vpack.c.bf16 %v189, %v182
    %v561 = vpack.c.bf16 %v190, %v183
    %v562 = vpack.c.bf16 %v191, %v184
    %v563 = vpack.c.bf16 %v192, %v185
    %v564 = vpack.c.bf16 %v193, %v186
    %v565 = vpack.c.bf16 %v201, %v194
    %v566 = vpack.c.bf16 %v202, %v195
    %v567 = vpack.c.bf16 %v203, %v196
    %v568 = vpack.c.bf16 %v204, %v197
    %v569 = vpack.c.bf16 %v205, %v198
    %v570 = vpack.c.bf16 %v206, %v199
    %v571 = vpack.c.bf16 %v207, %v200
    %v572 = vpack.c.bf16 %v215, %v208
    %v573 = vpack.c.bf16 %v216, %v209
    %v574 = vpack.c.bf16 %v217, %v210
    %v575 = vpack.c.bf16 %v218, %v211
    %v576 = vpack.c.bf16 %v219, %v212
    %v577 = vpack.c.bf16 %v220, %v213
    %v578 = vpack.c.bf16 %v221, %v214
    %v579 = vpack.c.bf16 %v229, %v222
    %v580 = vpack.c.bf16 %v230, %v223
    %v581 = vpack.c.bf16 %v231, %v224
    %v582 = vpack.c.bf16 %v232, %v225
    %v583 = vpack.c.bf16 %v233, %v226
    %v584 = vpack.c.bf16 %v234, %v227
    %v585 = vpack.c.bf16 %v235, %v228
    %v586 = vpack.c.bf16 %v243, %v236
    %v587 = vpack.c.bf16 %v244, %v237
    %v588 = vpack.c.bf16 %v245, %v238
    %v589 = vpack.c.bf16 %v246, %v239
    %v590 = vpack.c.bf16 %v247, %v240
    %v591 = vpack.c.bf16 %v248, %v241
    %v592 = vpack.c.bf16 %v249, %v242
    %v593 = vpack.c.bf16 %v257, %v250
    %v594 = vpack.c.bf16 %v258, %v251
    %v595 = vpack.c.bf16 %v259, %v252
    %v596 = vpack.c.bf16 %v260, %v253
    %v597 = vpack.c.bf16 %v261, %v254
    %v598 = vpack.c.bf16 %v262, %v255
    %v599 = vpack.c.bf16 %v263, %v256
    %v600 = vpack.c.bf16 %v271, %v264
    %v601 = vpack.c.bf16 %v272, %v265
    %v602 = vpack.c.bf16 %v273, %v266
    %v603 = vpack.c.bf16 %v274, %v267
    %v604 = vpack.c.bf16 %v275, %v268
    %v605 = vpack.c.bf16 %v276, %v269
    %v606 = vpack.c.bf16 %v277, %v270
    %v607 = vpack.c.bf16 %v285, %v278
    %v608 = vpack.c.bf16 %v286, %v279
    %v609 = vpack.c.bf16 %v287, %v280
    %v610 = vpack.c.bf16 %v288, %v281
    %v611 = vpack.c.bf16 %v289, %v282
    %v612 = vpack.c.bf16 %v290, %v283
    %v613 = vpack.c.bf16 %v291, %v284
    %v614 = vpack.c.bf16 %v299, %v292
    %v615 = vpack.c.bf16 %v300, %v293
    %v616 = vpack.c.bf16 %v301, %v294
    %v617 = vpack.c.bf16 %v302, %v295
    %v618 = vpack.c.bf16 %v303, %v296
    %v619 = vpack.c.bf16 %v304, %v297
    %v620 = vpack.c.bf16 %v305, %v298
    %v621 = vpack.c.bf16 %v313, %v306
    %v622 = vpack.c.bf16 %v314, %v307
    %v623 = vpack.c.bf16 %v315, %v308
    %v624 = vpack.c.bf16 %v316, %v309
    %v625 = vpack.c.bf16 %v317, %v310
    %v626 = vpack.c.bf16 %v318, %v311
    %v627 = vpack.c.bf16 %v319, %v312
    %v628 = vpack.c.bf16 %v327, %v320
    %v629 = vpack.c.bf16 %v328, %v321
    %v630 = vpack.c.bf16 %v329, %v322
    %v631 = vpack.c.bf16 %v330, %v323
    %v632 = vpack.c.bf16 %v331, %v324
    %v633 = vpack.c.bf16 %v332, %v325
    %v634 = vpack.c.bf16 %v333, %v326
    %v635 = vpack.c.bf16 %v341, %v334
    %v636 = vpack.c.bf16 %v342, %v335
    %v637 = vpack.c.bf16 %v343, %v336
    %v638 = vpack.c.bf16 %v344, %v337
    %v639 = vpack.c.bf16 %v345, %v338
    %v640 = vpack.c.bf16 %v346, %v339
    %v641 = vpack.c.bf16 %v347, %v340
    %v642 = vpack.c.bf16 %v355, %v348
    %v643 = vpack.c.bf16 %v356, %v349
    %v644 = vpack.c.bf16 %v357, %v350
    %v645 = vpack.c.bf16 %v358, %v351
    %v646 = vpack.c.bf16 %v359, %v352
    %v647 = vpack.c.bf16 %v360, %v353
    %v648 = vpack.c.bf16 %v361, %v354
    %v649 = vpack.c.bf16 %v369, %v362
    %v650 = vpack.c.bf16 %v370, %v363
    %v651 = vpack.c.bf16 %v371, %v364
    %v652 = vpack.c.bf16 %v372, %v365
    %v653 = vpack.c.bf16 %v373, %v366
    %v654 = vpack.c.bf16 %v374, %v367
    %v655 = vpack.c.bf16 %v375, %v368
    %v656 = vpack.c.bf16 %v383, %v376
    %v657 = vpack.c.bf16 %v384, %v377
    %v658 = vpack.c.bf16 %v385, %v378
    %v659 = vpack.c.bf16 %v386, %v379
    %v660 = vpack.c.bf16 %v387, %v380
    %v661 = vpack.c.bf16 %v388, %v381
    %v662 = vpack.c.bf16 %v389, %v382
    %v663 = vpack.c.bf16 %v397, %v390
    %v664 = vpack.c.bf16 %v398, %v391
    %v665 = vpack.c.bf16 %v399, %v392
    %v666 = vpack.c.bf16 %v400, %v393
    %v667 = vpack.c.bf16 %v401, %v394
    %v668 = vpack.c.bf16 %v402, %v395
    %v669 = vpack.c.bf16 %v403, %v396
    %v670 = vpack.c.bf16 %v411, %v404
    %v671 = vpack.c.bf16 %v412, %v405
    %v672 = vpack.c.bf16 %v413, %v406
    %v673 = vpack.c.bf16 %v414, %v407
    %v674 = vpack.c.bf16 %v415, %v408
    %v675 = vpack.c.bf16 %v416, %v409
    %v676 = vpack.c.bf16 %v417, %v410
    %v677 = vpack.c.bf16 %v425, %v418
    %v678 = vpack.c.bf16 %v426, %v419
    %v679 = vpack.c.bf16 %v427, %v420
    %v680 = vpack.c.bf16 %v428, %v421
    %v681 = vpack.c.bf16 %v429, %v422
    %v682 = vpack.c.bf16 %v430, %v423
    %v683 = vpack.c.bf16 %v431, %v424
    %v684 = vpack.c.bf16 %v439, %v432
    %v685 = vpack.c.bf16 %v440, %v433
    %v686 = vpack.c.bf16 %v441, %v434
    %v687 = vpack.c.bf16 %v442, %v435
    %v688 = vpack.c.bf16 %v443, %v436
    %v689 = vpack.c.bf16 %v444, %v437
    %v690 = vpack.c.bf16 %v445, %v438
    %v691 = vpack.c.bf16 %v453, %v446
    %v692 = vpack.c.bf16 %v454, %v447
    %v693 = vpack.c.bf16 %v455, %v448
    %v694 = vpack.c.bf16 %v456, %v449
    %v695 = vpack.c.bf16 %v457, %v450
    %v696 = vpack.c.bf16 %v458, %v451
    %v697 = vpack.c.bf16 %v459, %v452
    %v698 = vpack.c.bf16 %v467, %v460
    %v699 = vpack.c.bf16 %v468, %v461
    %v700 = vpack.c.bf16 %v469, %v462
    %v701 = vpack.c.bf16 %v470, %v463
    %v702 = vpack.c.bf16 %v471, %v464
    %v703 = vpack.c.bf16 %v472, %v465
    %v704 = vpack.c.bf16 %v473, %v466
    %v705 = vpack.c.bf16 %v481, %v474
    %v706 = vpack.c.bf16 %v482, %v475
    %v707 = vpack.c.bf16 %v483, %v476
    %v708 = vpack.c.bf16 %v484, %v477
    %v709 = vpack.c.bf16 %v485, %v478
    %v710 = vpack.c.bf16 %v486, %v479
    %v711 = vpack.c.bf16 %v487, %v480
    %v712 = vld [vmem:[%s1] sm:$0xff]
    %v713 = vld [vmem:[%s1 + $0x8] sm:$0xff]
    %v714 = vld [vmem:[%s1 + $0x10] sm:$0xf]
    %v715 = vld [vmem:[%s1 + $0x14] sm:$0xff]
    %v716 = vld [vmem:[%s1 + $0x1c] sm:$0xff]
    %v717 = vld [vmem:[%s1 + $0x24] sm:$0xf]
    %v718 = vld [vmem:[%s1 + $0x28] sm:$0xff]
    %v719 = vld [vmem:[%s1 + $0x30] sm:$0xff]
    %v720 = vld [vmem:[%s1 + $0x38] sm:$0xf]
    %v721 = vld [vmem:[%s1 + $0x3c] sm:$0xff]
    %v722 = vld [vmem:[%s1 + $0x44] sm:$0xff]
    %v723 = vld [vmem:[%s1 + $0x4c] sm:$0xf]
    %v724 = vld [vmem:[%s1 + $0x50] sm:$0xff]
    %v725 = vld [vmem:[%s1 + $0x58] sm:$0xff]
    %v726 = vld [vmem:[%s1 + $0x60] sm:$0xf]
    %v727 = vld [vmem:[%s1 + $0x64] sm:$0xff]
    %v728 = vld [vmem:[%s1 + $0x6c] sm:$0xff]
    %v729 = vld [vmem:[%s1 + $0x74] sm:$0xf]
    %v730 = vld [vmem:[%s1 + $0x78] sm:$0xff]
    %v731 = vld [vmem:[%s1 + $0x80] sm:$0xff]
    %v732 = vld [vmem:[%s1 + $0x88] sm:$0xf]
    %v733 = vld [vmem:[%s1 + $0x8c] sm:$0xff]
    %v734 = vld [vmem:[%s1 + $0x94] sm:$0xff]
    %v735 = vld [vmem:[%s1 + $0x9c] sm:$0xf]
    %v736 = vld [vmem:[%s1 + $0xa0] sm:$0xff]
    %v737 = vld [vmem:[%s1 + $0xa8] sm:$0xff]
    %v738 = vld [vmem:[%s1 + $0xb0] sm:$0xf]
    %v739 = vld [vmem:[%s1 + $0xb4] sm:$0xff]
    %v740 = vld [vmem:[%s1 + $0xbc] sm:$0xff]
    %v741 = vld [vmem:[%s1 + $0xc4] sm:$0xf]
    %v742 = vld [vmem:[%s1 + $0xc8] sm:$0xff]
    %v743 = vld [vmem:[%s1 + $0xd0] sm:$0xff]
    %v744 = vld [vmem:[%s1 + $0xd8] sm:$0xf]
    %v745 = vld [vmem:[%s1 + $0xdc] sm:$0xff]
    %v746 = vld [vmem:[%s1 + $0xe4] sm:$0xff]
    %v747 = vld [vmem:[%s1 + $0xec] sm:$0xf]
    %v748 = vld [vmem:[%s1 + $0xf0] sm:$0xff]
    %v749 = vld [vmem:[%s1 + $0xf8] sm:$0xff]
    %v750 = vld [vmem:[%s1 + $0x100] sm:$0xf]
    %v751 = vld [vmem:[%s1 + $0x104] sm:$0xff]
    %v752 = vld [vmem:[%s1 + $0x10c] sm:$0xff]
    %v753 = vld [vmem:[%s1 + $0x114] sm:$0xf]
    %v754 = vld [vmem:[%s1 + $0x118] sm:$0xff]
    %v755 = vld [vmem:[%s1 + $0x120] sm:$0xff]
    %v756 = vld [vmem:[%s1 + $0x128] sm:$0xf]
    %v757 = vld [vmem:[%s1 + $0x12c] sm:$0xff]
    %v758 = vld [vmem:[%s1 + $0x134] sm:$0xff]
    %v759 = vld [vmem:[%s1 + $0x13c] sm:$0xf]
    %v760 = vld [vmem:[%s1 + $0x140] sm:$0xff]
    %v761 = vld [vmem:[%s1 + $0x148] sm:$0xff]
    %v762 = vld [vmem:[%s1 + $0x150] sm:$0xf]
    %v763 = vld [vmem:[%s1 + $0x154] sm:$0xff]
    %v764 = vld [vmem:[%s1 + $0x15c] sm:$0xff]
    %v765 = vld [vmem:[%s1 + $0x164] sm:$0xf]
    %v766 = vld [vmem:[%s1 + $0x168] sm:$0xff]
    %v767 = vld [vmem:[%s1 + $0x170] sm:$0xff]
    %v768 = vld [vmem:[%s1 + $0x178] sm:$0xf]
    %v769 = vld [vmem:[%s1 + $0x17c] sm:$0xff]
    %v770 = vld [vmem:[%s1 + $0x184] sm:$0xff]
    %v771 = vld [vmem:[%s1 + $0x18c] sm:$0xf]
    %v772 = vld [vmem:[%s1 + $0x190] sm:$0xff]
    %v773 = vld [vmem:[%s1 + $0x198] sm:$0xff]
    %v774 = vld [vmem:[%s1 + $0x1a0] sm:$0xf]
    %v775 = vld [vmem:[%s1 + $0x1a4] sm:$0xff]
    %v776 = vld [vmem:[%s1 + $0x1ac] sm:$0xff]
    %v777 = vld [vmem:[%s1 + $0x1b4] sm:$0xf]
    %v778 = vld [vmem:[%s1 + $0x1b8] sm:$0xff]
    %v779 = vld [vmem:[%s1 + $0x1c0] sm:$0xff]
    %v780 = vld [vmem:[%s1 + $0x1c8] sm:$0xf]
    %v781 = vld [vmem:[%s1 + $0x1cc] sm:$0xff]
    %v782 = vld [vmem:[%s1 + $0x1d4] sm:$0xff]
    %v783 = vld [vmem:[%s1 + $0x1dc] sm:$0xf]
    %v784 = vld [vmem:[%s1 + $0x1e0] sm:$0xff]
    %v785 = vld [vmem:[%s1 + $0x1e8] sm:$0xff]
    %v786 = vld [vmem:[%s1 + $0x1f0] sm:$0xf]
    %v787 = vld [vmem:[%s1 + $0x1f4] sm:$0xff]
    %v788 = vld [vmem:[%s1 + $0x1fc] sm:$0xff]
    %v789 = vld [vmem:[%s1 + $0x204] sm:$0xf]
    %v790 = vld [vmem:[%s1 + $0x208] sm:$0xff]
    %v791 = vld [vmem:[%s1 + $0x210] sm:$0xff]
    %v792 = vld [vmem:[%s1 + $0x218] sm:$0xf]
    %v793 = vld [vmem:[%s1 + $0x21c] sm:$0xff]
    %v794 = vld [vmem:[%s1 + $0x224] sm:$0xff]
    %v795 = vld [vmem:[%s1 + $0x22c] sm:$0xf]
    %v796 = vld [vmem:[%s1 + $0x230] sm:$0xff]
    %v797 = vld [vmem:[%s1 + $0x238] sm:$0xff]
    %v798 = vld [vmem:[%s1 + $0x240] sm:$0xf]
    %v799 = vld [vmem:[%s1 + $0x244] sm:$0xff]
    %v800 = vld [vmem:[%s1 + $0x24c] sm:$0xff]
    %v801 = vld [vmem:[%s1 + $0x254] sm:$0xf]
    %v802 = vld [vmem:[%s1 + $0x258] sm:$0xff]
    %v803 = vld [vmem:[%s1 + $0x260] sm:$0xff]
    %v804 = vld [vmem:[%s1 + $0x268] sm:$0xf]
    %v805 = vld [vmem:[%s1 + $0x26c] sm:$0xff]
    %v806 = vld [vmem:[%s1 + $0x274] sm:$0xff]
    %v807 = vld [vmem:[%s1 + $0x27c] sm:$0xf]
    %v808 = vld [vmem:[%s1 + $0x280] sm:$0xff]
    %v809 = vld [vmem:[%s1 + $0x288] sm:$0xff]
    %v810 = vld [vmem:[%s1 + $0x290] sm:$0xf]
    %v811 = vld [vmem:[%s1 + $0x294] sm:$0xff]
    %v812 = vld [vmem:[%s1 + $0x29c] sm:$0xff]
    %v813 = vld [vmem:[%s1 + $0x2a4] sm:$0xf]
    %v814 = vld [vmem:[%s1 + $0x2a8] sm:$0xff]
    %v815 = vld [vmem:[%s1 + $0x2b0] sm:$0xff]
    %v816 = vld [vmem:[%s1 + $0x2b8] sm:$0xf]
    %v817 = vld [vmem:[%s1 + $0x2bc] sm:$0xff]
    %v818 = vld [vmem:[%s1 + $0x2c4] sm:$0xff]
    %v819 = vld [vmem:[%s1 + $0x2cc] sm:$0xf]
    %v820 = vld [vmem:[%s1 + $0x2d0] sm:$0xff]
    %v821 = vld [vmem:[%s1 + $0x2d8] sm:$0xff]
    %v822 = vld [vmem:[%s1 + $0x2e0] sm:$0xf]
    %v823 = vld [vmem:[%s1 + $0x2e4] sm:$0xff]
    %v824 = vld [vmem:[%s1 + $0x2ec] sm:$0xff]
    %v825 = vld [vmem:[%s1 + $0x2f4] sm:$0xf]
    %v826 = vld [vmem:[%s1 + $0x2f8] sm:$0xff]
    %v827 = vld [vmem:[%s1 + $0x300] sm:$0xff]
    %v828 = vld [vmem:[%s1 + $0x308] sm:$0xf]
    %v829 = vld [vmem:[%s1 + $0x30c] sm:$0xff]
    %v830 = vld [vmem:[%s1 + $0x314] sm:$0xff]
    %v831 = vld [vmem:[%s1 + $0x31c] sm:$0xf]
    %v832 = vld [vmem:[%s1 + $0x320] sm:$0xff]
    %v833 = vld [vmem:[%s1 + $0x328] sm:$0xff]
    %v834 = vld [vmem:[%s1 + $0x330] sm:$0xf]
    %v835 = vld [vmem:[%s1 + $0x334] sm:$0xff]
    %v836 = vld [vmem:[%s1 + $0x33c] sm:$0xff]
    %v837 = vld [vmem:[%s1 + $0x344] sm:$0xf]
    %v838 = vld [vmem:[%s1 + $0x348] sm:$0xff]
    %v839 = vld [vmem:[%s1 + $0x350] sm:$0xff]
    %v840 = vld [vmem:[%s1 + $0x358] sm:$0xf]
    %v841 = vld [vmem:[%s1 + $0x35c] sm:$0xff]
    %v842 = vld [vmem:[%s1 + $0x364] sm:$0xff]
    %v843 = vld [vmem:[%s1 + $0x36c] sm:$0xf]
    %v844 = vld [vmem:[%s1 + $0x370] sm:$0xff]
    %v845 = vld [vmem:[%s1 + $0x378] sm:$0xff]
    %v846 = vld [vmem:[%s1 + $0x380] sm:$0xf]
    %v847 = vld [vmem:[%s1 + $0x384] sm:$0xff]
    %v848 = vld [vmem:[%s1 + $0x38c] sm:$0xff]
    %v849 = vld [vmem:[%s1 + $0x394] sm:$0xf]
    %v850 = vld [vmem:[%s1 + $0x398] sm:$0xff]
    %v851 = vld [vmem:[%s1 + $0x3a0] sm:$0xff]
    %v852 = vld [vmem:[%s1 + $0x3a8] sm:$0xf]
    %v853 = vld [vmem:[%s1 + $0x3ac] sm:$0xff]
    %v854 = vld [vmem:[%s1 + $0x3b4] sm:$0xff]
    %v855 = vld [vmem:[%s1 + $0x3bc] sm:$0xf]
    %v856 = vld [vmem:[%s1 + $0x3c0] sm:$0xff]
    %v857 = vld [vmem:[%s1 + $0x3c8] sm:$0xff]
    %v858 = vld [vmem:[%s1 + $0x3d0] sm:$0xf]
    %v859 = vld [vmem:[%s1 + $0x3d4] sm:$0xff]
    %v860 = vld [vmem:[%s1 + $0x3dc] sm:$0xff]
    %v861 = vld [vmem:[%s1 + $0x3e4] sm:$0xf]
    %v862 = vld [vmem:[%s1 + $0x3e8] sm:$0xff]
    %v863 = vld [vmem:[%s1 + $0x3f0] sm:$0xff]
    %v864 = vld [vmem:[%s1 + $0x3f8] sm:$0xf]
    %v865 = vld [vmem:[%s1 + $0x3fc] sm:$0xff]
    %v866 = vld [vmem:[%s1 + $0x404] sm:$0xff]
    %v867 = vld [vmem:[%s1 + $0x40c] sm:$0xf]
    %v868 = vld [vmem:[%s1 + $0x410] sm:$0xff]
    %v869 = vld [vmem:[%s1 + $0x418] sm:$0xff]
    %v870 = vld [vmem:[%s1 + $0x420] sm:$0xf]
    %v871 = vld [vmem:[%s1 + $0x424] sm:$0xff]
    %v872 = vld [vmem:[%s1 + $0x42c] sm:$0xff]
    %v873 = vld [vmem:[%s1 + $0x434] sm:$0xf]
    %v874 = vld [vmem:[%s1 + $0x438] sm:$0xff]
    %v875 = vld [vmem:[%s1 + $0x440] sm:$0xff]
    %v876 = vld [vmem:[%s1 + $0x448] sm:$0xf]
    %v877 = vld [vmem:[%s1 + $0x44c] sm:$0xff]
    %v878 = vld [vmem:[%s1 + $0x454] sm:$0xff]
    %v879 = vld [vmem:[%s1 + $0x45c] sm:$0xf]
    %v880 = vld [vmem:[%s1 + $0x460] sm:$0xff]
    %v881 = vld [vmem:[%s1 + $0x468] sm:$0xff]
    %v882 = vld [vmem:[%s1 + $0x470] sm:$0xf]
    %v883 = vld [vmem:[%s1 + $0x474] sm:$0xff]
    %v884 = vld [vmem:[%s1 + $0x47c] sm:$0xff]
    %v885 = vld [vmem:[%s1 + $0x484] sm:$0xf]
    %v886 = vld [vmem:[%s1 + $0x488] sm:$0xff]
    %v887 = vld [vmem:[%s1 + $0x490] sm:$0xff]
    %v888 = vld [vmem:[%s1 + $0x498] sm:$0xf]
    %v889 = vld [vmem:[%s1 + $0x49c] sm:$0xff]
    %v890 = vld [vmem:[%s1 + $0x4a4] sm:$0xff]
    %v891 = vld [vmem:[%s1 + $0x4ac] sm:$0xf]
    %v892 = vld [vmem:[%s1 + $0x4b0] sm:$0xff]
    %v893 = vld [vmem:[%s1 + $0x4b8] sm:$0xff]
    %v894 = vld [vmem:[%s1 + $0x4c0] sm:$0xf]
    %v895 = vld [vmem:[%s1 + $0x4c4] sm:$0xff]
    %v896 = vld [vmem:[%s1 + $0x4cc] sm:$0xff]
    %v897 = vld [vmem:[%s1 + $0x4d4] sm:$0xf]
    %v898 = vld [vmem:[%s1 + $0x4d8] sm:$0xff]
    %v899 = vld [vmem:[%s1 + $0x4e0] sm:$0xff]
    %v900 = vld [vmem:[%s1 + $0x4e8] sm:$0xf]
    %v901 = vld [vmem:[%s1 + $0x4ec] sm:$0xff]
    %v902 = vld [vmem:[%s1 + $0x4f4] sm:$0xff]
    %v903 = vld [vmem:[%s1 + $0x4fc] sm:$0xf]
    %v904 = vld [vmem:[%s1 + $0x500] sm:$0xff]
    %v905 = vld [vmem:[%s1 + $0x508] sm:$0xff]
    %v906 = vld [vmem:[%s1 + $0x510] sm:$0xf]
    %v907 = vld [vmem:[%s1 + $0x514] sm:$0xff]
    %v908 = vld [vmem:[%s1 + $0x51c] sm:$0xff]
    %v909 = vld [vmem:[%s1 + $0x524] sm:$0xf]
    %v910 = vld [vmem:[%s1 + $0x528] sm:$0xff]
    %v911 = vld [vmem:[%s1 + $0x530] sm:$0xff]
    %v912 = vld [vmem:[%s1 + $0x538] sm:$0xf]
    %v913 = vld [vmem:[%s1 + $0x53c] sm:$0xff]
    %v914 = vld [vmem:[%s1 + $0x544] sm:$0xff]
    %v915 = vld [vmem:[%s1 + $0x54c] sm:$0xf]
    %v916 = vld [vmem:[%s1 + $0x550] sm:$0xff]
    %v917 = vld [vmem:[%s1 + $0x558] sm:$0xff]
    %v918 = vld [vmem:[%s1 + $0x560] sm:$0xf]
    %v919 = vld [vmem:[%s1 + $0x564] sm:$0xff]
    %v920 = vld [vmem:[%s1 + $0x56c] sm:$0xff]
    %v921 = vld [vmem:[%s1 + $0x574] sm:$0xf]
    %v922 = vld [vmem:[%s1 + $0x578] sm:$0xff]
    %v923 = vld [vmem:[%s1 + $0x580] sm:$0xff]
    %v924 = vld [vmem:[%s1 + $0x588] sm:$0xf]
    %v925 = vld [vmem:[%s1 + $0x58c] sm:$0xff]
    %v926 = vld [vmem:[%s1 + $0x594] sm:$0xff]
    %v927 = vld [vmem:[%s1 + $0x59c] sm:$0xf]
    %v928 = vld [vmem:[%s1 + $0x5a0] sm:$0xff]
    %v929 = vld [vmem:[%s1 + $0x5a8] sm:$0xff]
    %v930 = vld [vmem:[%s1 + $0x5b0] sm:$0xf]
    %v931 = vld [vmem:[%s1 + $0x5b4] sm:$0xff]
    %v932 = vld [vmem:[%s1 + $0x5bc] sm:$0xff]
    %v933 = vld [vmem:[%s1 + $0x5c4] sm:$0xf]
    %v934 = vld [vmem:[%s1 + $0x5c8] sm:$0xff]
    %v935 = vld [vmem:[%s1 + $0x5d0] sm:$0xff]
    %v936 = vld [vmem:[%s1 + $0x5d8] sm:$0xf]
    %v937 = vld [vmem:[%s1 + $0x5dc] sm:$0xff]
    %v938 = vld [vmem:[%s1 + $0x5e4] sm:$0xff]
    %v939 = vld [vmem:[%s1 + $0x5ec] sm:$0xf]
    %v940 = vld [vmem:[%s1 + $0x5f0] sm:$0xff]
    %v941 = vld [vmem:[%s1 + $0x5f8] sm:$0xff]
    %v942 = vld [vmem:[%s1 + $0x600] sm:$0xf]
    %v943 = vld [vmem:[%s1 + $0x604] sm:$0xff]
    %v944 = vld [vmem:[%s1 + $0x60c] sm:$0xff]
    %v945 = vld [vmem:[%s1 + $0x614] sm:$0xf]
    %v946 = vld [vmem:[%s1 + $0x618] sm:$0xff]
    %v947 = vld [vmem:[%s1 + $0x620] sm:$0xff]
    %v948 = vld [vmem:[%s1 + $0x628] sm:$0xf]
    %v949 = vld [vmem:[%s1 + $0x62c] sm:$0xff]
    %v950 = vld [vmem:[%s1 + $0x634] sm:$0xff]
    %v951 = vld [vmem:[%s1 + $0x63c] sm:$0xf]
    %v952 = vld [vmem:[%s1 + $0x640] sm:$0xff]
    %v953 = vld [vmem:[%s1 + $0x648] sm:$0xff]
    %v954 = vld [vmem:[%s1 + $0x650] sm:$0xf]
    %v955 = vld [vmem:[%s1 + $0x654] sm:$0xff]
    %v956 = vld [vmem:[%s1 + $0x65c] sm:$0xff]
    %v957 = vld [vmem:[%s1 + $0x664] sm:$0xf]
    %v958 = vld [vmem:[%s1 + $0x668] sm:$0xff]
    %v959 = vld [vmem:[%s1 + $0x670] sm:$0xff]
    %v960 = vld [vmem:[%s1 + $0x678] sm:$0xf]
    %v961 = vld [vmem:[%s1 + $0x67c] sm:$0xff]
    %v962 = vld [vmem:[%s1 + $0x684] sm:$0xff]
    %v963 = vld [vmem:[%s1 + $0x68c] sm:$0xf]
    %v964 = vld [vmem:[%s1 + $0x690] sm:$0xff]
    %v965 = vld [vmem:[%s1 + $0x698] sm:$0xff]
    %v966 = vld [vmem:[%s1 + $0x6a0] sm:$0xf]
    %v967 = vld [vmem:[%s1 + $0x6a4] sm:$0xff]
    %v968 = vld [vmem:[%s1 + $0x6ac] sm:$0xff]
    %v969 = vld [vmem:[%s1 + $0x6b4] sm:$0xf]
    %v970 = vld [vmem:[%s1 + $0x6b8] sm:$0xff]
    %v971 = vld [vmem:[%s1 + $0x6c0] sm:$0xff]
    %v972 = vld [vmem:[%s1 + $0x6c8] sm:$0xf]
    %v973 = vld [vmem:[%s1 + $0x6cc] sm:$0xff]
    %v974 = vld [vmem:[%s1 + $0x6d4] sm:$0xff]
    %v975 = vld [vmem:[%s1 + $0x6dc] sm:$0xf]
    %v976 = vld [vmem:[%s1 + $0x6e0] sm:$0xff]
    %v977 = vld [vmem:[%s1 + $0x6e8] sm:$0xff]
    %v978 = vld [vmem:[%s1 + $0x6f0] sm:$0xf]
    %v979 = vld [vmem:[%s1 + $0x6f4] sm:$0xff]
    %v980 = vld [vmem:[%s1 + $0x6fc] sm:$0xff]
    %v981 = vld [vmem:[%s1 + $0x704] sm:$0xf]
    %v982 = vld [vmem:[%s1 + $0x708] sm:$0xff]
    %v983 = vld [vmem:[%s1 + $0x710] sm:$0xff]
    %v984 = vld [vmem:[%s1 + $0x718] sm:$0xf]
    %v985 = vld [vmem:[%s1 + $0x71c] sm:$0xff]
    %v986 = vld [vmem:[%s1 + $0x724] sm:$0xff]
    %v987 = vld [vmem:[%s1 + $0x72c] sm:$0xf]
    %v988 = vld [vmem:[%s1 + $0x730] sm:$0xff]
    %v989 = vld [vmem:[%s1 + $0x738] sm:$0xff]
    %v990 = vld [vmem:[%s1 + $0x740] sm:$0xf]
    %v991 = vld [vmem:[%s1 + $0x744] sm:$0xff]
    %v992 = vld [vmem:[%s1 + $0x74c] sm:$0xff]
    %v993 = vld [vmem:[%s1 + $0x754] sm:$0xf]
    %v994 = vld [vmem:[%s1 + $0x758] sm:$0xff]
    %v995 = vld [vmem:[%s1 + $0x760] sm:$0xff]
    %v996 = vld [vmem:[%s1 + $0x768] sm:$0xf]
    %v997 = vld [vmem:[%s1 + $0x76c] sm:$0xff]
    %v998 = vld [vmem:[%s1 + $0x774] sm:$0xff]
    %v999 = vld [vmem:[%s1 + $0x77c] sm:$0xf]
    %v1000 = vld [vmem:[%s1 + $0x780] sm:$0xff]
    %v1001 = vld [vmem:[%s1 + $0x788] sm:$0xff]
    %v1002 = vld [vmem:[%s1 + $0x790] sm:$0xf]
    %v1003 = vld [vmem:[%s1 + $0x794] sm:$0xff]
    %v1004 = vld [vmem:[%s1 + $0x79c] sm:$0xff]
    %v1005 = vld [vmem:[%s1 + $0x7a4] sm:$0xf]
    %v1006 = vld [vmem:[%s2] sm:$0x1f]
    %v1008 = vlaneseq
    %v1009 = vshrl.u32 %v1008, 7
    %v1010 = vsub.s32 0, %v1009
    %v1011 = vrot.slane %v1006, %v1010
    %v1012 = vlaneseq
    %v1013 = vshrl.u32 %v1012, 7
    %v1014 = vsub.s32 1, %v1013
    %v1015 = vrot.slane %v1006, %v1014
    %v1016 = vlaneseq
    %v1017 = vshrl.u32 %v1016, 7
    %v1018 = vsub.s32 2, %v1017
    %v1019 = vrot.slane %v1006, %v1018
    %v1020 = vlaneseq
    %v1021 = vshrl.u32 %v1020, 7
    %v1022 = vsub.s32 3, %v1021
    %v1023 = vrot.slane %v1006, %v1022
    %v1024 = vlaneseq
    %v1025 = vshrl.u32 %v1024, 7
    %v1026 = vsub.s32 4, %v1025
    %v1027 = vrot.slane %v1006, %v1026
    %v1327 = vunpack.c.l.b16 %v712
    %v1328 = vunpack.c.h.b16 %v712
    %v1329 = vunpack.c.l.b16 %v713
    %v1330 = vunpack.c.h.b16 %v713
    %v1331 = vunpack.c.l.b16 %v714
    %v1332 = vunpack.c.l.b16 %v715
    %v1333 = vunpack.c.h.b16 %v715
    %v1334 = vunpack.c.l.b16 %v716
    %v1335 = vunpack.c.h.b16 %v716
    %v1336 = vunpack.c.l.b16 %v717
    %v1337 = vunpack.c.l.b16 %v718
    %v1338 = vunpack.c.h.b16 %v718
    %v1339 = vunpack.c.l.b16 %v719
    %v1340 = vunpack.c.h.b16 %v719
    %v1341 = vunpack.c.l.b16 %v720
    %v1342 = vunpack.c.l.b16 %v721
    %v1343 = vunpack.c.h.b16 %v721
    %v1344 = vunpack.c.l.b16 %v722
    %v1345 = vunpack.c.h.b16 %v722
    %v1346 = vunpack.c.l.b16 %v723
    %v1347 = vunpack.c.l.b16 %v724
    %v1348 = vunpack.c.h.b16 %v724
    %v1349 = vunpack.c.l.b16 %v725
    %v1350 = vunpack.c.h.b16 %v725
    %v1351 = vunpack.c.l.b16 %v726
    %v1352 = vunpack.c.l.b16 %v727
    %v1353 = vunpack.c.h.b16 %v727
    %v1354 = vunpack.c.l.b16 %v728
    %v1355 = vunpack.c.h.b16 %v728
    %v1356 = vunpack.c.l.b16 %v729
    %v1357 = vunpack.c.l.b16 %v730
    %v1358 = vunpack.c.h.b16 %v730
    %v1359 = vunpack.c.l.b16 %v731
    %v1360 = vunpack.c.h.b16 %v731
    %v1361 = vunpack.c.l.b16 %v732
    %v1362 = vunpack.c.l.b16 %v733
    %v1363 = vunpack.c.h.b16 %v733
    %v1364 = vunpack.c.l.b16 %v734
    %v1365 = vunpack.c.h.b16 %v734
    %v1366 = vunpack.c.l.b16 %v735
    %v1367 = vunpack.c.l.b16 %v736
    %v1368 = vunpack.c.h.b16 %v736
    %v1369 = vunpack.c.l.b16 %v737
    %v1370 = vunpack.c.h.b16 %v737
    %v1371 = vunpack.c.l.b16 %v738
    %v1372 = vunpack.c.l.b16 %v739
    %v1373 = vunpack.c.h.b16 %v739
    %v1374 = vunpack.c.l.b16 %v740
    %v1375 = vunpack.c.h.b16 %v740
    %v1376 = vunpack.c.l.b16 %v741
    %v1377 = vunpack.c.l.b16 %v742
    %v1378 = vunpack.c.h.b16 %v742
    %v1379 = vunpack.c.l.b16 %v743
    %v1380 = vunpack.c.h.b16 %v743
    %v1381 = vunpack.c.l.b16 %v744
    %v1382 = vunpack.c.l.b16 %v745
    %v1383 = vunpack.c.h.b16 %v745
    %v1384 = vunpack.c.l.b16 %v746
    %v1385 = vunpack.c.h.b16 %v746
    %v1386 = vunpack.c.l.b16 %v747
    %v1387 = vunpack.c.l.b16 %v748
    %v1388 = vunpack.c.h.b16 %v748
    %v1389 = vunpack.c.l.b16 %v749
    %v1390 = vunpack.c.h.b16 %v749
    %v1391 = vunpack.c.l.b16 %v750
    %v1392 = vunpack.c.l.b16 %v751
    %v1393 = vunpack.c.h.b16 %v751
    %v1394 = vunpack.c.l.b16 %v752
    %v1395 = vunpack.c.h.b16 %v752
    %v1396 = vunpack.c.l.b16 %v753
    %v1397 = vunpack.c.l.b16 %v754
    %v1398 = vunpack.c.h.b16 %v754
    %v1399 = vunpack.c.l.b16 %v755
    %v1400 = vunpack.c.h.b16 %v755
    %v1401 = vunpack.c.l.b16 %v756
    %v1402 = vunpack.c.l.b16 %v757
    %v1403 = vunpack.c.h.b16 %v757
    %v1404 = vunpack.c.l.b16 %v758
    %v1405 = vunpack.c.h.b16 %v758
    %v1406 = vunpack.c.l.b16 %v759
    %v1407 = vunpack.c.l.b16 %v760
    %v1408 = vunpack.c.h.b16 %v760
    %v1409 = vunpack.c.l.b16 %v761
    %v1410 = vunpack.c.h.b16 %v761
    %v1411 = vunpack.c.l.b16 %v762
    %v1412 = vunpack.c.l.b16 %v763
    %v1413 = vunpack.c.h.b16 %v763
    %v1414 = vunpack.c.l.b16 %v764
    %v1415 = vunpack.c.h.b16 %v764
    %v1416 = vunpack.c.l.b16 %v765
    %v1417 = vunpack.c.l.b16 %v766
    %v1418 = vunpack.c.h.b16 %v766
    %v1419 = vunpack.c.l.b16 %v767
    %v1420 = vunpack.c.h.b16 %v767
    %v1421 = vunpack.c.l.b16 %v768
    %v1422 = vunpack.c.l.b16 %v769
    %v1423 = vunpack.c.h.b16 %v769
    %v1424 = vunpack.c.l.b16 %v770
    %v1425 = vunpack.c.h.b16 %v770
    %v1426 = vunpack.c.l.b16 %v771
    %v1427 = vunpack.c.l.b16 %v772
    %v1428 = vunpack.c.h.b16 %v772
    %v1429 = vunpack.c.l.b16 %v773
    %v1430 = vunpack.c.h.b16 %v773
    %v1431 = vunpack.c.l.b16 %v774
    %v1432 = vunpack.c.l.b16 %v775
    %v1433 = vunpack.c.h.b16 %v775
    %v1434 = vunpack.c.l.b16 %v776
    %v1435 = vunpack.c.h.b16 %v776
    %v1436 = vunpack.c.l.b16 %v777
    %v1437 = vunpack.c.l.b16 %v778
    %v1438 = vunpack.c.h.b16 %v778
    %v1439 = vunpack.c.l.b16 %v779
    %v1440 = vunpack.c.h.b16 %v779
    %v1441 = vunpack.c.l.b16 %v780
    %v1442 = vunpack.c.l.b16 %v781
    %v1443 = vunpack.c.h.b16 %v781
    %v1444 = vunpack.c.l.b16 %v782
    %v1445 = vunpack.c.h.b16 %v782
    %v1446 = vunpack.c.l.b16 %v783
    %v1447 = vunpack.c.l.b16 %v784
    %v1448 = vunpack.c.h.b16 %v784
    %v1449 = vunpack.c.l.b16 %v785
    %v1450 = vunpack.c.h.b16 %v785
    %v1451 = vunpack.c.l.b16 %v786
    %v1452 = vunpack.c.l.b16 %v787
    %v1453 = vunpack.c.h.b16 %v787
    %v1454 = vunpack.c.l.b16 %v788
    %v1455 = vunpack.c.h.b16 %v788
    %v1456 = vunpack.c.l.b16 %v789
    %v1457 = vunpack.c.l.b16 %v790
    %v1458 = vunpack.c.h.b16 %v790
    %v1459 = vunpack.c.l.b16 %v791
    %v1460 = vunpack.c.h.b16 %v791
    %v1461 = vunpack.c.l.b16 %v792
    %v1462 = vunpack.c.l.b16 %v793
    %v1463 = vunpack.c.h.b16 %v793
    %v1464 = vunpack.c.l.b16 %v794
    %v1465 = vunpack.c.h.b16 %v794
    %v1466 = vunpack.c.l.b16 %v795
    %v1467 = vunpack.c.l.b16 %v796
    %v1468 = vunpack.c.h.b16 %v796
    %v1469 = vunpack.c.l.b16 %v797
    %v1470 = vunpack.c.h.b16 %v797
    %v1471 = vunpack.c.l.b16 %v798
    %v1472 = vunpack.c.l.b16 %v799
    %v1473 = vunpack.c.h.b16 %v799
    %v1474 = vunpack.c.l.b16 %v800
    %v1475 = vunpack.c.h.b16 %v800
    %v1476 = vunpack.c.l.b16 %v801
    %v1477 = vunpack.c.l.b16 %v802
    %v1478 = vunpack.c.h.b16 %v802
    %v1479 = vunpack.c.l.b16 %v803
    %v1480 = vunpack.c.h.b16 %v803
    %v1481 = vunpack.c.l.b16 %v804
    %v1482 = vunpack.c.l.b16 %v805
    %v1483 = vunpack.c.h.b16 %v805
    %v1484 = vunpack.c.l.b16 %v806
    %v1485 = vunpack.c.h.b16 %v806
    %v1486 = vunpack.c.l.b16 %v807
    %v1487 = vunpack.c.l.b16 %v808
    %v1488 = vunpack.c.h.b16 %v808
    %v1489 = vunpack.c.l.b16 %v809
    %v1490 = vunpack.c.h.b16 %v809
    %v1491 = vunpack.c.l.b16 %v810
    %v1492 = vunpack.c.l.b16 %v811
    %v1493 = vunpack.c.h.b16 %v811
    %v1494 = vunpack.c.l.b16 %v812
    %v1495 = vunpack.c.h.b16 %v812
    %v1496 = vunpack.c.l.b16 %v813
    %v1497 = vunpack.c.l.b16 %v814
    %v1498 = vunpack.c.h.b16 %v814
    %v1499 = vunpack.c.l.b16 %v815
    %v1500 = vunpack.c.h.b16 %v815
    %v1501 = vunpack.c.l.b16 %v816
    %v1502 = vunpack.c.l.b16 %v817
    %v1503 = vunpack.c.h.b16 %v817
    %v1504 = vunpack.c.l.b16 %v818
    %v1505 = vunpack.c.h.b16 %v818
    %v1506 = vunpack.c.l.b16 %v819
    %v1507 = vunpack.c.l.b16 %v820
    %v1508 = vunpack.c.h.b16 %v820
    %v1509 = vunpack.c.l.b16 %v821
    %v1510 = vunpack.c.h.b16 %v821
    %v1511 = vunpack.c.l.b16 %v822
    %v1512 = vunpack.c.l.b16 %v823
    %v1513 = vunpack.c.h.b16 %v823
    %v1514 = vunpack.c.l.b16 %v824
    %v1515 = vunpack.c.h.b16 %v824
    %v1516 = vunpack.c.l.b16 %v825
    %v1517 = vunpack.c.l.b16 %v826
    %v1518 = vunpack.c.h.b16 %v826
    %v1519 = vunpack.c.l.b16 %v827
    %v1520 = vunpack.c.h.b16 %v827
    %v1521 = vunpack.c.l.b16 %v828
    %v1522 = vunpack.c.l.b16 %v829
    %v1523 = vunpack.c.h.b16 %v829
    %v1524 = vunpack.c.l.b16 %v830
    %v1525 = vunpack.c.h.b16 %v830
    %v1526 = vunpack.c.l.b16 %v831
    %v1527 = vunpack.c.l.b16 %v832
    %v1528 = vunpack.c.h.b16 %v832
    %v1529 = vunpack.c.l.b16 %v833
    %v1530 = vunpack.c.h.b16 %v833
    %v1531 = vunpack.c.l.b16 %v834
    %v1532 = vunpack.c.l.b16 %v835
    %v1533 = vunpack.c.h.b16 %v835
    %v1534 = vunpack.c.l.b16 %v836
    %v1535 = vunpack.c.h.b16 %v836
    %v1536 = vunpack.c.l.b16 %v837
    %v1537 = vunpack.c.l.b16 %v838
    %v1538 = vunpack.c.h.b16 %v838
    %v1539 = vunpack.c.l.b16 %v839
    %v1540 = vunpack.c.h.b16 %v839
    %v1541 = vunpack.c.l.b16 %v840
    %v1542 = vunpack.c.l.b16 %v841
    %v1543 = vunpack.c.h.b16 %v841
    %v1544 = vunpack.c.l.b16 %v842
    %v1545 = vunpack.c.h.b16 %v842
    %v1546 = vunpack.c.l.b16 %v843
    %v1547 = vunpack.c.l.b16 %v844
    %v1548 = vunpack.c.h.b16 %v844
    %v1549 = vunpack.c.l.b16 %v845
    %v1550 = vunpack.c.h.b16 %v845
    %v1551 = vunpack.c.l.b16 %v846
    %v1552 = vunpack.c.l.b16 %v847
    %v1553 = vunpack.c.h.b16 %v847
    %v1554 = vunpack.c.l.b16 %v848
    %v1555 = vunpack.c.h.b16 %v848
    %v1556 = vunpack.c.l.b16 %v849
    %v1557 = vunpack.c.l.b16 %v850
    %v1558 = vunpack.c.h.b16 %v850
    %v1559 = vunpack.c.l.b16 %v851
    %v1560 = vunpack.c.h.b16 %v851
    %v1561 = vunpack.c.l.b16 %v852
    %v1562 = vunpack.c.l.b16 %v853
    %v1563 = vunpack.c.h.b16 %v853
    %v1564 = vunpack.c.l.b16 %v854
    %v1565 = vunpack.c.h.b16 %v854
    %v1566 = vunpack.c.l.b16 %v855
    %v1567 = vunpack.c.l.b16 %v856
    %v1568 = vunpack.c.h.b16 %v856
    %v1569 = vunpack.c.l.b16 %v857
    %v1570 = vunpack.c.h.b16 %v857
    %v1571 = vunpack.c.l.b16 %v858
    %v1572 = vunpack.c.l.b16 %v859
    %v1573 = vunpack.c.h.b16 %v859
    %v1574 = vunpack.c.l.b16 %v860
    %v1575 = vunpack.c.h.b16 %v860
    %v1576 = vunpack.c.l.b16 %v861
    %v1577 = vunpack.c.l.b16 %v862
    %v1578 = vunpack.c.h.b16 %v862
    %v1579 = vunpack.c.l.b16 %v863
    %v1580 = vunpack.c.h.b16 %v863
    %v1581 = vunpack.c.l.b16 %v864
    %v1582 = vunpack.c.l.b16 %v865
    %v1583 = vunpack.c.h.b16 %v865
    %v1584 = vunpack.c.l.b16 %v866
    %v1585 = vunpack.c.h.b16 %v866
    %v1586 = vunpack.c.l.b16 %v867
    %v1587 = vunpack.c.l.b16 %v868
    %v1588 = vunpack.c.h.b16 %v868
    %v1589 = vunpack.c.l.b16 %v869
    %v1590 = vunpack.c.h.b16 %v869
    %v1591 = vunpack.c.l.b16 %v870
    %v1592 = vunpack.c.l.b16 %v871
    %v1593 = vunpack.c.h.b16 %v871
    %v1594 = vunpack.c.l.b16 %v872
    %v1595 = vunpack.c.h.b16 %v872
    %v1596 = vunpack.c.l.b16 %v873
    %v1597 = vunpack.c.l.b16 %v874
    %v1598 = vunpack.c.h.b16 %v874
    %v1599 = vunpack.c.l.b16 %v875
    %v1600 = vunpack.c.h.b16 %v875
    %v1601 = vunpack.c.l.b16 %v876
    %v1602 = vunpack.c.l.b16 %v877
    %v1603 = vunpack.c.h.b16 %v877
    %v1604 = vunpack.c.l.b16 %v878
    %v1605 = vunpack.c.h.b16 %v878
    %v1606 = vunpack.c.l.b16 %v879
    %v1607 = vunpack.c.l.b16 %v880
    %v1608 = vunpack.c.h.b16 %v880
    %v1609 = vunpack.c.l.b16 %v881
    %v1610 = vunpack.c.h.b16 %v881
    %v1611 = vunpack.c.l.b16 %v882
    %v1612 = vunpack.c.l.b16 %v883
    %v1613 = vunpack.c.h.b16 %v883
    %v1614 = vunpack.c.l.b16 %v884
    %v1615 = vunpack.c.h.b16 %v884
    %v1616 = vunpack.c.l.b16 %v885
    %v1617 = vunpack.c.l.b16 %v886
    %v1618 = vunpack.c.h.b16 %v886
    %v1619 = vunpack.c.l.b16 %v887
    %v1620 = vunpack.c.h.b16 %v887
    %v1621 = vunpack.c.l.b16 %v888
    %v1622 = vunpack.c.l.b16 %v889
    %v1623 = vunpack.c.h.b16 %v889
    %v1624 = vunpack.c.l.b16 %v890
    %v1625 = vunpack.c.h.b16 %v890
    %v1626 = vunpack.c.l.b16 %v891
    %v1627 = vunpack.c.l.b16 %v892
    %v1628 = vunpack.c.h.b16 %v892
    %v1629 = vunpack.c.l.b16 %v893
    %v1630 = vunpack.c.h.b16 %v893
    %v1631 = vunpack.c.l.b16 %v894
    %v1632 = vunpack.c.l.b16 %v895
    %v1633 = vunpack.c.h.b16 %v895
    %v1634 = vunpack.c.l.b16 %v896
    %v1635 = vunpack.c.h.b16 %v896
    %v1636 = vunpack.c.l.b16 %v897
    %v1637 = vunpack.c.l.b16 %v898
    %v1638 = vunpack.c.h.b16 %v898
    %v1639 = vunpack.c.l.b16 %v899
    %v1640 = vunpack.c.h.b16 %v899
    %v1641 = vunpack.c.l.b16 %v900
    %v1642 = vunpack.c.l.b16 %v901
    %v1643 = vunpack.c.h.b16 %v901
    %v1644 = vunpack.c.l.b16 %v902
    %v1645 = vunpack.c.h.b16 %v902
    %v1646 = vunpack.c.l.b16 %v903
    %v1647 = vunpack.c.l.b16 %v904
    %v1648 = vunpack.c.h.b16 %v904
    %v1649 = vunpack.c.l.b16 %v905
    %v1650 = vunpack.c.h.b16 %v905
    %v1651 = vunpack.c.l.b16 %v906
    %v1652 = vunpack.c.l.b16 %v907
    %v1653 = vunpack.c.h.b16 %v907
    %v1654 = vunpack.c.l.b16 %v908
    %v1655 = vunpack.c.h.b16 %v908
    %v1656 = vunpack.c.l.b16 %v909
    %v1657 = vunpack.c.l.b16 %v910
    %v1658 = vunpack.c.h.b16 %v910
    %v1659 = vunpack.c.l.b16 %v911
    %v1660 = vunpack.c.h.b16 %v911
    %v1661 = vunpack.c.l.b16 %v912
    %v1662 = vunpack.c.l.b16 %v913
    %v1663 = vunpack.c.h.b16 %v913
    %v1664 = vunpack.c.l.b16 %v914
    %v1665 = vunpack.c.h.b16 %v914
    %v1666 = vunpack.c.l.b16 %v915
    %v1667 = vunpack.c.l.b16 %v916
    %v1668 = vunpack.c.h.b16 %v916
    %v1669 = vunpack.c.l.b16 %v917
    %v1670 = vunpack.c.h.b16 %v917
    %v1671 = vunpack.c.l.b16 %v918
    %v1672 = vunpack.c.l.b16 %v919
    %v1673 = vunpack.c.h.b16 %v919
    %v1674 = vunpack.c.l.b16 %v920
    %v1675 = vunpack.c.h.b16 %v920
    %v1676 = vunpack.c.l.b16 %v921
    %v1677 = vunpack.c.l.b16 %v922
    %v1678 = vunpack.c.h.b16 %v922
    %v1679 = vunpack.c.l.b16 %v923
    %v1680 = vunpack.c.h.b16 %v923
    %v1681 = vunpack.c.l.b16 %v924
    %v1682 = vunpack.c.l.b16 %v925
    %v1683 = vunpack.c.h.b16 %v925
    %v1684 = vunpack.c.l.b16 %v926
    %v1685 = vunpack.c.h.b16 %v926
    %v1686 = vunpack.c.l.b16 %v927
    %v1687 = vunpack.c.l.b16 %v928
    %v1688 = vunpack.c.h.b16 %v928
    %v1689 = vunpack.c.l.b16 %v929
    %v1690 = vunpack.c.h.b16 %v929
    %v1691 = vunpack.c.l.b16 %v930
    %v1692 = vunpack.c.l.b16 %v931
    %v1693 = vunpack.c.h.b16 %v931
    %v1694 = vunpack.c.l.b16 %v932
    %v1695 = vunpack.c.h.b16 %v932
    %v1696 = vunpack.c.l.b16 %v933
    %v1697 = vunpack.c.l.b16 %v934
    %v1698 = vunpack.c.h.b16 %v934
    %v1699 = vunpack.c.l.b16 %v935
    %v1700 = vunpack.c.h.b16 %v935
    %v1701 = vunpack.c.l.b16 %v936
    %v1702 = vunpack.c.l.b16 %v937
    %v1703 = vunpack.c.h.b16 %v937
    %v1704 = vunpack.c.l.b16 %v938
    %v1705 = vunpack.c.h.b16 %v938
    %v1706 = vunpack.c.l.b16 %v939
    %v1707 = vunpack.c.l.b16 %v940
    %v1708 = vunpack.c.h.b16 %v940
    %v1709 = vunpack.c.l.b16 %v941
    %v1710 = vunpack.c.h.b16 %v941
    %v1711 = vunpack.c.l.b16 %v942
    %v1712 = vunpack.c.l.b16 %v943
    %v1713 = vunpack.c.h.b16 %v943
    %v1714 = vunpack.c.l.b16 %v944
    %v1715 = vunpack.c.h.b16 %v944
    %v1716 = vunpack.c.l.b16 %v945
    %v1717 = vunpack.c.l.b16 %v946
    %v1718 = vunpack.c.h.b16 %v946
    %v1719 = vunpack.c.l.b16 %v947
    %v1720 = vunpack.c.h.b16 %v947
    %v1721 = vunpack.c.l.b16 %v948
    %v1722 = vunpack.c.l.b16 %v949
    %v1723 = vunpack.c.h.b16 %v949
    %v1724 = vunpack.c.l.b16 %v950
    %v1725 = vunpack.c.h.b16 %v950
    %v1726 = vunpack.c.l.b16 %v951
    %v1727 = vunpack.c.l.b16 %v952
    %v1728 = vunpack.c.h.b16 %v952
    %v1729 = vunpack.c.l.b16 %v953
    %v1730 = vunpack.c.h.b16 %v953
    %v1731 = vunpack.c.l.b16 %v954
    %v1732 = vunpack.c.l.b16 %v955
    %v1733 = vunpack.c.h.b16 %v955
    %v1734 = vunpack.c.l.b16 %v956
    %v1735 = vunpack.c.h.b16 %v956
    %v1736 = vunpack.c.l.b16 %v957
    %v1737 = vunpack.c.l.b16 %v958
    %v1738 = vunpack.c.h.b16 %v958
    %v1739 = vunpack.c.l.b16 %v959
    %v1740 = vunpack.c.h.b16 %v959
    %v1741 = vunpack.c.l.b16 %v960
    %v1742 = vunpack.c.l.b16 %v961
    %v1743 = vunpack.c.h.b16 %v961
    %v1744 = vunpack.c.l.b16 %v962
    %v1745 = vunpack.c.h.b16 %v962
    %v1746 = vunpack.c.l.b16 %v963
    %v1747 = vunpack.c.l.b16 %v964
    %v1748 = vunpack.c.h.b16 %v964
    %v1749 = vunpack.c.l.b16 %v965
    %v1750 = vunpack.c.h.b16 %v965
    %v1751 = vunpack.c.l.b16 %v966
    %v1752 = vunpack.c.l.b16 %v967
    %v1753 = vunpack.c.h.b16 %v967
    %v1754 = vunpack.c.l.b16 %v968
    %v1755 = vunpack.c.h.b16 %v968
    %v1756 = vunpack.c.l.b16 %v969
    %v1757 = vunpack.c.l.b16 %v970
    %v1758 = vunpack.c.h.b16 %v970
    %v1759 = vunpack.c.l.b16 %v971
    %v1760 = vunpack.c.h.b16 %v971
    %v1761 = vunpack.c.l.b16 %v972
    %v1762 = vunpack.c.l.b16 %v973
    %v1763 = vunpack.c.h.b16 %v973
    %v1764 = vunpack.c.l.b16 %v974
    %v1765 = vunpack.c.h.b16 %v974
    %v1766 = vunpack.c.l.b16 %v975
    %v1767 = vunpack.c.l.b16 %v976
    %v1768 = vunpack.c.h.b16 %v976
    %v1769 = vunpack.c.l.b16 %v977
    %v1770 = vunpack.c.h.b16 %v977
    %v1771 = vunpack.c.l.b16 %v978
    %v1772 = vunpack.c.l.b16 %v979
    %v1773 = vunpack.c.h.b16 %v979
    %v1774 = vunpack.c.l.b16 %v980
    %v1775 = vunpack.c.h.b16 %v980
    %v1776 = vunpack.c.l.b16 %v981
    %v1777 = vunpack.c.l.b16 %v982
    %v1778 = vunpack.c.h.b16 %v982
    %v1779 = vunpack.c.l.b16 %v983
    %v1780 = vunpack.c.h.b16 %v983
    %v1781 = vunpack.c.l.b16 %v984
    %v1782 = vunpack.c.l.b16 %v985
    %v1783 = vunpack.c.h.b16 %v985
    %v1784 = vunpack.c.l.b16 %v986
    %v1785 = vunpack.c.h.b16 %v986
    %v1786 = vunpack.c.l.b16 %v987
    %v1787 = vunpack.c.l.b16 %v988
    %v1788 = vunpack.c.h.b16 %v988
    %v1789 = vunpack.c.l.b16 %v989
    %v1790 = vunpack.c.h.b16 %v989
    %v1791 = vunpack.c.l.b16 %v990
    %v1792 = vunpack.c.l.b16 %v991
    %v1793 = vunpack.c.h.b16 %v991
    %v1794 = vunpack.c.l.b16 %v992
    %v1795 = vunpack.c.h.b16 %v992
    %v1796 = vunpack.c.l.b16 %v993
    %v1797 = vunpack.c.l.b16 %v994
    %v1798 = vunpack.c.h.b16 %v994
    %v1799 = vunpack.c.l.b16 %v995
    %v1800 = vunpack.c.h.b16 %v995
    %v1801 = vunpack.c.l.b16 %v996
    %v1802 = vunpack.c.l.b16 %v997
    %v1803 = vunpack.c.h.b16 %v997
    %v1804 = vunpack.c.l.b16 %v998
    %v1805 = vunpack.c.h.b16 %v998
    %v1806 = vunpack.c.l.b16 %v999
    %v1807 = vunpack.c.l.b16 %v1000
    %v1808 = vunpack.c.h.b16 %v1000
    %v1809 = vunpack.c.l.b16 %v1001
    %v1810 = vunpack.c.h.b16 %v1001
    %v1811 = vunpack.c.l.b16 %v1002
    %v1812 = vunpack.c.l.b16 %v1003
    %v1813 = vunpack.c.h.b16 %v1003
    %v1814 = vunpack.c.l.b16 %v1004
    %v1815 = vunpack.c.h.b16 %v1004
    %v1816 = vunpack.c.l.b16 %v1005
    %v1817 = vpack.c.b16 %v1332, %v1327
    %v1818 = vpack.c.b16 %v1333, %v1328
    %v1819 = vpack.c.b16 %v1334, %v1329
    %v1820 = vpack.c.b16 %v1335, %v1330
    %v1821 = vpack.c.b16 %v1336, %v1331
    %v1822 = vpack.c.b16 %v1342, %v1337
    %v1823 = vpack.c.b16 %v1343, %v1338
    %v1824 = vpack.c.b16 %v1344, %v1339
    %v1825 = vpack.c.b16 %v1345, %v1340
    %v1826 = vpack.c.b16 %v1346, %v1341
    %v1827 = vpack.c.b16 %v1352, %v1347
    %v1828 = vpack.c.b16 %v1353, %v1348
    %v1829 = vpack.c.b16 %v1354, %v1349
    %v1830 = vpack.c.b16 %v1355, %v1350
    %v1831 = vpack.c.b16 %v1356, %v1351
    %v1832 = vpack.c.b16 %v1362, %v1357
    %v1833 = vpack.c.b16 %v1363, %v1358
    %v1834 = vpack.c.b16 %v1364, %v1359
    %v1835 = vpack.c.b16 %v1365, %v1360
    %v1836 = vpack.c.b16 %v1366, %v1361
    %v1837 = vpack.c.b16 %v1372, %v1367
    %v1838 = vpack.c.b16 %v1373, %v1368
    %v1839 = vpack.c.b16 %v1374, %v1369
    %v1840 = vpack.c.b16 %v1375, %v1370
    %v1841 = vpack.c.b16 %v1376, %v1371
    %v1842 = vpack.c.b16 %v1382, %v1377
    %v1843 = vpack.c.b16 %v1383, %v1378
    %v1844 = vpack.c.b16 %v1384, %v1379
    %v1845 = vpack.c.b16 %v1385, %v1380
    %v1846 = vpack.c.b16 %v1386, %v1381
    %v1847 = vpack.c.b16 %v1392, %v1387
    %v1848 = vpack.c.b16 %v1393, %v1388
    %v1849 = vpack.c.b16 %v1394, %v1389
    %v1850 = vpack.c.b16 %v1395, %v1390
    %v1851 = vpack.c.b16 %v1396, %v1391
    %v1852 = vpack.c.b16 %v1402, %v1397
    %v1853 = vpack.c.b16 %v1403, %v1398
    %v1854 = vpack.c.b16 %v1404, %v1399
    %v1855 = vpack.c.b16 %v1405, %v1400
    %v1856 = vpack.c.b16 %v1406, %v1401
    %v1857 = vpack.c.b16 %v1412, %v1407
    %v1858 = vpack.c.b16 %v1413, %v1408
    %v1859 = vpack.c.b16 %v1414, %v1409
    %v1860 = vpack.c.b16 %v1415, %v1410
    %v1861 = vpack.c.b16 %v1416, %v1411
    %v1862 = vpack.c.b16 %v1422, %v1417
    %v1863 = vpack.c.b16 %v1423, %v1418
    %v1864 = vpack.c.b16 %v1424, %v1419
    %v1865 = vpack.c.b16 %v1425, %v1420
    %v1866 = vpack.c.b16 %v1426, %v1421
    %v1867 = vpack.c.b16 %v1432, %v1427
    %v1868 = vpack.c.b16 %v1433, %v1428
    %v1869 = vpack.c.b16 %v1434, %v1429
    %v1870 = vpack.c.b16 %v1435, %v1430
    %v1871 = vpack.c.b16 %v1436, %v1431
    %v1872 = vpack.c.b16 %v1442, %v1437
    %v1873 = vpack.c.b16 %v1443, %v1438
    %v1874 = vpack.c.b16 %v1444, %v1439
    %v1875 = vpack.c.b16 %v1445, %v1440
    %v1876 = vpack.c.b16 %v1446, %v1441
    %v1877 = vpack.c.b16 %v1452, %v1447
    %v1878 = vpack.c.b16 %v1453, %v1448
    %v1879 = vpack.c.b16 %v1454, %v1449
    %v1880 = vpack.c.b16 %v1455, %v1450
    %v1881 = vpack.c.b16 %v1456, %v1451
    %v1882 = vpack.c.b16 %v1462, %v1457
    %v1883 = vpack.c.b16 %v1463, %v1458
    %v1884 = vpack.c.b16 %v1464, %v1459
    %v1885 = vpack.c.b16 %v1465, %v1460
    %v1886 = vpack.c.b16 %v1466, %v1461
    %v1887 = vpack.c.b16 %v1472, %v1467
    %v1888 = vpack.c.b16 %v1473, %v1468
    %v1889 = vpack.c.b16 %v1474, %v1469
    %v1890 = vpack.c.b16 %v1475, %v1470
    %v1891 = vpack.c.b16 %v1476, %v1471
    %v1892 = vpack.c.b16 %v1482, %v1477
    %v1893 = vpack.c.b16 %v1483, %v1478
    %v1894 = vpack.c.b16 %v1484, %v1479
    %v1895 = vpack.c.b16 %v1485, %v1480
    %v1896 = vpack.c.b16 %v1486, %v1481
    %v1897 = vpack.c.b16 %v1492, %v1487
    %v1898 = vpack.c.b16 %v1493, %v1488
    %v1899 = vpack.c.b16 %v1494, %v1489
    %v1900 = vpack.c.b16 %v1495, %v1490
    %v1901 = vpack.c.b16 %v1496, %v1491
    %v1902 = vpack.c.b16 %v1502, %v1497
    %v1903 = vpack.c.b16 %v1503, %v1498
    %v1904 = vpack.c.b16 %v1504, %v1499
    %v1905 = vpack.c.b16 %v1505, %v1500
    %v1906 = vpack.c.b16 %v1506, %v1501
    %v1907 = vpack.c.b16 %v1512, %v1507
    %v1908 = vpack.c.b16 %v1513, %v1508
    %v1909 = vpack.c.b16 %v1514, %v1509
    %v1910 = vpack.c.b16 %v1515, %v1510
    %v1911 = vpack.c.b16 %v1516, %v1511
    %v1912 = vpack.c.b16 %v1522, %v1517
    %v1913 = vpack.c.b16 %v1523, %v1518
    %v1914 = vpack.c.b16 %v1524, %v1519
    %v1915 = vpack.c.b16 %v1525, %v1520
    %v1916 = vpack.c.b16 %v1526, %v1521
    %v1917 = vpack.c.b16 %v1532, %v1527
    %v1918 = vpack.c.b16 %v1533, %v1528
    %v1919 = vpack.c.b16 %v1534, %v1529
    %v1920 = vpack.c.b16 %v1535, %v1530
    %v1921 = vpack.c.b16 %v1536, %v1531
    %v1922 = vpack.c.b16 %v1542, %v1537
    %v1923 = vpack.c.b16 %v1543, %v1538
    %v1924 = vpack.c.b16 %v1544, %v1539
    %v1925 = vpack.c.b16 %v1545, %v1540
    %v1926 = vpack.c.b16 %v1546, %v1541
    %v1927 = vpack.c.b16 %v1552, %v1547
    %v1928 = vpack.c.b16 %v1553, %v1548
    %v1929 = vpack.c.b16 %v1554, %v1549
    %v1930 = vpack.c.b16 %v1555, %v1550
    %v1931 = vpack.c.b16 %v1556, %v1551
    %v1932 = vpack.c.b16 %v1562, %v1557
    %v1933 = vpack.c.b16 %v1563, %v1558
    %v1934 = vpack.c.b16 %v1564, %v1559
    %v1935 = vpack.c.b16 %v1565, %v1560
    %v1936 = vpack.c.b16 %v1566, %v1561
    %v1937 = vpack.c.b16 %v1572, %v1567
    %v1938 = vpack.c.b16 %v1573, %v1568
    %v1939 = vpack.c.b16 %v1574, %v1569
    %v1940 = vpack.c.b16 %v1575, %v1570
    %v1941 = vpack.c.b16 %v1576, %v1571
    %v1942 = vpack.c.b16 %v1582, %v1577
    %v1943 = vpack.c.b16 %v1583, %v1578
    %v1944 = vpack.c.b16 %v1584, %v1579
    %v1945 = vpack.c.b16 %v1585, %v1580
    %v1946 = vpack.c.b16 %v1586, %v1581
    %v1947 = vpack.c.b16 %v1592, %v1587
    %v1948 = vpack.c.b16 %v1593, %v1588
    %v1949 = vpack.c.b16 %v1594, %v1589
    %v1950 = vpack.c.b16 %v1595, %v1590
    %v1951 = vpack.c.b16 %v1596, %v1591
    %v1952 = vpack.c.b16 %v1602, %v1597
    %v1953 = vpack.c.b16 %v1603, %v1598
    %v1954 = vpack.c.b16 %v1604, %v1599
    %v1955 = vpack.c.b16 %v1605, %v1600
    %v1956 = vpack.c.b16 %v1606, %v1601
    %v1957 = vpack.c.b16 %v1612, %v1607
    %v1958 = vpack.c.b16 %v1613, %v1608
    %v1959 = vpack.c.b16 %v1614, %v1609
    %v1960 = vpack.c.b16 %v1615, %v1610
    %v1961 = vpack.c.b16 %v1616, %v1611
    %v1962 = vpack.c.b16 %v1622, %v1617
    %v1963 = vpack.c.b16 %v1623, %v1618
    %v1964 = vpack.c.b16 %v1624, %v1619
    %v1965 = vpack.c.b16 %v1625, %v1620
    %v1966 = vpack.c.b16 %v1626, %v1621
    %v1967 = vpack.c.b16 %v1632, %v1627
    %v1968 = vpack.c.b16 %v1633, %v1628
    %v1969 = vpack.c.b16 %v1634, %v1629
    %v1970 = vpack.c.b16 %v1635, %v1630
    %v1971 = vpack.c.b16 %v1636, %v1631
    %v1972 = vpack.c.b16 %v1642, %v1637
    %v1973 = vpack.c.b16 %v1643, %v1638
    %v1974 = vpack.c.b16 %v1644, %v1639
    %v1975 = vpack.c.b16 %v1645, %v1640
    %v1976 = vpack.c.b16 %v1646, %v1641
    %v1977 = vpack.c.b16 %v1652, %v1647
    %v1978 = vpack.c.b16 %v1653, %v1648
    %v1979 = vpack.c.b16 %v1654, %v1649
    %v1980 = vpack.c.b16 %v1655, %v1650
    %v1981 = vpack.c.b16 %v1656, %v1651
    %v1982 = vpack.c.b16 %v1662, %v1657
    %v1983 = vpack.c.b16 %v1663, %v1658
    %v1984 = vpack.c.b16 %v1664, %v1659
    %v1985 = vpack.c.b16 %v1665, %v1660
    %v1986 = vpack.c.b16 %v1666, %v1661
    %v1987 = vpack.c.b16 %v1672, %v1667
    %v1988 = vpack.c.b16 %v1673, %v1668
    %v1989 = vpack.c.b16 %v1674, %v1669
    %v1990 = vpack.c.b16 %v1675, %v1670
    %v1991 = vpack.c.b16 %v1676, %v1671
    %v1992 = vpack.c.b16 %v1682, %v1677
    %v1993 = vpack.c.b16 %v1683, %v1678
    %v1994 = vpack.c.b16 %v1684, %v1679
    %v1995 = vpack.c.b16 %v1685, %v1680
    %v1996 = vpack.c.b16 %v1686, %v1681
    %v1997 = vpack.c.b16 %v1692, %v1687
    %v1998 = vpack.c.b16 %v1693, %v1688
    %v1999 = vpack.c.b16 %v1694, %v1689
    %v2000 = vpack.c.b16 %v1695, %v1690
    %v2001 = vpack.c.b16 %v1696, %v1691
    %v2002 = vpack.c.b16 %v1702, %v1697
    %v2003 = vpack.c.b16 %v1703, %v1698
    %v2004 = vpack.c.b16 %v1704, %v1699
    %v2005 = vpack.c.b16 %v1705, %v1700
    %v2006 = vpack.c.b16 %v1706, %v1701
    %v2007 = vpack.c.b16 %v1712, %v1707
    %v2008 = vpack.c.b16 %v1713, %v1708
    %v2009 = vpack.c.b16 %v1714, %v1709
    %v2010 = vpack.c.b16 %v1715, %v1710
    %v2011 = vpack.c.b16 %v1716, %v1711
    %v2012 = vpack.c.b16 %v1722, %v1717
    %v2013 = vpack.c.b16 %v1723, %v1718
    %v2014 = vpack.c.b16 %v1724, %v1719
    %v2015 = vpack.c.b16 %v1725, %v1720
    %v2016 = vpack.c.b16 %v1726, %v1721
    %v2017 = vpack.c.b16 %v1732, %v1727
    %v2018 = vpack.c.b16 %v1733, %v1728
    %v2019 = vpack.c.b16 %v1734, %v1729
    %v2020 = vpack.c.b16 %v1735, %v1730
    %v2021 = vpack.c.b16 %v1736, %v1731
    %v2022 = vpack.c.b16 %v1742, %v1737
    %v2023 = vpack.c.b16 %v1743, %v1738
    %v2024 = vpack.c.b16 %v1744, %v1739
    %v2025 = vpack.c.b16 %v1745, %v1740
    %v2026 = vpack.c.b16 %v1746, %v1741
    %v2027 = vpack.c.b16 %v1752, %v1747
    %v2028 = vpack.c.b16 %v1753, %v1748
    %v2029 = vpack.c.b16 %v1754, %v1749
    %v2030 = vpack.c.b16 %v1755, %v1750
    %v2031 = vpack.c.b16 %v1756, %v1751
    %v2032 = vpack.c.b16 %v1762, %v1757
    %v2033 = vpack.c.b16 %v1763, %v1758
    %v2034 = vpack.c.b16 %v1764, %v1759
    %v2035 = vpack.c.b16 %v1765, %v1760
    %v2036 = vpack.c.b16 %v1766, %v1761
    %v2037 = vpack.c.b16 %v1772, %v1767
    %v2038 = vpack.c.b16 %v1773, %v1768
    %v2039 = vpack.c.b16 %v1774, %v1769
    %v2040 = vpack.c.b16 %v1775, %v1770
    %v2041 = vpack.c.b16 %v1776, %v1771
    %v2042 = vpack.c.b16 %v1782, %v1777
    %v2043 = vpack.c.b16 %v1783, %v1778
    %v2044 = vpack.c.b16 %v1784, %v1779
    %v2045 = vpack.c.b16 %v1785, %v1780
    %v2046 = vpack.c.b16 %v1786, %v1781
    %v2047 = vpack.c.b16 %v1792, %v1787
    %v2048 = vpack.c.b16 %v1793, %v1788
    %v2049 = vpack.c.b16 %v1794, %v1789
    %v2050 = vpack.c.b16 %v1795, %v1790
    %v2051 = vpack.c.b16 %v1796, %v1791
    %v2052 = vpack.c.b16 %v1802, %v1797
    %v2053 = vpack.c.b16 %v1803, %v1798
    %v2054 = vpack.c.b16 %v1804, %v1799
    %v2055 = vpack.c.b16 %v1805, %v1800
    %v2056 = vpack.c.b16 %v1806, %v1801
    %v2057 = vpack.c.b16 %v1812, %v1807
    %v2058 = vpack.c.b16 %v1813, %v1808
    %v2059 = vpack.c.b16 %v1814, %v1809
    %v2060 = vpack.c.b16 %v1815, %v1810
    %v2061 = vpack.c.b16 %v1816, %v1811
    %vm2307 = vcmask 130048
    %v2309 = vsel %vm2307, %v494, 0
    %v2312 = vsel %vm2307, %v501, 0
    %v2315 = vsel %vm2307, %v508, 0
    %v2318 = vsel %vm2307, %v515, 0
    %v2321 = vsel %vm2307, %v522, 0
    %v2324 = vsel %vm2307, %v529, 0
    %v2327 = vsel %vm2307, %v536, 0
    %v2330 = vsel %vm2307, %v543, 0
    %v2333 = vsel %vm2307, %v550, 0
    %v2336 = vsel %vm2307, %v557, 0
    %v2339 = vsel %vm2307, %v564, 0
    %v2342 = vsel %vm2307, %v571, 0
    %v2345 = vsel %vm2307, %v578, 0
    %v2348 = vsel %vm2307, %v585, 0
    %v2351 = vsel %vm2307, %v592, 0
    %v2354 = vsel %vm2307, %v599, 0
    %v2357 = vsel %vm2307, %v606, 0
    %v2360 = vsel %vm2307, %v613, 0
    %v2363 = vsel %vm2307, %v620, 0
    %v2366 = vsel %vm2307, %v627, 0
    %v2369 = vsel %vm2307, %v634, 0
    %v2372 = vsel %vm2307, %v641, 0
    %v2375 = vsel %vm2307, %v648, 0
    %v2378 = vsel %vm2307, %v655, 0
    %v2381 = vsel %vm2307, %v662, 0
    %v2384 = vsel %vm2307, %v669, 0
    %v2387 = vsel %vm2307, %v676, 0
    %v2390 = vsel %vm2307, %v683, 0
    %v2393 = vsel %vm2307, %v690, 0
    %v2396 = vsel %vm2307, %v697, 0
    %v2399 = vsel %vm2307, %v704, 0
    %v2402 = vsel %vm2307, %v711, 0
    %2404 = vmatprep.subr.bf16.mxu0 %v1853
    %2405 = vmatpush1.bf16.msra.mxu0 %v1852
    %2406 = vmatprep.subr.bf16.mxu0 %v1848
    %2407 = vmatpush1.bf16.msra.mxu0 %v1847
    %2408 = vmatprep.subr.bf16.mxu0 %v1843
    %2409 = vmatpush1.bf16.msra.mxu0 %v1842
    %2410 = vmatprep.subr.bf16.mxu0 %v1838
    %2411 = vmatpush1.bf16.msra.mxu0 %v1837
    %2412 = vmatprep.subr.bf16.mxu0 %v1833
    %2413 = vmatpush1.bf16.msra.mxu0 %v1832
    %2414 = vmatprep.subr.bf16.mxu0 %v1828
    %2415 = vmatpush1.bf16.msra.mxu0 %v1827
    %2416 = vmatprep.subr.bf16.mxu0 %v1823
    %2417 = vmatpush1.bf16.msra.mxu0 %v1822
    %2418 = vmatprep.subr.bf16.mxu0 %v1818
    %2419 = vmatpush1.bf16.msra.mxu0 %v1817
    %2420 = vmatprep.subr.bf16.mxu0 %v1893
    %2421 = vmatpush2.bf16.msra.mxu0 %v1892
    %2422 = vmatprep.subr.bf16.mxu0 %v1888
    %2423 = vmatpush2.bf16.msra.mxu0 %v1887
    %2424 = vmatprep.subr.bf16.mxu0 %v1883
    %2425 = vmatpush2.bf16.msra.mxu0 %v1882
    %2426 = vmatprep.subr.bf16.mxu0 %v1878
    %2427 = vmatpush2.bf16.msra.mxu0 %v1877
    %2428 = vmatprep.subr.bf16.mxu0 %v1873
    %2429 = vmatpush2.bf16.msra.mxu0 %v1872
    %2430 = vmatprep.subr.bf16.mxu0 %v1868
    %2431 = vmatpush2.bf16.msra.mxu0 %v1867
    %2432 = vmatprep.subr.bf16.mxu0 %v1863
    %2433 = vmatpush2.bf16.msra.mxu0 %v1862
    %2434 = vmatprep.subr.bf16.mxu0 %v1858
    %2435 = vmatpush2.bf16.msra.mxu0 %v1857
    %2436 = vmatprep.mubr.bf16.mxu0 %v489
    %2437 = vmatmul.mubr.bf16.gmra.mxu0 %v488
    %v2438 = vpop.f32.mrf.mxu0
    %v2439 = vadd.f32 %v1011, %v2438
    %v2440 = vpop.f32.mrf.mxu0
    %v2441 = vadd.f32 %v1015, %v2440
    %v2442 = vpop.f32.mrf.mxu0
    %v2443 = vadd.f32 %v1011, %v2442
    %v2444 = vpop.f32.mrf.mxu0
    %v2445 = vadd.f32 %v1015, %v2444
    %2446 = vmatprep.mubr.bf16.mxu0 %v496
    %2447 = vmatmul.mubr.bf16.gmra.mxu0 %v495
    %v2448 = vpop.f32.mrf.mxu0
    %v2449 = vadd.f32 %v1011, %v2448
    %v2450 = vpop.f32.mrf.mxu0
    %v2451 = vadd.f32 %v1015, %v2450
    %v2452 = vpop.f32.mrf.mxu0
    %v2453 = vadd.f32 %v1011, %v2452
    %v2454 = vpop.f32.mrf.mxu0
    %v2455 = vadd.f32 %v1015, %v2454
    %2456 = vmatprep.mubr.bf16.mxu0 %v503
    %2457 = vmatmul.mubr.bf16.gmra.mxu0 %v502
    %v2458 = vpop.f32.mrf.mxu0
    %v2459 = vadd.f32 %v1011, %v2458
    %v2460 = vpop.f32.mrf.mxu0
    %v2461 = vadd.f32 %v1015, %v2460
    %v2462 = vpop.f32.mrf.mxu0
    %v2463 = vadd.f32 %v1011, %v2462
    %v2464 = vpop.f32.mrf.mxu0
    %v2465 = vadd.f32 %v1015, %v2464
    %2466 = vmatprep.mubr.bf16.mxu0 %v510
    %2467 = vmatmul.mubr.bf16.gmra.mxu0 %v509
    %v2468 = vpop.f32.mrf.mxu0
    %v2469 = vadd.f32 %v1011, %v2468
    %v2470 = vpop.f32.mrf.mxu0
    %v2471 = vadd.f32 %v1015, %v2470
    %v2472 = vpop.f32.mrf.mxu0
    %v2473 = vadd.f32 %v1011, %v2472
    %v2474 = vpop.f32.mrf.mxu0
    %v2475 = vadd.f32 %v1015, %v2474
    %2476 = vmatprep.mubr.bf16.mxu0 %v517
    %2477 = vmatmul.mubr.bf16.gmra.mxu0 %v516
    %v2478 = vpop.f32.mrf.mxu0
    %v2479 = vadd.f32 %v1011, %v2478
    %v2480 = vpop.f32.mrf.mxu0
    %v2481 = vadd.f32 %v1015, %v2480
    %v2482 = vpop.f32.mrf.mxu0
    %v2483 = vadd.f32 %v1011, %v2482
    %v2484 = vpop.f32.mrf.mxu0
    %v2485 = vadd.f32 %v1015, %v2484
    %2486 = vmatprep.mubr.bf16.mxu0 %v524
    %2487 = vmatmul.mubr.bf16.gmra.mxu0 %v523
    %v2488 = vpop.f32.mrf.mxu0
    %v2489 = vadd.f32 %v1011, %v2488
    %v2490 = vpop.f32.mrf.mxu0
    %v2491 = vadd.f32 %v1015, %v2490
    %v2492 = vpop.f32.mrf.mxu0
    %v2493 = vadd.f32 %v1011, %v2492
    %v2494 = vpop.f32.mrf.mxu0
    %v2495 = vadd.f32 %v1015, %v2494
    %2496 = vmatprep.mubr.bf16.mxu0 %v531
    %2497 = vmatmul.mubr.bf16.gmra.mxu0 %v530
    %v2498 = vpop.f32.mrf.mxu0
    %v2499 = vadd.f32 %v1011, %v2498
    %v2500 = vpop.f32.mrf.mxu0
    %v2501 = vadd.f32 %v1015, %v2500
    %v2502 = vpop.f32.mrf.mxu0
    %v2503 = vadd.f32 %v1011, %v2502
    %v2504 = vpop.f32.mrf.mxu0
    %v2505 = vadd.f32 %v1015, %v2504
    %2506 = vmatprep.mubr.bf16.mxu0 %v538
    %2507 = vmatmul.mubr.bf16.gmra.mxu0 %v537
    %v2508 = vpop.f32.mrf.mxu0
    %v2509 = vadd.f32 %v1011, %v2508
    %v2510 = vpop.f32.mrf.mxu0
    %v2511 = vadd.f32 %v1015, %v2510
    %v2512 = vpop.f32.mrf.mxu0
    %v2513 = vadd.f32 %v1011, %v2512
    %v2514 = vpop.f32.mrf.mxu0
    %v2515 = vadd.f32 %v1015, %v2514
    %2516 = vmatprep.mubr.bf16.mxu0 %v545
    %2517 = vmatmul.mubr.bf16.gmra.mxu0 %v544
    %v2518 = vpop.f32.mrf.mxu0
    %v2519 = vadd.f32 %v1011, %v2518
    %v2520 = vpop.f32.mrf.mxu0
    %v2521 = vadd.f32 %v1015, %v2520
    %v2522 = vpop.f32.mrf.mxu0
    %v2523 = vadd.f32 %v1011, %v2522
    %v2524 = vpop.f32.mrf.mxu0
    %v2525 = vadd.f32 %v1015, %v2524
    %2526 = vmatprep.mubr.bf16.mxu0 %v552
    %2527 = vmatmul.mubr.bf16.gmra.mxu0 %v551
    %v2528 = vpop.f32.mrf.mxu0
    %v2529 = vadd.f32 %v1011, %v2528
    %v2530 = vpop.f32.mrf.mxu0
    %v2531 = vadd.f32 %v1015, %v2530
    %v2532 = vpop.f32.mrf.mxu0
    %v2533 = vadd.f32 %v1011, %v2532
    %v2534 = vpop.f32.mrf.mxu0
    %v2535 = vadd.f32 %v1015, %v2534
    %2536 = vmatprep.mubr.bf16.mxu0 %v559
    %2537 = vmatmul.mubr.bf16.gmra.mxu0 %v558
    %v2538 = vpop.f32.mrf.mxu0
    %v2539 = vadd.f32 %v1011, %v2538
    %v2540 = vpop.f32.mrf.mxu0
    %v2541 = vadd.f32 %v1015, %v2540
    %v2542 = vpop.f32.mrf.mxu0
    %v2543 = vadd.f32 %v1011, %v2542
    %v2544 = vpop.f32.mrf.mxu0
    %v2545 = vadd.f32 %v1015, %v2544
    %2546 = vmatprep.mubr.bf16.mxu0 %v566
    %2547 = vmatmul.mubr.bf16.gmra.mxu0 %v565
    %v2548 = vpop.f32.mrf.mxu0
    %v2549 = vadd.f32 %v1011, %v2548
    %v2550 = vpop.f32.mrf.mxu0
    %v2551 = vadd.f32 %v1015, %v2550
    %v2552 = vpop.f32.mrf.mxu0
    %v2553 = vadd.f32 %v1011, %v2552
    %v2554 = vpop.f32.mrf.mxu0
    %v2555 = vadd.f32 %v1015, %v2554
    %2556 = vmatprep.mubr.bf16.mxu0 %v573
    %2557 = vmatmul.mubr.bf16.gmra.mxu0 %v572
    %v2558 = vpop.f32.mrf.mxu0
    %v2559 = vadd.f32 %v1011, %v2558
    %v2560 = vpop.f32.mrf.mxu0
    %v2561 = vadd.f32 %v1015, %v2560
    %v2562 = vpop.f32.mrf.mxu0
    %v2563 = vadd.f32 %v1011, %v2562
    %v2564 = vpop.f32.mrf.mxu0
    %v2565 = vadd.f32 %v1015, %v2564
    %2566 = vmatprep.mubr.bf16.mxu0 %v580
    %2567 = vmatmul.mubr.bf16.gmra.mxu0 %v579
    %v2568 = vpop.f32.mrf.mxu0
    %v2569 = vadd.f32 %v1011, %v2568
    %v2570 = vpop.f32.mrf.mxu0
    %v2571 = vadd.f32 %v1015, %v2570
    %v2572 = vpop.f32.mrf.mxu0
    %v2573 = vadd.f32 %v1011, %v2572
    %v2574 = vpop.f32.mrf.mxu0
    %v2575 = vadd.f32 %v1015, %v2574
    %2576 = vmatprep.mubr.bf16.mxu0 %v587
    %2577 = vmatmul.mubr.bf16.gmra.mxu0 %v586
    %v2578 = vpop.f32.mrf.mxu0
    %v2579 = vadd.f32 %v1011, %v2578
    %v2580 = vpop.f32.mrf.mxu0
    %v2581 = vadd.f32 %v1015, %v2580
    %v2582 = vpop.f32.mrf.mxu0
    %v2583 = vadd.f32 %v1011, %v2582
    %v2584 = vpop.f32.mrf.mxu0
    %v2585 = vadd.f32 %v1015, %v2584
    %2586 = vmatprep.mubr.bf16.mxu0 %v594
    %2587 = vmatmul.mubr.bf16.gmra.mxu0 %v593
    %v2588 = vpop.f32.mrf.mxu0
    %v2589 = vadd.f32 %v1011, %v2588
    %v2590 = vpop.f32.mrf.mxu0
    %v2591 = vadd.f32 %v1015, %v2590
    %v2592 = vpop.f32.mrf.mxu0
    %v2593 = vadd.f32 %v1011, %v2592
    %v2594 = vpop.f32.mrf.mxu0
    %v2595 = vadd.f32 %v1015, %v2594
    %2596 = vmatprep.mubr.bf16.mxu0 %v601
    %2597 = vmatmul.mubr.bf16.gmra.mxu0 %v600
    %v2598 = vpop.f32.mrf.mxu0
    %v2599 = vadd.f32 %v1011, %v2598
    %v2600 = vpop.f32.mrf.mxu0
    %v2601 = vadd.f32 %v1015, %v2600
    %v2602 = vpop.f32.mrf.mxu0
    %v2603 = vadd.f32 %v1011, %v2602
    %v2604 = vpop.f32.mrf.mxu0
    %v2605 = vadd.f32 %v1015, %v2604
    %2606 = vmatprep.mubr.bf16.mxu0 %v608
    %2607 = vmatmul.mubr.bf16.gmra.mxu0 %v607
    %v2608 = vpop.f32.mrf.mxu0
    %v2609 = vadd.f32 %v1011, %v2608
    %v2610 = vpop.f32.mrf.mxu0
    %v2611 = vadd.f32 %v1015, %v2610
    %v2612 = vpop.f32.mrf.mxu0
    %v2613 = vadd.f32 %v1011, %v2612
    %v2614 = vpop.f32.mrf.mxu0
    %v2615 = vadd.f32 %v1015, %v2614
    %2616 = vmatprep.mubr.bf16.mxu0 %v615
    %2617 = vmatmul.mubr.bf16.gmra.mxu0 %v614
    %v2618 = vpop.f32.mrf.mxu0
    %v2619 = vadd.f32 %v1011, %v2618
    %v2620 = vpop.f32.mrf.mxu0
    %v2621 = vadd.f32 %v1015, %v2620
    %v2622 = vpop.f32.mrf.mxu0
    %v2623 = vadd.f32 %v1011, %v2622
    %v2624 = vpop.f32.mrf.mxu0
    %v2625 = vadd.f32 %v1015, %v2624
    %2626 = vmatprep.mubr.bf16.mxu0 %v622
    %2627 = vmatmul.mubr.bf16.gmra.mxu0 %v621
    %v2628 = vpop.f32.mrf.mxu0
    %v2629 = vadd.f32 %v1011, %v2628
    %v2630 = vpop.f32.mrf.mxu0
    %v2631 = vadd.f32 %v1015, %v2630
    %v2632 = vpop.f32.mrf.mxu0
    %v2633 = vadd.f32 %v1011, %v2632
    %v2634 = vpop.f32.mrf.mxu0
    %v2635 = vadd.f32 %v1015, %v2634
    %2636 = vmatprep.mubr.bf16.mxu0 %v629
    %2637 = vmatmul.mubr.bf16.gmra.mxu0 %v628
    %v2638 = vpop.f32.mrf.mxu0
    %v2639 = vadd.f32 %v1011, %v2638
    %v2640 = vpop.f32.mrf.mxu0
    %v2641 = vadd.f32 %v1015, %v2640
    %v2642 = vpop.f32.mrf.mxu0
    %v2643 = vadd.f32 %v1011, %v2642
    %v2644 = vpop.f32.mrf.mxu0
    %v2645 = vadd.f32 %v1015, %v2644
    %2646 = vmatprep.mubr.bf16.mxu0 %v636
    %2647 = vmatmul.mubr.bf16.gmra.mxu0 %v635
    %v2648 = vpop.f32.mrf.mxu0
    %v2649 = vadd.f32 %v1011, %v2648
    %v2650 = vpop.f32.mrf.mxu0
    %v2651 = vadd.f32 %v1015, %v2650
    %v2652 = vpop.f32.mrf.mxu0
    %v2653 = vadd.f32 %v1011, %v2652
    %v2654 = vpop.f32.mrf.mxu0
    %v2655 = vadd.f32 %v1015, %v2654
    %2656 = vmatprep.mubr.bf16.mxu0 %v643
    %2657 = vmatmul.mubr.bf16.gmra.mxu0 %v642
    %v2658 = vpop.f32.mrf.mxu0
    %v2659 = vadd.f32 %v1011, %v2658
    %v2660 = vpop.f32.mrf.mxu0
    %v2661 = vadd.f32 %v1015, %v2660
    %v2662 = vpop.f32.mrf.mxu0
    %v2663 = vadd.f32 %v1011, %v2662
    %v2664 = vpop.f32.mrf.mxu0
    %v2665 = vadd.f32 %v1015, %v2664
    %2666 = vmatprep.mubr.bf16.mxu0 %v650
    %2667 = vmatmul.mubr.bf16.gmra.mxu0 %v649
    %v2668 = vpop.f32.mrf.mxu0
    %v2669 = vadd.f32 %v1011, %v2668
    %v2670 = vpop.f32.mrf.mxu0
    %v2671 = vadd.f32 %v1015, %v2670
    %v2672 = vpop.f32.mrf.mxu0
    %v2673 = vadd.f32 %v1011, %v2672
    %v2674 = vpop.f32.mrf.mxu0
    %v2675 = vadd.f32 %v1015, %v2674
    %2676 = vmatprep.mubr.bf16.mxu0 %v657
    %2677 = vmatmul.mubr.bf16.gmra.mxu0 %v656
    %v2678 = vpop.f32.mrf.mxu0
    %v2679 = vadd.f32 %v1011, %v2678
    %v2680 = vpop.f32.mrf.mxu0
    %v2681 = vadd.f32 %v1015, %v2680
    %v2682 = vpop.f32.mrf.mxu0
    %v2683 = vadd.f32 %v1011, %v2682
    %v2684 = vpop.f32.mrf.mxu0
    %v2685 = vadd.f32 %v1015, %v2684
    %2686 = vmatprep.mubr.bf16.mxu0 %v664
    %2687 = vmatmul.mubr.bf16.gmra.mxu0 %v663
    %v2688 = vpop.f32.mrf.mxu0
    %v2689 = vadd.f32 %v1011, %v2688
    %v2690 = vpop.f32.mrf.mxu0
    %v2691 = vadd.f32 %v1015, %v2690
    %v2692 = vpop.f32.mrf.mxu0
    %v2693 = vadd.f32 %v1011, %v2692
    %v2694 = vpop.f32.mrf.mxu0
    %v2695 = vadd.f32 %v1015, %v2694
    %2696 = vmatprep.mubr.bf16.mxu0 %v671
    %2697 = vmatmul.mubr.bf16.gmra.mxu0 %v670
    %v2698 = vpop.f32.mrf.mxu0
    %v2699 = vadd.f32 %v1011, %v2698
    %v2700 = vpop.f32.mrf.mxu0
    %v2701 = vadd.f32 %v1015, %v2700
    %v2702 = vpop.f32.mrf.mxu0
    %v2703 = vadd.f32 %v1011, %v2702
    %v2704 = vpop.f32.mrf.mxu0
    %v2705 = vadd.f32 %v1015, %v2704
    %2706 = vmatprep.mubr.bf16.mxu0 %v678
    %2707 = vmatmul.mubr.bf16.gmra.mxu0 %v677
    %v2708 = vpop.f32.mrf.mxu0
    %v2709 = vadd.f32 %v1011, %v2708
    %v2710 = vpop.f32.mrf.mxu0
    %v2711 = vadd.f32 %v1015, %v2710
    %v2712 = vpop.f32.mrf.mxu0
    %v2713 = vadd.f32 %v1011, %v2712
    %v2714 = vpop.f32.mrf.mxu0
    %v2715 = vadd.f32 %v1015, %v2714
    %2716 = vmatprep.mubr.bf16.mxu0 %v685
    %2717 = vmatmul.mubr.bf16.gmra.mxu0 %v684
    %v2718 = vpop.f32.mrf.mxu0
    %v2719 = vadd.f32 %v1011, %v2718
    %v2720 = vpop.f32.mrf.mxu0
    %v2721 = vadd.f32 %v1015, %v2720
    %v2722 = vpop.f32.mrf.mxu0
    %v2723 = vadd.f32 %v1011, %v2722
    %v2724 = vpop.f32.mrf.mxu0
    %v2725 = vadd.f32 %v1015, %v2724
    %2726 = vmatprep.mubr.bf16.mxu0 %v692
    %2727 = vmatmul.mubr.bf16.gmra.mxu0 %v691
    %v2728 = vpop.f32.mrf.mxu0
    %v2729 = vadd.f32 %v1011, %v2728
    %v2730 = vpop.f32.mrf.mxu0
    %v2731 = vadd.f32 %v1015, %v2730
    %v2732 = vpop.f32.mrf.mxu0
    %v2733 = vadd.f32 %v1011, %v2732
    %v2734 = vpop.f32.mrf.mxu0
    %v2735 = vadd.f32 %v1015, %v2734
    %2736 = vmatprep.mubr.bf16.mxu0 %v699
    %2737 = vmatmul.mubr.bf16.gmra.mxu0 %v698
    %v2738 = vpop.f32.mrf.mxu0
    %v2739 = vadd.f32 %v1011, %v2738
    %v2740 = vpop.f32.mrf.mxu0
    %v2741 = vadd.f32 %v1015, %v2740
    %v2742 = vpop.f32.mrf.mxu0
    %v2743 = vadd.f32 %v1011, %v2742
    %v2744 = vpop.f32.mrf.mxu0
    %v2745 = vadd.f32 %v1015, %v2744
    %2746 = vmatprep.mubr.bf16.mxu0 %v706
    %2747 = vmatmul.mubr.bf16.gmra.mxu0 %v705
    %v2748 = vpop.f32.mrf.mxu0
    %v2749 = vadd.f32 %v1011, %v2748
    %v2750 = vpop.f32.mrf.mxu0
    %v2751 = vadd.f32 %v1015, %v2750
    %v2752 = vpop.f32.mrf.mxu0
    %v2753 = vadd.f32 %v1011, %v2752
    %v2754 = vpop.f32.mrf.mxu0
    %v2755 = vadd.f32 %v1015, %v2754
    %2756 = vdwg.mxu0
    %2757 = vmatprep.subr.bf16.mxu0 %v1933
    %2758 = vmatpush1.bf16.msra.mxu0 %v1932
    %2759 = vmatprep.subr.bf16.mxu0 %v1928
    %2760 = vmatpush1.bf16.msra.mxu0 %v1927
    %2761 = vmatprep.subr.bf16.mxu0 %v1923
    %2762 = vmatpush1.bf16.msra.mxu0 %v1922
    %2763 = vmatprep.subr.bf16.mxu0 %v1918
    %2764 = vmatpush1.bf16.msra.mxu0 %v1917
    %2765 = vmatprep.subr.bf16.mxu0 %v1913
    %2766 = vmatpush1.bf16.msra.mxu0 %v1912
    %2767 = vmatprep.subr.bf16.mxu0 %v1908
    %2768 = vmatpush1.bf16.msra.mxu0 %v1907
    %2769 = vmatprep.subr.bf16.mxu0 %v1903
    %2770 = vmatpush1.bf16.msra.mxu0 %v1902
    %2771 = vmatprep.subr.bf16.mxu0 %v1898
    %2772 = vmatpush1.bf16.msra.mxu0 %v1897
    %2773 = vmatprep.subr.bf16.mxu0 %v1973
    %2774 = vmatpush2.bf16.msra.mxu0 %v1972
    %2775 = vmatprep.subr.bf16.mxu0 %v1968
    %2776 = vmatpush2.bf16.msra.mxu0 %v1967
    %2777 = vmatprep.subr.bf16.mxu0 %v1963
    %2778 = vmatpush2.bf16.msra.mxu0 %v1962
    %2779 = vmatprep.subr.bf16.mxu0 %v1958
    %2780 = vmatpush2.bf16.msra.mxu0 %v1957
    %2781 = vmatprep.subr.bf16.mxu0 %v1953
    %2782 = vmatpush2.bf16.msra.mxu0 %v1952
    %2783 = vmatprep.subr.bf16.mxu0 %v1948
    %2784 = vmatpush2.bf16.msra.mxu0 %v1947
    %2785 = vmatprep.subr.bf16.mxu0 %v1943
    %2786 = vmatpush2.bf16.msra.mxu0 %v1942
    %2787 = vmatprep.subr.bf16.mxu0 %v1938
    %2788 = vmatpush2.bf16.msra.mxu0 %v1937
    %2789 = vmatprep.mubr.bf16.mxu0 %v491
    %2790 = vmatmul.mubr.bf16.gmra.mxu0 %v490
    %v2791 = vpop.f32.mrf.mxu0
    %v2792 = vadd.f32 %v2439, %v2791
    %v2793 = vpop.f32.mrf.mxu0
    %v2794 = vadd.f32 %v2441, %v2793
    %v2795 = vpop.f32.mrf.mxu0
    %v2796 = vadd.f32 %v2443, %v2795
    %v2797 = vpop.f32.mrf.mxu0
    %v2798 = vadd.f32 %v2445, %v2797
    %2799 = vmatprep.mubr.bf16.mxu0 %v498
    %2800 = vmatmul.mubr.bf16.gmra.mxu0 %v497
    %v2801 = vpop.f32.mrf.mxu0
    %v2802 = vadd.f32 %v2449, %v2801
    %v2803 = vpop.f32.mrf.mxu0
    %v2804 = vadd.f32 %v2451, %v2803
    %v2805 = vpop.f32.mrf.mxu0
    %v2806 = vadd.f32 %v2453, %v2805
    %v2807 = vpop.f32.mrf.mxu0
    %v2808 = vadd.f32 %v2455, %v2807
    %2809 = vmatprep.mubr.bf16.mxu0 %v505
    %2810 = vmatmul.mubr.bf16.gmra.mxu0 %v504
    %v2811 = vpop.f32.mrf.mxu0
    %v2812 = vadd.f32 %v2459, %v2811
    %v2813 = vpop.f32.mrf.mxu0
    %v2814 = vadd.f32 %v2461, %v2813
    %v2815 = vpop.f32.mrf.mxu0
    %v2816 = vadd.f32 %v2463, %v2815
    %v2817 = vpop.f32.mrf.mxu0
    %v2818 = vadd.f32 %v2465, %v2817
    %2819 = vmatprep.mubr.bf16.mxu0 %v512
    %2820 = vmatmul.mubr.bf16.gmra.mxu0 %v511
    %v2821 = vpop.f32.mrf.mxu0
    %v2822 = vadd.f32 %v2469, %v2821
    %v2823 = vpop.f32.mrf.mxu0
    %v2824 = vadd.f32 %v2471, %v2823
    %v2825 = vpop.f32.mrf.mxu0
    %v2826 = vadd.f32 %v2473, %v2825
    %v2827 = vpop.f32.mrf.mxu0
    %v2828 = vadd.f32 %v2475, %v2827
    %2829 = vmatprep.mubr.bf16.mxu0 %v519
    %2830 = vmatmul.mubr.bf16.gmra.mxu0 %v518
    %v2831 = vpop.f32.mrf.mxu0
    %v2832 = vadd.f32 %v2479, %v2831
    %v2833 = vpop.f32.mrf.mxu0
    %v2834 = vadd.f32 %v2481, %v2833
    %v2835 = vpop.f32.mrf.mxu0
    %v2836 = vadd.f32 %v2483, %v2835
    %v2837 = vpop.f32.mrf.mxu0
    %v2838 = vadd.f32 %v2485, %v2837
    %2839 = vmatprep.mubr.bf16.mxu0 %v526
    %2840 = vmatmul.mubr.bf16.gmra.mxu0 %v525
    %v2841 = vpop.f32.mrf.mxu0
    %v2842 = vadd.f32 %v2489, %v2841
    %v2843 = vpop.f32.mrf.mxu0
    %v2844 = vadd.f32 %v2491, %v2843
    %v2845 = vpop.f32.mrf.mxu0
    %v2846 = vadd.f32 %v2493, %v2845
    %v2847 = vpop.f32.mrf.mxu0
    %v2848 = vadd.f32 %v2495, %v2847
    %2849 = vmatprep.mubr.bf16.mxu0 %v533
    %2850 = vmatmul.mubr.bf16.gmra.mxu0 %v532
    %v2851 = vpop.f32.mrf.mxu0
    %v2852 = vadd.f32 %v2499, %v2851
    %v2853 = vpop.f32.mrf.mxu0
    %v2854 = vadd.f32 %v2501, %v2853
    %v2855 = vpop.f32.mrf.mxu0
    %v2856 = vadd.f32 %v2503, %v2855
    %v2857 = vpop.f32.mrf.mxu0
    %v2858 = vadd.f32 %v2505, %v2857
    %2859 = vmatprep.mubr.bf16.mxu0 %v540
    %2860 = vmatmul.mubr.bf16.gmra.mxu0 %v539
    %v2861 = vpop.f32.mrf.mxu0
    %v2862 = vadd.f32 %v2509, %v2861
    %v2863 = vpop.f32.mrf.mxu0
    %v2864 = vadd.f32 %v2511, %v2863
    %v2865 = vpop.f32.mrf.mxu0
    %v2866 = vadd.f32 %v2513, %v2865
    %v2867 = vpop.f32.mrf.mxu0
    %v2868 = vadd.f32 %v2515, %v2867
    %2869 = vmatprep.mubr.bf16.mxu0 %v547
    %2870 = vmatmul.mubr.bf16.gmra.mxu0 %v546
    %v2871 = vpop.f32.mrf.mxu0
    %v2872 = vadd.f32 %v2519, %v2871
    %v2873 = vpop.f32.mrf.mxu0
    %v2874 = vadd.f32 %v2521, %v2873
    %v2875 = vpop.f32.mrf.mxu0
    %v2876 = vadd.f32 %v2523, %v2875
    %v2877 = vpop.f32.mrf.mxu0
    %v2878 = vadd.f32 %v2525, %v2877
    %2879 = vmatprep.mubr.bf16.mxu0 %v554
    %2880 = vmatmul.mubr.bf16.gmra.mxu0 %v553
    %v2881 = vpop.f32.mrf.mxu0
    %v2882 = vadd.f32 %v2529, %v2881
    %v2883 = vpop.f32.mrf.mxu0
    %v2884 = vadd.f32 %v2531, %v2883
    %v2885 = vpop.f32.mrf.mxu0
    %v2886 = vadd.f32 %v2533, %v2885
    %v2887 = vpop.f32.mrf.mxu0
    %v2888 = vadd.f32 %v2535, %v2887
    %2889 = vmatprep.mubr.bf16.mxu0 %v561
    %2890 = vmatmul.mubr.bf16.gmra.mxu0 %v560
    %v2891 = vpop.f32.mrf.mxu0
    %v2892 = vadd.f32 %v2539, %v2891
    %v2893 = vpop.f32.mrf.mxu0
    %v2894 = vadd.f32 %v2541, %v2893
    %v2895 = vpop.f32.mrf.mxu0
    %v2896 = vadd.f32 %v2543, %v2895
    %v2897 = vpop.f32.mrf.mxu0
    %v2898 = vadd.f32 %v2545, %v2897
    %2899 = vmatprep.mubr.bf16.mxu0 %v568
    %2900 = vmatmul.mubr.bf16.gmra.mxu0 %v567
    %v2901 = vpop.f32.mrf.mxu0
    %v2902 = vadd.f32 %v2549, %v2901
    %v2903 = vpop.f32.mrf.mxu0
    %v2904 = vadd.f32 %v2551, %v2903
    %v2905 = vpop.f32.mrf.mxu0
    %v2906 = vadd.f32 %v2553, %v2905
    %v2907 = vpop.f32.mrf.mxu0
    %v2908 = vadd.f32 %v2555, %v2907
    %2909 = vmatprep.mubr.bf16.mxu0 %v575
    %2910 = vmatmul.mubr.bf16.gmra.mxu0 %v574
    %v2911 = vpop.f32.mrf.mxu0
    %v2912 = vadd.f32 %v2559, %v2911
    %v2913 = vpop.f32.mrf.mxu0
    %v2914 = vadd.f32 %v2561, %v2913
    %v2915 = vpop.f32.mrf.mxu0
    %v2916 = vadd.f32 %v2563, %v2915
    %v2917 = vpop.f32.mrf.mxu0
    %v2918 = vadd.f32 %v2565, %v2917
    %2919 = vmatprep.mubr.bf16.mxu0 %v582
    %2920 = vmatmul.mubr.bf16.gmra.mxu0 %v581
    %v2921 = vpop.f32.mrf.mxu0
    %v2922 = vadd.f32 %v2569, %v2921
    %v2923 = vpop.f32.mrf.mxu0
    %v2924 = vadd.f32 %v2571, %v2923
    %v2925 = vpop.f32.mrf.mxu0
    %v2926 = vadd.f32 %v2573, %v2925
    %v2927 = vpop.f32.mrf.mxu0
    %v2928 = vadd.f32 %v2575, %v2927
    %2929 = vmatprep.mubr.bf16.mxu0 %v589
    %2930 = vmatmul.mubr.bf16.gmra.mxu0 %v588
    %v2931 = vpop.f32.mrf.mxu0
    %v2932 = vadd.f32 %v2579, %v2931
    %v2933 = vpop.f32.mrf.mxu0
    %v2934 = vadd.f32 %v2581, %v2933
    %v2935 = vpop.f32.mrf.mxu0
    %v2936 = vadd.f32 %v2583, %v2935
    %v2937 = vpop.f32.mrf.mxu0
    %v2938 = vadd.f32 %v2585, %v2937
    %2939 = vmatprep.mubr.bf16.mxu0 %v596
    %2940 = vmatmul.mubr.bf16.gmra.mxu0 %v595
    %v2941 = vpop.f32.mrf.mxu0
    %v2942 = vadd.f32 %v2589, %v2941
    %v2943 = vpop.f32.mrf.mxu0
    %v2944 = vadd.f32 %v2591, %v2943
    %v2945 = vpop.f32.mrf.mxu0
    %v2946 = vadd.f32 %v2593, %v2945
    %v2947 = vpop.f32.mrf.mxu0
    %v2948 = vadd.f32 %v2595, %v2947
    %2949 = vmatprep.mubr.bf16.mxu0 %v603
    %2950 = vmatmul.mubr.bf16.gmra.mxu0 %v602
    %v2951 = vpop.f32.mrf.mxu0
    %v2952 = vadd.f32 %v2599, %v2951
    %v2953 = vpop.f32.mrf.mxu0
    %v2954 = vadd.f32 %v2601, %v2953
    %v2955 = vpop.f32.mrf.mxu0
    %v2956 = vadd.f32 %v2603, %v2955
    %v2957 = vpop.f32.mrf.mxu0
    %v2958 = vadd.f32 %v2605, %v2957
    %2959 = vmatprep.mubr.bf16.mxu0 %v610
    %2960 = vmatmul.mubr.bf16.gmra.mxu0 %v609
    %v2961 = vpop.f32.mrf.mxu0
    %v2962 = vadd.f32 %v2609, %v2961
    %v2963 = vpop.f32.mrf.mxu0
    %v2964 = vadd.f32 %v2611, %v2963
    %v2965 = vpop.f32.mrf.mxu0
    %v2966 = vadd.f32 %v2613, %v2965
    %v2967 = vpop.f32.mrf.mxu0
    %v2968 = vadd.f32 %v2615, %v2967
    %2969 = vmatprep.mubr.bf16.mxu0 %v617
    %2970 = vmatmul.mubr.bf16.gmra.mxu0 %v616
    %v2971 = vpop.f32.mrf.mxu0
    %v2972 = vadd.f32 %v2619, %v2971
    %v2973 = vpop.f32.mrf.mxu0
    %v2974 = vadd.f32 %v2621, %v2973
    %v2975 = vpop.f32.mrf.mxu0
    %v2976 = vadd.f32 %v2623, %v2975
    %v2977 = vpop.f32.mrf.mxu0
    %v2978 = vadd.f32 %v2625, %v2977
    %2979 = vmatprep.mubr.bf16.mxu0 %v624
    %2980 = vmatmul.mubr.bf16.gmra.mxu0 %v623
    %v2981 = vpop.f32.mrf.mxu0
    %v2982 = vadd.f32 %v2629, %v2981
    %v2983 = vpop.f32.mrf.mxu0
    %v2984 = vadd.f32 %v2631, %v2983
    %v2985 = vpop.f32.mrf.mxu0
    %v2986 = vadd.f32 %v2633, %v2985
    %v2987 = vpop.f32.mrf.mxu0
    %v2988 = vadd.f32 %v2635, %v2987
    %2989 = vmatprep.mubr.bf16.mxu0 %v631
    %2990 = vmatmul.mubr.bf16.gmra.mxu0 %v630
    %v2991 = vpop.f32.mrf.mxu0
    %v2992 = vadd.f32 %v2639, %v2991
    %v2993 = vpop.f32.mrf.mxu0
    %v2994 = vadd.f32 %v2641, %v2993
    %v2995 = vpop.f32.mrf.mxu0
    %v2996 = vadd.f32 %v2643, %v2995
    %v2997 = vpop.f32.mrf.mxu0
    %v2998 = vadd.f32 %v2645, %v2997
    %2999 = vmatprep.mubr.bf16.mxu0 %v638
    %3000 = vmatmul.mubr.bf16.gmra.mxu0 %v637
    %v3001 = vpop.f32.mrf.mxu0
    %v3002 = vadd.f32 %v2649, %v3001
    %v3003 = vpop.f32.mrf.mxu0
    %v3004 = vadd.f32 %v2651, %v3003
    %v3005 = vpop.f32.mrf.mxu0
    %v3006 = vadd.f32 %v2653, %v3005
    %v3007 = vpop.f32.mrf.mxu0
    %v3008 = vadd.f32 %v2655, %v3007
    %3009 = vmatprep.mubr.bf16.mxu0 %v645
    %3010 = vmatmul.mubr.bf16.gmra.mxu0 %v644
    %v3011 = vpop.f32.mrf.mxu0
    %v3012 = vadd.f32 %v2659, %v3011
    %v3013 = vpop.f32.mrf.mxu0
    %v3014 = vadd.f32 %v2661, %v3013
    %v3015 = vpop.f32.mrf.mxu0
    %v3016 = vadd.f32 %v2663, %v3015
    %v3017 = vpop.f32.mrf.mxu0
    %v3018 = vadd.f32 %v2665, %v3017
    %3019 = vmatprep.mubr.bf16.mxu0 %v652
    %3020 = vmatmul.mubr.bf16.gmra.mxu0 %v651
    %v3021 = vpop.f32.mrf.mxu0
    %v3022 = vadd.f32 %v2669, %v3021
    %v3023 = vpop.f32.mrf.mxu0
    %v3024 = vadd.f32 %v2671, %v3023
    %v3025 = vpop.f32.mrf.mxu0
    %v3026 = vadd.f32 %v2673, %v3025
    %v3027 = vpop.f32.mrf.mxu0
    %v3028 = vadd.f32 %v2675, %v3027
    %3029 = vmatprep.mubr.bf16.mxu0 %v659
    %3030 = vmatmul.mubr.bf16.gmra.mxu0 %v658
    %v3031 = vpop.f32.mrf.mxu0
    %v3032 = vadd.f32 %v2679, %v3031
    %v3033 = vpop.f32.mrf.mxu0
    %v3034 = vadd.f32 %v2681, %v3033
    %v3035 = vpop.f32.mrf.mxu0
    %v3036 = vadd.f32 %v2683, %v3035
    %v3037 = vpop.f32.mrf.mxu0
    %v3038 = vadd.f32 %v2685, %v3037
    %3039 = vmatprep.mubr.bf16.mxu0 %v666
    %3040 = vmatmul.mubr.bf16.gmra.mxu0 %v665
    %v3041 = vpop.f32.mrf.mxu0
    %v3042 = vadd.f32 %v2689, %v3041
    %v3043 = vpop.f32.mrf.mxu0
    %v3044 = vadd.f32 %v2691, %v3043
    %v3045 = vpop.f32.mrf.mxu0
    %v3046 = vadd.f32 %v2693, %v3045
    %v3047 = vpop.f32.mrf.mxu0
    %v3048 = vadd.f32 %v2695, %v3047
    %3049 = vmatprep.mubr.bf16.mxu0 %v673
    %3050 = vmatmul.mubr.bf16.gmra.mxu0 %v672
    %v3051 = vpop.f32.mrf.mxu0
    %v3052 = vadd.f32 %v2699, %v3051
    %v3053 = vpop.f32.mrf.mxu0
    %v3054 = vadd.f32 %v2701, %v3053
    %v3055 = vpop.f32.mrf.mxu0
    %v3056 = vadd.f32 %v2703, %v3055
    %v3057 = vpop.f32.mrf.mxu0
    %v3058 = vadd.f32 %v2705, %v3057
    %3059 = vmatprep.mubr.bf16.mxu0 %v680
    %3060 = vmatmul.mubr.bf16.gmra.mxu0 %v679
    %v3061 = vpop.f32.mrf.mxu0
    %v3062 = vadd.f32 %v2709, %v3061
    %v3063 = vpop.f32.mrf.mxu0
    %v3064 = vadd.f32 %v2711, %v3063
    %v3065 = vpop.f32.mrf.mxu0
    %v3066 = vadd.f32 %v2713, %v3065
    %v3067 = vpop.f32.mrf.mxu0
    %v3068 = vadd.f32 %v2715, %v3067
    %3069 = vmatprep.mubr.bf16.mxu0 %v687
    %3070 = vmatmul.mubr.bf16.gmra.mxu0 %v686
    %v3071 = vpop.f32.mrf.mxu0
    %v3072 = vadd.f32 %v2719, %v3071
    %v3073 = vpop.f32.mrf.mxu0
    %v3074 = vadd.f32 %v2721, %v3073
    %v3075 = vpop.f32.mrf.mxu0
    %v3076 = vadd.f32 %v2723, %v3075
    %v3077 = vpop.f32.mrf.mxu0
    %v3078 = vadd.f32 %v2725, %v3077
    %3079 = vmatprep.mubr.bf16.mxu0 %v694
    %3080 = vmatmul.mubr.bf16.gmra.mxu0 %v693
    %v3081 = vpop.f32.mrf.mxu0
    %v3082 = vadd.f32 %v2729, %v3081
    %v3083 = vpop.f32.mrf.mxu0
    %v3084 = vadd.f32 %v2731, %v3083
    %v3085 = vpop.f32.mrf.mxu0
    %v3086 = vadd.f32 %v2733, %v3085
    %v3087 = vpop.f32.mrf.mxu0
    %v3088 = vadd.f32 %v2735, %v3087
    %3089 = vmatprep.mubr.bf16.mxu0 %v701
    %3090 = vmatmul.mubr.bf16.gmra.mxu0 %v700
    %v3091 = vpop.f32.mrf.mxu0
    %v3092 = vadd.f32 %v2739, %v3091
    %v3093 = vpop.f32.mrf.mxu0
    %v3094 = vadd.f32 %v2741, %v3093
    %v3095 = vpop.f32.mrf.mxu0
    %v3096 = vadd.f32 %v2743, %v3095
    %v3097 = vpop.f32.mrf.mxu0
    %v3098 = vadd.f32 %v2745, %v3097
    %3099 = vmatprep.mubr.bf16.mxu0 %v708
    %3100 = vmatmul.mubr.bf16.gmra.mxu0 %v707
    %v3101 = vpop.f32.mrf.mxu0
    %v3102 = vadd.f32 %v2749, %v3101
    %v3103 = vpop.f32.mrf.mxu0
    %v3104 = vadd.f32 %v2751, %v3103
    %v3105 = vpop.f32.mrf.mxu0
    %v3106 = vadd.f32 %v2753, %v3105
    %v3107 = vpop.f32.mrf.mxu0
    %v3108 = vadd.f32 %v2755, %v3107
    %3109 = vdwg.mxu0
    %3110 = vmatprep.subr.bf16.mxu0 %v2013
    %3111 = vmatpush1.bf16.msra.mxu0 %v2012
    %3112 = vmatprep.subr.bf16.mxu0 %v2008
    %3113 = vmatpush1.bf16.msra.mxu0 %v2007
    %3114 = vmatprep.subr.bf16.mxu0 %v2003
    %3115 = vmatpush1.bf16.msra.mxu0 %v2002
    %3116 = vmatprep.subr.bf16.mxu0 %v1998
    %3117 = vmatpush1.bf16.msra.mxu0 %v1997
    %3118 = vmatprep.subr.bf16.mxu0 %v1993
    %3119 = vmatpush1.bf16.msra.mxu0 %v1992
    %3120 = vmatprep.subr.bf16.mxu0 %v1988
    %3121 = vmatpush1.bf16.msra.mxu0 %v1987
    %3122 = vmatprep.subr.bf16.mxu0 %v1983
    %3123 = vmatpush1.bf16.msra.mxu0 %v1982
    %3124 = vmatprep.subr.bf16.mxu0 %v1978
    %3125 = vmatpush1.bf16.msra.mxu0 %v1977
    %3126 = vmatprep.subr.bf16.mxu0 %v2053
    %3127 = vmatpush2.bf16.msra.mxu0 %v2052
    %3128 = vmatprep.subr.bf16.mxu0 %v2048
    %3129 = vmatpush2.bf16.msra.mxu0 %v2047
    %3130 = vmatprep.subr.bf16.mxu0 %v2043
    %3131 = vmatpush2.bf16.msra.mxu0 %v2042
    %3132 = vmatprep.subr.bf16.mxu0 %v2038
    %3133 = vmatpush2.bf16.msra.mxu0 %v2037
    %3134 = vmatprep.subr.bf16.mxu0 %v2033
    %3135 = vmatpush2.bf16.msra.mxu0 %v2032
    %3136 = vmatprep.subr.bf16.mxu0 %v2028
    %3137 = vmatpush2.bf16.msra.mxu0 %v2027
    %3138 = vmatprep.subr.bf16.mxu0 %v2023
    %3139 = vmatpush2.bf16.msra.mxu0 %v2022
    %3140 = vmatprep.subr.bf16.mxu0 %v2018
    %3141 = vmatpush2.bf16.msra.mxu0 %v2017
    %3142 = vmatprep.mubr.bf16.mxu0 %v493
    %3143 = vmatmul.mubr.bf16.gmra.mxu0 %v492
    %v3144 = vpop.f32.mrf.mxu0
    %v3145 = vadd.f32 %v2792, %v3144
    %v3146 = vpop.f32.mrf.mxu0
    %v3147 = vadd.f32 %v2794, %v3146
    %v3148 = vpop.f32.mrf.mxu0
    %v3149 = vadd.f32 %v2796, %v3148
    %v3150 = vpop.f32.mrf.mxu0
    %v3151 = vadd.f32 %v2798, %v3150
    %3152 = vmatprep.mubr.bf16.mxu0 %v500
    %3153 = vmatmul.mubr.bf16.gmra.mxu0 %v499
    %v3154 = vpop.f32.mrf.mxu0
    %v3155 = vadd.f32 %v2802, %v3154
    %v3156 = vpop.f32.mrf.mxu0
    %v3157 = vadd.f32 %v2804, %v3156
    %v3158 = vpop.f32.mrf.mxu0
    %v3159 = vadd.f32 %v2806, %v3158
    %v3160 = vpop.f32.mrf.mxu0
    %v3161 = vadd.f32 %v2808, %v3160
    %3162 = vmatprep.mubr.bf16.mxu0 %v507
    %3163 = vmatmul.mubr.bf16.gmra.mxu0 %v506
    %v3164 = vpop.f32.mrf.mxu0
    %v3165 = vadd.f32 %v2812, %v3164
    %v3166 = vpop.f32.mrf.mxu0
    %v3167 = vadd.f32 %v2814, %v3166
    %v3168 = vpop.f32.mrf.mxu0
    %v3169 = vadd.f32 %v2816, %v3168
    %v3170 = vpop.f32.mrf.mxu0
    %v3171 = vadd.f32 %v2818, %v3170
    %3172 = vmatprep.mubr.bf16.mxu0 %v514
    %3173 = vmatmul.mubr.bf16.gmra.mxu0 %v513
    %v3174 = vpop.f32.mrf.mxu0
    %v3175 = vadd.f32 %v2822, %v3174
    %v3176 = vpop.f32.mrf.mxu0
    %v3177 = vadd.f32 %v2824, %v3176
    %v3178 = vpop.f32.mrf.mxu0
    %v3179 = vadd.f32 %v2826, %v3178
    %v3180 = vpop.f32.mrf.mxu0
    %v3181 = vadd.f32 %v2828, %v3180
    %3182 = vmatprep.mubr.bf16.mxu0 %v521
    %3183 = vmatmul.mubr.bf16.gmra.mxu0 %v520
    %v3184 = vpop.f32.mrf.mxu0
    %v3185 = vadd.f32 %v2832, %v3184
    %v3186 = vpop.f32.mrf.mxu0
    %v3187 = vadd.f32 %v2834, %v3186
    %v3188 = vpop.f32.mrf.mxu0
    %v3189 = vadd.f32 %v2836, %v3188
    %v3190 = vpop.f32.mrf.mxu0
    %v3191 = vadd.f32 %v2838, %v3190
    %3192 = vmatprep.mubr.bf16.mxu0 %v528
    %3193 = vmatmul.mubr.bf16.gmra.mxu0 %v527
    %v3194 = vpop.f32.mrf.mxu0
    %v3195 = vadd.f32 %v2842, %v3194
    %v3196 = vpop.f32.mrf.mxu0
    %v3197 = vadd.f32 %v2844, %v3196
    %v3198 = vpop.f32.mrf.mxu0
    %v3199 = vadd.f32 %v2846, %v3198
    %v3200 = vpop.f32.mrf.mxu0
    %v3201 = vadd.f32 %v2848, %v3200
    %3202 = vmatprep.mubr.bf16.mxu0 %v535
    %3203 = vmatmul.mubr.bf16.gmra.mxu0 %v534
    %v3204 = vpop.f32.mrf.mxu0
    %v3205 = vadd.f32 %v2852, %v3204
    %v3206 = vpop.f32.mrf.mxu0
    %v3207 = vadd.f32 %v2854, %v3206
    %v3208 = vpop.f32.mrf.mxu0
    %v3209 = vadd.f32 %v2856, %v3208
    %v3210 = vpop.f32.mrf.mxu0
    %v3211 = vadd.f32 %v2858, %v3210
    %3212 = vmatprep.mubr.bf16.mxu0 %v542
    %3213 = vmatmul.mubr.bf16.gmra.mxu0 %v541
    %v3214 = vpop.f32.mrf.mxu0
    %v3215 = vadd.f32 %v2862, %v3214
    %v3216 = vpop.f32.mrf.mxu0
    %v3217 = vadd.f32 %v2864, %v3216
    %v3218 = vpop.f32.mrf.mxu0
    %v3219 = vadd.f32 %v2866, %v3218
    %v3220 = vpop.f32.mrf.mxu0
    %v3221 = vadd.f32 %v2868, %v3220
    %3222 = vmatprep.mubr.bf16.mxu0 %v549
    %3223 = vmatmul.mubr.bf16.gmra.mxu0 %v548
    %v3224 = vpop.f32.mrf.mxu0
    %v3225 = vadd.f32 %v2872, %v3224
    %v3226 = vpop.f32.mrf.mxu0
    %v3227 = vadd.f32 %v2874, %v3226
    %v3228 = vpop.f32.mrf.mxu0
    %v3229 = vadd.f32 %v2876, %v3228
    %v3230 = vpop.f32.mrf.mxu0
    %v3231 = vadd.f32 %v2878, %v3230
    %3232 = vmatprep.mubr.bf16.mxu0 %v556
    %3233 = vmatmul.mubr.bf16.gmra.mxu0 %v555
    %v3234 = vpop.f32.mrf.mxu0
    %v3235 = vadd.f32 %v2882, %v3234
    %v3236 = vpop.f32.mrf.mxu0
    %v3237 = vadd.f32 %v2884, %v3236
    %v3238 = vpop.f32.mrf.mxu0
    %v3239 = vadd.f32 %v2886, %v3238
    %v3240 = vpop.f32.mrf.mxu0
    %v3241 = vadd.f32 %v2888, %v3240
    %3242 = vmatprep.mubr.bf16.mxu0 %v563
    %3243 = vmatmul.mubr.bf16.gmra.mxu0 %v562
    %v3244 = vpop.f32.mrf.mxu0
    %v3245 = vadd.f32 %v2892, %v3244
    %v3246 = vpop.f32.mrf.mxu0
    %v3247 = vadd.f32 %v2894, %v3246
    %v3248 = vpop.f32.mrf.mxu0
    %v3249 = vadd.f32 %v2896, %v3248
    %v3250 = vpop.f32.mrf.mxu0
    %v3251 = vadd.f32 %v2898, %v3250
    %3252 = vmatprep.mubr.bf16.mxu0 %v570
    %3253 = vmatmul.mubr.bf16.gmra.mxu0 %v569
    %v3254 = vpop.f32.mrf.mxu0
    %v3255 = vadd.f32 %v2902, %v3254
    %v3256 = vpop.f32.mrf.mxu0
    %v3257 = vadd.f32 %v2904, %v3256
    %v3258 = vpop.f32.mrf.mxu0
    %v3259 = vadd.f32 %v2906, %v3258
    %v3260 = vpop.f32.mrf.mxu0
    %v3261 = vadd.f32 %v2908, %v3260
    %3262 = vmatprep.mubr.bf16.mxu0 %v577
    %3263 = vmatmul.mubr.bf16.gmra.mxu0 %v576
    %v3264 = vpop.f32.mrf.mxu0
    %v3265 = vadd.f32 %v2912, %v3264
    %v3266 = vpop.f32.mrf.mxu0
    %v3267 = vadd.f32 %v2914, %v3266
    %v3268 = vpop.f32.mrf.mxu0
    %v3269 = vadd.f32 %v2916, %v3268
    %v3270 = vpop.f32.mrf.mxu0
    %v3271 = vadd.f32 %v2918, %v3270
    %3272 = vmatprep.mubr.bf16.mxu0 %v584
    %3273 = vmatmul.mubr.bf16.gmra.mxu0 %v583
    %v3274 = vpop.f32.mrf.mxu0
    %v3275 = vadd.f32 %v2922, %v3274
    %v3276 = vpop.f32.mrf.mxu0
    %v3277 = vadd.f32 %v2924, %v3276
    %v3278 = vpop.f32.mrf.mxu0
    %v3279 = vadd.f32 %v2926, %v3278
    %v3280 = vpop.f32.mrf.mxu0
    %v3281 = vadd.f32 %v2928, %v3280
    %3282 = vmatprep.mubr.bf16.mxu0 %v591
    %3283 = vmatmul.mubr.bf16.gmra.mxu0 %v590
    %v3284 = vpop.f32.mrf.mxu0
    %v3285 = vadd.f32 %v2932, %v3284
    %v3286 = vpop.f32.mrf.mxu0
    %v3287 = vadd.f32 %v2934, %v3286
    %v3288 = vpop.f32.mrf.mxu0
    %v3289 = vadd.f32 %v2936, %v3288
    %v3290 = vpop.f32.mrf.mxu0
    %v3291 = vadd.f32 %v2938, %v3290
    %3292 = vmatprep.mubr.bf16.mxu0 %v598
    %3293 = vmatmul.mubr.bf16.gmra.mxu0 %v597
    %v3294 = vpop.f32.mrf.mxu0
    %v3295 = vadd.f32 %v2942, %v3294
    %v3296 = vpop.f32.mrf.mxu0
    %v3297 = vadd.f32 %v2944, %v3296
    %v3298 = vpop.f32.mrf.mxu0
    %v3299 = vadd.f32 %v2946, %v3298
    %v3300 = vpop.f32.mrf.mxu0
    %v3301 = vadd.f32 %v2948, %v3300
    %3302 = vmatprep.mubr.bf16.mxu0 %v605
    %3303 = vmatmul.mubr.bf16.gmra.mxu0 %v604
    %v3304 = vpop.f32.mrf.mxu0
    %v3305 = vadd.f32 %v2952, %v3304
    %v3306 = vpop.f32.mrf.mxu0
    %v3307 = vadd.f32 %v2954, %v3306
    %v3308 = vpop.f32.mrf.mxu0
    %v3309 = vadd.f32 %v2956, %v3308
    %v3310 = vpop.f32.mrf.mxu0
    %v3311 = vadd.f32 %v2958, %v3310
    %3312 = vmatprep.mubr.bf16.mxu0 %v612
    %3313 = vmatmul.mubr.bf16.gmra.mxu0 %v611
    %v3314 = vpop.f32.mrf.mxu0
    %v3315 = vadd.f32 %v2962, %v3314
    %v3316 = vpop.f32.mrf.mxu0
    %v3317 = vadd.f32 %v2964, %v3316
    %v3318 = vpop.f32.mrf.mxu0
    %v3319 = vadd.f32 %v2966, %v3318
    %v3320 = vpop.f32.mrf.mxu0
    %v3321 = vadd.f32 %v2968, %v3320
    %3322 = vmatprep.mubr.bf16.mxu0 %v619
    %3323 = vmatmul.mubr.bf16.gmra.mxu0 %v618
    %v3324 = vpop.f32.mrf.mxu0
    %v3325 = vadd.f32 %v2972, %v3324
    %v3326 = vpop.f32.mrf.mxu0
    %v3327 = vadd.f32 %v2974, %v3326
    %v3328 = vpop.f32.mrf.mxu0
    %v3329 = vadd.f32 %v2976, %v3328
    %v3330 = vpop.f32.mrf.mxu0
    %v3331 = vadd.f32 %v2978, %v3330
    %3332 = vmatprep.mubr.bf16.mxu0 %v626
    %3333 = vmatmul.mubr.bf16.gmra.mxu0 %v625
    %v3334 = vpop.f32.mrf.mxu0
    %v3335 = vadd.f32 %v2982, %v3334
    %v3336 = vpop.f32.mrf.mxu0
    %v3337 = vadd.f32 %v2984, %v3336
    %v3338 = vpop.f32.mrf.mxu0
    %v3339 = vadd.f32 %v2986, %v3338
    %v3340 = vpop.f32.mrf.mxu0
    %v3341 = vadd.f32 %v2988, %v3340
    %3342 = vmatprep.mubr.bf16.mxu0 %v633
    %3343 = vmatmul.mubr.bf16.gmra.mxu0 %v632
    %v3344 = vpop.f32.mrf.mxu0
    %v3345 = vadd.f32 %v2992, %v3344
    %v3346 = vpop.f32.mrf.mxu0
    %v3347 = vadd.f32 %v2994, %v3346
    %v3348 = vpop.f32.mrf.mxu0
    %v3349 = vadd.f32 %v2996, %v3348
    %v3350 = vpop.f32.mrf.mxu0
    %v3351 = vadd.f32 %v2998, %v3350
    %3352 = vmatprep.mubr.bf16.mxu0 %v640
    %3353 = vmatmul.mubr.bf16.gmra.mxu0 %v639
    %v3354 = vpop.f32.mrf.mxu0
    %v3355 = vadd.f32 %v3002, %v3354
    %v3356 = vpop.f32.mrf.mxu0
    %v3357 = vadd.f32 %v3004, %v3356
    %v3358 = vpop.f32.mrf.mxu0
    %v3359 = vadd.f32 %v3006, %v3358
    %v3360 = vpop.f32.mrf.mxu0
    %v3361 = vadd.f32 %v3008, %v3360
    %3362 = vmatprep.mubr.bf16.mxu0 %v647
    %3363 = vmatmul.mubr.bf16.gmra.mxu0 %v646
    %v3364 = vpop.f32.mrf.mxu0
    %v3365 = vadd.f32 %v3012, %v3364
    %v3366 = vpop.f32.mrf.mxu0
    %v3367 = vadd.f32 %v3014, %v3366
    %v3368 = vpop.f32.mrf.mxu0
    %v3369 = vadd.f32 %v3016, %v3368
    %v3370 = vpop.f32.mrf.mxu0
    %v3371 = vadd.f32 %v3018, %v3370
    %3372 = vmatprep.mubr.bf16.mxu0 %v654
    %3373 = vmatmul.mubr.bf16.gmra.mxu0 %v653
    %v3374 = vpop.f32.mrf.mxu0
    %v3375 = vadd.f32 %v3022, %v3374
    %v3376 = vpop.f32.mrf.mxu0
    %v3377 = vadd.f32 %v3024, %v3376
    %v3378 = vpop.f32.mrf.mxu0
    %v3379 = vadd.f32 %v3026, %v3378
    %v3380 = vpop.f32.mrf.mxu0
    %v3381 = vadd.f32 %v3028, %v3380
    %3382 = vmatprep.mubr.bf16.mxu0 %v661
    %3383 = vmatmul.mubr.bf16.gmra.mxu0 %v660
    %v3384 = vpop.f32.mrf.mxu0
    %v3385 = vadd.f32 %v3032, %v3384
    %v3386 = vpop.f32.mrf.mxu0
    %v3387 = vadd.f32 %v3034, %v3386
    %v3388 = vpop.f32.mrf.mxu0
    %v3389 = vadd.f32 %v3036, %v3388
    %v3390 = vpop.f32.mrf.mxu0
    %v3391 = vadd.f32 %v3038, %v3390
    %3392 = vmatprep.mubr.bf16.mxu0 %v668
    %3393 = vmatmul.mubr.bf16.gmra.mxu0 %v667
    %v3394 = vpop.f32.mrf.mxu0
    %v3395 = vadd.f32 %v3042, %v3394
    %v3396 = vpop.f32.mrf.mxu0
    %v3397 = vadd.f32 %v3044, %v3396
    %v3398 = vpop.f32.mrf.mxu0
    %v3399 = vadd.f32 %v3046, %v3398
    %v3400 = vpop.f32.mrf.mxu0
    %v3401 = vadd.f32 %v3048, %v3400
    %3402 = vmatprep.mubr.bf16.mxu0 %v675
    %3403 = vmatmul.mubr.bf16.gmra.mxu0 %v674
    %v3404 = vpop.f32.mrf.mxu0
    %v3405 = vadd.f32 %v3052, %v3404
    %v3406 = vpop.f32.mrf.mxu0
    %v3407 = vadd.f32 %v3054, %v3406
    %v3408 = vpop.f32.mrf.mxu0
    %v3409 = vadd.f32 %v3056, %v3408
    %v3410 = vpop.f32.mrf.mxu0
    %v3411 = vadd.f32 %v3058, %v3410
    %3412 = vmatprep.mubr.bf16.mxu0 %v682
    %3413 = vmatmul.mubr.bf16.gmra.mxu0 %v681
    %v3414 = vpop.f32.mrf.mxu0
    %v3415 = vadd.f32 %v3062, %v3414
    %v3416 = vpop.f32.mrf.mxu0
    %v3417 = vadd.f32 %v3064, %v3416
    %v3418 = vpop.f32.mrf.mxu0
    %v3419 = vadd.f32 %v3066, %v3418
    %v3420 = vpop.f32.mrf.mxu0
    %v3421 = vadd.f32 %v3068, %v3420
    %3422 = vmatprep.mubr.bf16.mxu0 %v689
    %3423 = vmatmul.mubr.bf16.gmra.mxu0 %v688
    %v3424 = vpop.f32.mrf.mxu0
    %v3425 = vadd.f32 %v3072, %v3424
    %v3426 = vpop.f32.mrf.mxu0
    %v3427 = vadd.f32 %v3074, %v3426
    %v3428 = vpop.f32.mrf.mxu0
    %v3429 = vadd.f32 %v3076, %v3428
    %v3430 = vpop.f32.mrf.mxu0
    %v3431 = vadd.f32 %v3078, %v3430
    %3432 = vmatprep.mubr.bf16.mxu0 %v696
    %3433 = vmatmul.mubr.bf16.gmra.mxu0 %v695
    %v3434 = vpop.f32.mrf.mxu0
    %v3435 = vadd.f32 %v3082, %v3434
    %v3436 = vpop.f32.mrf.mxu0
    %v3437 = vadd.f32 %v3084, %v3436
    %v3438 = vpop.f32.mrf.mxu0
    %v3439 = vadd.f32 %v3086, %v3438
    %v3440 = vpop.f32.mrf.mxu0
    %v3441 = vadd.f32 %v3088, %v3440
    %3442 = vmatprep.mubr.bf16.mxu0 %v703
    %3443 = vmatmul.mubr.bf16.gmra.mxu0 %v702
    %v3444 = vpop.f32.mrf.mxu0
    %v3445 = vadd.f32 %v3092, %v3444
    %v3446 = vpop.f32.mrf.mxu0
    %v3447 = vadd.f32 %v3094, %v3446
    %v3448 = vpop.f32.mrf.mxu0
    %v3449 = vadd.f32 %v3096, %v3448
    %v3450 = vpop.f32.mrf.mxu0
    %v3451 = vadd.f32 %v3098, %v3450
    %3452 = vmatprep.mubr.bf16.mxu0 %v710
    %3453 = vmatmul.mubr.bf16.gmra.mxu0 %v709
    %v3454 = vpop.f32.mrf.mxu0
    %v3455 = vadd.f32 %v3102, %v3454
    %v3456 = vpop.f32.mrf.mxu0
    %v3457 = vadd.f32 %v3104, %v3456
    %v3458 = vpop.f32.mrf.mxu0
    %v3459 = vadd.f32 %v3106, %v3458
    %v3460 = vpop.f32.mrf.mxu0
    %v3461 = vadd.f32 %v3108, %v3460
    %3462 = vdwg.mxu0
    %3463 = vmatprep.subr.bf16.mxu0 0
    %3464 = vmatpush1.bf16.msra.mxu0 0
    %3465 = vmatprep.subr.bf16.mxu0 0
    %3466 = vmatpush1.bf16.msra.mxu0 0
    %3467 = vmatprep.subr.bf16.mxu0 0
    %3468 = vmatpush1.bf16.msra.mxu0 0
    %3469 = vmatprep.subr.bf16.mxu0 0
    %3470 = vmatpush1.bf16.msra.mxu0 0
    %3471 = vmatprep.subr.bf16.mxu0 0
    %3472 = vmatpush1.bf16.msra.mxu0 0
    %3473 = vmatprep.subr.bf16.mxu0 0
    %3474 = vmatpush1.bf16.msra.mxu0 0
    %3475 = vmatprep.subr.bf16.mxu0 0
    %3476 = vmatpush1.bf16.msra.mxu0 0
    %3477 = vmatprep.subr.bf16.mxu0 %v2058
    %3478 = vmatpush1.bf16.msra.mxu0 %v2057
    %3479 = vmatprep.subr.bf16.mxu0 0
    %3480 = vmatpush2.bf16.msra.mxu0 0
    %3481 = vmatprep.subr.bf16.mxu0 0
    %3482 = vmatpush2.bf16.msra.mxu0 0
    %3483 = vmatprep.subr.bf16.mxu0 0
    %3484 = vmatpush2.bf16.msra.mxu0 0
    %3485 = vmatprep.subr.bf16.mxu0 0
    %3486 = vmatpush2.bf16.msra.mxu0 0
    %3487 = vmatprep.subr.bf16.mxu0 0
    %3488 = vmatpush2.bf16.msra.mxu0 0
    %3489 = vmatprep.subr.bf16.mxu0 0
    %3490 = vmatpush2.bf16.msra.mxu0 0
    %3491 = vmatprep.subr.bf16.mxu0 0
    %3492 = vmatpush2.bf16.msra.mxu0 0
    %3493 = vmatprep.subr.bf16.mxu0 0
    %3494 = vmatpush2.bf16.msra.mxu0 0
    %3495 = vmatprep.mubr.bf16.mxu0 0
    %3496 = vmatmul.mubr.bf16.gmra.mxu0 %v2309
    %v3497 = vpop.f32.mrf.mxu0
    %v3498 = vadd.f32 %v3145, %v3497
    %v3499 = vpop.f32.mrf.mxu0
    %v3500 = vadd.f32 %v3147, %v3499
    %v3501 = vpop.f32.mrf.mxu0
    %v3502 = vadd.f32 %v3149, %v3501
    %v3503 = vpop.f32.mrf.mxu0
    %v3504 = vadd.f32 %v3151, %v3503
    %3505 = vmatprep.mubr.bf16.mxu0 0
    %3506 = vmatmul.mubr.bf16.gmra.mxu0 %v2312
    %v3507 = vpop.f32.mrf.mxu0
    %v3508 = vadd.f32 %v3155, %v3507
    %v3509 = vpop.f32.mrf.mxu0
    %v3510 = vadd.f32 %v3157, %v3509
    %v3511 = vpop.f32.mrf.mxu0
    %v3512 = vadd.f32 %v3159, %v3511
    %v3513 = vpop.f32.mrf.mxu0
    %v3514 = vadd.f32 %v3161, %v3513
    %3515 = vmatprep.mubr.bf16.mxu0 0
    %3516 = vmatmul.mubr.bf16.gmra.mxu0 %v2315
    %v3517 = vpop.f32.mrf.mxu0
    %v3518 = vadd.f32 %v3165, %v3517
    %v3519 = vpop.f32.mrf.mxu0
    %v3520 = vadd.f32 %v3167, %v3519
    %v3521 = vpop.f32.mrf.mxu0
    %v3522 = vadd.f32 %v3169, %v3521
    %v3523 = vpop.f32.mrf.mxu0
    %v3524 = vadd.f32 %v3171, %v3523
    %3525 = vmatprep.mubr.bf16.mxu0 0
    %3526 = vmatmul.mubr.bf16.gmra.mxu0 %v2318
    %v3527 = vpop.f32.mrf.mxu0
    %v3528 = vadd.f32 %v3175, %v3527
    %v3529 = vpop.f32.mrf.mxu0
    %v3530 = vadd.f32 %v3177, %v3529
    %v3531 = vpop.f32.mrf.mxu0
    %v3532 = vadd.f32 %v3179, %v3531
    %v3533 = vpop.f32.mrf.mxu0
    %v3534 = vadd.f32 %v3181, %v3533
    %3535 = vmatprep.mubr.bf16.mxu0 0
    %3536 = vmatmul.mubr.bf16.gmra.mxu0 %v2321
    %v3537 = vpop.f32.mrf.mxu0
    %v3538 = vadd.f32 %v3185, %v3537
    %v3539 = vpop.f32.mrf.mxu0
    %v3540 = vadd.f32 %v3187, %v3539
    %v3541 = vpop.f32.mrf.mxu0
    %v3542 = vadd.f32 %v3189, %v3541
    %v3543 = vpop.f32.mrf.mxu0
    %v3544 = vadd.f32 %v3191, %v3543
    %3545 = vmatprep.mubr.bf16.mxu0 0
    %3546 = vmatmul.mubr.bf16.gmra.mxu0 %v2324
    %v3547 = vpop.f32.mrf.mxu0
    %v3548 = vadd.f32 %v3195, %v3547
    %v3549 = vpop.f32.mrf.mxu0
    %v3550 = vadd.f32 %v3197, %v3549
    %v3551 = vpop.f32.mrf.mxu0
    %v3552 = vadd.f32 %v3199, %v3551
    %v3553 = vpop.f32.mrf.mxu0
    %v3554 = vadd.f32 %v3201, %v3553
    %3555 = vmatprep.mubr.bf16.mxu0 0
    %3556 = vmatmul.mubr.bf16.gmra.mxu0 %v2327
    %v3557 = vpop.f32.mrf.mxu0
    %v3558 = vadd.f32 %v3205, %v3557
    %v3559 = vpop.f32.mrf.mxu0
    %v3560 = vadd.f32 %v3207, %v3559
    %v3561 = vpop.f32.mrf.mxu0
    %v3562 = vadd.f32 %v3209, %v3561
    %v3563 = vpop.f32.mrf.mxu0
    %v3564 = vadd.f32 %v3211, %v3563
    %3565 = vmatprep.mubr.bf16.mxu0 0
    %3566 = vmatmul.mubr.bf16.gmra.mxu0 %v2330
    %v3567 = vpop.f32.mrf.mxu0
    %v3568 = vadd.f32 %v3215, %v3567
    %v3569 = vpop.f32.mrf.mxu0
    %v3570 = vadd.f32 %v3217, %v3569
    %v3571 = vpop.f32.mrf.mxu0
    %v3572 = vadd.f32 %v3219, %v3571
    %v3573 = vpop.f32.mrf.mxu0
    %v3574 = vadd.f32 %v3221, %v3573
    %3575 = vmatprep.mubr.bf16.mxu0 0
    %3576 = vmatmul.mubr.bf16.gmra.mxu0 %v2333
    %v3577 = vpop.f32.mrf.mxu0
    %v3578 = vadd.f32 %v3225, %v3577
    %v3579 = vpop.f32.mrf.mxu0
    %v3580 = vadd.f32 %v3227, %v3579
    %v3581 = vpop.f32.mrf.mxu0
    %v3582 = vadd.f32 %v3229, %v3581
    %v3583 = vpop.f32.mrf.mxu0
    %v3584 = vadd.f32 %v3231, %v3583
    %3585 = vmatprep.mubr.bf16.mxu0 0
    %3586 = vmatmul.mubr.bf16.gmra.mxu0 %v2336
    %v3587 = vpop.f32.mrf.mxu0
    %v3588 = vadd.f32 %v3235, %v3587
    %v3589 = vpop.f32.mrf.mxu0
    %v3590 = vadd.f32 %v3237, %v3589
    %v3591 = vpop.f32.mrf.mxu0
    %v3592 = vadd.f32 %v3239, %v3591
    %v3593 = vpop.f32.mrf.mxu0
    %v3594 = vadd.f32 %v3241, %v3593
    %3595 = vmatprep.mubr.bf16.mxu0 0
    %3596 = vmatmul.mubr.bf16.gmra.mxu0 %v2339
    %v3597 = vpop.f32.mrf.mxu0
    %v3598 = vadd.f32 %v3245, %v3597
    %v3599 = vpop.f32.mrf.mxu0
    %v3600 = vadd.f32 %v3247, %v3599
    %v3601 = vpop.f32.mrf.mxu0
    %v3602 = vadd.f32 %v3249, %v3601
    %v3603 = vpop.f32.mrf.mxu0
    %v3604 = vadd.f32 %v3251, %v3603
    %3605 = vmatprep.mubr.bf16.mxu0 0
    %3606 = vmatmul.mubr.bf16.gmra.mxu0 %v2342
    %v3607 = vpop.f32.mrf.mxu0
    %v3608 = vadd.f32 %v3255, %v3607
    %v3609 = vpop.f32.mrf.mxu0
    %v3610 = vadd.f32 %v3257, %v3609
    %v3611 = vpop.f32.mrf.mxu0
    %v3612 = vadd.f32 %v3259, %v3611
    %v3613 = vpop.f32.mrf.mxu0
    %v3614 = vadd.f32 %v3261, %v3613
    %3615 = vmatprep.mubr.bf16.mxu0 0
    %3616 = vmatmul.mubr.bf16.gmra.mxu0 %v2345
    %v3617 = vpop.f32.mrf.mxu0
    %v3618 = vadd.f32 %v3265, %v3617
    %v3619 = vpop.f32.mrf.mxu0
    %v3620 = vadd.f32 %v3267, %v3619
    %v3621 = vpop.f32.mrf.mxu0
    %v3622 = vadd.f32 %v3269, %v3621
    %v3623 = vpop.f32.mrf.mxu0
    %v3624 = vadd.f32 %v3271, %v3623
    %3625 = vmatprep.mubr.bf16.mxu0 0
    %3626 = vmatmul.mubr.bf16.gmra.mxu0 %v2348
    %v3627 = vpop.f32.mrf.mxu0
    %v3628 = vadd.f32 %v3275, %v3627
    %v3629 = vpop.f32.mrf.mxu0
    %v3630 = vadd.f32 %v3277, %v3629
    %v3631 = vpop.f32.mrf.mxu0
    %v3632 = vadd.f32 %v3279, %v3631
    %v3633 = vpop.f32.mrf.mxu0
    %v3634 = vadd.f32 %v3281, %v3633
    %3635 = vmatprep.mubr.bf16.mxu0 0
    %3636 = vmatmul.mubr.bf16.gmra.mxu0 %v2351
    %v3637 = vpop.f32.mrf.mxu0
    %v3638 = vadd.f32 %v3285, %v3637
    %v3639 = vpop.f32.mrf.mxu0
    %v3640 = vadd.f32 %v3287, %v3639
    %v3641 = vpop.f32.mrf.mxu0
    %v3642 = vadd.f32 %v3289, %v3641
    %v3643 = vpop.f32.mrf.mxu0
    %v3644 = vadd.f32 %v3291, %v3643
    %3645 = vmatprep.mubr.bf16.mxu0 0
    %3646 = vmatmul.mubr.bf16.gmra.mxu0 %v2354
    %v3647 = vpop.f32.mrf.mxu0
    %v3648 = vadd.f32 %v3295, %v3647
    %v3649 = vpop.f32.mrf.mxu0
    %v3650 = vadd.f32 %v3297, %v3649
    %v3651 = vpop.f32.mrf.mxu0
    %v3652 = vadd.f32 %v3299, %v3651
    %v3653 = vpop.f32.mrf.mxu0
    %v3654 = vadd.f32 %v3301, %v3653
    %3655 = vmatprep.mubr.bf16.mxu0 0
    %3656 = vmatmul.mubr.bf16.gmra.mxu0 %v2357
    %v3657 = vpop.f32.mrf.mxu0
    %v3658 = vadd.f32 %v3305, %v3657
    %v3659 = vpop.f32.mrf.mxu0
    %v3660 = vadd.f32 %v3307, %v3659
    %v3661 = vpop.f32.mrf.mxu0
    %v3662 = vadd.f32 %v3309, %v3661
    %v3663 = vpop.f32.mrf.mxu0
    %v3664 = vadd.f32 %v3311, %v3663
    %3665 = vmatprep.mubr.bf16.mxu0 0
    %3666 = vmatmul.mubr.bf16.gmra.mxu0 %v2360
    %v3667 = vpop.f32.mrf.mxu0
    %v3668 = vadd.f32 %v3315, %v3667
    %v3669 = vpop.f32.mrf.mxu0
    %v3670 = vadd.f32 %v3317, %v3669
    %v3671 = vpop.f32.mrf.mxu0
    %v3672 = vadd.f32 %v3319, %v3671
    %v3673 = vpop.f32.mrf.mxu0
    %v3674 = vadd.f32 %v3321, %v3673
    %3675 = vmatprep.mubr.bf16.mxu0 0
    %3676 = vmatmul.mubr.bf16.gmra.mxu0 %v2363
    %v3677 = vpop.f32.mrf.mxu0
    %v3678 = vadd.f32 %v3325, %v3677
    %v3679 = vpop.f32.mrf.mxu0
    %v3680 = vadd.f32 %v3327, %v3679
    %v3681 = vpop.f32.mrf.mxu0
    %v3682 = vadd.f32 %v3329, %v3681
    %v3683 = vpop.f32.mrf.mxu0
    %v3684 = vadd.f32 %v3331, %v3683
    %3685 = vmatprep.mubr.bf16.mxu0 0
    %3686 = vmatmul.mubr.bf16.gmra.mxu0 %v2366
    %v3687 = vpop.f32.mrf.mxu0
    %v3688 = vadd.f32 %v3335, %v3687
    %v3689 = vpop.f32.mrf.mxu0
    %v3690 = vadd.f32 %v3337, %v3689
    %v3691 = vpop.f32.mrf.mxu0
    %v3692 = vadd.f32 %v3339, %v3691
    %v3693 = vpop.f32.mrf.mxu0
    %v3694 = vadd.f32 %v3341, %v3693
    %3695 = vmatprep.mubr.bf16.mxu0 0
    %3696 = vmatmul.mubr.bf16.gmra.mxu0 %v2369
    %v3697 = vpop.f32.mrf.mxu0
    %v3698 = vadd.f32 %v3345, %v3697
    %v3699 = vpop.f32.mrf.mxu0
    %v3700 = vadd.f32 %v3347, %v3699
    %v3701 = vpop.f32.mrf.mxu0
    %v3702 = vadd.f32 %v3349, %v3701
    %v3703 = vpop.f32.mrf.mxu0
    %v3704 = vadd.f32 %v3351, %v3703
    %3705 = vmatprep.mubr.bf16.mxu0 0
    %3706 = vmatmul.mubr.bf16.gmra.mxu0 %v2372
    %v3707 = vpop.f32.mrf.mxu0
    %v3708 = vadd.f32 %v3355, %v3707
    %v3709 = vpop.f32.mrf.mxu0
    %v3710 = vadd.f32 %v3357, %v3709
    %v3711 = vpop.f32.mrf.mxu0
    %v3712 = vadd.f32 %v3359, %v3711
    %v3713 = vpop.f32.mrf.mxu0
    %v3714 = vadd.f32 %v3361, %v3713
    %3715 = vmatprep.mubr.bf16.mxu0 0
    %3716 = vmatmul.mubr.bf16.gmra.mxu0 %v2375
    %v3717 = vpop.f32.mrf.mxu0
    %v3718 = vadd.f32 %v3365, %v3717
    %v3719 = vpop.f32.mrf.mxu0
    %v3720 = vadd.f32 %v3367, %v3719
    %v3721 = vpop.f32.mrf.mxu0
    %v3722 = vadd.f32 %v3369, %v3721
    %v3723 = vpop.f32.mrf.mxu0
    %v3724 = vadd.f32 %v3371, %v3723
    %3725 = vmatprep.mubr.bf16.mxu0 0
    %3726 = vmatmul.mubr.bf16.gmra.mxu0 %v2378
    %v3727 = vpop.f32.mrf.mxu0
    %v3728 = vadd.f32 %v3375, %v3727
    %v3729 = vpop.f32.mrf.mxu0
    %v3730 = vadd.f32 %v3377, %v3729
    %v3731 = vpop.f32.mrf.mxu0
    %v3732 = vadd.f32 %v3379, %v3731
    %v3733 = vpop.f32.mrf.mxu0
    %v3734 = vadd.f32 %v3381, %v3733
    %3735 = vmatprep.mubr.bf16.mxu0 0
    %3736 = vmatmul.mubr.bf16.gmra.mxu0 %v2381
    %v3737 = vpop.f32.mrf.mxu0
    %v3738 = vadd.f32 %v3385, %v3737
    %v3739 = vpop.f32.mrf.mxu0
    %v3740 = vadd.f32 %v3387, %v3739
    %v3741 = vpop.f32.mrf.mxu0
    %v3742 = vadd.f32 %v3389, %v3741
    %v3743 = vpop.f32.mrf.mxu0
    %v3744 = vadd.f32 %v3391, %v3743
    %3745 = vmatprep.mubr.bf16.mxu0 0
    %3746 = vmatmul.mubr.bf16.gmra.mxu0 %v2384
    %v3747 = vpop.f32.mrf.mxu0
    %v3748 = vadd.f32 %v3395, %v3747
    %v3749 = vpop.f32.mrf.mxu0
    %v3750 = vadd.f32 %v3397, %v3749
    %v3751 = vpop.f32.mrf.mxu0
    %v3752 = vadd.f32 %v3399, %v3751
    %v3753 = vpop.f32.mrf.mxu0
    %v3754 = vadd.f32 %v3401, %v3753
    %3755 = vmatprep.mubr.bf16.mxu0 0
    %3756 = vmatmul.mubr.bf16.gmra.mxu0 %v2387
    %v3757 = vpop.f32.mrf.mxu0
    %v3758 = vadd.f32 %v3405, %v3757
    %v3759 = vpop.f32.mrf.mxu0
    %v3760 = vadd.f32 %v3407, %v3759
    %v3761 = vpop.f32.mrf.mxu0
    %v3762 = vadd.f32 %v3409, %v3761
    %v3763 = vpop.f32.mrf.mxu0
    %v3764 = vadd.f32 %v3411, %v3763
    %3765 = vmatprep.mubr.bf16.mxu0 0
    %3766 = vmatmul.mubr.bf16.gmra.mxu0 %v2390
    %v3767 = vpop.f32.mrf.mxu0
    %v3768 = vadd.f32 %v3415, %v3767
    %v3769 = vpop.f32.mrf.mxu0
    %v3770 = vadd.f32 %v3417, %v3769
    %v3771 = vpop.f32.mrf.mxu0
    %v3772 = vadd.f32 %v3419, %v3771
    %v3773 = vpop.f32.mrf.mxu0
    %v3774 = vadd.f32 %v3421, %v3773
    %3775 = vmatprep.mubr.bf16.mxu0 0
    %3776 = vmatmul.mubr.bf16.gmra.mxu0 %v2393
    %v3777 = vpop.f32.mrf.mxu0
    %v3778 = vadd.f32 %v3425, %v3777
    %v3779 = vpop.f32.mrf.mxu0
    %v3780 = vadd.f32 %v3427, %v3779
    %v3781 = vpop.f32.mrf.mxu0
    %v3782 = vadd.f32 %v3429, %v3781
    %v3783 = vpop.f32.mrf.mxu0
    %v3784 = vadd.f32 %v3431, %v3783
    %3785 = vmatprep.mubr.bf16.mxu0 0
    %3786 = vmatmul.mubr.bf16.gmra.mxu0 %v2396
    %v3787 = vpop.f32.mrf.mxu0
    %v3788 = vadd.f32 %v3435, %v3787
    %v3789 = vpop.f32.mrf.mxu0
    %v3790 = vadd.f32 %v3437, %v3789
    %v3791 = vpop.f32.mrf.mxu0
    %v3792 = vadd.f32 %v3439, %v3791
    %v3793 = vpop.f32.mrf.mxu0
    %v3794 = vadd.f32 %v3441, %v3793
    %3795 = vmatprep.mubr.bf16.mxu0 0
    %3796 = vmatmul.mubr.bf16.gmra.mxu0 %v2399
    %v3797 = vpop.f32.mrf.mxu0
    %v3798 = vadd.f32 %v3445, %v3797
    %v3799 = vpop.f32.mrf.mxu0
    %v3800 = vadd.f32 %v3447, %v3799
    %v3801 = vpop.f32.mrf.mxu0
    %v3802 = vadd.f32 %v3449, %v3801
    %v3803 = vpop.f32.mrf.mxu0
    %v3804 = vadd.f32 %v3451, %v3803
    %3805 = vmatprep.mubr.bf16.mxu0 0
    %3806 = vmatmul.mubr.bf16.gmra.mxu0 %v2402
    %v3807 = vpop.f32.mrf.mxu0
    %v3808 = vadd.f32 %v3455, %v3807
    %v3809 = vpop.f32.mrf.mxu0
    %v3810 = vadd.f32 %v3457, %v3809
    %v3811 = vpop.f32.mrf.mxu0
    %v3812 = vadd.f32 %v3459, %v3811
    %v3813 = vpop.f32.mrf.mxu0
    %v3814 = vadd.f32 %v3461, %v3813
    %3815 = vdwg.mxu0
    %3816 = vmatprep.subr.bf16.mxu0 %v1855
    %3817 = vmatpush1.bf16.msra.mxu0 %v1854
    %3818 = vmatprep.subr.bf16.mxu0 %v1850
    %3819 = vmatpush1.bf16.msra.mxu0 %v1849
    %3820 = vmatprep.subr.bf16.mxu0 %v1845
    %3821 = vmatpush1.bf16.msra.mxu0 %v1844
    %3822 = vmatprep.subr.bf16.mxu0 %v1840
    %3823 = vmatpush1.bf16.msra.mxu0 %v1839
    %3824 = vmatprep.subr.bf16.mxu0 %v1835
    %3825 = vmatpush1.bf16.msra.mxu0 %v1834
    %3826 = vmatprep.subr.bf16.mxu0 %v1830
    %3827 = vmatpush1.bf16.msra.mxu0 %v1829
    %3828 = vmatprep.subr.bf16.mxu0 %v1825
    %3829 = vmatpush1.bf16.msra.mxu0 %v1824
    %3830 = vmatprep.subr.bf16.mxu0 %v1820
    %3831 = vmatpush1.bf16.msra.mxu0 %v1819
    %3832 = vmatprep.subr.bf16.mxu0 %v1895
    %3833 = vmatpush2.bf16.msra.mxu0 %v1894
    %3834 = vmatprep.subr.bf16.mxu0 %v1890
    %3835 = vmatpush2.bf16.msra.mxu0 %v1889
    %3836 = vmatprep.subr.bf16.mxu0 %v1885
    %3837 = vmatpush2.bf16.msra.mxu0 %v1884
    %3838 = vmatprep.subr.bf16.mxu0 %v1880
    %3839 = vmatpush2.bf16.msra.mxu0 %v1879
    %3840 = vmatprep.subr.bf16.mxu0 %v1875
    %3841 = vmatpush2.bf16.msra.mxu0 %v1874
    %3842 = vmatprep.subr.bf16.mxu0 %v1870
    %3843 = vmatpush2.bf16.msra.mxu0 %v1869
    %3844 = vmatprep.subr.bf16.mxu0 %v1865
    %3845 = vmatpush2.bf16.msra.mxu0 %v1864
    %3846 = vmatprep.subr.bf16.mxu0 %v1860
    %3847 = vmatpush2.bf16.msra.mxu0 %v1859
    %3848 = vmatprep.mubr.bf16.mxu0 %v489
    %3849 = vmatmul.mubr.bf16.gmra.mxu0 %v488
    %v3850 = vpop.f32.mrf.mxu0
    %v3851 = vadd.f32 %v1019, %v3850
    %v3852 = vpop.f32.mrf.mxu0
    %v3853 = vadd.f32 %v1023, %v3852
    %v3854 = vpop.f32.mrf.mxu0
    %v3855 = vadd.f32 %v1019, %v3854
    %v3856 = vpop.f32.mrf.mxu0
    %v3857 = vadd.f32 %v1023, %v3856
    %3858 = vmatprep.mubr.bf16.mxu0 %v496
    %3859 = vmatmul.mubr.bf16.gmra.mxu0 %v495
    %v3860 = vpop.f32.mrf.mxu0
    %v3861 = vadd.f32 %v1019, %v3860
    %v3862 = vpop.f32.mrf.mxu0
    %v3863 = vadd.f32 %v1023, %v3862
    %v3864 = vpop.f32.mrf.mxu0
    %v3865 = vadd.f32 %v1019, %v3864
    %v3866 = vpop.f32.mrf.mxu0
    %v3867 = vadd.f32 %v1023, %v3866
    %3868 = vmatprep.mubr.bf16.mxu0 %v503
    %3869 = vmatmul.mubr.bf16.gmra.mxu0 %v502
    %v3870 = vpop.f32.mrf.mxu0
    %v3871 = vadd.f32 %v1019, %v3870
    %v3872 = vpop.f32.mrf.mxu0
    %v3873 = vadd.f32 %v1023, %v3872
    %v3874 = vpop.f32.mrf.mxu0
    %v3875 = vadd.f32 %v1019, %v3874
    %v3876 = vpop.f32.mrf.mxu0
    %v3877 = vadd.f32 %v1023, %v3876
    %3878 = vmatprep.mubr.bf16.mxu0 %v510
    %3879 = vmatmul.mubr.bf16.gmra.mxu0 %v509
    %v3880 = vpop.f32.mrf.mxu0
    %v3881 = vadd.f32 %v1019, %v3880
    %v3882 = vpop.f32.mrf.mxu0
    %v3883 = vadd.f32 %v1023, %v3882
    %v3884 = vpop.f32.mrf.mxu0
    %v3885 = vadd.f32 %v1019, %v3884
    %v3886 = vpop.f32.mrf.mxu0
    %v3887 = vadd.f32 %v1023, %v3886
    %3888 = vmatprep.mubr.bf16.mxu0 %v517
    %3889 = vmatmul.mubr.bf16.gmra.mxu0 %v516
    %v3890 = vpop.f32.mrf.mxu0
    %v3891 = vadd.f32 %v1019, %v3890
    %v3892 = vpop.f32.mrf.mxu0
    %v3893 = vadd.f32 %v1023, %v3892
    %v3894 = vpop.f32.mrf.mxu0
    %v3895 = vadd.f32 %v1019, %v3894
    %v3896 = vpop.f32.mrf.mxu0
    %v3897 = vadd.f32 %v1023, %v3896
    %3898 = vmatprep.mubr.bf16.mxu0 %v524
    %3899 = vmatmul.mubr.bf16.gmra.mxu0 %v523
    %v3900 = vpop.f32.mrf.mxu0
    %v3901 = vadd.f32 %v1019, %v3900
    %v3902 = vpop.f32.mrf.mxu0
    %v3903 = vadd.f32 %v1023, %v3902
    %v3904 = vpop.f32.mrf.mxu0
    %v3905 = vadd.f32 %v1019, %v3904
    %v3906 = vpop.f32.mrf.mxu0
    %v3907 = vadd.f32 %v1023, %v3906
    %3908 = vmatprep.mubr.bf16.mxu0 %v531
    %3909 = vmatmul.mubr.bf16.gmra.mxu0 %v530
    %v3910 = vpop.f32.mrf.mxu0
    %v3911 = vadd.f32 %v1019, %v3910
    %v3912 = vpop.f32.mrf.mxu0
    %v3913 = vadd.f32 %v1023, %v3912
    %v3914 = vpop.f32.mrf.mxu0
    %v3915 = vadd.f32 %v1019, %v3914
    %v3916 = vpop.f32.mrf.mxu0
    %v3917 = vadd.f32 %v1023, %v3916
    %3918 = vmatprep.mubr.bf16.mxu0 %v538
    %3919 = vmatmul.mubr.bf16.gmra.mxu0 %v537
    %v3920 = vpop.f32.mrf.mxu0
    %v3921 = vadd.f32 %v1019, %v3920
    %v3922 = vpop.f32.mrf.mxu0
    %v3923 = vadd.f32 %v1023, %v3922
    %v3924 = vpop.f32.mrf.mxu0
    %v3925 = vadd.f32 %v1019, %v3924
    %v3926 = vpop.f32.mrf.mxu0
    %v3927 = vadd.f32 %v1023, %v3926
    %3928 = vmatprep.mubr.bf16.mxu0 %v545
    %3929 = vmatmul.mubr.bf16.gmra.mxu0 %v544
    %v3930 = vpop.f32.mrf.mxu0
    %v3931 = vadd.f32 %v1019, %v3930
    %v3932 = vpop.f32.mrf.mxu0
    %v3933 = vadd.f32 %v1023, %v3932
    %v3934 = vpop.f32.mrf.mxu0
    %v3935 = vadd.f32 %v1019, %v3934
    %v3936 = vpop.f32.mrf.mxu0
    %v3937 = vadd.f32 %v1023, %v3936
    %3938 = vmatprep.mubr.bf16.mxu0 %v552
    %3939 = vmatmul.mubr.bf16.gmra.mxu0 %v551
    %v3940 = vpop.f32.mrf.mxu0
    %v3941 = vadd.f32 %v1019, %v3940
    %v3942 = vpop.f32.mrf.mxu0
    %v3943 = vadd.f32 %v1023, %v3942
    %v3944 = vpop.f32.mrf.mxu0
    %v3945 = vadd.f32 %v1019, %v3944
    %v3946 = vpop.f32.mrf.mxu0
    %v3947 = vadd.f32 %v1023, %v3946
    %3948 = vmatprep.mubr.bf16.mxu0 %v559
    %3949 = vmatmul.mubr.bf16.gmra.mxu0 %v558
    %v3950 = vpop.f32.mrf.mxu0
    %v3951 = vadd.f32 %v1019, %v3950
    %v3952 = vpop.f32.mrf.mxu0
    %v3953 = vadd.f32 %v1023, %v3952
    %v3954 = vpop.f32.mrf.mxu0
    %v3955 = vadd.f32 %v1019, %v3954
    %v3956 = vpop.f32.mrf.mxu0
    %v3957 = vadd.f32 %v1023, %v3956
    %3958 = vmatprep.mubr.bf16.mxu0 %v566
    %3959 = vmatmul.mubr.bf16.gmra.mxu0 %v565
    %v3960 = vpop.f32.mrf.mxu0
    %v3961 = vadd.f32 %v1019, %v3960
    %v3962 = vpop.f32.mrf.mxu0
    %v3963 = vadd.f32 %v1023, %v3962
    %v3964 = vpop.f32.mrf.mxu0
    %v3965 = vadd.f32 %v1019, %v3964
    %v3966 = vpop.f32.mrf.mxu0
    %v3967 = vadd.f32 %v1023, %v3966
    %3968 = vmatprep.mubr.bf16.mxu0 %v573
    %3969 = vmatmul.mubr.bf16.gmra.mxu0 %v572
    %v3970 = vpop.f32.mrf.mxu0
    %v3971 = vadd.f32 %v1019, %v3970
    %v3972 = vpop.f32.mrf.mxu0
    %v3973 = vadd.f32 %v1023, %v3972
    %v3974 = vpop.f32.mrf.mxu0
    %v3975 = vadd.f32 %v1019, %v3974
    %v3976 = vpop.f32.mrf.mxu0
    %v3977 = vadd.f32 %v1023, %v3976
    %3978 = vmatprep.mubr.bf16.mxu0 %v580
    %3979 = vmatmul.mubr.bf16.gmra.mxu0 %v579
    %v3980 = vpop.f32.mrf.mxu0
    %v3981 = vadd.f32 %v1019, %v3980
    %v3982 = vpop.f32.mrf.mxu0
    %v3983 = vadd.f32 %v1023, %v3982
    %v3984 = vpop.f32.mrf.mxu0
    %v3985 = vadd.f32 %v1019, %v3984
    %v3986 = vpop.f32.mrf.mxu0
    %v3987 = vadd.f32 %v1023, %v3986
    %3988 = vmatprep.mubr.bf16.mxu0 %v587
    %3989 = vmatmul.mubr.bf16.gmra.mxu0 %v586
    %v3990 = vpop.f32.mrf.mxu0
    %v3991 = vadd.f32 %v1019, %v3990
    %v3992 = vpop.f32.mrf.mxu0
    %v3993 = vadd.f32 %v1023, %v3992
    %v3994 = vpop.f32.mrf.mxu0
    %v3995 = vadd.f32 %v1019, %v3994
    %v3996 = vpop.f32.mrf.mxu0
    %v3997 = vadd.f32 %v1023, %v3996
    %3998 = vmatprep.mubr.bf16.mxu0 %v594
    %3999 = vmatmul.mubr.bf16.gmra.mxu0 %v593
    %v4000 = vpop.f32.mrf.mxu0
    %v4001 = vadd.f32 %v1019, %v4000
    %v4002 = vpop.f32.mrf.mxu0
    %v4003 = vadd.f32 %v1023, %v4002
    %v4004 = vpop.f32.mrf.mxu0
    %v4005 = vadd.f32 %v1019, %v4004
    %v4006 = vpop.f32.mrf.mxu0
    %v4007 = vadd.f32 %v1023, %v4006
    %4008 = vmatprep.mubr.bf16.mxu0 %v601
    %4009 = vmatmul.mubr.bf16.gmra.mxu0 %v600
    %v4010 = vpop.f32.mrf.mxu0
    %v4011 = vadd.f32 %v1019, %v4010
    %v4012 = vpop.f32.mrf.mxu0
    %v4013 = vadd.f32 %v1023, %v4012
    %v4014 = vpop.f32.mrf.mxu0
    %v4015 = vadd.f32 %v1019, %v4014
    %v4016 = vpop.f32.mrf.mxu0
    %v4017 = vadd.f32 %v1023, %v4016
    %4018 = vmatprep.mubr.bf16.mxu0 %v608
    %4019 = vmatmul.mubr.bf16.gmra.mxu0 %v607
    %v4020 = vpop.f32.mrf.mxu0
    %v4021 = vadd.f32 %v1019, %v4020
    %v4022 = vpop.f32.mrf.mxu0
    %v4023 = vadd.f32 %v1023, %v4022
    %v4024 = vpop.f32.mrf.mxu0
    %v4025 = vadd.f32 %v1019, %v4024
    %v4026 = vpop.f32.mrf.mxu0
    %v4027 = vadd.f32 %v1023, %v4026
    %4028 = vmatprep.mubr.bf16.mxu0 %v615
    %4029 = vmatmul.mubr.bf16.gmra.mxu0 %v614
    %v4030 = vpop.f32.mrf.mxu0
    %v4031 = vadd.f32 %v1019, %v4030
    %v4032 = vpop.f32.mrf.mxu0
    %v4033 = vadd.f32 %v1023, %v4032
    %v4034 = vpop.f32.mrf.mxu0
    %v4035 = vadd.f32 %v1019, %v4034
    %v4036 = vpop.f32.mrf.mxu0
    %v4037 = vadd.f32 %v1023, %v4036
    %4038 = vmatprep.mubr.bf16.mxu0 %v622
    %4039 = vmatmul.mubr.bf16.gmra.mxu0 %v621
    %v4040 = vpop.f32.mrf.mxu0
    %v4041 = vadd.f32 %v1019, %v4040
    %v4042 = vpop.f32.mrf.mxu0
    %v4043 = vadd.f32 %v1023, %v4042
    %v4044 = vpop.f32.mrf.mxu0
    %v4045 = vadd.f32 %v1019, %v4044
    %v4046 = vpop.f32.mrf.mxu0
    %v4047 = vadd.f32 %v1023, %v4046
    %4048 = vmatprep.mubr.bf16.mxu0 %v629
    %4049 = vmatmul.mubr.bf16.gmra.mxu0 %v628
    %v4050 = vpop.f32.mrf.mxu0
    %v4051 = vadd.f32 %v1019, %v4050
    %v4052 = vpop.f32.mrf.mxu0
    %v4053 = vadd.f32 %v1023, %v4052
    %v4054 = vpop.f32.mrf.mxu0
    %v4055 = vadd.f32 %v1019, %v4054
    %v4056 = vpop.f32.mrf.mxu0
    %v4057 = vadd.f32 %v1023, %v4056
    %4058 = vmatprep.mubr.bf16.mxu0 %v636
    %4059 = vmatmul.mubr.bf16.gmra.mxu0 %v635
    %v4060 = vpop.f32.mrf.mxu0
    %v4061 = vadd.f32 %v1019, %v4060
    %v4062 = vpop.f32.mrf.mxu0
    %v4063 = vadd.f32 %v1023, %v4062
    %v4064 = vpop.f32.mrf.mxu0
    %v4065 = vadd.f32 %v1019, %v4064
    %v4066 = vpop.f32.mrf.mxu0
    %v4067 = vadd.f32 %v1023, %v4066
    %4068 = vmatprep.mubr.bf16.mxu0 %v643
    %4069 = vmatmul.mubr.bf16.gmra.mxu0 %v642
    %v4070 = vpop.f32.mrf.mxu0
    %v4071 = vadd.f32 %v1019, %v4070
    %v4072 = vpop.f32.mrf.mxu0
    %v4073 = vadd.f32 %v1023, %v4072
    %v4074 = vpop.f32.mrf.mxu0
    %v4075 = vadd.f32 %v1019, %v4074
    %v4076 = vpop.f32.mrf.mxu0
    %v4077 = vadd.f32 %v1023, %v4076
    %4078 = vmatprep.mubr.bf16.mxu0 %v650
    %4079 = vmatmul.mubr.bf16.gmra.mxu0 %v649
    %v4080 = vpop.f32.mrf.mxu0
    %v4081 = vadd.f32 %v1019, %v4080
    %v4082 = vpop.f32.mrf.mxu0
    %v4083 = vadd.f32 %v1023, %v4082
    %v4084 = vpop.f32.mrf.mxu0
    %v4085 = vadd.f32 %v1019, %v4084
    %v4086 = vpop.f32.mrf.mxu0
    %v4087 = vadd.f32 %v1023, %v4086
    %4088 = vmatprep.mubr.bf16.mxu0 %v657
    %4089 = vmatmul.mubr.bf16.gmra.mxu0 %v656
    %v4090 = vpop.f32.mrf.mxu0
    %v4091 = vadd.f32 %v1019, %v4090
    %v4092 = vpop.f32.mrf.mxu0
    %v4093 = vadd.f32 %v1023, %v4092
    %v4094 = vpop.f32.mrf.mxu0
    %v4095 = vadd.f32 %v1019, %v4094
    %v4096 = vpop.f32.mrf.mxu0
    %v4097 = vadd.f32 %v1023, %v4096
    %4098 = vmatprep.mubr.bf16.mxu0 %v664
    %4099 = vmatmul.mubr.bf16.gmra.mxu0 %v663
    %v4100 = vpop.f32.mrf.mxu0
    %v4101 = vadd.f32 %v1019, %v4100
    %v4102 = vpop.f32.mrf.mxu0
    %v4103 = vadd.f32 %v1023, %v4102
    %v4104 = vpop.f32.mrf.mxu0
    %v4105 = vadd.f32 %v1019, %v4104
    %v4106 = vpop.f32.mrf.mxu0
    %v4107 = vadd.f32 %v1023, %v4106
    %4108 = vmatprep.mubr.bf16.mxu0 %v671
    %4109 = vmatmul.mubr.bf16.gmra.mxu0 %v670
    %v4110 = vpop.f32.mrf.mxu0
    %v4111 = vadd.f32 %v1019, %v4110
    %v4112 = vpop.f32.mrf.mxu0
    %v4113 = vadd.f32 %v1023, %v4112
    %v4114 = vpop.f32.mrf.mxu0
    %v4115 = vadd.f32 %v1019, %v4114
    %v4116 = vpop.f32.mrf.mxu0
    %v4117 = vadd.f32 %v1023, %v4116
    %4118 = vmatprep.mubr.bf16.mxu0 %v678
    %4119 = vmatmul.mubr.bf16.gmra.mxu0 %v677
    %v4120 = vpop.f32.mrf.mxu0
    %v4121 = vadd.f32 %v1019, %v4120
    %v4122 = vpop.f32.mrf.mxu0
    %v4123 = vadd.f32 %v1023, %v4122
    %v4124 = vpop.f32.mrf.mxu0
    %v4125 = vadd.f32 %v1019, %v4124
    %v4126 = vpop.f32.mrf.mxu0
    %v4127 = vadd.f32 %v1023, %v4126
    %4128 = vmatprep.mubr.bf16.mxu0 %v685
    %4129 = vmatmul.mubr.bf16.gmra.mxu0 %v684
    %v4130 = vpop.f32.mrf.mxu0
    %v4131 = vadd.f32 %v1019, %v4130
    %v4132 = vpop.f32.mrf.mxu0
    %v4133 = vadd.f32 %v1023, %v4132
    %v4134 = vpop.f32.mrf.mxu0
    %v4135 = vadd.f32 %v1019, %v4134
    %v4136 = vpop.f32.mrf.mxu0
    %v4137 = vadd.f32 %v1023, %v4136
    %4138 = vmatprep.mubr.bf16.mxu0 %v692
    %4139 = vmatmul.mubr.bf16.gmra.mxu0 %v691
    %v4140 = vpop.f32.mrf.mxu0
    %v4141 = vadd.f32 %v1019, %v4140
    %v4142 = vpop.f32.mrf.mxu0
    %v4143 = vadd.f32 %v1023, %v4142
    %v4144 = vpop.f32.mrf.mxu0
    %v4145 = vadd.f32 %v1019, %v4144
    %v4146 = vpop.f32.mrf.mxu0
    %v4147 = vadd.f32 %v1023, %v4146
    %4148 = vmatprep.mubr.bf16.mxu0 %v699
    %4149 = vmatmul.mubr.bf16.gmra.mxu0 %v698
    %v4150 = vpop.f32.mrf.mxu0
    %v4151 = vadd.f32 %v1019, %v4150
    %v4152 = vpop.f32.mrf.mxu0
    %v4153 = vadd.f32 %v1023, %v4152
    %v4154 = vpop.f32.mrf.mxu0
    %v4155 = vadd.f32 %v1019, %v4154
    %v4156 = vpop.f32.mrf.mxu0
    %v4157 = vadd.f32 %v1023, %v4156
    %4158 = vmatprep.mubr.bf16.mxu0 %v706
    %4159 = vmatmul.mubr.bf16.gmra.mxu0 %v705
    %v4160 = vpop.f32.mrf.mxu0
    %v4161 = vadd.f32 %v1019, %v4160
    %v4162 = vpop.f32.mrf.mxu0
    %v4163 = vadd.f32 %v1023, %v4162
    %v4164 = vpop.f32.mrf.mxu0
    %v4165 = vadd.f32 %v1019, %v4164
    %v4166 = vpop.f32.mrf.mxu0
    %v4167 = vadd.f32 %v1023, %v4166
    %4168 = vdwg.mxu0
    %4169 = vmatprep.subr.bf16.mxu0 %v1935
    %4170 = vmatpush1.bf16.msra.mxu0 %v1934
    %4171 = vmatprep.subr.bf16.mxu0 %v1930
    %4172 = vmatpush1.bf16.msra.mxu0 %v1929
    %4173 = vmatprep.subr.bf16.mxu0 %v1925
    %4174 = vmatpush1.bf16.msra.mxu0 %v1924
    %4175 = vmatprep.subr.bf16.mxu0 %v1920
    %4176 = vmatpush1.bf16.msra.mxu0 %v1919
    %4177 = vmatprep.subr.bf16.mxu0 %v1915
    %4178 = vmatpush1.bf16.msra.mxu0 %v1914
    %4179 = vmatprep.subr.bf16.mxu0 %v1910
    %4180 = vmatpush1.bf16.msra.mxu0 %v1909
    %4181 = vmatprep.subr.bf16.mxu0 %v1905
    %4182 = vmatpush1.bf16.msra.mxu0 %v1904
    %4183 = vmatprep.subr.bf16.mxu0 %v1900
    %4184 = vmatpush1.bf16.msra.mxu0 %v1899
    %4185 = vmatprep.subr.bf16.mxu0 %v1975
    %4186 = vmatpush2.bf16.msra.mxu0 %v1974
    %4187 = vmatprep.subr.bf16.mxu0 %v1970
    %4188 = vmatpush2.bf16.msra.mxu0 %v1969
    %4189 = vmatprep.subr.bf16.mxu0 %v1965
    %4190 = vmatpush2.bf16.msra.mxu0 %v1964
    %4191 = vmatprep.subr.bf16.mxu0 %v1960
    %4192 = vmatpush2.bf16.msra.mxu0 %v1959
    %4193 = vmatprep.subr.bf16.mxu0 %v1955
    %4194 = vmatpush2.bf16.msra.mxu0 %v1954
    %4195 = vmatprep.subr.bf16.mxu0 %v1950
    %4196 = vmatpush2.bf16.msra.mxu0 %v1949
    %4197 = vmatprep.subr.bf16.mxu0 %v1945
    %4198 = vmatpush2.bf16.msra.mxu0 %v1944
    %4199 = vmatprep.subr.bf16.mxu0 %v1940
    %4200 = vmatpush2.bf16.msra.mxu0 %v1939
    %4201 = vmatprep.mubr.bf16.mxu0 %v491
    %4202 = vmatmul.mubr.bf16.gmra.mxu0 %v490
    %v4203 = vpop.f32.mrf.mxu0
    %v4204 = vadd.f32 %v3851, %v4203
    %v4205 = vpop.f32.mrf.mxu0
    %v4206 = vadd.f32 %v3853, %v4205
    %v4207 = vpop.f32.mrf.mxu0
    %v4208 = vadd.f32 %v3855, %v4207
    %v4209 = vpop.f32.mrf.mxu0
    %v4210 = vadd.f32 %v3857, %v4209
    %4211 = vmatprep.mubr.bf16.mxu0 %v498
    %4212 = vmatmul.mubr.bf16.gmra.mxu0 %v497
    %v4213 = vpop.f32.mrf.mxu0
    %v4214 = vadd.f32 %v3861, %v4213
    %v4215 = vpop.f32.mrf.mxu0
    %v4216 = vadd.f32 %v3863, %v4215
    %v4217 = vpop.f32.mrf.mxu0
    %v4218 = vadd.f32 %v3865, %v4217
    %v4219 = vpop.f32.mrf.mxu0
    %v4220 = vadd.f32 %v3867, %v4219
    %4221 = vmatprep.mubr.bf16.mxu0 %v505
    %4222 = vmatmul.mubr.bf16.gmra.mxu0 %v504
    %v4223 = vpop.f32.mrf.mxu0
    %v4224 = vadd.f32 %v3871, %v4223
    %v4225 = vpop.f32.mrf.mxu0
    %v4226 = vadd.f32 %v3873, %v4225
    %v4227 = vpop.f32.mrf.mxu0
    %v4228 = vadd.f32 %v3875, %v4227
    %v4229 = vpop.f32.mrf.mxu0
    %v4230 = vadd.f32 %v3877, %v4229
    %4231 = vmatprep.mubr.bf16.mxu0 %v512
    %4232 = vmatmul.mubr.bf16.gmra.mxu0 %v511
    %v4233 = vpop.f32.mrf.mxu0
    %v4234 = vadd.f32 %v3881, %v4233
    %v4235 = vpop.f32.mrf.mxu0
    %v4236 = vadd.f32 %v3883, %v4235
    %v4237 = vpop.f32.mrf.mxu0
    %v4238 = vadd.f32 %v3885, %v4237
    %v4239 = vpop.f32.mrf.mxu0
    %v4240 = vadd.f32 %v3887, %v4239
    %4241 = vmatprep.mubr.bf16.mxu0 %v519
    %4242 = vmatmul.mubr.bf16.gmra.mxu0 %v518
    %v4243 = vpop.f32.mrf.mxu0
    %v4244 = vadd.f32 %v3891, %v4243
    %v4245 = vpop.f32.mrf.mxu0
    %v4246 = vadd.f32 %v3893, %v4245
    %v4247 = vpop.f32.mrf.mxu0
    %v4248 = vadd.f32 %v3895, %v4247
    %v4249 = vpop.f32.mrf.mxu0
    %v4250 = vadd.f32 %v3897, %v4249
    %4251 = vmatprep.mubr.bf16.mxu0 %v526
    %4252 = vmatmul.mubr.bf16.gmra.mxu0 %v525
    %v4253 = vpop.f32.mrf.mxu0
    %v4254 = vadd.f32 %v3901, %v4253
    %v4255 = vpop.f32.mrf.mxu0
    %v4256 = vadd.f32 %v3903, %v4255
    %v4257 = vpop.f32.mrf.mxu0
    %v4258 = vadd.f32 %v3905, %v4257
    %v4259 = vpop.f32.mrf.mxu0
    %v4260 = vadd.f32 %v3907, %v4259
    %4261 = vmatprep.mubr.bf16.mxu0 %v533
    %4262 = vmatmul.mubr.bf16.gmra.mxu0 %v532
    %v4263 = vpop.f32.mrf.mxu0
    %v4264 = vadd.f32 %v3911, %v4263
    %v4265 = vpop.f32.mrf.mxu0
    %v4266 = vadd.f32 %v3913, %v4265
    %v4267 = vpop.f32.mrf.mxu0
    %v4268 = vadd.f32 %v3915, %v4267
    %v4269 = vpop.f32.mrf.mxu0
    %v4270 = vadd.f32 %v3917, %v4269
    %4271 = vmatprep.mubr.bf16.mxu0 %v540
    %4272 = vmatmul.mubr.bf16.gmra.mxu0 %v539
    %v4273 = vpop.f32.mrf.mxu0
    %v4274 = vadd.f32 %v3921, %v4273
    %v4275 = vpop.f32.mrf.mxu0
    %v4276 = vadd.f32 %v3923, %v4275
    %v4277 = vpop.f32.mrf.mxu0
    %v4278 = vadd.f32 %v3925, %v4277
    %v4279 = vpop.f32.mrf.mxu0
    %v4280 = vadd.f32 %v3927, %v4279
    %4281 = vmatprep.mubr.bf16.mxu0 %v547
    %4282 = vmatmul.mubr.bf16.gmra.mxu0 %v546
    %v4283 = vpop.f32.mrf.mxu0
    %v4284 = vadd.f32 %v3931, %v4283
    %v4285 = vpop.f32.mrf.mxu0
    %v4286 = vadd.f32 %v3933, %v4285
    %v4287 = vpop.f32.mrf.mxu0
    %v4288 = vadd.f32 %v3935, %v4287
    %v4289 = vpop.f32.mrf.mxu0
    %v4290 = vadd.f32 %v3937, %v4289
    %4291 = vmatprep.mubr.bf16.mxu0 %v554
    %4292 = vmatmul.mubr.bf16.gmra.mxu0 %v553
    %v4293 = vpop.f32.mrf.mxu0
    %v4294 = vadd.f32 %v3941, %v4293
    %v4295 = vpop.f32.mrf.mxu0
    %v4296 = vadd.f32 %v3943, %v4295
    %v4297 = vpop.f32.mrf.mxu0
    %v4298 = vadd.f32 %v3945, %v4297
    %v4299 = vpop.f32.mrf.mxu0
    %v4300 = vadd.f32 %v3947, %v4299
    %4301 = vmatprep.mubr.bf16.mxu0 %v561
    %4302 = vmatmul.mubr.bf16.gmra.mxu0 %v560
    %v4303 = vpop.f32.mrf.mxu0
    %v4304 = vadd.f32 %v3951, %v4303
    %v4305 = vpop.f32.mrf.mxu0
    %v4306 = vadd.f32 %v3953, %v4305
    %v4307 = vpop.f32.mrf.mxu0
    %v4308 = vadd.f32 %v3955, %v4307
    %v4309 = vpop.f32.mrf.mxu0
    %v4310 = vadd.f32 %v3957, %v4309
    %4311 = vmatprep.mubr.bf16.mxu0 %v568
    %4312 = vmatmul.mubr.bf16.gmra.mxu0 %v567
    %v4313 = vpop.f32.mrf.mxu0
    %v4314 = vadd.f32 %v3961, %v4313
    %v4315 = vpop.f32.mrf.mxu0
    %v4316 = vadd.f32 %v3963, %v4315
    %v4317 = vpop.f32.mrf.mxu0
    %v4318 = vadd.f32 %v3965, %v4317
    %v4319 = vpop.f32.mrf.mxu0
    %v4320 = vadd.f32 %v3967, %v4319
    %4321 = vmatprep.mubr.bf16.mxu0 %v575
    %4322 = vmatmul.mubr.bf16.gmra.mxu0 %v574
    %v4323 = vpop.f32.mrf.mxu0
    %v4324 = vadd.f32 %v3971, %v4323
    %v4325 = vpop.f32.mrf.mxu0
    %v4326 = vadd.f32 %v3973, %v4325
    %v4327 = vpop.f32.mrf.mxu0
    %v4328 = vadd.f32 %v3975, %v4327
    %v4329 = vpop.f32.mrf.mxu0
    %v4330 = vadd.f32 %v3977, %v4329
    %4331 = vmatprep.mubr.bf16.mxu0 %v582
    %4332 = vmatmul.mubr.bf16.gmra.mxu0 %v581
    %v4333 = vpop.f32.mrf.mxu0
    %v4334 = vadd.f32 %v3981, %v4333
    %v4335 = vpop.f32.mrf.mxu0
    %v4336 = vadd.f32 %v3983, %v4335
    %v4337 = vpop.f32.mrf.mxu0
    %v4338 = vadd.f32 %v3985, %v4337
    %v4339 = vpop.f32.mrf.mxu0
    %v4340 = vadd.f32 %v3987, %v4339
    %4341 = vmatprep.mubr.bf16.mxu0 %v589
    %4342 = vmatmul.mubr.bf16.gmra.mxu0 %v588
    %v4343 = vpop.f32.mrf.mxu0
    %v4344 = vadd.f32 %v3991, %v4343
    %v4345 = vpop.f32.mrf.mxu0
    %v4346 = vadd.f32 %v3993, %v4345
    %v4347 = vpop.f32.mrf.mxu0
    %v4348 = vadd.f32 %v3995, %v4347
    %v4349 = vpop.f32.mrf.mxu0
    %v4350 = vadd.f32 %v3997, %v4349
    %4351 = vmatprep.mubr.bf16.mxu0 %v596
    %4352 = vmatmul.mubr.bf16.gmra.mxu0 %v595
    %v4353 = vpop.f32.mrf.mxu0
    %v4354 = vadd.f32 %v4001, %v4353
    %v4355 = vpop.f32.mrf.mxu0
    %v4356 = vadd.f32 %v4003, %v4355
    %v4357 = vpop.f32.mrf.mxu0
    %v4358 = vadd.f32 %v4005, %v4357
    %v4359 = vpop.f32.mrf.mxu0
    %v4360 = vadd.f32 %v4007, %v4359
    %4361 = vmatprep.mubr.bf16.mxu0 %v603
    %4362 = vmatmul.mubr.bf16.gmra.mxu0 %v602
    %v4363 = vpop.f32.mrf.mxu0
    %v4364 = vadd.f32 %v4011, %v4363
    %v4365 = vpop.f32.mrf.mxu0
    %v4366 = vadd.f32 %v4013, %v4365
    %v4367 = vpop.f32.mrf.mxu0
    %v4368 = vadd.f32 %v4015, %v4367
    %v4369 = vpop.f32.mrf.mxu0
    %v4370 = vadd.f32 %v4017, %v4369
    %4371 = vmatprep.mubr.bf16.mxu0 %v610
    %4372 = vmatmul.mubr.bf16.gmra.mxu0 %v609
    %v4373 = vpop.f32.mrf.mxu0
    %v4374 = vadd.f32 %v4021, %v4373
    %v4375 = vpop.f32.mrf.mxu0
    %v4376 = vadd.f32 %v4023, %v4375
    %v4377 = vpop.f32.mrf.mxu0
    %v4378 = vadd.f32 %v4025, %v4377
    %v4379 = vpop.f32.mrf.mxu0
    %v4380 = vadd.f32 %v4027, %v4379
    %4381 = vmatprep.mubr.bf16.mxu0 %v617
    %4382 = vmatmul.mubr.bf16.gmra.mxu0 %v616
    %v4383 = vpop.f32.mrf.mxu0
    %v4384 = vadd.f32 %v4031, %v4383
    %v4385 = vpop.f32.mrf.mxu0
    %v4386 = vadd.f32 %v4033, %v4385
    %v4387 = vpop.f32.mrf.mxu0
    %v4388 = vadd.f32 %v4035, %v4387
    %v4389 = vpop.f32.mrf.mxu0
    %v4390 = vadd.f32 %v4037, %v4389
    %4391 = vmatprep.mubr.bf16.mxu0 %v624
    %4392 = vmatmul.mubr.bf16.gmra.mxu0 %v623
    %v4393 = vpop.f32.mrf.mxu0
    %v4394 = vadd.f32 %v4041, %v4393
    %v4395 = vpop.f32.mrf.mxu0
    %v4396 = vadd.f32 %v4043, %v4395
    %v4397 = vpop.f32.mrf.mxu0
    %v4398 = vadd.f32 %v4045, %v4397
    %v4399 = vpop.f32.mrf.mxu0
    %v4400 = vadd.f32 %v4047, %v4399
    %4401 = vmatprep.mubr.bf16.mxu0 %v631
    %4402 = vmatmul.mubr.bf16.gmra.mxu0 %v630
    %v4403 = vpop.f32.mrf.mxu0
    %v4404 = vadd.f32 %v4051, %v4403
    %v4405 = vpop.f32.mrf.mxu0
    %v4406 = vadd.f32 %v4053, %v4405
    %v4407 = vpop.f32.mrf.mxu0
    %v4408 = vadd.f32 %v4055, %v4407
    %v4409 = vpop.f32.mrf.mxu0
    %v4410 = vadd.f32 %v4057, %v4409
    %4411 = vmatprep.mubr.bf16.mxu0 %v638
    %4412 = vmatmul.mubr.bf16.gmra.mxu0 %v637
    %v4413 = vpop.f32.mrf.mxu0
    %v4414 = vadd.f32 %v4061, %v4413
    %v4415 = vpop.f32.mrf.mxu0
    %v4416 = vadd.f32 %v4063, %v4415
    %v4417 = vpop.f32.mrf.mxu0
    %v4418 = vadd.f32 %v4065, %v4417
    %v4419 = vpop.f32.mrf.mxu0
    %v4420 = vadd.f32 %v4067, %v4419
    %4421 = vmatprep.mubr.bf16.mxu0 %v645
    %4422 = vmatmul.mubr.bf16.gmra.mxu0 %v644
    %v4423 = vpop.f32.mrf.mxu0
    %v4424 = vadd.f32 %v4071, %v4423
    %v4425 = vpop.f32.mrf.mxu0
    %v4426 = vadd.f32 %v4073, %v4425
    %v4427 = vpop.f32.mrf.mxu0
    %v4428 = vadd.f32 %v4075, %v4427
    %v4429 = vpop.f32.mrf.mxu0
    %v4430 = vadd.f32 %v4077, %v4429
    %4431 = vmatprep.mubr.bf16.mxu0 %v652
    %4432 = vmatmul.mubr.bf16.gmra.mxu0 %v651
    %v4433 = vpop.f32.mrf.mxu0
    %v4434 = vadd.f32 %v4081, %v4433
    %v4435 = vpop.f32.mrf.mxu0
    %v4436 = vadd.f32 %v4083, %v4435
    %v4437 = vpop.f32.mrf.mxu0
    %v4438 = vadd.f32 %v4085, %v4437
    %v4439 = vpop.f32.mrf.mxu0
    %v4440 = vadd.f32 %v4087, %v4439
    %4441 = vmatprep.mubr.bf16.mxu0 %v659
    %4442 = vmatmul.mubr.bf16.gmra.mxu0 %v658
    %v4443 = vpop.f32.mrf.mxu0
    %v4444 = vadd.f32 %v4091, %v4443
    %v4445 = vpop.f32.mrf.mxu0
    %v4446 = vadd.f32 %v4093, %v4445
    %v4447 = vpop.f32.mrf.mxu0
    %v4448 = vadd.f32 %v4095, %v4447
    %v4449 = vpop.f32.mrf.mxu0
    %v4450 = vadd.f32 %v4097, %v4449
    %4451 = vmatprep.mubr.bf16.mxu0 %v666
    %4452 = vmatmul.mubr.bf16.gmra.mxu0 %v665
    %v4453 = vpop.f32.mrf.mxu0
    %v4454 = vadd.f32 %v4101, %v4453
    %v4455 = vpop.f32.mrf.mxu0
    %v4456 = vadd.f32 %v4103, %v4455
    %v4457 = vpop.f32.mrf.mxu0
    %v4458 = vadd.f32 %v4105, %v4457
    %v4459 = vpop.f32.mrf.mxu0
    %v4460 = vadd.f32 %v4107, %v4459
    %4461 = vmatprep.mubr.bf16.mxu0 %v673
    %4462 = vmatmul.mubr.bf16.gmra.mxu0 %v672
    %v4463 = vpop.f32.mrf.mxu0
    %v4464 = vadd.f32 %v4111, %v4463
    %v4465 = vpop.f32.mrf.mxu0
    %v4466 = vadd.f32 %v4113, %v4465
    %v4467 = vpop.f32.mrf.mxu0
    %v4468 = vadd.f32 %v4115, %v4467
    %v4469 = vpop.f32.mrf.mxu0
    %v4470 = vadd.f32 %v4117, %v4469
    %4471 = vmatprep.mubr.bf16.mxu0 %v680
    %4472 = vmatmul.mubr.bf16.gmra.mxu0 %v679
    %v4473 = vpop.f32.mrf.mxu0
    %v4474 = vadd.f32 %v4121, %v4473
    %v4475 = vpop.f32.mrf.mxu0
    %v4476 = vadd.f32 %v4123, %v4475
    %v4477 = vpop.f32.mrf.mxu0
    %v4478 = vadd.f32 %v4125, %v4477
    %v4479 = vpop.f32.mrf.mxu0
    %v4480 = vadd.f32 %v4127, %v4479
    %4481 = vmatprep.mubr.bf16.mxu0 %v687
    %4482 = vmatmul.mubr.bf16.gmra.mxu0 %v686
    %v4483 = vpop.f32.mrf.mxu0
    %v4484 = vadd.f32 %v4131, %v4483
    %v4485 = vpop.f32.mrf.mxu0
    %v4486 = vadd.f32 %v4133, %v4485
    %v4487 = vpop.f32.mrf.mxu0
    %v4488 = vadd.f32 %v4135, %v4487
    %v4489 = vpop.f32.mrf.mxu0
    %v4490 = vadd.f32 %v4137, %v4489
    %4491 = vmatprep.mubr.bf16.mxu0 %v694
    %4492 = vmatmul.mubr.bf16.gmra.mxu0 %v693
    %v4493 = vpop.f32.mrf.mxu0
    %v4494 = vadd.f32 %v4141, %v4493
    %v4495 = vpop.f32.mrf.mxu0
    %v4496 = vadd.f32 %v4143, %v4495
    %v4497 = vpop.f32.mrf.mxu0
    %v4498 = vadd.f32 %v4145, %v4497
    %v4499 = vpop.f32.mrf.mxu0
    %v4500 = vadd.f32 %v4147, %v4499
    %4501 = vmatprep.mubr.bf16.mxu0 %v701
    %4502 = vmatmul.mubr.bf16.gmra.mxu0 %v700
    %v4503 = vpop.f32.mrf.mxu0
    %v4504 = vadd.f32 %v4151, %v4503
    %v4505 = vpop.f32.mrf.mxu0
    %v4506 = vadd.f32 %v4153, %v4505
    %v4507 = vpop.f32.mrf.mxu0
    %v4508 = vadd.f32 %v4155, %v4507
    %v4509 = vpop.f32.mrf.mxu0
    %v4510 = vadd.f32 %v4157, %v4509
    %4511 = vmatprep.mubr.bf16.mxu0 %v708
    %4512 = vmatmul.mubr.bf16.gmra.mxu0 %v707
    %v4513 = vpop.f32.mrf.mxu0
    %v4514 = vadd.f32 %v4161, %v4513
    %v4515 = vpop.f32.mrf.mxu0
    %v4516 = vadd.f32 %v4163, %v4515
    %v4517 = vpop.f32.mrf.mxu0
    %v4518 = vadd.f32 %v4165, %v4517
    %v4519 = vpop.f32.mrf.mxu0
    %v4520 = vadd.f32 %v4167, %v4519
    %4521 = vdwg.mxu0
    %4522 = vmatprep.subr.bf16.mxu0 %v2015
    %4523 = vmatpush1.bf16.msra.mxu0 %v2014
    %4524 = vmatprep.subr.bf16.mxu0 %v2010
    %4525 = vmatpush1.bf16.msra.mxu0 %v2009
    %4526 = vmatprep.subr.bf16.mxu0 %v2005
    %4527 = vmatpush1.bf16.msra.mxu0 %v2004
    %4528 = vmatprep.subr.bf16.mxu0 %v2000
    %4529 = vmatpush1.bf16.msra.mxu0 %v1999
    %4530 = vmatprep.subr.bf16.mxu0 %v1995
    %4531 = vmatpush1.bf16.msra.mxu0 %v1994
    %4532 = vmatprep.subr.bf16.mxu0 %v1990
    %4533 = vmatpush1.bf16.msra.mxu0 %v1989
    %4534 = vmatprep.subr.bf16.mxu0 %v1985
    %4535 = vmatpush1.bf16.msra.mxu0 %v1984
    %4536 = vmatprep.subr.bf16.mxu0 %v1980
    %4537 = vmatpush1.bf16.msra.mxu0 %v1979
    %4538 = vmatprep.subr.bf16.mxu0 %v2055
    %4539 = vmatpush2.bf16.msra.mxu0 %v2054
    %4540 = vmatprep.subr.bf16.mxu0 %v2050
    %4541 = vmatpush2.bf16.msra.mxu0 %v2049
    %4542 = vmatprep.subr.bf16.mxu0 %v2045
    %4543 = vmatpush2.bf16.msra.mxu0 %v2044
    %4544 = vmatprep.subr.bf16.mxu0 %v2040
    %4545 = vmatpush2.bf16.msra.mxu0 %v2039
    %4546 = vmatprep.subr.bf16.mxu0 %v2035
    %4547 = vmatpush2.bf16.msra.mxu0 %v2034
    %4548 = vmatprep.subr.bf16.mxu0 %v2030
    %4549 = vmatpush2.bf16.msra.mxu0 %v2029
    %4550 = vmatprep.subr.bf16.mxu0 %v2025
    %4551 = vmatpush2.bf16.msra.mxu0 %v2024
    %4552 = vmatprep.subr.bf16.mxu0 %v2020
    %4553 = vmatpush2.bf16.msra.mxu0 %v2019
    %4554 = vmatprep.mubr.bf16.mxu0 %v493
    %4555 = vmatmul.mubr.bf16.gmra.mxu0 %v492
    %v4556 = vpop.f32.mrf.mxu0
    %v4557 = vadd.f32 %v4204, %v4556
    %v4558 = vpop.f32.mrf.mxu0
    %v4559 = vadd.f32 %v4206, %v4558
    %v4560 = vpop.f32.mrf.mxu0
    %v4561 = vadd.f32 %v4208, %v4560
    %v4562 = vpop.f32.mrf.mxu0
    %v4563 = vadd.f32 %v4210, %v4562
    %4564 = vmatprep.mubr.bf16.mxu0 %v500
    %4565 = vmatmul.mubr.bf16.gmra.mxu0 %v499
    %v4566 = vpop.f32.mrf.mxu0
    %v4567 = vadd.f32 %v4214, %v4566
    %v4568 = vpop.f32.mrf.mxu0
    %v4569 = vadd.f32 %v4216, %v4568
    %v4570 = vpop.f32.mrf.mxu0
    %v4571 = vadd.f32 %v4218, %v4570
    %v4572 = vpop.f32.mrf.mxu0
    %v4573 = vadd.f32 %v4220, %v4572
    %4574 = vmatprep.mubr.bf16.mxu0 %v507
    %4575 = vmatmul.mubr.bf16.gmra.mxu0 %v506
    %v4576 = vpop.f32.mrf.mxu0
    %v4577 = vadd.f32 %v4224, %v4576
    %v4578 = vpop.f32.mrf.mxu0
    %v4579 = vadd.f32 %v4226, %v4578
    %v4580 = vpop.f32.mrf.mxu0
    %v4581 = vadd.f32 %v4228, %v4580
    %v4582 = vpop.f32.mrf.mxu0
    %v4583 = vadd.f32 %v4230, %v4582
    %4584 = vmatprep.mubr.bf16.mxu0 %v514
    %4585 = vmatmul.mubr.bf16.gmra.mxu0 %v513
    %v4586 = vpop.f32.mrf.mxu0
    %v4587 = vadd.f32 %v4234, %v4586
    %v4588 = vpop.f32.mrf.mxu0
    %v4589 = vadd.f32 %v4236, %v4588
    %v4590 = vpop.f32.mrf.mxu0
    %v4591 = vadd.f32 %v4238, %v4590
    %v4592 = vpop.f32.mrf.mxu0
    %v4593 = vadd.f32 %v4240, %v4592
    %4594 = vmatprep.mubr.bf16.mxu0 %v521
    %4595 = vmatmul.mubr.bf16.gmra.mxu0 %v520
    %v4596 = vpop.f32.mrf.mxu0
    %v4597 = vadd.f32 %v4244, %v4596
    %v4598 = vpop.f32.mrf.mxu0
    %v4599 = vadd.f32 %v4246, %v4598
    %v4600 = vpop.f32.mrf.mxu0
    %v4601 = vadd.f32 %v4248, %v4600
    %v4602 = vpop.f32.mrf.mxu0
    %v4603 = vadd.f32 %v4250, %v4602
    %4604 = vmatprep.mubr.bf16.mxu0 %v528
    %4605 = vmatmul.mubr.bf16.gmra.mxu0 %v527
    %v4606 = vpop.f32.mrf.mxu0
    %v4607 = vadd.f32 %v4254, %v4606
    %v4608 = vpop.f32.mrf.mxu0
    %v4609 = vadd.f32 %v4256, %v4608
    %v4610 = vpop.f32.mrf.mxu0
    %v4611 = vadd.f32 %v4258, %v4610
    %v4612 = vpop.f32.mrf.mxu0
    %v4613 = vadd.f32 %v4260, %v4612
    %4614 = vmatprep.mubr.bf16.mxu0 %v535
    %4615 = vmatmul.mubr.bf16.gmra.mxu0 %v534
    %v4616 = vpop.f32.mrf.mxu0
    %v4617 = vadd.f32 %v4264, %v4616
    %v4618 = vpop.f32.mrf.mxu0
    %v4619 = vadd.f32 %v4266, %v4618
    %v4620 = vpop.f32.mrf.mxu0
    %v4621 = vadd.f32 %v4268, %v4620
    %v4622 = vpop.f32.mrf.mxu0
    %v4623 = vadd.f32 %v4270, %v4622
    %4624 = vmatprep.mubr.bf16.mxu0 %v542
    %4625 = vmatmul.mubr.bf16.gmra.mxu0 %v541
    %v4626 = vpop.f32.mrf.mxu0
    %v4627 = vadd.f32 %v4274, %v4626
    %v4628 = vpop.f32.mrf.mxu0
    %v4629 = vadd.f32 %v4276, %v4628
    %v4630 = vpop.f32.mrf.mxu0
    %v4631 = vadd.f32 %v4278, %v4630
    %v4632 = vpop.f32.mrf.mxu0
    %v4633 = vadd.f32 %v4280, %v4632
    %4634 = vmatprep.mubr.bf16.mxu0 %v549
    %4635 = vmatmul.mubr.bf16.gmra.mxu0 %v548
    %v4636 = vpop.f32.mrf.mxu0
    %v4637 = vadd.f32 %v4284, %v4636
    %v4638 = vpop.f32.mrf.mxu0
    %v4639 = vadd.f32 %v4286, %v4638
    %v4640 = vpop.f32.mrf.mxu0
    %v4641 = vadd.f32 %v4288, %v4640
    %v4642 = vpop.f32.mrf.mxu0
    %v4643 = vadd.f32 %v4290, %v4642
    %4644 = vmatprep.mubr.bf16.mxu0 %v556
    %4645 = vmatmul.mubr.bf16.gmra.mxu0 %v555
    %v4646 = vpop.f32.mrf.mxu0
    %v4647 = vadd.f32 %v4294, %v4646
    %v4648 = vpop.f32.mrf.mxu0
    %v4649 = vadd.f32 %v4296, %v4648
    %v4650 = vpop.f32.mrf.mxu0
    %v4651 = vadd.f32 %v4298, %v4650
    %v4652 = vpop.f32.mrf.mxu0
    %v4653 = vadd.f32 %v4300, %v4652
    %4654 = vmatprep.mubr.bf16.mxu0 %v563
    %4655 = vmatmul.mubr.bf16.gmra.mxu0 %v562
    %v4656 = vpop.f32.mrf.mxu0
    %v4657 = vadd.f32 %v4304, %v4656
    %v4658 = vpop.f32.mrf.mxu0
    %v4659 = vadd.f32 %v4306, %v4658
    %v4660 = vpop.f32.mrf.mxu0
    %v4661 = vadd.f32 %v4308, %v4660
    %v4662 = vpop.f32.mrf.mxu0
    %v4663 = vadd.f32 %v4310, %v4662
    %4664 = vmatprep.mubr.bf16.mxu0 %v570
    %4665 = vmatmul.mubr.bf16.gmra.mxu0 %v569
    %v4666 = vpop.f32.mrf.mxu0
    %v4667 = vadd.f32 %v4314, %v4666
    %v4668 = vpop.f32.mrf.mxu0
    %v4669 = vadd.f32 %v4316, %v4668
    %v4670 = vpop.f32.mrf.mxu0
    %v4671 = vadd.f32 %v4318, %v4670
    %v4672 = vpop.f32.mrf.mxu0
    %v4673 = vadd.f32 %v4320, %v4672
    %4674 = vmatprep.mubr.bf16.mxu0 %v577
    %4675 = vmatmul.mubr.bf16.gmra.mxu0 %v576
    %v4676 = vpop.f32.mrf.mxu0
    %v4677 = vadd.f32 %v4324, %v4676
    %v4678 = vpop.f32.mrf.mxu0
    %v4679 = vadd.f32 %v4326, %v4678
    %v4680 = vpop.f32.mrf.mxu0
    %v4681 = vadd.f32 %v4328, %v4680
    %v4682 = vpop.f32.mrf.mxu0
    %v4683 = vadd.f32 %v4330, %v4682
    %4684 = vmatprep.mubr.bf16.mxu0 %v584
    %4685 = vmatmul.mubr.bf16.gmra.mxu0 %v583
    %v4686 = vpop.f32.mrf.mxu0
    %v4687 = vadd.f32 %v4334, %v4686
    %v4688 = vpop.f32.mrf.mxu0
    %v4689 = vadd.f32 %v4336, %v4688
    %v4690 = vpop.f32.mrf.mxu0
    %v4691 = vadd.f32 %v4338, %v4690
    %v4692 = vpop.f32.mrf.mxu0
    %v4693 = vadd.f32 %v4340, %v4692
    %4694 = vmatprep.mubr.bf16.mxu0 %v591
    %4695 = vmatmul.mubr.bf16.gmra.mxu0 %v590
    %v4696 = vpop.f32.mrf.mxu0
    %v4697 = vadd.f32 %v4344, %v4696
    %v4698 = vpop.f32.mrf.mxu0
    %v4699 = vadd.f32 %v4346, %v4698
    %v4700 = vpop.f32.mrf.mxu0
    %v4701 = vadd.f32 %v4348, %v4700
    %v4702 = vpop.f32.mrf.mxu0
    %v4703 = vadd.f32 %v4350, %v4702
    %4704 = vmatprep.mubr.bf16.mxu0 %v598
    %4705 = vmatmul.mubr.bf16.gmra.mxu0 %v597
    %v4706 = vpop.f32.mrf.mxu0
    %v4707 = vadd.f32 %v4354, %v4706
    %v4708 = vpop.f32.mrf.mxu0
    %v4709 = vadd.f32 %v4356, %v4708
    %v4710 = vpop.f32.mrf.mxu0
    %v4711 = vadd.f32 %v4358, %v4710
    %v4712 = vpop.f32.mrf.mxu0
    %v4713 = vadd.f32 %v4360, %v4712
    %4714 = vmatprep.mubr.bf16.mxu0 %v605
    %4715 = vmatmul.mubr.bf16.gmra.mxu0 %v604
    %v4716 = vpop.f32.mrf.mxu0
    %v4717 = vadd.f32 %v4364, %v4716
    %v4718 = vpop.f32.mrf.mxu0
    %v4719 = vadd.f32 %v4366, %v4718
    %v4720 = vpop.f32.mrf.mxu0
    %v4721 = vadd.f32 %v4368, %v4720
    %v4722 = vpop.f32.mrf.mxu0
    %v4723 = vadd.f32 %v4370, %v4722
    %4724 = vmatprep.mubr.bf16.mxu0 %v612
    %4725 = vmatmul.mubr.bf16.gmra.mxu0 %v611
    %v4726 = vpop.f32.mrf.mxu0
    %v4727 = vadd.f32 %v4374, %v4726
    %v4728 = vpop.f32.mrf.mxu0
    %v4729 = vadd.f32 %v4376, %v4728
    %v4730 = vpop.f32.mrf.mxu0
    %v4731 = vadd.f32 %v4378, %v4730
    %v4732 = vpop.f32.mrf.mxu0
    %v4733 = vadd.f32 %v4380, %v4732
    %4734 = vmatprep.mubr.bf16.mxu0 %v619
    %4735 = vmatmul.mubr.bf16.gmra.mxu0 %v618
    %v4736 = vpop.f32.mrf.mxu0
    %v4737 = vadd.f32 %v4384, %v4736
    %v4738 = vpop.f32.mrf.mxu0
    %v4739 = vadd.f32 %v4386, %v4738
    %v4740 = vpop.f32.mrf.mxu0
    %v4741 = vadd.f32 %v4388, %v4740
    %v4742 = vpop.f32.mrf.mxu0
    %v4743 = vadd.f32 %v4390, %v4742
    %4744 = vmatprep.mubr.bf16.mxu0 %v626
    %4745 = vmatmul.mubr.bf16.gmra.mxu0 %v625
    %v4746 = vpop.f32.mrf.mxu0
    %v4747 = vadd.f32 %v4394, %v4746
    %v4748 = vpop.f32.mrf.mxu0
    %v4749 = vadd.f32 %v4396, %v4748
    %v4750 = vpop.f32.mrf.mxu0
    %v4751 = vadd.f32 %v4398, %v4750
    %v4752 = vpop.f32.mrf.mxu0
    %v4753 = vadd.f32 %v4400, %v4752
    %4754 = vmatprep.mubr.bf16.mxu0 %v633
    %4755 = vmatmul.mubr.bf16.gmra.mxu0 %v632
    %v4756 = vpop.f32.mrf.mxu0
    %v4757 = vadd.f32 %v4404, %v4756
    %v4758 = vpop.f32.mrf.mxu0
    %v4759 = vadd.f32 %v4406, %v4758
    %v4760 = vpop.f32.mrf.mxu0
    %v4761 = vadd.f32 %v4408, %v4760
    %v4762 = vpop.f32.mrf.mxu0
    %v4763 = vadd.f32 %v4410, %v4762
    %4764 = vmatprep.mubr.bf16.mxu0 %v640
    %4765 = vmatmul.mubr.bf16.gmra.mxu0 %v639
    %v4766 = vpop.f32.mrf.mxu0
    %v4767 = vadd.f32 %v4414, %v4766
    %v4768 = vpop.f32.mrf.mxu0
    %v4769 = vadd.f32 %v4416, %v4768
    %v4770 = vpop.f32.mrf.mxu0
    %v4771 = vadd.f32 %v4418, %v4770
    %v4772 = vpop.f32.mrf.mxu0
    %v4773 = vadd.f32 %v4420, %v4772
    %4774 = vmatprep.mubr.bf16.mxu0 %v647
    %4775 = vmatmul.mubr.bf16.gmra.mxu0 %v646
    %v4776 = vpop.f32.mrf.mxu0
    %v4777 = vadd.f32 %v4424, %v4776
    %v4778 = vpop.f32.mrf.mxu0
    %v4779 = vadd.f32 %v4426, %v4778
    %v4780 = vpop.f32.mrf.mxu0
    %v4781 = vadd.f32 %v4428, %v4780
    %v4782 = vpop.f32.mrf.mxu0
    %v4783 = vadd.f32 %v4430, %v4782
    %4784 = vmatprep.mubr.bf16.mxu0 %v654
    %4785 = vmatmul.mubr.bf16.gmra.mxu0 %v653
    %v4786 = vpop.f32.mrf.mxu0
    %v4787 = vadd.f32 %v4434, %v4786
    %v4788 = vpop.f32.mrf.mxu0
    %v4789 = vadd.f32 %v4436, %v4788
    %v4790 = vpop.f32.mrf.mxu0
    %v4791 = vadd.f32 %v4438, %v4790
    %v4792 = vpop.f32.mrf.mxu0
    %v4793 = vadd.f32 %v4440, %v4792
    %4794 = vmatprep.mubr.bf16.mxu0 %v661
    %4795 = vmatmul.mubr.bf16.gmra.mxu0 %v660
    %v4796 = vpop.f32.mrf.mxu0
    %v4797 = vadd.f32 %v4444, %v4796
    %v4798 = vpop.f32.mrf.mxu0
    %v4799 = vadd.f32 %v4446, %v4798
    %v4800 = vpop.f32.mrf.mxu0
    %v4801 = vadd.f32 %v4448, %v4800
    %v4802 = vpop.f32.mrf.mxu0
    %v4803 = vadd.f32 %v4450, %v4802
    %4804 = vmatprep.mubr.bf16.mxu0 %v668
    %4805 = vmatmul.mubr.bf16.gmra.mxu0 %v667
    %v4806 = vpop.f32.mrf.mxu0
    %v4807 = vadd.f32 %v4454, %v4806
    %v4808 = vpop.f32.mrf.mxu0
    %v4809 = vadd.f32 %v4456, %v4808
    %v4810 = vpop.f32.mrf.mxu0
    %v4811 = vadd.f32 %v4458, %v4810
    %v4812 = vpop.f32.mrf.mxu0
    %v4813 = vadd.f32 %v4460, %v4812
    %4814 = vmatprep.mubr.bf16.mxu0 %v675
    %4815 = vmatmul.mubr.bf16.gmra.mxu0 %v674
    %v4816 = vpop.f32.mrf.mxu0
    %v4817 = vadd.f32 %v4464, %v4816
    %v4818 = vpop.f32.mrf.mxu0
    %v4819 = vadd.f32 %v4466, %v4818
    %v4820 = vpop.f32.mrf.mxu0
    %v4821 = vadd.f32 %v4468, %v4820
    %v4822 = vpop.f32.mrf.mxu0
    %v4823 = vadd.f32 %v4470, %v4822
    %4824 = vmatprep.mubr.bf16.mxu0 %v682
    %4825 = vmatmul.mubr.bf16.gmra.mxu0 %v681
    %v4826 = vpop.f32.mrf.mxu0
    %v4827 = vadd.f32 %v4474, %v4826
    %v4828 = vpop.f32.mrf.mxu0
    %v4829 = vadd.f32 %v4476, %v4828
    %v4830 = vpop.f32.mrf.mxu0
    %v4831 = vadd.f32 %v4478, %v4830
    %v4832 = vpop.f32.mrf.mxu0
    %v4833 = vadd.f32 %v4480, %v4832
    %4834 = vmatprep.mubr.bf16.mxu0 %v689
    %4835 = vmatmul.mubr.bf16.gmra.mxu0 %v688
    %v4836 = vpop.f32.mrf.mxu0
    %v4837 = vadd.f32 %v4484, %v4836
    %v4838 = vpop.f32.mrf.mxu0
    %v4839 = vadd.f32 %v4486, %v4838
    %v4840 = vpop.f32.mrf.mxu0
    %v4841 = vadd.f32 %v4488, %v4840
    %v4842 = vpop.f32.mrf.mxu0
    %v4843 = vadd.f32 %v4490, %v4842
    %4844 = vmatprep.mubr.bf16.mxu0 %v696
    %4845 = vmatmul.mubr.bf16.gmra.mxu0 %v695
    %v4846 = vpop.f32.mrf.mxu0
    %v4847 = vadd.f32 %v4494, %v4846
    %v4848 = vpop.f32.mrf.mxu0
    %v4849 = vadd.f32 %v4496, %v4848
    %v4850 = vpop.f32.mrf.mxu0
    %v4851 = vadd.f32 %v4498, %v4850
    %v4852 = vpop.f32.mrf.mxu0
    %v4853 = vadd.f32 %v4500, %v4852
    %4854 = vmatprep.mubr.bf16.mxu0 %v703
    %4855 = vmatmul.mubr.bf16.gmra.mxu0 %v702
    %v4856 = vpop.f32.mrf.mxu0
    %v4857 = vadd.f32 %v4504, %v4856
    %v4858 = vpop.f32.mrf.mxu0
    %v4859 = vadd.f32 %v4506, %v4858
    %v4860 = vpop.f32.mrf.mxu0
    %v4861 = vadd.f32 %v4508, %v4860
    %v4862 = vpop.f32.mrf.mxu0
    %v4863 = vadd.f32 %v4510, %v4862
    %4864 = vmatprep.mubr.bf16.mxu0 %v710
    %4865 = vmatmul.mubr.bf16.gmra.mxu0 %v709
    %v4866 = vpop.f32.mrf.mxu0
    %v4867 = vadd.f32 %v4514, %v4866
    %v4868 = vpop.f32.mrf.mxu0
    %v4869 = vadd.f32 %v4516, %v4868
    %v4870 = vpop.f32.mrf.mxu0
    %v4871 = vadd.f32 %v4518, %v4870
    %v4872 = vpop.f32.mrf.mxu0
    %v4873 = vadd.f32 %v4520, %v4872
    %4874 = vdwg.mxu0
    %4875 = vmatprep.subr.bf16.mxu0 0
    %4876 = vmatpush1.bf16.msra.mxu0 0
    %4877 = vmatprep.subr.bf16.mxu0 0
    %4878 = vmatpush1.bf16.msra.mxu0 0
    %4879 = vmatprep.subr.bf16.mxu0 0
    %4880 = vmatpush1.bf16.msra.mxu0 0
    %4881 = vmatprep.subr.bf16.mxu0 0
    %4882 = vmatpush1.bf16.msra.mxu0 0
    %4883 = vmatprep.subr.bf16.mxu0 0
    %4884 = vmatpush1.bf16.msra.mxu0 0
    %4885 = vmatprep.subr.bf16.mxu0 0
    %4886 = vmatpush1.bf16.msra.mxu0 0
    %4887 = vmatprep.subr.bf16.mxu0 0
    %4888 = vmatpush1.bf16.msra.mxu0 0
    %4889 = vmatprep.subr.bf16.mxu0 %v2060
    %4890 = vmatpush1.bf16.msra.mxu0 %v2059
    %4891 = vmatprep.subr.bf16.mxu0 0
    %4892 = vmatpush2.bf16.msra.mxu0 0
    %4893 = vmatprep.subr.bf16.mxu0 0
    %4894 = vmatpush2.bf16.msra.mxu0 0
    %4895 = vmatprep.subr.bf16.mxu0 0
    %4896 = vmatpush2.bf16.msra.mxu0 0
    %4897 = vmatprep.subr.bf16.mxu0 0
    %4898 = vmatpush2.bf16.msra.mxu0 0
    %4899 = vmatprep.subr.bf16.mxu0 0
    %4900 = vmatpush2.bf16.msra.mxu0 0
    %4901 = vmatprep.subr.bf16.mxu0 0
    %4902 = vmatpush2.bf16.msra.mxu0 0
    %4903 = vmatprep.subr.bf16.mxu0 0
    %4904 = vmatpush2.bf16.msra.mxu0 0
    %4905 = vmatprep.subr.bf16.mxu0 0
    %4906 = vmatpush2.bf16.msra.mxu0 0
    %4907 = vmatprep.mubr.bf16.mxu0 0
    %4908 = vmatmul.mubr.bf16.gmra.mxu0 %v2309
    %v4909 = vpop.f32.mrf.mxu0
    %v4910 = vadd.f32 %v4557, %v4909
    %v4911 = vpop.f32.mrf.mxu0
    %v4912 = vadd.f32 %v4559, %v4911
    %v4913 = vpop.f32.mrf.mxu0
    %v4914 = vadd.f32 %v4561, %v4913
    %v4915 = vpop.f32.mrf.mxu0
    %v4916 = vadd.f32 %v4563, %v4915
    %4917 = vmatprep.mubr.bf16.mxu0 0
    %4918 = vmatmul.mubr.bf16.gmra.mxu0 %v2312
    %v4919 = vpop.f32.mrf.mxu0
    %v4920 = vadd.f32 %v4567, %v4919
    %v4921 = vpop.f32.mrf.mxu0
    %v4922 = vadd.f32 %v4569, %v4921
    %v4923 = vpop.f32.mrf.mxu0
    %v4924 = vadd.f32 %v4571, %v4923
    %v4925 = vpop.f32.mrf.mxu0
    %v4926 = vadd.f32 %v4573, %v4925
    %4927 = vmatprep.mubr.bf16.mxu0 0
    %4928 = vmatmul.mubr.bf16.gmra.mxu0 %v2315
    %v4929 = vpop.f32.mrf.mxu0
    %v4930 = vadd.f32 %v4577, %v4929
    %v4931 = vpop.f32.mrf.mxu0
    %v4932 = vadd.f32 %v4579, %v4931
    %v4933 = vpop.f32.mrf.mxu0
    %v4934 = vadd.f32 %v4581, %v4933
    %v4935 = vpop.f32.mrf.mxu0
    %v4936 = vadd.f32 %v4583, %v4935
    %4937 = vmatprep.mubr.bf16.mxu0 0
    %4938 = vmatmul.mubr.bf16.gmra.mxu0 %v2318
    %v4939 = vpop.f32.mrf.mxu0
    %v4940 = vadd.f32 %v4587, %v4939
    %v4941 = vpop.f32.mrf.mxu0
    %v4942 = vadd.f32 %v4589, %v4941
    %v4943 = vpop.f32.mrf.mxu0
    %v4944 = vadd.f32 %v4591, %v4943
    %v4945 = vpop.f32.mrf.mxu0
    %v4946 = vadd.f32 %v4593, %v4945
    %4947 = vmatprep.mubr.bf16.mxu0 0
    %4948 = vmatmul.mubr.bf16.gmra.mxu0 %v2321
    %v4949 = vpop.f32.mrf.mxu0
    %v4950 = vadd.f32 %v4597, %v4949
    %v4951 = vpop.f32.mrf.mxu0
    %v4952 = vadd.f32 %v4599, %v4951
    %v4953 = vpop.f32.mrf.mxu0
    %v4954 = vadd.f32 %v4601, %v4953
    %v4955 = vpop.f32.mrf.mxu0
    %v4956 = vadd.f32 %v4603, %v4955
    %4957 = vmatprep.mubr.bf16.mxu0 0
    %4958 = vmatmul.mubr.bf16.gmra.mxu0 %v2324
    %v4959 = vpop.f32.mrf.mxu0
    %v4960 = vadd.f32 %v4607, %v4959
    %v4961 = vpop.f32.mrf.mxu0
    %v4962 = vadd.f32 %v4609, %v4961
    %v4963 = vpop.f32.mrf.mxu0
    %v4964 = vadd.f32 %v4611, %v4963
    %v4965 = vpop.f32.mrf.mxu0
    %v4966 = vadd.f32 %v4613, %v4965
    %4967 = vmatprep.mubr.bf16.mxu0 0
    %4968 = vmatmul.mubr.bf16.gmra.mxu0 %v2327
    %v4969 = vpop.f32.mrf.mxu0
    %v4970 = vadd.f32 %v4617, %v4969
    %v4971 = vpop.f32.mrf.mxu0
    %v4972 = vadd.f32 %v4619, %v4971
    %v4973 = vpop.f32.mrf.mxu0
    %v4974 = vadd.f32 %v4621, %v4973
    %v4975 = vpop.f32.mrf.mxu0
    %v4976 = vadd.f32 %v4623, %v4975
    %4977 = vmatprep.mubr.bf16.mxu0 0
    %4978 = vmatmul.mubr.bf16.gmra.mxu0 %v2330
    %v4979 = vpop.f32.mrf.mxu0
    %v4980 = vadd.f32 %v4627, %v4979
    %v4981 = vpop.f32.mrf.mxu0
    %v4982 = vadd.f32 %v4629, %v4981
    %v4983 = vpop.f32.mrf.mxu0
    %v4984 = vadd.f32 %v4631, %v4983
    %v4985 = vpop.f32.mrf.mxu0
    %v4986 = vadd.f32 %v4633, %v4985
    %4987 = vmatprep.mubr.bf16.mxu0 0
    %4988 = vmatmul.mubr.bf16.gmra.mxu0 %v2333
    %v4989 = vpop.f32.mrf.mxu0
    %v4990 = vadd.f32 %v4637, %v4989
    %v4991 = vpop.f32.mrf.mxu0
    %v4992 = vadd.f32 %v4639, %v4991
    %v4993 = vpop.f32.mrf.mxu0
    %v4994 = vadd.f32 %v4641, %v4993
    %v4995 = vpop.f32.mrf.mxu0
    %v4996 = vadd.f32 %v4643, %v4995
    %4997 = vmatprep.mubr.bf16.mxu0 0
    %4998 = vmatmul.mubr.bf16.gmra.mxu0 %v2336
    %v4999 = vpop.f32.mrf.mxu0
    %v5000 = vadd.f32 %v4647, %v4999
    %v5001 = vpop.f32.mrf.mxu0
    %v5002 = vadd.f32 %v4649, %v5001
    %v5003 = vpop.f32.mrf.mxu0
    %v5004 = vadd.f32 %v4651, %v5003
    %v5005 = vpop.f32.mrf.mxu0
    %v5006 = vadd.f32 %v4653, %v5005
    %5007 = vmatprep.mubr.bf16.mxu0 0
    %5008 = vmatmul.mubr.bf16.gmra.mxu0 %v2339
    %v5009 = vpop.f32.mrf.mxu0
    %v5010 = vadd.f32 %v4657, %v5009
    %v5011 = vpop.f32.mrf.mxu0
    %v5012 = vadd.f32 %v4659, %v5011
    %v5013 = vpop.f32.mrf.mxu0
    %v5014 = vadd.f32 %v4661, %v5013
    %v5015 = vpop.f32.mrf.mxu0
    %v5016 = vadd.f32 %v4663, %v5015
    %5017 = vmatprep.mubr.bf16.mxu0 0
    %5018 = vmatmul.mubr.bf16.gmra.mxu0 %v2342
    %v5019 = vpop.f32.mrf.mxu0
    %v5020 = vadd.f32 %v4667, %v5019
    %v5021 = vpop.f32.mrf.mxu0
    %v5022 = vadd.f32 %v4669, %v5021
    %v5023 = vpop.f32.mrf.mxu0
    %v5024 = vadd.f32 %v4671, %v5023
    %v5025 = vpop.f32.mrf.mxu0
    %v5026 = vadd.f32 %v4673, %v5025
    %5027 = vmatprep.mubr.bf16.mxu0 0
    %5028 = vmatmul.mubr.bf16.gmra.mxu0 %v2345
    %v5029 = vpop.f32.mrf.mxu0
    %v5030 = vadd.f32 %v4677, %v5029
    %v5031 = vpop.f32.mrf.mxu0
    %v5032 = vadd.f32 %v4679, %v5031
    %v5033 = vpop.f32.mrf.mxu0
    %v5034 = vadd.f32 %v4681, %v5033
    %v5035 = vpop.f32.mrf.mxu0
    %v5036 = vadd.f32 %v4683, %v5035
    %5037 = vmatprep.mubr.bf16.mxu0 0
    %5038 = vmatmul.mubr.bf16.gmra.mxu0 %v2348
    %v5039 = vpop.f32.mrf.mxu0
    %v5040 = vadd.f32 %v4687, %v5039
    %v5041 = vpop.f32.mrf.mxu0
    %v5042 = vadd.f32 %v4689, %v5041
    %v5043 = vpop.f32.mrf.mxu0
    %v5044 = vadd.f32 %v4691, %v5043
    %v5045 = vpop.f32.mrf.mxu0
    %v5046 = vadd.f32 %v4693, %v5045
    %5047 = vmatprep.mubr.bf16.mxu0 0
    %5048 = vmatmul.mubr.bf16.gmra.mxu0 %v2351
    %v5049 = vpop.f32.mrf.mxu0
    %v5050 = vadd.f32 %v4697, %v5049
    %v5051 = vpop.f32.mrf.mxu0
    %v5052 = vadd.f32 %v4699, %v5051
    %v5053 = vpop.f32.mrf.mxu0
    %v5054 = vadd.f32 %v4701, %v5053
    %v5055 = vpop.f32.mrf.mxu0
    %v5056 = vadd.f32 %v4703, %v5055
    %5057 = vmatprep.mubr.bf16.mxu0 0
    %5058 = vmatmul.mubr.bf16.gmra.mxu0 %v2354
    %v5059 = vpop.f32.mrf.mxu0
    %v5060 = vadd.f32 %v4707, %v5059
    %v5061 = vpop.f32.mrf.mxu0
    %v5062 = vadd.f32 %v4709, %v5061
    %v5063 = vpop.f32.mrf.mxu0
    %v5064 = vadd.f32 %v4711, %v5063
    %v5065 = vpop.f32.mrf.mxu0
    %v5066 = vadd.f32 %v4713, %v5065
    %5067 = vmatprep.mubr.bf16.mxu0 0
    %5068 = vmatmul.mubr.bf16.gmra.mxu0 %v2357
    %v5069 = vpop.f32.mrf.mxu0
    %v5070 = vadd.f32 %v4717, %v5069
    %v5071 = vpop.f32.mrf.mxu0
    %v5072 = vadd.f32 %v4719, %v5071
    %v5073 = vpop.f32.mrf.mxu0
    %v5074 = vadd.f32 %v4721, %v5073
    %v5075 = vpop.f32.mrf.mxu0
    %v5076 = vadd.f32 %v4723, %v5075
    %5077 = vmatprep.mubr.bf16.mxu0 0
    %5078 = vmatmul.mubr.bf16.gmra.mxu0 %v2360
    %v5079 = vpop.f32.mrf.mxu0
    %v5080 = vadd.f32 %v4727, %v5079
    %v5081 = vpop.f32.mrf.mxu0
    %v5082 = vadd.f32 %v4729, %v5081
    %v5083 = vpop.f32.mrf.mxu0
    %v5084 = vadd.f32 %v4731, %v5083
    %v5085 = vpop.f32.mrf.mxu0
    %v5086 = vadd.f32 %v4733, %v5085
    %5087 = vmatprep.mubr.bf16.mxu0 0
    %5088 = vmatmul.mubr.bf16.gmra.mxu0 %v2363
    %v5089 = vpop.f32.mrf.mxu0
    %v5090 = vadd.f32 %v4737, %v5089
    %v5091 = vpop.f32.mrf.mxu0
    %v5092 = vadd.f32 %v4739, %v5091
    %v5093 = vpop.f32.mrf.mxu0
    %v5094 = vadd.f32 %v4741, %v5093
    %v5095 = vpop.f32.mrf.mxu0
    %v5096 = vadd.f32 %v4743, %v5095
    %5097 = vmatprep.mubr.bf16.mxu0 0
    %5098 = vmatmul.mubr.bf16.gmra.mxu0 %v2366
    %v5099 = vpop.f32.mrf.mxu0
    %v5100 = vadd.f32 %v4747, %v5099
    %v5101 = vpop.f32.mrf.mxu0
    %v5102 = vadd.f32 %v4749, %v5101
    %v5103 = vpop.f32.mrf.mxu0
    %v5104 = vadd.f32 %v4751, %v5103
    %v5105 = vpop.f32.mrf.mxu0
    %v5106 = vadd.f32 %v4753, %v5105
    %5107 = vmatprep.mubr.bf16.mxu0 0
    %5108 = vmatmul.mubr.bf16.gmra.mxu0 %v2369
    %v5109 = vpop.f32.mrf.mxu0
    %v5110 = vadd.f32 %v4757, %v5109
    %v5111 = vpop.f32.mrf.mxu0
    %v5112 = vadd.f32 %v4759, %v5111
    %v5113 = vpop.f32.mrf.mxu0
    %v5114 = vadd.f32 %v4761, %v5113
    %v5115 = vpop.f32.mrf.mxu0
    %v5116 = vadd.f32 %v4763, %v5115
    %5117 = vmatprep.mubr.bf16.mxu0 0
    %5118 = vmatmul.mubr.bf16.gmra.mxu0 %v2372
    %v5119 = vpop.f32.mrf.mxu0
    %v5120 = vadd.f32 %v4767, %v5119
    %v5121 = vpop.f32.mrf.mxu0
    %v5122 = vadd.f32 %v4769, %v5121
    %v5123 = vpop.f32.mrf.mxu0
    %v5124 = vadd.f32 %v4771, %v5123
    %v5125 = vpop.f32.mrf.mxu0
    %v5126 = vadd.f32 %v4773, %v5125
    %5127 = vmatprep.mubr.bf16.mxu0 0
    %5128 = vmatmul.mubr.bf16.gmra.mxu0 %v2375
    %v5129 = vpop.f32.mrf.mxu0
    %v5130 = vadd.f32 %v4777, %v5129
    %v5131 = vpop.f32.mrf.mxu0
    %v5132 = vadd.f32 %v4779, %v5131
    %v5133 = vpop.f32.mrf.mxu0
    %v5134 = vadd.f32 %v4781, %v5133
    %v5135 = vpop.f32.mrf.mxu0
    %v5136 = vadd.f32 %v4783, %v5135
    %5137 = vmatprep.mubr.bf16.mxu0 0
    %5138 = vmatmul.mubr.bf16.gmra.mxu0 %v2378
    %v5139 = vpop.f32.mrf.mxu0
    %v5140 = vadd.f32 %v4787, %v5139
    %v5141 = vpop.f32.mrf.mxu0
    %v5142 = vadd.f32 %v4789, %v5141
    %v5143 = vpop.f32.mrf.mxu0
    %v5144 = vadd.f32 %v4791, %v5143
    %v5145 = vpop.f32.mrf.mxu0
    %v5146 = vadd.f32 %v4793, %v5145
    %5147 = vmatprep.mubr.bf16.mxu0 0
    %5148 = vmatmul.mubr.bf16.gmra.mxu0 %v2381
    %v5149 = vpop.f32.mrf.mxu0
    %v5150 = vadd.f32 %v4797, %v5149
    %v5151 = vpop.f32.mrf.mxu0
    %v5152 = vadd.f32 %v4799, %v5151
    %v5153 = vpop.f32.mrf.mxu0
    %v5154 = vadd.f32 %v4801, %v5153
    %v5155 = vpop.f32.mrf.mxu0
    %v5156 = vadd.f32 %v4803, %v5155
    %5157 = vmatprep.mubr.bf16.mxu0 0
    %5158 = vmatmul.mubr.bf16.gmra.mxu0 %v2384
    %v5159 = vpop.f32.mrf.mxu0
    %v5160 = vadd.f32 %v4807, %v5159
    %v5161 = vpop.f32.mrf.mxu0
    %v5162 = vadd.f32 %v4809, %v5161
    %v5163 = vpop.f32.mrf.mxu0
    %v5164 = vadd.f32 %v4811, %v5163
    %v5165 = vpop.f32.mrf.mxu0
    %v5166 = vadd.f32 %v4813, %v5165
    %5167 = vmatprep.mubr.bf16.mxu0 0
    %5168 = vmatmul.mubr.bf16.gmra.mxu0 %v2387
    %v5169 = vpop.f32.mrf.mxu0
    %v5170 = vadd.f32 %v4817, %v5169
    %v5171 = vpop.f32.mrf.mxu0
    %v5172 = vadd.f32 %v4819, %v5171
    %v5173 = vpop.f32.mrf.mxu0
    %v5174 = vadd.f32 %v4821, %v5173
    %v5175 = vpop.f32.mrf.mxu0
    %v5176 = vadd.f32 %v4823, %v5175
    %5177 = vmatprep.mubr.bf16.mxu0 0
    %5178 = vmatmul.mubr.bf16.gmra.mxu0 %v2390
    %v5179 = vpop.f32.mrf.mxu0
    %v5180 = vadd.f32 %v4827, %v5179
    %v5181 = vpop.f32.mrf.mxu0
    %v5182 = vadd.f32 %v4829, %v5181
    %v5183 = vpop.f32.mrf.mxu0
    %v5184 = vadd.f32 %v4831, %v5183
    %v5185 = vpop.f32.mrf.mxu0
    %v5186 = vadd.f32 %v4833, %v5185
    %5187 = vmatprep.mubr.bf16.mxu0 0
    %5188 = vmatmul.mubr.bf16.gmra.mxu0 %v2393
    %v5189 = vpop.f32.mrf.mxu0
    %v5190 = vadd.f32 %v4837, %v5189
    %v5191 = vpop.f32.mrf.mxu0
    %v5192 = vadd.f32 %v4839, %v5191
    %v5193 = vpop.f32.mrf.mxu0
    %v5194 = vadd.f32 %v4841, %v5193
    %v5195 = vpop.f32.mrf.mxu0
    %v5196 = vadd.f32 %v4843, %v5195
    %5197 = vmatprep.mubr.bf16.mxu0 0
    %5198 = vmatmul.mubr.bf16.gmra.mxu0 %v2396
    %v5199 = vpop.f32.mrf.mxu0
    %v5200 = vadd.f32 %v4847, %v5199
    %v5201 = vpop.f32.mrf.mxu0
    %v5202 = vadd.f32 %v4849, %v5201
    %v5203 = vpop.f32.mrf.mxu0
    %v5204 = vadd.f32 %v4851, %v5203
    %v5205 = vpop.f32.mrf.mxu0
    %v5206 = vadd.f32 %v4853, %v5205
    %5207 = vmatprep.mubr.bf16.mxu0 0
    %5208 = vmatmul.mubr.bf16.gmra.mxu0 %v2399
    %v5209 = vpop.f32.mrf.mxu0
    %v5210 = vadd.f32 %v4857, %v5209
    %v5211 = vpop.f32.mrf.mxu0
    %v5212 = vadd.f32 %v4859, %v5211
    %v5213 = vpop.f32.mrf.mxu0
    %v5214 = vadd.f32 %v4861, %v5213
    %v5215 = vpop.f32.mrf.mxu0
    %v5216 = vadd.f32 %v4863, %v5215
    %5217 = vmatprep.mubr.bf16.mxu0 0
    %5218 = vmatmul.mubr.bf16.gmra.mxu0 %v2402
    %v5219 = vpop.f32.mrf.mxu0
    %v5220 = vadd.f32 %v4867, %v5219
    %v5221 = vpop.f32.mrf.mxu0
    %v5222 = vadd.f32 %v4869, %v5221
    %v5223 = vpop.f32.mrf.mxu0
    %v5224 = vadd.f32 %v4871, %v5223
    %v5225 = vpop.f32.mrf.mxu0
    %v5226 = vadd.f32 %v4873, %v5225
    %5227 = vdwg.mxu0
    %5228 = vmatprep.subr.bf16.mxu0 0
    %5229 = vmatpush1.bf16.msra.mxu0 %v1856
    %5230 = vmatprep.subr.bf16.mxu0 0
    %5231 = vmatpush1.bf16.msra.mxu0 %v1851
    %5232 = vmatprep.subr.bf16.mxu0 0
    %5233 = vmatpush1.bf16.msra.mxu0 %v1846
    %5234 = vmatprep.subr.bf16.mxu0 0
    %5235 = vmatpush1.bf16.msra.mxu0 %v1841
    %5236 = vmatprep.subr.bf16.mxu0 0
    %5237 = vmatpush1.bf16.msra.mxu0 %v1836
    %5238 = vmatprep.subr.bf16.mxu0 0
    %5239 = vmatpush1.bf16.msra.mxu0 %v1831
    %5240 = vmatprep.subr.bf16.mxu0 0
    %5241 = vmatpush1.bf16.msra.mxu0 %v1826
    %5242 = vmatprep.subr.bf16.mxu0 0
    %5243 = vmatpush1.bf16.msra.mxu0 %v1821
    %5244 = vmatprep.subr.bf16.mxu0 0
    %5245 = vmatpush2.bf16.msra.mxu0 %v1896
    %5246 = vmatprep.subr.bf16.mxu0 0
    %5247 = vmatpush2.bf16.msra.mxu0 %v1891
    %5248 = vmatprep.subr.bf16.mxu0 0
    %5249 = vmatpush2.bf16.msra.mxu0 %v1886
    %5250 = vmatprep.subr.bf16.mxu0 0
    %5251 = vmatpush2.bf16.msra.mxu0 %v1881
    %5252 = vmatprep.subr.bf16.mxu0 0
    %5253 = vmatpush2.bf16.msra.mxu0 %v1876
    %5254 = vmatprep.subr.bf16.mxu0 0
    %5255 = vmatpush2.bf16.msra.mxu0 %v1871
    %5256 = vmatprep.subr.bf16.mxu0 0
    %5257 = vmatpush2.bf16.msra.mxu0 %v1866
    %5258 = vmatprep.subr.bf16.mxu0 0
    %5259 = vmatpush2.bf16.msra.mxu0 %v1861
    %5260 = vmatprep.mubr.bf16.mxu0 %v489
    %5261 = vmatmul.mubr.bf16.gmra.mxu0 %v488
    %v5262 = vpop.f32.mrf.mxu0
    %v5263 = vadd.f32 %v1027, %v5262
    %v5264 = vpop.f32.mrf.mxu0
    %v5265 = vpop.f32.mrf.mxu0
    %v5266 = vadd.f32 %v1027, %v5265
    %v5267 = vpop.f32.mrf.mxu0
    %5268 = vmatprep.mubr.bf16.mxu0 %v496
    %5269 = vmatmul.mubr.bf16.gmra.mxu0 %v495
    %v5270 = vpop.f32.mrf.mxu0
    %v5271 = vadd.f32 %v1027, %v5270
    %v5272 = vpop.f32.mrf.mxu0
    %v5273 = vpop.f32.mrf.mxu0
    %v5274 = vadd.f32 %v1027, %v5273
    %v5275 = vpop.f32.mrf.mxu0
    %5276 = vmatprep.mubr.bf16.mxu0 %v503
    %5277 = vmatmul.mubr.bf16.gmra.mxu0 %v502
    %v5278 = vpop.f32.mrf.mxu0
    %v5279 = vadd.f32 %v1027, %v5278
    %v5280 = vpop.f32.mrf.mxu0
    %v5281 = vpop.f32.mrf.mxu0
    %v5282 = vadd.f32 %v1027, %v5281
    %v5283 = vpop.f32.mrf.mxu0
    %5284 = vmatprep.mubr.bf16.mxu0 %v510
    %5285 = vmatmul.mubr.bf16.gmra.mxu0 %v509
    %v5286 = vpop.f32.mrf.mxu0
    %v5287 = vadd.f32 %v1027, %v5286
    %v5288 = vpop.f32.mrf.mxu0
    %v5289 = vpop.f32.mrf.mxu0
    %v5290 = vadd.f32 %v1027, %v5289
    %v5291 = vpop.f32.mrf.mxu0
    %5292 = vmatprep.mubr.bf16.mxu0 %v517
    %5293 = vmatmul.mubr.bf16.gmra.mxu0 %v516
    %v5294 = vpop.f32.mrf.mxu0
    %v5295 = vadd.f32 %v1027, %v5294
    %v5296 = vpop.f32.mrf.mxu0
    %v5297 = vpop.f32.mrf.mxu0
    %v5298 = vadd.f32 %v1027, %v5297
    %v5299 = vpop.f32.mrf.mxu0
    %5300 = vmatprep.mubr.bf16.mxu0 %v524
    %5301 = vmatmul.mubr.bf16.gmra.mxu0 %v523
    %v5302 = vpop.f32.mrf.mxu0
    %v5303 = vadd.f32 %v1027, %v5302
    %v5304 = vpop.f32.mrf.mxu0
    %v5305 = vpop.f32.mrf.mxu0
    %v5306 = vadd.f32 %v1027, %v5305
    %v5307 = vpop.f32.mrf.mxu0
    %5308 = vmatprep.mubr.bf16.mxu0 %v531
    %5309 = vmatmul.mubr.bf16.gmra.mxu0 %v530
    %v5310 = vpop.f32.mrf.mxu0
    %v5311 = vadd.f32 %v1027, %v5310
    %v5312 = vpop.f32.mrf.mxu0
    %v5313 = vpop.f32.mrf.mxu0
    %v5314 = vadd.f32 %v1027, %v5313
    %v5315 = vpop.f32.mrf.mxu0
    %5316 = vmatprep.mubr.bf16.mxu0 %v538
    %5317 = vmatmul.mubr.bf16.gmra.mxu0 %v537
    %v5318 = vpop.f32.mrf.mxu0
    %v5319 = vadd.f32 %v1027, %v5318
    %v5320 = vpop.f32.mrf.mxu0
    %v5321 = vpop.f32.mrf.mxu0
    %v5322 = vadd.f32 %v1027, %v5321
    %v5323 = vpop.f32.mrf.mxu0
    %5324 = vmatprep.mubr.bf16.mxu0 %v545
    %5325 = vmatmul.mubr.bf16.gmra.mxu0 %v544
    %v5326 = vpop.f32.mrf.mxu0
    %v5327 = vadd.f32 %v1027, %v5326
    %v5328 = vpop.f32.mrf.mxu0
    %v5329 = vpop.f32.mrf.mxu0
    %v5330 = vadd.f32 %v1027, %v5329
    %v5331 = vpop.f32.mrf.mxu0
    %5332 = vmatprep.mubr.bf16.mxu0 %v552
    %5333 = vmatmul.mubr.bf16.gmra.mxu0 %v551
    %v5334 = vpop.f32.mrf.mxu0
    %v5335 = vadd.f32 %v1027, %v5334
    %v5336 = vpop.f32.mrf.mxu0
    %v5337 = vpop.f32.mrf.mxu0
    %v5338 = vadd.f32 %v1027, %v5337
    %v5339 = vpop.f32.mrf.mxu0
    %5340 = vmatprep.mubr.bf16.mxu0 %v559
    %5341 = vmatmul.mubr.bf16.gmra.mxu0 %v558
    %v5342 = vpop.f32.mrf.mxu0
    %v5343 = vadd.f32 %v1027, %v5342
    %v5344 = vpop.f32.mrf.mxu0
    %v5345 = vpop.f32.mrf.mxu0
    %v5346 = vadd.f32 %v1027, %v5345
    %v5347 = vpop.f32.mrf.mxu0
    %5348 = vmatprep.mubr.bf16.mxu0 %v566
    %5349 = vmatmul.mubr.bf16.gmra.mxu0 %v565
    %v5350 = vpop.f32.mrf.mxu0
    %v5351 = vadd.f32 %v1027, %v5350
    %v5352 = vpop.f32.mrf.mxu0
    %v5353 = vpop.f32.mrf.mxu0
    %v5354 = vadd.f32 %v1027, %v5353
    %v5355 = vpop.f32.mrf.mxu0
    %5356 = vmatprep.mubr.bf16.mxu0 %v573
    %5357 = vmatmul.mubr.bf16.gmra.mxu0 %v572
    %v5358 = vpop.f32.mrf.mxu0
    %v5359 = vadd.f32 %v1027, %v5358
    %v5360 = vpop.f32.mrf.mxu0
    %v5361 = vpop.f32.mrf.mxu0
    %v5362 = vadd.f32 %v1027, %v5361
    %v5363 = vpop.f32.mrf.mxu0
    %5364 = vmatprep.mubr.bf16.mxu0 %v580
    %5365 = vmatmul.mubr.bf16.gmra.mxu0 %v579
    %v5366 = vpop.f32.mrf.mxu0
    %v5367 = vadd.f32 %v1027, %v5366
    %v5368 = vpop.f32.mrf.mxu0
    %v5369 = vpop.f32.mrf.mxu0
    %v5370 = vadd.f32 %v1027, %v5369
    %v5371 = vpop.f32.mrf.mxu0
    %5372 = vmatprep.mubr.bf16.mxu0 %v587
    %5373 = vmatmul.mubr.bf16.gmra.mxu0 %v586
    %v5374 = vpop.f32.mrf.mxu0
    %v5375 = vadd.f32 %v1027, %v5374
    %v5376 = vpop.f32.mrf.mxu0
    %v5377 = vpop.f32.mrf.mxu0
    %v5378 = vadd.f32 %v1027, %v5377
    %v5379 = vpop.f32.mrf.mxu0
    %5380 = vmatprep.mubr.bf16.mxu0 %v594
    %5381 = vmatmul.mubr.bf16.gmra.mxu0 %v593
    %v5382 = vpop.f32.mrf.mxu0
    %v5383 = vadd.f32 %v1027, %v5382
    %v5384 = vpop.f32.mrf.mxu0
    %v5385 = vpop.f32.mrf.mxu0
    %v5386 = vadd.f32 %v1027, %v5385
    %v5387 = vpop.f32.mrf.mxu0
    %5388 = vmatprep.mubr.bf16.mxu0 %v601
    %5389 = vmatmul.mubr.bf16.gmra.mxu0 %v600
    %v5390 = vpop.f32.mrf.mxu0
    %v5391 = vadd.f32 %v1027, %v5390
    %v5392 = vpop.f32.mrf.mxu0
    %v5393 = vpop.f32.mrf.mxu0
    %v5394 = vadd.f32 %v1027, %v5393
    %v5395 = vpop.f32.mrf.mxu0
    %5396 = vmatprep.mubr.bf16.mxu0 %v608
    %5397 = vmatmul.mubr.bf16.gmra.mxu0 %v607
    %v5398 = vpop.f32.mrf.mxu0
    %v5399 = vadd.f32 %v1027, %v5398
    %v5400 = vpop.f32.mrf.mxu0
    %v5401 = vpop.f32.mrf.mxu0
    %v5402 = vadd.f32 %v1027, %v5401
    %v5403 = vpop.f32.mrf.mxu0
    %5404 = vmatprep.mubr.bf16.mxu0 %v615
    %5405 = vmatmul.mubr.bf16.gmra.mxu0 %v614
    %v5406 = vpop.f32.mrf.mxu0
    %v5407 = vadd.f32 %v1027, %v5406
    %v5408 = vpop.f32.mrf.mxu0
    %v5409 = vpop.f32.mrf.mxu0
    %v5410 = vadd.f32 %v1027, %v5409
    %v5411 = vpop.f32.mrf.mxu0
    %5412 = vmatprep.mubr.bf16.mxu0 %v622
    %5413 = vmatmul.mubr.bf16.gmra.mxu0 %v621
    %v5414 = vpop.f32.mrf.mxu0
    %v5415 = vadd.f32 %v1027, %v5414
    %v5416 = vpop.f32.mrf.mxu0
    %v5417 = vpop.f32.mrf.mxu0
    %v5418 = vadd.f32 %v1027, %v5417
    %v5419 = vpop.f32.mrf.mxu0
    %5420 = vmatprep.mubr.bf16.mxu0 %v629
    %5421 = vmatmul.mubr.bf16.gmra.mxu0 %v628
    %v5422 = vpop.f32.mrf.mxu0
    %v5423 = vadd.f32 %v1027, %v5422
    %v5424 = vpop.f32.mrf.mxu0
    %v5425 = vpop.f32.mrf.mxu0
    %v5426 = vadd.f32 %v1027, %v5425
    %v5427 = vpop.f32.mrf.mxu0
    %5428 = vmatprep.mubr.bf16.mxu0 %v636
    %5429 = vmatmul.mubr.bf16.gmra.mxu0 %v635
    %v5430 = vpop.f32.mrf.mxu0
    %v5431 = vadd.f32 %v1027, %v5430
    %v5432 = vpop.f32.mrf.mxu0
    %v5433 = vpop.f32.mrf.mxu0
    %v5434 = vadd.f32 %v1027, %v5433
    %v5435 = vpop.f32.mrf.mxu0
    %5436 = vmatprep.mubr.bf16.mxu0 %v643
    %5437 = vmatmul.mubr.bf16.gmra.mxu0 %v642
    %v5438 = vpop.f32.mrf.mxu0
    %v5439 = vadd.f32 %v1027, %v5438
    %v5440 = vpop.f32.mrf.mxu0
    %v5441 = vpop.f32.mrf.mxu0
    %v5442 = vadd.f32 %v1027, %v5441
    %v5443 = vpop.f32.mrf.mxu0
    %5444 = vmatprep.mubr.bf16.mxu0 %v650
    %5445 = vmatmul.mubr.bf16.gmra.mxu0 %v649
    %v5446 = vpop.f32.mrf.mxu0
    %v5447 = vadd.f32 %v1027, %v5446
    %v5448 = vpop.f32.mrf.mxu0
    %v5449 = vpop.f32.mrf.mxu0
    %v5450 = vadd.f32 %v1027, %v5449
    %v5451 = vpop.f32.mrf.mxu0
    %5452 = vmatprep.mubr.bf16.mxu0 %v657
    %5453 = vmatmul.mubr.bf16.gmra.mxu0 %v656
    %v5454 = vpop.f32.mrf.mxu0
    %v5455 = vadd.f32 %v1027, %v5454
    %v5456 = vpop.f32.mrf.mxu0
    %v5457 = vpop.f32.mrf.mxu0
    %v5458 = vadd.f32 %v1027, %v5457
    %v5459 = vpop.f32.mrf.mxu0
    %5460 = vmatprep.mubr.bf16.mxu0 %v664
    %5461 = vmatmul.mubr.bf16.gmra.mxu0 %v663
    %v5462 = vpop.f32.mrf.mxu0
    %v5463 = vadd.f32 %v1027, %v5462
    %v5464 = vpop.f32.mrf.mxu0
    %v5465 = vpop.f32.mrf.mxu0
    %v5466 = vadd.f32 %v1027, %v5465
    %v5467 = vpop.f32.mrf.mxu0
    %5468 = vmatprep.mubr.bf16.mxu0 %v671
    %5469 = vmatmul.mubr.bf16.gmra.mxu0 %v670
    %v5470 = vpop.f32.mrf.mxu0
    %v5471 = vadd.f32 %v1027, %v5470
    %v5472 = vpop.f32.mrf.mxu0
    %v5473 = vpop.f32.mrf.mxu0
    %v5474 = vadd.f32 %v1027, %v5473
    %v5475 = vpop.f32.mrf.mxu0
    %5476 = vmatprep.mubr.bf16.mxu0 %v678
    %5477 = vmatmul.mubr.bf16.gmra.mxu0 %v677
    %v5478 = vpop.f32.mrf.mxu0
    %v5479 = vadd.f32 %v1027, %v5478
    %v5480 = vpop.f32.mrf.mxu0
    %v5481 = vpop.f32.mrf.mxu0
    %v5482 = vadd.f32 %v1027, %v5481
    %v5483 = vpop.f32.mrf.mxu0
    %5484 = vmatprep.mubr.bf16.mxu0 %v685
    %5485 = vmatmul.mubr.bf16.gmra.mxu0 %v684
    %v5486 = vpop.f32.mrf.mxu0
    %v5487 = vadd.f32 %v1027, %v5486
    %v5488 = vpop.f32.mrf.mxu0
    %v5489 = vpop.f32.mrf.mxu0
    %v5490 = vadd.f32 %v1027, %v5489
    %v5491 = vpop.f32.mrf.mxu0
    %5492 = vmatprep.mubr.bf16.mxu0 %v692
    %5493 = vmatmul.mubr.bf16.gmra.mxu0 %v691
    %v5494 = vpop.f32.mrf.mxu0
    %v5495 = vadd.f32 %v1027, %v5494
    %v5496 = vpop.f32.mrf.mxu0
    %v5497 = vpop.f32.mrf.mxu0
    %v5498 = vadd.f32 %v1027, %v5497
    %v5499 = vpop.f32.mrf.mxu0
    %5500 = vmatprep.mubr.bf16.mxu0 %v699
    %5501 = vmatmul.mubr.bf16.gmra.mxu0 %v698
    %v5502 = vpop.f32.mrf.mxu0
    %v5503 = vadd.f32 %v1027, %v5502
    %v5504 = vpop.f32.mrf.mxu0
    %v5505 = vpop.f32.mrf.mxu0
    %v5506 = vadd.f32 %v1027, %v5505
    %v5507 = vpop.f32.mrf.mxu0
    %5508 = vmatprep.mubr.bf16.mxu0 %v706
    %5509 = vmatmul.mubr.bf16.gmra.mxu0 %v705
    %v5510 = vpop.f32.mrf.mxu0
    %v5511 = vadd.f32 %v1027, %v5510
    %v5512 = vpop.f32.mrf.mxu0
    %v5513 = vpop.f32.mrf.mxu0
    %v5514 = vadd.f32 %v1027, %v5513
    %v5515 = vpop.f32.mrf.mxu0
    %5516 = vdwg.mxu0
    %5517 = vmatprep.subr.bf16.mxu0 0
    %5518 = vmatpush1.bf16.msra.mxu0 %v1936
    %5519 = vmatprep.subr.bf16.mxu0 0
    %5520 = vmatpush1.bf16.msra.mxu0 %v1931
    %5521 = vmatprep.subr.bf16.mxu0 0
    %5522 = vmatpush1.bf16.msra.mxu0 %v1926
    %5523 = vmatprep.subr.bf16.mxu0 0
    %5524 = vmatpush1.bf16.msra.mxu0 %v1921
    %5525 = vmatprep.subr.bf16.mxu0 0
    %5526 = vmatpush1.bf16.msra.mxu0 %v1916
    %5527 = vmatprep.subr.bf16.mxu0 0
    %5528 = vmatpush1.bf16.msra.mxu0 %v1911
    %5529 = vmatprep.subr.bf16.mxu0 0
    %5530 = vmatpush1.bf16.msra.mxu0 %v1906
    %5531 = vmatprep.subr.bf16.mxu0 0
    %5532 = vmatpush1.bf16.msra.mxu0 %v1901
    %5533 = vmatprep.subr.bf16.mxu0 0
    %5534 = vmatpush2.bf16.msra.mxu0 %v1976
    %5535 = vmatprep.subr.bf16.mxu0 0
    %5536 = vmatpush2.bf16.msra.mxu0 %v1971
    %5537 = vmatprep.subr.bf16.mxu0 0
    %5538 = vmatpush2.bf16.msra.mxu0 %v1966
    %5539 = vmatprep.subr.bf16.mxu0 0
    %5540 = vmatpush2.bf16.msra.mxu0 %v1961
    %5541 = vmatprep.subr.bf16.mxu0 0
    %5542 = vmatpush2.bf16.msra.mxu0 %v1956
    %5543 = vmatprep.subr.bf16.mxu0 0
    %5544 = vmatpush2.bf16.msra.mxu0 %v1951
    %5545 = vmatprep.subr.bf16.mxu0 0
    %5546 = vmatpush2.bf16.msra.mxu0 %v1946
    %5547 = vmatprep.subr.bf16.mxu0 0
    %5548 = vmatpush2.bf16.msra.mxu0 %v1941
    %5549 = vmatprep.mubr.bf16.mxu0 %v491
    %5550 = vmatmul.mubr.bf16.gmra.mxu0 %v490
    %v5551 = vpop.f32.mrf.mxu0
    %v5552 = vadd.f32 %v5263, %v5551
    %v5553 = vpop.f32.mrf.mxu0
    %v5554 = vpop.f32.mrf.mxu0
    %v5555 = vadd.f32 %v5266, %v5554
    %v5556 = vpop.f32.mrf.mxu0
    %5557 = vmatprep.mubr.bf16.mxu0 %v498
    %5558 = vmatmul.mubr.bf16.gmra.mxu0 %v497
    %v5559 = vpop.f32.mrf.mxu0
    %v5560 = vadd.f32 %v5271, %v5559
    %v5561 = vpop.f32.mrf.mxu0
    %v5562 = vpop.f32.mrf.mxu0
    %v5563 = vadd.f32 %v5274, %v5562
    %v5564 = vpop.f32.mrf.mxu0
    %5565 = vmatprep.mubr.bf16.mxu0 %v505
    %5566 = vmatmul.mubr.bf16.gmra.mxu0 %v504
    %v5567 = vpop.f32.mrf.mxu0
    %v5568 = vadd.f32 %v5279, %v5567
    %v5569 = vpop.f32.mrf.mxu0
    %v5570 = vpop.f32.mrf.mxu0
    %v5571 = vadd.f32 %v5282, %v5570
    %v5572 = vpop.f32.mrf.mxu0
    %5573 = vmatprep.mubr.bf16.mxu0 %v512
    %5574 = vmatmul.mubr.bf16.gmra.mxu0 %v511
    %v5575 = vpop.f32.mrf.mxu0
    %v5576 = vadd.f32 %v5287, %v5575
    %v5577 = vpop.f32.mrf.mxu0
    %v5578 = vpop.f32.mrf.mxu0
    %v5579 = vadd.f32 %v5290, %v5578
    %v5580 = vpop.f32.mrf.mxu0
    %5581 = vmatprep.mubr.bf16.mxu0 %v519
    %5582 = vmatmul.mubr.bf16.gmra.mxu0 %v518
    %v5583 = vpop.f32.mrf.mxu0
    %v5584 = vadd.f32 %v5295, %v5583
    %v5585 = vpop.f32.mrf.mxu0
    %v5586 = vpop.f32.mrf.mxu0
    %v5587 = vadd.f32 %v5298, %v5586
    %v5588 = vpop.f32.mrf.mxu0
    %5589 = vmatprep.mubr.bf16.mxu0 %v526
    %5590 = vmatmul.mubr.bf16.gmra.mxu0 %v525
    %v5591 = vpop.f32.mrf.mxu0
    %v5592 = vadd.f32 %v5303, %v5591
    %v5593 = vpop.f32.mrf.mxu0
    %v5594 = vpop.f32.mrf.mxu0
    %v5595 = vadd.f32 %v5306, %v5594
    %v5596 = vpop.f32.mrf.mxu0
    %5597 = vmatprep.mubr.bf16.mxu0 %v533
    %5598 = vmatmul.mubr.bf16.gmra.mxu0 %v532
    %v5599 = vpop.f32.mrf.mxu0
    %v5600 = vadd.f32 %v5311, %v5599
    %v5601 = vpop.f32.mrf.mxu0
    %v5602 = vpop.f32.mrf.mxu0
    %v5603 = vadd.f32 %v5314, %v5602
    %v5604 = vpop.f32.mrf.mxu0
    %5605 = vmatprep.mubr.bf16.mxu0 %v540
    %5606 = vmatmul.mubr.bf16.gmra.mxu0 %v539
    %v5607 = vpop.f32.mrf.mxu0
    %v5608 = vadd.f32 %v5319, %v5607
    %v5609 = vpop.f32.mrf.mxu0
    %v5610 = vpop.f32.mrf.mxu0
    %v5611 = vadd.f32 %v5322, %v5610
    %v5612 = vpop.f32.mrf.mxu0
    %5613 = vmatprep.mubr.bf16.mxu0 %v547
    %5614 = vmatmul.mubr.bf16.gmra.mxu0 %v546
    %v5615 = vpop.f32.mrf.mxu0
    %v5616 = vadd.f32 %v5327, %v5615
    %v5617 = vpop.f32.mrf.mxu0
    %v5618 = vpop.f32.mrf.mxu0
    %v5619 = vadd.f32 %v5330, %v5618
    %v5620 = vpop.f32.mrf.mxu0
    %5621 = vmatprep.mubr.bf16.mxu0 %v554
    %5622 = vmatmul.mubr.bf16.gmra.mxu0 %v553
    %v5623 = vpop.f32.mrf.mxu0
    %v5624 = vadd.f32 %v5335, %v5623
    %v5625 = vpop.f32.mrf.mxu0
    %v5626 = vpop.f32.mrf.mxu0
    %v5627 = vadd.f32 %v5338, %v5626
    %v5628 = vpop.f32.mrf.mxu0
    %5629 = vmatprep.mubr.bf16.mxu0 %v561
    %5630 = vmatmul.mubr.bf16.gmra.mxu0 %v560
    %v5631 = vpop.f32.mrf.mxu0
    %v5632 = vadd.f32 %v5343, %v5631
    %v5633 = vpop.f32.mrf.mxu0
    %v5634 = vpop.f32.mrf.mxu0
    %v5635 = vadd.f32 %v5346, %v5634
    %v5636 = vpop.f32.mrf.mxu0
    %5637 = vmatprep.mubr.bf16.mxu0 %v568
    %5638 = vmatmul.mubr.bf16.gmra.mxu0 %v567
    %v5639 = vpop.f32.mrf.mxu0
    %v5640 = vadd.f32 %v5351, %v5639
    %v5641 = vpop.f32.mrf.mxu0
    %v5642 = vpop.f32.mrf.mxu0
    %v5643 = vadd.f32 %v5354, %v5642
    %v5644 = vpop.f32.mrf.mxu0
    %5645 = vmatprep.mubr.bf16.mxu0 %v575
    %5646 = vmatmul.mubr.bf16.gmra.mxu0 %v574
    %v5647 = vpop.f32.mrf.mxu0
    %v5648 = vadd.f32 %v5359, %v5647
    %v5649 = vpop.f32.mrf.mxu0
    %v5650 = vpop.f32.mrf.mxu0
    %v5651 = vadd.f32 %v5362, %v5650
    %v5652 = vpop.f32.mrf.mxu0
    %5653 = vmatprep.mubr.bf16.mxu0 %v582
    %5654 = vmatmul.mubr.bf16.gmra.mxu0 %v581
    %v5655 = vpop.f32.mrf.mxu0
    %v5656 = vadd.f32 %v5367, %v5655
    %v5657 = vpop.f32.mrf.mxu0
    %v5658 = vpop.f32.mrf.mxu0
    %v5659 = vadd.f32 %v5370, %v5658
    %v5660 = vpop.f32.mrf.mxu0
    %5661 = vmatprep.mubr.bf16.mxu0 %v589
    %5662 = vmatmul.mubr.bf16.gmra.mxu0 %v588
    %v5663 = vpop.f32.mrf.mxu0
    %v5664 = vadd.f32 %v5375, %v5663
    %v5665 = vpop.f32.mrf.mxu0
    %v5666 = vpop.f32.mrf.mxu0
    %v5667 = vadd.f32 %v5378, %v5666
    %v5668 = vpop.f32.mrf.mxu0
    %5669 = vmatprep.mubr.bf16.mxu0 %v596
    %5670 = vmatmul.mubr.bf16.gmra.mxu0 %v595
    %v5671 = vpop.f32.mrf.mxu0
    %v5672 = vadd.f32 %v5383, %v5671
    %v5673 = vpop.f32.mrf.mxu0
    %v5674 = vpop.f32.mrf.mxu0
    %v5675 = vadd.f32 %v5386, %v5674
    %v5676 = vpop.f32.mrf.mxu0
    %5677 = vmatprep.mubr.bf16.mxu0 %v603
    %5678 = vmatmul.mubr.bf16.gmra.mxu0 %v602
    %v5679 = vpop.f32.mrf.mxu0
    %v5680 = vadd.f32 %v5391, %v5679
    %v5681 = vpop.f32.mrf.mxu0
    %v5682 = vpop.f32.mrf.mxu0
    %v5683 = vadd.f32 %v5394, %v5682
    %v5684 = vpop.f32.mrf.mxu0
    %5685 = vmatprep.mubr.bf16.mxu0 %v610
    %5686 = vmatmul.mubr.bf16.gmra.mxu0 %v609
    %v5687 = vpop.f32.mrf.mxu0
    %v5688 = vadd.f32 %v5399, %v5687
    %v5689 = vpop.f32.mrf.mxu0
    %v5690 = vpop.f32.mrf.mxu0
    %v5691 = vadd.f32 %v5402, %v5690
    %v5692 = vpop.f32.mrf.mxu0
    %5693 = vmatprep.mubr.bf16.mxu0 %v617
    %5694 = vmatmul.mubr.bf16.gmra.mxu0 %v616
    %v5695 = vpop.f32.mrf.mxu0
    %v5696 = vadd.f32 %v5407, %v5695
    %v5697 = vpop.f32.mrf.mxu0
    %v5698 = vpop.f32.mrf.mxu0
    %v5699 = vadd.f32 %v5410, %v5698
    %v5700 = vpop.f32.mrf.mxu0
    %5701 = vmatprep.mubr.bf16.mxu0 %v624
    %5702 = vmatmul.mubr.bf16.gmra.mxu0 %v623
    %v5703 = vpop.f32.mrf.mxu0
    %v5704 = vadd.f32 %v5415, %v5703
    %v5705 = vpop.f32.mrf.mxu0
    %v5706 = vpop.f32.mrf.mxu0
    %v5707 = vadd.f32 %v5418, %v5706
    %v5708 = vpop.f32.mrf.mxu0
    %5709 = vmatprep.mubr.bf16.mxu0 %v631
    %5710 = vmatmul.mubr.bf16.gmra.mxu0 %v630
    %v5711 = vpop.f32.mrf.mxu0
    %v5712 = vadd.f32 %v5423, %v5711
    %v5713 = vpop.f32.mrf.mxu0
    %v5714 = vpop.f32.mrf.mxu0
    %v5715 = vadd.f32 %v5426, %v5714
    %v5716 = vpop.f32.mrf.mxu0
    %5717 = vmatprep.mubr.bf16.mxu0 %v638
    %5718 = vmatmul.mubr.bf16.gmra.mxu0 %v637
    %v5719 = vpop.f32.mrf.mxu0
    %v5720 = vadd.f32 %v5431, %v5719
    %v5721 = vpop.f32.mrf.mxu0
    %v5722 = vpop.f32.mrf.mxu0
    %v5723 = vadd.f32 %v5434, %v5722
    %v5724 = vpop.f32.mrf.mxu0
    %5725 = vmatprep.mubr.bf16.mxu0 %v645
    %5726 = vmatmul.mubr.bf16.gmra.mxu0 %v644
    %v5727 = vpop.f32.mrf.mxu0
    %v5728 = vadd.f32 %v5439, %v5727
    %v5729 = vpop.f32.mrf.mxu0
    %v5730 = vpop.f32.mrf.mxu0
    %v5731 = vadd.f32 %v5442, %v5730
    %v5732 = vpop.f32.mrf.mxu0
    %5733 = vmatprep.mubr.bf16.mxu0 %v652
    %5734 = vmatmul.mubr.bf16.gmra.mxu0 %v651
    %v5735 = vpop.f32.mrf.mxu0
    %v5736 = vadd.f32 %v5447, %v5735
    %v5737 = vpop.f32.mrf.mxu0
    %v5738 = vpop.f32.mrf.mxu0
    %v5739 = vadd.f32 %v5450, %v5738
    %v5740 = vpop.f32.mrf.mxu0
    %5741 = vmatprep.mubr.bf16.mxu0 %v659
    %5742 = vmatmul.mubr.bf16.gmra.mxu0 %v658
    %v5743 = vpop.f32.mrf.mxu0
    %v5744 = vadd.f32 %v5455, %v5743
    %v5745 = vpop.f32.mrf.mxu0
    %v5746 = vpop.f32.mrf.mxu0
    %v5747 = vadd.f32 %v5458, %v5746
    %v5748 = vpop.f32.mrf.mxu0
    %5749 = vmatprep.mubr.bf16.mxu0 %v666
    %5750 = vmatmul.mubr.bf16.gmra.mxu0 %v665
    %v5751 = vpop.f32.mrf.mxu0
    %v5752 = vadd.f32 %v5463, %v5751
    %v5753 = vpop.f32.mrf.mxu0
    %v5754 = vpop.f32.mrf.mxu0
    %v5755 = vadd.f32 %v5466, %v5754
    %v5756 = vpop.f32.mrf.mxu0
    %5757 = vmatprep.mubr.bf16.mxu0 %v673
    %5758 = vmatmul.mubr.bf16.gmra.mxu0 %v672
    %v5759 = vpop.f32.mrf.mxu0
    %v5760 = vadd.f32 %v5471, %v5759
    %v5761 = vpop.f32.mrf.mxu0
    %v5762 = vpop.f32.mrf.mxu0
    %v5763 = vadd.f32 %v5474, %v5762
    %v5764 = vpop.f32.mrf.mxu0
    %5765 = vmatprep.mubr.bf16.mxu0 %v680
    %5766 = vmatmul.mubr.bf16.gmra.mxu0 %v679
    %v5767 = vpop.f32.mrf.mxu0
    %v5768 = vadd.f32 %v5479, %v5767
    %v5769 = vpop.f32.mrf.mxu0
    %v5770 = vpop.f32.mrf.mxu0
    %v5771 = vadd.f32 %v5482, %v5770
    %v5772 = vpop.f32.mrf.mxu0
    %5773 = vmatprep.mubr.bf16.mxu0 %v687
    %5774 = vmatmul.mubr.bf16.gmra.mxu0 %v686
    %v5775 = vpop.f32.mrf.mxu0
    %v5776 = vadd.f32 %v5487, %v5775
    %v5777 = vpop.f32.mrf.mxu0
    %v5778 = vpop.f32.mrf.mxu0
    %v5779 = vadd.f32 %v5490, %v5778
    %v5780 = vpop.f32.mrf.mxu0
    %5781 = vmatprep.mubr.bf16.mxu0 %v694
    %5782 = vmatmul.mubr.bf16.gmra.mxu0 %v693
    %v5783 = vpop.f32.mrf.mxu0
    %v5784 = vadd.f32 %v5495, %v5783
    %v5785 = vpop.f32.mrf.mxu0
    %v5786 = vpop.f32.mrf.mxu0
    %v5787 = vadd.f32 %v5498, %v5786
    %v5788 = vpop.f32.mrf.mxu0
    %5789 = vmatprep.mubr.bf16.mxu0 %v701
    %5790 = vmatmul.mubr.bf16.gmra.mxu0 %v700
    %v5791 = vpop.f32.mrf.mxu0
    %v5792 = vadd.f32 %v5503, %v5791
    %v5793 = vpop.f32.mrf.mxu0
    %v5794 = vpop.f32.mrf.mxu0
    %v5795 = vadd.f32 %v5506, %v5794
    %v5796 = vpop.f32.mrf.mxu0
    %5797 = vmatprep.mubr.bf16.mxu0 %v708
    %5798 = vmatmul.mubr.bf16.gmra.mxu0 %v707
    %v5799 = vpop.f32.mrf.mxu0
    %v5800 = vadd.f32 %v5511, %v5799
    %v5801 = vpop.f32.mrf.mxu0
    %v5802 = vpop.f32.mrf.mxu0
    %v5803 = vadd.f32 %v5514, %v5802
    %v5804 = vpop.f32.mrf.mxu0
    %5805 = vdwg.mxu0
    %5806 = vmatprep.subr.bf16.mxu0 0
    %5807 = vmatpush1.bf16.msra.mxu0 %v2016
    %5808 = vmatprep.subr.bf16.mxu0 0
    %5809 = vmatpush1.bf16.msra.mxu0 %v2011
    %5810 = vmatprep.subr.bf16.mxu0 0
    %5811 = vmatpush1.bf16.msra.mxu0 %v2006
    %5812 = vmatprep.subr.bf16.mxu0 0
    %5813 = vmatpush1.bf16.msra.mxu0 %v2001
    %5814 = vmatprep.subr.bf16.mxu0 0
    %5815 = vmatpush1.bf16.msra.mxu0 %v1996
    %5816 = vmatprep.subr.bf16.mxu0 0
    %5817 = vmatpush1.bf16.msra.mxu0 %v1991
    %5818 = vmatprep.subr.bf16.mxu0 0
    %5819 = vmatpush1.bf16.msra.mxu0 %v1986
    %5820 = vmatprep.subr.bf16.mxu0 0
    %5821 = vmatpush1.bf16.msra.mxu0 %v1981
    %5822 = vmatprep.subr.bf16.mxu0 0
    %5823 = vmatpush2.bf16.msra.mxu0 %v2056
    %5824 = vmatprep.subr.bf16.mxu0 0
    %5825 = vmatpush2.bf16.msra.mxu0 %v2051
    %5826 = vmatprep.subr.bf16.mxu0 0
    %5827 = vmatpush2.bf16.msra.mxu0 %v2046
    %5828 = vmatprep.subr.bf16.mxu0 0
    %5829 = vmatpush2.bf16.msra.mxu0 %v2041
    %5830 = vmatprep.subr.bf16.mxu0 0
    %5831 = vmatpush2.bf16.msra.mxu0 %v2036
    %5832 = vmatprep.subr.bf16.mxu0 0
    %5833 = vmatpush2.bf16.msra.mxu0 %v2031
    %5834 = vmatprep.subr.bf16.mxu0 0
    %5835 = vmatpush2.bf16.msra.mxu0 %v2026
    %5836 = vmatprep.subr.bf16.mxu0 0
    %5837 = vmatpush2.bf16.msra.mxu0 %v2021
    %5838 = vmatprep.mubr.bf16.mxu0 %v493
    %5839 = vmatmul.mubr.bf16.gmra.mxu0 %v492
    %v5840 = vpop.f32.mrf.mxu0
    %v5841 = vadd.f32 %v5552, %v5840
    %v5842 = vpop.f32.mrf.mxu0
    %v5843 = vpop.f32.mrf.mxu0
    %v5844 = vadd.f32 %v5555, %v5843
    %v5845 = vpop.f32.mrf.mxu0
    %5846 = vmatprep.mubr.bf16.mxu0 %v500
    %5847 = vmatmul.mubr.bf16.gmra.mxu0 %v499
    %v5848 = vpop.f32.mrf.mxu0
    %v5849 = vadd.f32 %v5560, %v5848
    %v5850 = vpop.f32.mrf.mxu0
    %v5851 = vpop.f32.mrf.mxu0
    %v5852 = vadd.f32 %v5563, %v5851
    %v5853 = vpop.f32.mrf.mxu0
    %5854 = vmatprep.mubr.bf16.mxu0 %v507
    %5855 = vmatmul.mubr.bf16.gmra.mxu0 %v506
    %v5856 = vpop.f32.mrf.mxu0
    %v5857 = vadd.f32 %v5568, %v5856
    %v5858 = vpop.f32.mrf.mxu0
    %v5859 = vpop.f32.mrf.mxu0
    %v5860 = vadd.f32 %v5571, %v5859
    %v5861 = vpop.f32.mrf.mxu0
    %5862 = vmatprep.mubr.bf16.mxu0 %v514
    %5863 = vmatmul.mubr.bf16.gmra.mxu0 %v513
    %v5864 = vpop.f32.mrf.mxu0
    %v5865 = vadd.f32 %v5576, %v5864
    %v5866 = vpop.f32.mrf.mxu0
    %v5867 = vpop.f32.mrf.mxu0
    %v5868 = vadd.f32 %v5579, %v5867
    %v5869 = vpop.f32.mrf.mxu0
    %5870 = vmatprep.mubr.bf16.mxu0 %v521
    %5871 = vmatmul.mubr.bf16.gmra.mxu0 %v520
    %v5872 = vpop.f32.mrf.mxu0
    %v5873 = vadd.f32 %v5584, %v5872
    %v5874 = vpop.f32.mrf.mxu0
    %v5875 = vpop.f32.mrf.mxu0
    %v5876 = vadd.f32 %v5587, %v5875
    %v5877 = vpop.f32.mrf.mxu0
    %5878 = vmatprep.mubr.bf16.mxu0 %v528
    %5879 = vmatmul.mubr.bf16.gmra.mxu0 %v527
    %v5880 = vpop.f32.mrf.mxu0
    %v5881 = vadd.f32 %v5592, %v5880
    %v5882 = vpop.f32.mrf.mxu0
    %v5883 = vpop.f32.mrf.mxu0
    %v5884 = vadd.f32 %v5595, %v5883
    %v5885 = vpop.f32.mrf.mxu0
    %5886 = vmatprep.mubr.bf16.mxu0 %v535
    %5887 = vmatmul.mubr.bf16.gmra.mxu0 %v534
    %v5888 = vpop.f32.mrf.mxu0
    %v5889 = vadd.f32 %v5600, %v5888
    %v5890 = vpop.f32.mrf.mxu0
    %v5891 = vpop.f32.mrf.mxu0
    %v5892 = vadd.f32 %v5603, %v5891
    %v5893 = vpop.f32.mrf.mxu0
    %5894 = vmatprep.mubr.bf16.mxu0 %v542
    %5895 = vmatmul.mubr.bf16.gmra.mxu0 %v541
    %v5896 = vpop.f32.mrf.mxu0
    %v5897 = vadd.f32 %v5608, %v5896
    %v5898 = vpop.f32.mrf.mxu0
    %v5899 = vpop.f32.mrf.mxu0
    %v5900 = vadd.f32 %v5611, %v5899
    %v5901 = vpop.f32.mrf.mxu0
    %5902 = vmatprep.mubr.bf16.mxu0 %v549
    %5903 = vmatmul.mubr.bf16.gmra.mxu0 %v548
    %v5904 = vpop.f32.mrf.mxu0
    %v5905 = vadd.f32 %v5616, %v5904
    %v5906 = vpop.f32.mrf.mxu0
    %v5907 = vpop.f32.mrf.mxu0
    %v5908 = vadd.f32 %v5619, %v5907
    %v5909 = vpop.f32.mrf.mxu0
    %5910 = vmatprep.mubr.bf16.mxu0 %v556
    %5911 = vmatmul.mubr.bf16.gmra.mxu0 %v555
    %v5912 = vpop.f32.mrf.mxu0
    %v5913 = vadd.f32 %v5624, %v5912
    %v5914 = vpop.f32.mrf.mxu0
    %v5915 = vpop.f32.mrf.mxu0
    %v5916 = vadd.f32 %v5627, %v5915
    %v5917 = vpop.f32.mrf.mxu0
    %5918 = vmatprep.mubr.bf16.mxu0 %v563
    %5919 = vmatmul.mubr.bf16.gmra.mxu0 %v562
    %v5920 = vpop.f32.mrf.mxu0
    %v5921 = vadd.f32 %v5632, %v5920
    %v5922 = vpop.f32.mrf.mxu0
    %v5923 = vpop.f32.mrf.mxu0
    %v5924 = vadd.f32 %v5635, %v5923
    %v5925 = vpop.f32.mrf.mxu0
    %5926 = vmatprep.mubr.bf16.mxu0 %v570
    %5927 = vmatmul.mubr.bf16.gmra.mxu0 %v569
    %v5928 = vpop.f32.mrf.mxu0
    %v5929 = vadd.f32 %v5640, %v5928
    %v5930 = vpop.f32.mrf.mxu0
    %v5931 = vpop.f32.mrf.mxu0
    %v5932 = vadd.f32 %v5643, %v5931
    %v5933 = vpop.f32.mrf.mxu0
    %5934 = vmatprep.mubr.bf16.mxu0 %v577
    %5935 = vmatmul.mubr.bf16.gmra.mxu0 %v576
    %v5936 = vpop.f32.mrf.mxu0
    %v5937 = vadd.f32 %v5648, %v5936
    %v5938 = vpop.f32.mrf.mxu0
    %v5939 = vpop.f32.mrf.mxu0
    %v5940 = vadd.f32 %v5651, %v5939
    %v5941 = vpop.f32.mrf.mxu0
    %5942 = vmatprep.mubr.bf16.mxu0 %v584
    %5943 = vmatmul.mubr.bf16.gmra.mxu0 %v583
    %v5944 = vpop.f32.mrf.mxu0
    %v5945 = vadd.f32 %v5656, %v5944
    %v5946 = vpop.f32.mrf.mxu0
    %v5947 = vpop.f32.mrf.mxu0
    %v5948 = vadd.f32 %v5659, %v5947
    %v5949 = vpop.f32.mrf.mxu0
    %5950 = vmatprep.mubr.bf16.mxu0 %v591
    %5951 = vmatmul.mubr.bf16.gmra.mxu0 %v590
    %v5952 = vpop.f32.mrf.mxu0
    %v5953 = vadd.f32 %v5664, %v5952
    %v5954 = vpop.f32.mrf.mxu0
    %v5955 = vpop.f32.mrf.mxu0
    %v5956 = vadd.f32 %v5667, %v5955
    %v5957 = vpop.f32.mrf.mxu0
    %5958 = vmatprep.mubr.bf16.mxu0 %v598
    %5959 = vmatmul.mubr.bf16.gmra.mxu0 %v597
    %v5960 = vpop.f32.mrf.mxu0
    %v5961 = vadd.f32 %v5672, %v5960
    %v5962 = vpop.f32.mrf.mxu0
    %v5963 = vpop.f32.mrf.mxu0
    %v5964 = vadd.f32 %v5675, %v5963
    %v5965 = vpop.f32.mrf.mxu0
    %5966 = vmatprep.mubr.bf16.mxu0 %v605
    %5967 = vmatmul.mubr.bf16.gmra.mxu0 %v604
    %v5968 = vpop.f32.mrf.mxu0
    %v5969 = vadd.f32 %v5680, %v5968
    %v5970 = vpop.f32.mrf.mxu0
    %v5971 = vpop.f32.mrf.mxu0
    %v5972 = vadd.f32 %v5683, %v5971
    %v5973 = vpop.f32.mrf.mxu0
    %5974 = vmatprep.mubr.bf16.mxu0 %v612
    %5975 = vmatmul.mubr.bf16.gmra.mxu0 %v611
    %v5976 = vpop.f32.mrf.mxu0
    %v5977 = vadd.f32 %v5688, %v5976
    %v5978 = vpop.f32.mrf.mxu0
    %v5979 = vpop.f32.mrf.mxu0
    %v5980 = vadd.f32 %v5691, %v5979
    %v5981 = vpop.f32.mrf.mxu0
    %5982 = vmatprep.mubr.bf16.mxu0 %v619
    %5983 = vmatmul.mubr.bf16.gmra.mxu0 %v618
    %v5984 = vpop.f32.mrf.mxu0
    %v5985 = vadd.f32 %v5696, %v5984
    %v5986 = vpop.f32.mrf.mxu0
    %v5987 = vpop.f32.mrf.mxu0
    %v5988 = vadd.f32 %v5699, %v5987
    %v5989 = vpop.f32.mrf.mxu0
    %5990 = vmatprep.mubr.bf16.mxu0 %v626
    %5991 = vmatmul.mubr.bf16.gmra.mxu0 %v625
    %v5992 = vpop.f32.mrf.mxu0
    %v5993 = vadd.f32 %v5704, %v5992
    %v5994 = vpop.f32.mrf.mxu0
    %v5995 = vpop.f32.mrf.mxu0
    %v5996 = vadd.f32 %v5707, %v5995
    %v5997 = vpop.f32.mrf.mxu0
    %5998 = vmatprep.mubr.bf16.mxu0 %v633
    %5999 = vmatmul.mubr.bf16.gmra.mxu0 %v632
    %v6000 = vpop.f32.mrf.mxu0
    %v6001 = vadd.f32 %v5712, %v6000
    %v6002 = vpop.f32.mrf.mxu0
    %v6003 = vpop.f32.mrf.mxu0
    %v6004 = vadd.f32 %v5715, %v6003
    %v6005 = vpop.f32.mrf.mxu0
    %6006 = vmatprep.mubr.bf16.mxu0 %v640
    %6007 = vmatmul.mubr.bf16.gmra.mxu0 %v639
    %v6008 = vpop.f32.mrf.mxu0
    %v6009 = vadd.f32 %v5720, %v6008
    %v6010 = vpop.f32.mrf.mxu0
    %v6011 = vpop.f32.mrf.mxu0
    %v6012 = vadd.f32 %v5723, %v6011
    %v6013 = vpop.f32.mrf.mxu0
    %6014 = vmatprep.mubr.bf16.mxu0 %v647
    %6015 = vmatmul.mubr.bf16.gmra.mxu0 %v646
    %v6016 = vpop.f32.mrf.mxu0
    %v6017 = vadd.f32 %v5728, %v6016
    %v6018 = vpop.f32.mrf.mxu0
    %v6019 = vpop.f32.mrf.mxu0
    %v6020 = vadd.f32 %v5731, %v6019
    %v6021 = vpop.f32.mrf.mxu0
    %6022 = vmatprep.mubr.bf16.mxu0 %v654
    %6023 = vmatmul.mubr.bf16.gmra.mxu0 %v653
    %v6024 = vpop.f32.mrf.mxu0
    %v6025 = vadd.f32 %v5736, %v6024
    %v6026 = vpop.f32.mrf.mxu0
    %v6027 = vpop.f32.mrf.mxu0
    %v6028 = vadd.f32 %v5739, %v6027
    %v6029 = vpop.f32.mrf.mxu0
    %6030 = vmatprep.mubr.bf16.mxu0 %v661
    %6031 = vmatmul.mubr.bf16.gmra.mxu0 %v660
    %v6032 = vpop.f32.mrf.mxu0
    %v6033 = vadd.f32 %v5744, %v6032
    %v6034 = vpop.f32.mrf.mxu0
    %v6035 = vpop.f32.mrf.mxu0
    %v6036 = vadd.f32 %v5747, %v6035
    %v6037 = vpop.f32.mrf.mxu0
    %6038 = vmatprep.mubr.bf16.mxu0 %v668
    %6039 = vmatmul.mubr.bf16.gmra.mxu0 %v667
    %v6040 = vpop.f32.mrf.mxu0
    %v6041 = vadd.f32 %v5752, %v6040
    %v6042 = vpop.f32.mrf.mxu0
    %v6043 = vpop.f32.mrf.mxu0
    %v6044 = vadd.f32 %v5755, %v6043
    %v6045 = vpop.f32.mrf.mxu0
    %6046 = vmatprep.mubr.bf16.mxu0 %v675
    %6047 = vmatmul.mubr.bf16.gmra.mxu0 %v674
    %v6048 = vpop.f32.mrf.mxu0
    %v6049 = vadd.f32 %v5760, %v6048
    %v6050 = vpop.f32.mrf.mxu0
    %v6051 = vpop.f32.mrf.mxu0
    %v6052 = vadd.f32 %v5763, %v6051
    %v6053 = vpop.f32.mrf.mxu0
    %6054 = vmatprep.mubr.bf16.mxu0 %v682
    %6055 = vmatmul.mubr.bf16.gmra.mxu0 %v681
    %v6056 = vpop.f32.mrf.mxu0
    %v6057 = vadd.f32 %v5768, %v6056
    %v6058 = vpop.f32.mrf.mxu0
    %v6059 = vpop.f32.mrf.mxu0
    %v6060 = vadd.f32 %v5771, %v6059
    %v6061 = vpop.f32.mrf.mxu0
    %6062 = vmatprep.mubr.bf16.mxu0 %v689
    %6063 = vmatmul.mubr.bf16.gmra.mxu0 %v688
    %v6064 = vpop.f32.mrf.mxu0
    %v6065 = vadd.f32 %v5776, %v6064
    %v6066 = vpop.f32.mrf.mxu0
    %v6067 = vpop.f32.mrf.mxu0
    %v6068 = vadd.f32 %v5779, %v6067
    %v6069 = vpop.f32.mrf.mxu0
    %6070 = vmatprep.mubr.bf16.mxu0 %v696
    %6071 = vmatmul.mubr.bf16.gmra.mxu0 %v695
    %v6072 = vpop.f32.mrf.mxu0
    %v6073 = vadd.f32 %v5784, %v6072
    %v6074 = vpop.f32.mrf.mxu0
    %v6075 = vpop.f32.mrf.mxu0
    %v6076 = vadd.f32 %v5787, %v6075
    %v6077 = vpop.f32.mrf.mxu0
    %6078 = vmatprep.mubr.bf16.mxu0 %v703
    %6079 = vmatmul.mubr.bf16.gmra.mxu0 %v702
    %v6080 = vpop.f32.mrf.mxu0
    %v6081 = vadd.f32 %v5792, %v6080
    %v6082 = vpop.f32.mrf.mxu0
    %v6083 = vpop.f32.mrf.mxu0
    %v6084 = vadd.f32 %v5795, %v6083
    %v6085 = vpop.f32.mrf.mxu0
    %6086 = vmatprep.mubr.bf16.mxu0 %v710
    %6087 = vmatmul.mubr.bf16.gmra.mxu0 %v709
    %v6088 = vpop.f32.mrf.mxu0
    %v6089 = vadd.f32 %v5800, %v6088
    %v6090 = vpop.f32.mrf.mxu0
    %v6091 = vpop.f32.mrf.mxu0
    %v6092 = vadd.f32 %v5803, %v6091
    %v6093 = vpop.f32.mrf.mxu0
    %6094 = vdwg.mxu0
    %6095 = vmatprep.subr.bf16.mxu0 0
    %6096 = vmatpush1.bf16.msra.mxu0 0
    %6097 = vmatprep.subr.bf16.mxu0 0
    %6098 = vmatpush1.bf16.msra.mxu0 0
    %6099 = vmatprep.subr.bf16.mxu0 0
    %6100 = vmatpush1.bf16.msra.mxu0 0
    %6101 = vmatprep.subr.bf16.mxu0 0
    %6102 = vmatpush1.bf16.msra.mxu0 0
    %6103 = vmatprep.subr.bf16.mxu0 0
    %6104 = vmatpush1.bf16.msra.mxu0 0
    %6105 = vmatprep.subr.bf16.mxu0 0
    %6106 = vmatpush1.bf16.msra.mxu0 0
    %6107 = vmatprep.subr.bf16.mxu0 0
    %6108 = vmatpush1.bf16.msra.mxu0 0
    %6109 = vmatprep.subr.bf16.mxu0 0
    %6110 = vmatpush1.bf16.msra.mxu0 %v2061
    %6111 = vmatprep.subr.bf16.mxu0 0
    %6112 = vmatpush2.bf16.msra.mxu0 0
    %6113 = vmatprep.subr.bf16.mxu0 0
    %6114 = vmatpush2.bf16.msra.mxu0 0
    %6115 = vmatprep.subr.bf16.mxu0 0
    %6116 = vmatpush2.bf16.msra.mxu0 0
    %6117 = vmatprep.subr.bf16.mxu0 0
    %6118 = vmatpush2.bf16.msra.mxu0 0
    %6119 = vmatprep.subr.bf16.mxu0 0
    %6120 = vmatpush2.bf16.msra.mxu0 0
    %6121 = vmatprep.subr.bf16.mxu0 0
    %6122 = vmatpush2.bf16.msra.mxu0 0
    %6123 = vmatprep.subr.bf16.mxu0 0
    %6124 = vmatpush2.bf16.msra.mxu0 0
    %6125 = vmatprep.subr.bf16.mxu0 0
    %6126 = vmatpush2.bf16.msra.mxu0 0
    %6127 = vmatprep.mubr.bf16.mxu0 0
    %6128 = vmatmul.mubr.bf16.gmra.mxu0 %v2309
    %v6129 = vpop.f32.mrf.mxu0
    %v6130 = vadd.f32 %v5841, %v6129
    %v6131 = vpop.f32.mrf.mxu0
    %v6132 = vpop.f32.mrf.mxu0
    %v6133 = vadd.f32 %v5844, %v6132
    %v6134 = vpop.f32.mrf.mxu0
    %6135 = vmatprep.mubr.bf16.mxu0 0
    %6136 = vmatmul.mubr.bf16.gmra.mxu0 %v2312
    %v6137 = vpop.f32.mrf.mxu0
    %v6138 = vadd.f32 %v5849, %v6137
    %v6139 = vpop.f32.mrf.mxu0
    %v6140 = vpop.f32.mrf.mxu0
    %v6141 = vadd.f32 %v5852, %v6140
    %v6142 = vpop.f32.mrf.mxu0
    %6143 = vmatprep.mubr.bf16.mxu0 0
    %6144 = vmatmul.mubr.bf16.gmra.mxu0 %v2315
    %v6145 = vpop.f32.mrf.mxu0
    %v6146 = vadd.f32 %v5857, %v6145
    %v6147 = vpop.f32.mrf.mxu0
    %v6148 = vpop.f32.mrf.mxu0
    %v6149 = vadd.f32 %v5860, %v6148
    %v6150 = vpop.f32.mrf.mxu0
    %6151 = vmatprep.mubr.bf16.mxu0 0
    %6152 = vmatmul.mubr.bf16.gmra.mxu0 %v2318
    %v6153 = vpop.f32.mrf.mxu0
    %v6154 = vadd.f32 %v5865, %v6153
    %v6155 = vpop.f32.mrf.mxu0
    %v6156 = vpop.f32.mrf.mxu0
    %v6157 = vadd.f32 %v5868, %v6156
    %v6158 = vpop.f32.mrf.mxu0
    %6159 = vmatprep.mubr.bf16.mxu0 0
    %6160 = vmatmul.mubr.bf16.gmra.mxu0 %v2321
    %v6161 = vpop.f32.mrf.mxu0
    %v6162 = vadd.f32 %v5873, %v6161
    %v6163 = vpop.f32.mrf.mxu0
    %v6164 = vpop.f32.mrf.mxu0
    %v6165 = vadd.f32 %v5876, %v6164
    %v6166 = vpop.f32.mrf.mxu0
    %6167 = vmatprep.mubr.bf16.mxu0 0
    %6168 = vmatmul.mubr.bf16.gmra.mxu0 %v2324
    %v6169 = vpop.f32.mrf.mxu0
    %v6170 = vadd.f32 %v5881, %v6169
    %v6171 = vpop.f32.mrf.mxu0
    %v6172 = vpop.f32.mrf.mxu0
    %v6173 = vadd.f32 %v5884, %v6172
    %v6174 = vpop.f32.mrf.mxu0
    %6175 = vmatprep.mubr.bf16.mxu0 0
    %6176 = vmatmul.mubr.bf16.gmra.mxu0 %v2327
    %v6177 = vpop.f32.mrf.mxu0
    %v6178 = vadd.f32 %v5889, %v6177
    %v6179 = vpop.f32.mrf.mxu0
    %v6180 = vpop.f32.mrf.mxu0
    %v6181 = vadd.f32 %v5892, %v6180
    %v6182 = vpop.f32.mrf.mxu0
    %6183 = vmatprep.mubr.bf16.mxu0 0
    %6184 = vmatmul.mubr.bf16.gmra.mxu0 %v2330
    %v6185 = vpop.f32.mrf.mxu0
    %v6186 = vadd.f32 %v5897, %v6185
    %v6187 = vpop.f32.mrf.mxu0
    %v6188 = vpop.f32.mrf.mxu0
    %v6189 = vadd.f32 %v5900, %v6188
    %v6190 = vpop.f32.mrf.mxu0
    %6191 = vmatprep.mubr.bf16.mxu0 0
    %6192 = vmatmul.mubr.bf16.gmra.mxu0 %v2333
    %v6193 = vpop.f32.mrf.mxu0
    %v6194 = vadd.f32 %v5905, %v6193
    %v6195 = vpop.f32.mrf.mxu0
    %v6196 = vpop.f32.mrf.mxu0
    %v6197 = vadd.f32 %v5908, %v6196
    %v6198 = vpop.f32.mrf.mxu0
    %6199 = vmatprep.mubr.bf16.mxu0 0
    %6200 = vmatmul.mubr.bf16.gmra.mxu0 %v2336
    %v6201 = vpop.f32.mrf.mxu0
    %v6202 = vadd.f32 %v5913, %v6201
    %v6203 = vpop.f32.mrf.mxu0
    %v6204 = vpop.f32.mrf.mxu0
    %v6205 = vadd.f32 %v5916, %v6204
    %v6206 = vpop.f32.mrf.mxu0
    %6207 = vmatprep.mubr.bf16.mxu0 0
    %6208 = vmatmul.mubr.bf16.gmra.mxu0 %v2339
    %v6209 = vpop.f32.mrf.mxu0
    %v6210 = vadd.f32 %v5921, %v6209
    %v6211 = vpop.f32.mrf.mxu0
    %v6212 = vpop.f32.mrf.mxu0
    %v6213 = vadd.f32 %v5924, %v6212
    %v6214 = vpop.f32.mrf.mxu0
    %6215 = vmatprep.mubr.bf16.mxu0 0
    %6216 = vmatmul.mubr.bf16.gmra.mxu0 %v2342
    %v6217 = vpop.f32.mrf.mxu0
    %v6218 = vadd.f32 %v5929, %v6217
    %v6219 = vpop.f32.mrf.mxu0
    %v6220 = vpop.f32.mrf.mxu0
    %v6221 = vadd.f32 %v5932, %v6220
    %v6222 = vpop.f32.mrf.mxu0
    %6223 = vmatprep.mubr.bf16.mxu0 0
    %6224 = vmatmul.mubr.bf16.gmra.mxu0 %v2345
    %v6225 = vpop.f32.mrf.mxu0
    %v6226 = vadd.f32 %v5937, %v6225
    %v6227 = vpop.f32.mrf.mxu0
    %v6228 = vpop.f32.mrf.mxu0
    %v6229 = vadd.f32 %v5940, %v6228
    %v6230 = vpop.f32.mrf.mxu0
    %6231 = vmatprep.mubr.bf16.mxu0 0
    %6232 = vmatmul.mubr.bf16.gmra.mxu0 %v2348
    %v6233 = vpop.f32.mrf.mxu0
    %v6234 = vadd.f32 %v5945, %v6233
    %v6235 = vpop.f32.mrf.mxu0
    %v6236 = vpop.f32.mrf.mxu0
    %v6237 = vadd.f32 %v5948, %v6236
    %v6238 = vpop.f32.mrf.mxu0
    %6239 = vmatprep.mubr.bf16.mxu0 0
    %6240 = vmatmul.mubr.bf16.gmra.mxu0 %v2351
    %v6241 = vpop.f32.mrf.mxu0
    %v6242 = vadd.f32 %v5953, %v6241
    %v6243 = vpop.f32.mrf.mxu0
    %v6244 = vpop.f32.mrf.mxu0
    %v6245 = vadd.f32 %v5956, %v6244
    %v6246 = vpop.f32.mrf.mxu0
    %6247 = vmatprep.mubr.bf16.mxu0 0
    %6248 = vmatmul.mubr.bf16.gmra.mxu0 %v2354
    %v6249 = vpop.f32.mrf.mxu0
    %v6250 = vadd.f32 %v5961, %v6249
    %v6251 = vpop.f32.mrf.mxu0
    %v6252 = vpop.f32.mrf.mxu0
    %v6253 = vadd.f32 %v5964, %v6252
    %v6254 = vpop.f32.mrf.mxu0
    %6255 = vmatprep.mubr.bf16.mxu0 0
    %6256 = vmatmul.mubr.bf16.gmra.mxu0 %v2357
    %v6257 = vpop.f32.mrf.mxu0
    %v6258 = vadd.f32 %v5969, %v6257
    %v6259 = vpop.f32.mrf.mxu0
    %v6260 = vpop.f32.mrf.mxu0
    %v6261 = vadd.f32 %v5972, %v6260
    %v6262 = vpop.f32.mrf.mxu0
    %6263 = vmatprep.mubr.bf16.mxu0 0
    %6264 = vmatmul.mubr.bf16.gmra.mxu0 %v2360
    %v6265 = vpop.f32.mrf.mxu0
    %v6266 = vadd.f32 %v5977, %v6265
    %v6267 = vpop.f32.mrf.mxu0
    %v6268 = vpop.f32.mrf.mxu0
    %v6269 = vadd.f32 %v5980, %v6268
    %v6270 = vpop.f32.mrf.mxu0
    %6271 = vmatprep.mubr.bf16.mxu0 0
    %6272 = vmatmul.mubr.bf16.gmra.mxu0 %v2363
    %v6273 = vpop.f32.mrf.mxu0
    %v6274 = vadd.f32 %v5985, %v6273
    %v6275 = vpop.f32.mrf.mxu0
    %v6276 = vpop.f32.mrf.mxu0
    %v6277 = vadd.f32 %v5988, %v6276
    %v6278 = vpop.f32.mrf.mxu0
    %6279 = vmatprep.mubr.bf16.mxu0 0
    %6280 = vmatmul.mubr.bf16.gmra.mxu0 %v2366
    %v6281 = vpop.f32.mrf.mxu0
    %v6282 = vadd.f32 %v5993, %v6281
    %v6283 = vpop.f32.mrf.mxu0
    %v6284 = vpop.f32.mrf.mxu0
    %v6285 = vadd.f32 %v5996, %v6284
    %v6286 = vpop.f32.mrf.mxu0
    %6287 = vmatprep.mubr.bf16.mxu0 0
    %6288 = vmatmul.mubr.bf16.gmra.mxu0 %v2369
    %v6289 = vpop.f32.mrf.mxu0
    %v6290 = vadd.f32 %v6001, %v6289
    %v6291 = vpop.f32.mrf.mxu0
    %v6292 = vpop.f32.mrf.mxu0
    %v6293 = vadd.f32 %v6004, %v6292
    %v6294 = vpop.f32.mrf.mxu0
    %6295 = vmatprep.mubr.bf16.mxu0 0
    %6296 = vmatmul.mubr.bf16.gmra.mxu0 %v2372
    %v6297 = vpop.f32.mrf.mxu0
    %v6298 = vadd.f32 %v6009, %v6297
    %v6299 = vpop.f32.mrf.mxu0
    %v6300 = vpop.f32.mrf.mxu0
    %v6301 = vadd.f32 %v6012, %v6300
    %v6302 = vpop.f32.mrf.mxu0
    %6303 = vmatprep.mubr.bf16.mxu0 0
    %6304 = vmatmul.mubr.bf16.gmra.mxu0 %v2375
    %v6305 = vpop.f32.mrf.mxu0
    %v6306 = vadd.f32 %v6017, %v6305
    %v6307 = vpop.f32.mrf.mxu0
    %v6308 = vpop.f32.mrf.mxu0
    %v6309 = vadd.f32 %v6020, %v6308
    %v6310 = vpop.f32.mrf.mxu0
    %6311 = vmatprep.mubr.bf16.mxu0 0
    %6312 = vmatmul.mubr.bf16.gmra.mxu0 %v2378
    %v6313 = vpop.f32.mrf.mxu0
    %v6314 = vadd.f32 %v6025, %v6313
    %v6315 = vpop.f32.mrf.mxu0
    %v6316 = vpop.f32.mrf.mxu0
    %v6317 = vadd.f32 %v6028, %v6316
    %v6318 = vpop.f32.mrf.mxu0
    %6319 = vmatprep.mubr.bf16.mxu0 0
    %6320 = vmatmul.mubr.bf16.gmra.mxu0 %v2381
    %v6321 = vpop.f32.mrf.mxu0
    %v6322 = vadd.f32 %v6033, %v6321
    %v6323 = vpop.f32.mrf.mxu0
    %v6324 = vpop.f32.mrf.mxu0
    %v6325 = vadd.f32 %v6036, %v6324
    %v6326 = vpop.f32.mrf.mxu0
    %6327 = vmatprep.mubr.bf16.mxu0 0
    %6328 = vmatmul.mubr.bf16.gmra.mxu0 %v2384
    %v6329 = vpop.f32.mrf.mxu0
    %v6330 = vadd.f32 %v6041, %v6329
    %v6331 = vpop.f32.mrf.mxu0
    %v6332 = vpop.f32.mrf.mxu0
    %v6333 = vadd.f32 %v6044, %v6332
    %v6334 = vpop.f32.mrf.mxu0
    %6335 = vmatprep.mubr.bf16.mxu0 0
    %6336 = vmatmul.mubr.bf16.gmra.mxu0 %v2387
    %v6337 = vpop.f32.mrf.mxu0
    %v6338 = vadd.f32 %v6049, %v6337
    %v6339 = vpop.f32.mrf.mxu0
    %v6340 = vpop.f32.mrf.mxu0
    %v6341 = vadd.f32 %v6052, %v6340
    %v6342 = vpop.f32.mrf.mxu0
    %6343 = vmatprep.mubr.bf16.mxu0 0
    %6344 = vmatmul.mubr.bf16.gmra.mxu0 %v2390
    %v6345 = vpop.f32.mrf.mxu0
    %v6346 = vadd.f32 %v6057, %v6345
    %v6347 = vpop.f32.mrf.mxu0
    %v6348 = vpop.f32.mrf.mxu0
    %v6349 = vadd.f32 %v6060, %v6348
    %v6350 = vpop.f32.mrf.mxu0
    %6351 = vmatprep.mubr.bf16.mxu0 0
    %6352 = vmatmul.mubr.bf16.gmra.mxu0 %v2393
    %v6353 = vpop.f32.mrf.mxu0
    %v6354 = vadd.f32 %v6065, %v6353
    %v6355 = vpop.f32.mrf.mxu0
    %v6356 = vpop.f32.mrf.mxu0
    %v6357 = vadd.f32 %v6068, %v6356
    %v6358 = vpop.f32.mrf.mxu0
    %6359 = vmatprep.mubr.bf16.mxu0 0
    %6360 = vmatmul.mubr.bf16.gmra.mxu0 %v2396
    %v6361 = vpop.f32.mrf.mxu0
    %v6362 = vadd.f32 %v6073, %v6361
    %v6363 = vpop.f32.mrf.mxu0
    %v6364 = vpop.f32.mrf.mxu0
    %v6365 = vadd.f32 %v6076, %v6364
    %v6366 = vpop.f32.mrf.mxu0
    %6367 = vmatprep.mubr.bf16.mxu0 0
    %6368 = vmatmul.mubr.bf16.gmra.mxu0 %v2399
    %v6369 = vpop.f32.mrf.mxu0
    %v6370 = vadd.f32 %v6081, %v6369
    %v6371 = vpop.f32.mrf.mxu0
    %v6372 = vpop.f32.mrf.mxu0
    %v6373 = vadd.f32 %v6084, %v6372
    %v6374 = vpop.f32.mrf.mxu0
    %6375 = vmatprep.mubr.bf16.mxu0 0
    %6376 = vmatmul.mubr.bf16.gmra.mxu0 %v2402
    %v6377 = vpop.f32.mrf.mxu0
    %v6378 = vadd.f32 %v6089, %v6377
    %v6379 = vpop.f32.mrf.mxu0
    %v6380 = vpop.f32.mrf.mxu0
    %v6381 = vadd.f32 %v6092, %v6380
    %v6382 = vpop.f32.mrf.mxu0
    %6383 = vdwg.mxu0
    %v6384 = vmax.f32 %v3498, 0.0
    %v6385 = vmax.f32 %v3500, 0.0
    %v6386 = vmax.f32 %v4910, 0.0
    %v6387 = vmax.f32 %v4912, 0.0
    %v6388 = vmax.f32 %v6130, 0.0
    %v6389 = vmax.f32 %v3502, 0.0
    %v6390 = vmax.f32 %v3504, 0.0
    %v6391 = vmax.f32 %v4914, 0.0
    %v6392 = vmax.f32 %v4916, 0.0
    %v6393 = vmax.f32 %v6133, 0.0
    %v6394 = vmax.f32 %v3508, 0.0
    %v6395 = vmax.f32 %v3510, 0.0
    %v6396 = vmax.f32 %v4920, 0.0
    %v6397 = vmax.f32 %v4922, 0.0
    %v6398 = vmax.f32 %v6138, 0.0
    %v6399 = vmax.f32 %v3512, 0.0
    %v6400 = vmax.f32 %v3514, 0.0
    %v6401 = vmax.f32 %v4924, 0.0
    %v6402 = vmax.f32 %v4926, 0.0
    %v6403 = vmax.f32 %v6141, 0.0
    %v6404 = vmax.f32 %v3518, 0.0
    %v6405 = vmax.f32 %v3520, 0.0
    %v6406 = vmax.f32 %v4930, 0.0
    %v6407 = vmax.f32 %v4932, 0.0
    %v6408 = vmax.f32 %v6146, 0.0
    %v6409 = vmax.f32 %v3522, 0.0
    %v6410 = vmax.f32 %v3524, 0.0
    %v6411 = vmax.f32 %v4934, 0.0
    %v6412 = vmax.f32 %v4936, 0.0
    %v6413 = vmax.f32 %v6149, 0.0
    %v6414 = vmax.f32 %v3528, 0.0
    %v6415 = vmax.f32 %v3530, 0.0
    %v6416 = vmax.f32 %v4940, 0.0
    %v6417 = vmax.f32 %v4942, 0.0
    %v6418 = vmax.f32 %v6154, 0.0
    %v6419 = vmax.f32 %v3532, 0.0
    %v6420 = vmax.f32 %v3534, 0.0
    %v6421 = vmax.f32 %v4944, 0.0
    %v6422 = vmax.f32 %v4946, 0.0
    %v6423 = vmax.f32 %v6157, 0.0
    %v6424 = vmax.f32 %v3538, 0.0
    %v6425 = vmax.f32 %v3540, 0.0
    %v6426 = vmax.f32 %v4950, 0.0
    %v6427 = vmax.f32 %v4952, 0.0
    %v6428 = vmax.f32 %v6162, 0.0
    %v6429 = vmax.f32 %v3542, 0.0
    %v6430 = vmax.f32 %v3544, 0.0
    %v6431 = vmax.f32 %v4954, 0.0
    %v6432 = vmax.f32 %v4956, 0.0
    %v6433 = vmax.f32 %v6165, 0.0
    %v6434 = vmax.f32 %v3548, 0.0
    %v6435 = vmax.f32 %v3550, 0.0
    %v6436 = vmax.f32 %v4960, 0.0
    %v6437 = vmax.f32 %v4962, 0.0
    %v6438 = vmax.f32 %v6170, 0.0
    %v6439 = vmax.f32 %v3552, 0.0
    %v6440 = vmax.f32 %v3554, 0.0
    %v6441 = vmax.f32 %v4964, 0.0
    %v6442 = vmax.f32 %v4966, 0.0
    %v6443 = vmax.f32 %v6173, 0.0
    %v6444 = vmax.f32 %v3558, 0.0
    %v6445 = vmax.f32 %v3560, 0.0
    %v6446 = vmax.f32 %v4970, 0.0
    %v6447 = vmax.f32 %v4972, 0.0
    %v6448 = vmax.f32 %v6178, 0.0
    %v6449 = vmax.f32 %v3562, 0.0
    %v6450 = vmax.f32 %v3564, 0.0
    %v6451 = vmax.f32 %v4974, 0.0
    %v6452 = vmax.f32 %v4976, 0.0
    %v6453 = vmax.f32 %v6181, 0.0
    %v6454 = vmax.f32 %v3568, 0.0
    %v6455 = vmax.f32 %v3570, 0.0
    %v6456 = vmax.f32 %v4980, 0.0
    %v6457 = vmax.f32 %v4982, 0.0
    %v6458 = vmax.f32 %v6186, 0.0
    %v6459 = vmax.f32 %v3572, 0.0
    %v6460 = vmax.f32 %v3574, 0.0
    %v6461 = vmax.f32 %v4984, 0.0
    %v6462 = vmax.f32 %v4986, 0.0
    %v6463 = vmax.f32 %v6189, 0.0
    %v6464 = vmax.f32 %v3578, 0.0
    %v6465 = vmax.f32 %v3580, 0.0
    %v6466 = vmax.f32 %v4990, 0.0
    %v6467 = vmax.f32 %v4992, 0.0
    %v6468 = vmax.f32 %v6194, 0.0
    %v6469 = vmax.f32 %v3582, 0.0
    %v6470 = vmax.f32 %v3584, 0.0
    %v6471 = vmax.f32 %v4994, 0.0
    %v6472 = vmax.f32 %v4996, 0.0
    %v6473 = vmax.f32 %v6197, 0.0
    %v6474 = vmax.f32 %v3588, 0.0
    %v6475 = vmax.f32 %v3590, 0.0
    %v6476 = vmax.f32 %v5000, 0.0
    %v6477 = vmax.f32 %v5002, 0.0
    %v6478 = vmax.f32 %v6202, 0.0
    %v6479 = vmax.f32 %v3592, 0.0
    %v6480 = vmax.f32 %v3594, 0.0
    %v6481 = vmax.f32 %v5004, 0.0
    %v6482 = vmax.f32 %v5006, 0.0
    %v6483 = vmax.f32 %v6205, 0.0
    %v6484 = vmax.f32 %v3598, 0.0
    %v6485 = vmax.f32 %v3600, 0.0
    %v6486 = vmax.f32 %v5010, 0.0
    %v6487 = vmax.f32 %v5012, 0.0
    %v6488 = vmax.f32 %v6210, 0.0
    %v6489 = vmax.f32 %v3602, 0.0
    %v6490 = vmax.f32 %v3604, 0.0
    %v6491 = vmax.f32 %v5014, 0.0
    %v6492 = vmax.f32 %v5016, 0.0
    %v6493 = vmax.f32 %v6213, 0.0
    %v6494 = vmax.f32 %v3608, 0.0
    %v6495 = vmax.f32 %v3610, 0.0
    %v6496 = vmax.f32 %v5020, 0.0
    %v6497 = vmax.f32 %v5022, 0.0
    %v6498 = vmax.f32 %v6218, 0.0
    %v6499 = vmax.f32 %v3612, 0.0
    %v6500 = vmax.f32 %v3614, 0.0
    %v6501 = vmax.f32 %v5024, 0.0
    %v6502 = vmax.f32 %v5026, 0.0
    %v6503 = vmax.f32 %v6221, 0.0
    %v6504 = vmax.f32 %v3618, 0.0
    %v6505 = vmax.f32 %v3620, 0.0
    %v6506 = vmax.f32 %v5030, 0.0
    %v6507 = vmax.f32 %v5032, 0.0
    %v6508 = vmax.f32 %v6226, 0.0
    %v6509 = vmax.f32 %v3622, 0.0
    %v6510 = vmax.f32 %v3624, 0.0
    %v6511 = vmax.f32 %v5034, 0.0
    %v6512 = vmax.f32 %v5036, 0.0
    %v6513 = vmax.f32 %v6229, 0.0
    %v6514 = vmax.f32 %v3628, 0.0
    %v6515 = vmax.f32 %v3630, 0.0
    %v6516 = vmax.f32 %v5040, 0.0
    %v6517 = vmax.f32 %v5042, 0.0
    %v6518 = vmax.f32 %v6234, 0.0
    %v6519 = vmax.f32 %v3632, 0.0
    %v6520 = vmax.f32 %v3634, 0.0
    %v6521 = vmax.f32 %v5044, 0.0
    %v6522 = vmax.f32 %v5046, 0.0
    %v6523 = vmax.f32 %v6237, 0.0
    %v6524 = vmax.f32 %v3638, 0.0
    %v6525 = vmax.f32 %v3640, 0.0
    %v6526 = vmax.f32 %v5050, 0.0
    %v6527 = vmax.f32 %v5052, 0.0
    %v6528 = vmax.f32 %v6242, 0.0
    %v6529 = vmax.f32 %v3642, 0.0
    %v6530 = vmax.f32 %v3644, 0.0
    %v6531 = vmax.f32 %v5054, 0.0
    %v6532 = vmax.f32 %v5056, 0.0
    %v6533 = vmax.f32 %v6245, 0.0
    %v6534 = vmax.f32 %v3648, 0.0
    %v6535 = vmax.f32 %v3650, 0.0
    %v6536 = vmax.f32 %v5060, 0.0
    %v6537 = vmax.f32 %v5062, 0.0
    %v6538 = vmax.f32 %v6250, 0.0
    %v6539 = vmax.f32 %v3652, 0.0
    %v6540 = vmax.f32 %v3654, 0.0
    %v6541 = vmax.f32 %v5064, 0.0
    %v6542 = vmax.f32 %v5066, 0.0
    %v6543 = vmax.f32 %v6253, 0.0
    %v6544 = vmax.f32 %v3658, 0.0
    %v6545 = vmax.f32 %v3660, 0.0
    %v6546 = vmax.f32 %v5070, 0.0
    %v6547 = vmax.f32 %v5072, 0.0
    %v6548 = vmax.f32 %v6258, 0.0
    %v6549 = vmax.f32 %v3662, 0.0
    %v6550 = vmax.f32 %v3664, 0.0
    %v6551 = vmax.f32 %v5074, 0.0
    %v6552 = vmax.f32 %v5076, 0.0
    %v6553 = vmax.f32 %v6261, 0.0
    %v6554 = vmax.f32 %v3668, 0.0
    %v6555 = vmax.f32 %v3670, 0.0
    %v6556 = vmax.f32 %v5080, 0.0
    %v6557 = vmax.f32 %v5082, 0.0
    %v6558 = vmax.f32 %v6266, 0.0
    %v6559 = vmax.f32 %v3672, 0.0
    %v6560 = vmax.f32 %v3674, 0.0
    %v6561 = vmax.f32 %v5084, 0.0
    %v6562 = vmax.f32 %v5086, 0.0
    %v6563 = vmax.f32 %v6269, 0.0
    %v6564 = vmax.f32 %v3678, 0.0
    %v6565 = vmax.f32 %v3680, 0.0
    %v6566 = vmax.f32 %v5090, 0.0
    %v6567 = vmax.f32 %v5092, 0.0
    %v6568 = vmax.f32 %v6274, 0.0
    %v6569 = vmax.f32 %v3682, 0.0
    %v6570 = vmax.f32 %v3684, 0.0
    %v6571 = vmax.f32 %v5094, 0.0
    %v6572 = vmax.f32 %v5096, 0.0
    %v6573 = vmax.f32 %v6277, 0.0
    %v6574 = vmax.f32 %v3688, 0.0
    %v6575 = vmax.f32 %v3690, 0.0
    %v6576 = vmax.f32 %v5100, 0.0
    %v6577 = vmax.f32 %v5102, 0.0
    %v6578 = vmax.f32 %v6282, 0.0
    %v6579 = vmax.f32 %v3692, 0.0
    %v6580 = vmax.f32 %v3694, 0.0
    %v6581 = vmax.f32 %v5104, 0.0
    %v6582 = vmax.f32 %v5106, 0.0
    %v6583 = vmax.f32 %v6285, 0.0
    %v6584 = vmax.f32 %v3698, 0.0
    %v6585 = vmax.f32 %v3700, 0.0
    %v6586 = vmax.f32 %v5110, 0.0
    %v6587 = vmax.f32 %v5112, 0.0
    %v6588 = vmax.f32 %v6290, 0.0
    %v6589 = vmax.f32 %v3702, 0.0
    %v6590 = vmax.f32 %v3704, 0.0
    %v6591 = vmax.f32 %v5114, 0.0
    %v6592 = vmax.f32 %v5116, 0.0
    %v6593 = vmax.f32 %v6293, 0.0
    %v6594 = vmax.f32 %v3708, 0.0
    %v6595 = vmax.f32 %v3710, 0.0
    %v6596 = vmax.f32 %v5120, 0.0
    %v6597 = vmax.f32 %v5122, 0.0
    %v6598 = vmax.f32 %v6298, 0.0
    %v6599 = vmax.f32 %v3712, 0.0
    %v6600 = vmax.f32 %v3714, 0.0
    %v6601 = vmax.f32 %v5124, 0.0
    %v6602 = vmax.f32 %v5126, 0.0
    %v6603 = vmax.f32 %v6301, 0.0
    %v6604 = vmax.f32 %v3718, 0.0
    %v6605 = vmax.f32 %v3720, 0.0
    %v6606 = vmax.f32 %v5130, 0.0
    %v6607 = vmax.f32 %v5132, 0.0
    %v6608 = vmax.f32 %v6306, 0.0
    %v6609 = vmax.f32 %v3722, 0.0
    %v6610 = vmax.f32 %v3724, 0.0
    %v6611 = vmax.f32 %v5134, 0.0
    %v6612 = vmax.f32 %v5136, 0.0
    %v6613 = vmax.f32 %v6309, 0.0
    %v6614 = vmax.f32 %v3728, 0.0
    %v6615 = vmax.f32 %v3730, 0.0
    %v6616 = vmax.f32 %v5140, 0.0
    %v6617 = vmax.f32 %v5142, 0.0
    %v6618 = vmax.f32 %v6314, 0.0
    %v6619 = vmax.f32 %v3732, 0.0
    %v6620 = vmax.f32 %v3734, 0.0
    %v6621 = vmax.f32 %v5144, 0.0
    %v6622 = vmax.f32 %v5146, 0.0
    %v6623 = vmax.f32 %v6317, 0.0
    %v6624 = vmax.f32 %v3738, 0.0
    %v6625 = vmax.f32 %v3740, 0.0
    %v6626 = vmax.f32 %v5150, 0.0
    %v6627 = vmax.f32 %v5152, 0.0
    %v6628 = vmax.f32 %v6322, 0.0
    %v6629 = vmax.f32 %v3742, 0.0
    %v6630 = vmax.f32 %v3744, 0.0
    %v6631 = vmax.f32 %v5154, 0.0
    %v6632 = vmax.f32 %v5156, 0.0
    %v6633 = vmax.f32 %v6325, 0.0
    %v6634 = vmax.f32 %v3748, 0.0
    %v6635 = vmax.f32 %v3750, 0.0
    %v6636 = vmax.f32 %v5160, 0.0
    %v6637 = vmax.f32 %v5162, 0.0
    %v6638 = vmax.f32 %v6330, 0.0
    %v6639 = vmax.f32 %v3752, 0.0
    %v6640 = vmax.f32 %v3754, 0.0
    %v6641 = vmax.f32 %v5164, 0.0
    %v6642 = vmax.f32 %v5166, 0.0
    %v6643 = vmax.f32 %v6333, 0.0
    %v6644 = vmax.f32 %v3758, 0.0
    %v6645 = vmax.f32 %v3760, 0.0
    %v6646 = vmax.f32 %v5170, 0.0
    %v6647 = vmax.f32 %v5172, 0.0
    %v6648 = vmax.f32 %v6338, 0.0
    %v6649 = vmax.f32 %v3762, 0.0
    %v6650 = vmax.f32 %v3764, 0.0
    %v6651 = vmax.f32 %v5174, 0.0
    %v6652 = vmax.f32 %v5176, 0.0
    %v6653 = vmax.f32 %v6341, 0.0
    %v6654 = vmax.f32 %v3768, 0.0
    %v6655 = vmax.f32 %v3770, 0.0
    %v6656 = vmax.f32 %v5180, 0.0
    %v6657 = vmax.f32 %v5182, 0.0
    %v6658 = vmax.f32 %v6346, 0.0
    %v6659 = vmax.f32 %v3772, 0.0
    %v6660 = vmax.f32 %v3774, 0.0
    %v6661 = vmax.f32 %v5184, 0.0
    %v6662 = vmax.f32 %v5186, 0.0
    %v6663 = vmax.f32 %v6349, 0.0
    %v6664 = vmax.f32 %v3778, 0.0
    %v6665 = vmax.f32 %v3780, 0.0
    %v6666 = vmax.f32 %v5190, 0.0
    %v6667 = vmax.f32 %v5192, 0.0
    %v6668 = vmax.f32 %v6354, 0.0
    %v6669 = vmax.f32 %v3782, 0.0
    %v6670 = vmax.f32 %v3784, 0.0
    %v6671 = vmax.f32 %v5194, 0.0
    %v6672 = vmax.f32 %v5196, 0.0
    %v6673 = vmax.f32 %v6357, 0.0
    %v6674 = vmax.f32 %v3788, 0.0
    %v6675 = vmax.f32 %v3790, 0.0
    %v6676 = vmax.f32 %v5200, 0.0
    %v6677 = vmax.f32 %v5202, 0.0
    %v6678 = vmax.f32 %v6362, 0.0
    %v6679 = vmax.f32 %v3792, 0.0
    %v6680 = vmax.f32 %v3794, 0.0
    %v6681 = vmax.f32 %v5204, 0.0
    %v6682 = vmax.f32 %v5206, 0.0
    %v6683 = vmax.f32 %v6365, 0.0
    %v6684 = vmax.f32 %v3798, 0.0
    %v6685 = vmax.f32 %v3800, 0.0
    %v6686 = vmax.f32 %v5210, 0.0
    %v6687 = vmax.f32 %v5212, 0.0
    %v6688 = vmax.f32 %v6370, 0.0
    %v6689 = vmax.f32 %v3802, 0.0
    %v6690 = vmax.f32 %v3804, 0.0
    %v6691 = vmax.f32 %v5214, 0.0
    %v6692 = vmax.f32 %v5216, 0.0
    %v6693 = vmax.f32 %v6373, 0.0
    %v6694 = vmax.f32 %v3808, 0.0
    %v6695 = vmax.f32 %v3810, 0.0
    %v6696 = vmax.f32 %v5220, 0.0
    %v6697 = vmax.f32 %v5222, 0.0
    %v6698 = vmax.f32 %v6378, 0.0
    %v6699 = vmax.f32 %v3812, 0.0
    %v6700 = vmax.f32 %v3814, 0.0
    %v6701 = vmax.f32 %v5224, 0.0
    %v6702 = vmax.f32 %v5226, 0.0
    %v6703 = vmax.f32 %v6381, 0.0
    %v6704 = vpack.c.bf16 %v6389, %v6384
    %v6705 = vpack.c.bf16 %v6390, %v6385
    %v6706 = vpack.c.bf16 %v6391, %v6386
    %v6707 = vpack.c.bf16 %v6392, %v6387
    %v6708 = vpack.c.bf16 %v6393, %v6388
    %v6709 = vpack.c.bf16 %v6399, %v6394
    %v6710 = vpack.c.bf16 %v6400, %v6395
    %v6711 = vpack.c.bf16 %v6401, %v6396
    %v6712 = vpack.c.bf16 %v6402, %v6397
    %v6713 = vpack.c.bf16 %v6403, %v6398
    %v6714 = vpack.c.bf16 %v6409, %v6404
    %v6715 = vpack.c.bf16 %v6410, %v6405
    %v6716 = vpack.c.bf16 %v6411, %v6406
    %v6717 = vpack.c.bf16 %v6412, %v6407
    %v6718 = vpack.c.bf16 %v6413, %v6408
    %v6719 = vpack.c.bf16 %v6419, %v6414
    %v6720 = vpack.c.bf16 %v6420, %v6415
    %v6721 = vpack.c.bf16 %v6421, %v6416
    %v6722 = vpack.c.bf16 %v6422, %v6417
    %v6723 = vpack.c.bf16 %v6423, %v6418
    %v6724 = vpack.c.bf16 %v6429, %v6424
    %v6725 = vpack.c.bf16 %v6430, %v6425
    %v6726 = vpack.c.bf16 %v6431, %v6426
    %v6727 = vpack.c.bf16 %v6432, %v6427
    %v6728 = vpack.c.bf16 %v6433, %v6428
    %v6729 = vpack.c.bf16 %v6439, %v6434
    %v6730 = vpack.c.bf16 %v6440, %v6435
    %v6731 = vpack.c.bf16 %v6441, %v6436
    %v6732 = vpack.c.bf16 %v6442, %v6437
    %v6733 = vpack.c.bf16 %v6443, %v6438
    %v6734 = vpack.c.bf16 %v6449, %v6444
    %v6735 = vpack.c.bf16 %v6450, %v6445
    %v6736 = vpack.c.bf16 %v6451, %v6446
    %v6737 = vpack.c.bf16 %v6452, %v6447
    %v6738 = vpack.c.bf16 %v6453, %v6448
    %v6739 = vpack.c.bf16 %v6459, %v6454
    %v6740 = vpack.c.bf16 %v6460, %v6455
    %v6741 = vpack.c.bf16 %v6461, %v6456
    %v6742 = vpack.c.bf16 %v6462, %v6457
    %v6743 = vpack.c.bf16 %v6463, %v6458
    %v6744 = vpack.c.bf16 %v6469, %v6464
    %v6745 = vpack.c.bf16 %v6470, %v6465
    %v6746 = vpack.c.bf16 %v6471, %v6466
    %v6747 = vpack.c.bf16 %v6472, %v6467
    %v6748 = vpack.c.bf16 %v6473, %v6468
    %v6749 = vpack.c.bf16 %v6479, %v6474
    %v6750 = vpack.c.bf16 %v6480, %v6475
    %v6751 = vpack.c.bf16 %v6481, %v6476
    %v6752 = vpack.c.bf16 %v6482, %v6477
    %v6753 = vpack.c.bf16 %v6483, %v6478
    %v6754 = vpack.c.bf16 %v6489, %v6484
    %v6755 = vpack.c.bf16 %v6490, %v6485
    %v6756 = vpack.c.bf16 %v6491, %v6486
    %v6757 = vpack.c.bf16 %v6492, %v6487
    %v6758 = vpack.c.bf16 %v6493, %v6488
    %v6759 = vpack.c.bf16 %v6499, %v6494
    %v6760 = vpack.c.bf16 %v6500, %v6495
    %v6761 = vpack.c.bf16 %v6501, %v6496
    %v6762 = vpack.c.bf16 %v6502, %v6497
    %v6763 = vpack.c.bf16 %v6503, %v6498
    %v6764 = vpack.c.bf16 %v6509, %v6504
    %v6765 = vpack.c.bf16 %v6510, %v6505
    %v6766 = vpack.c.bf16 %v6511, %v6506
    %v6767 = vpack.c.bf16 %v6512, %v6507
    %v6768 = vpack.c.bf16 %v6513, %v6508
    %v6769 = vpack.c.bf16 %v6519, %v6514
    %v6770 = vpack.c.bf16 %v6520, %v6515
    %v6771 = vpack.c.bf16 %v6521, %v6516
    %v6772 = vpack.c.bf16 %v6522, %v6517
    %v6773 = vpack.c.bf16 %v6523, %v6518
    %v6774 = vpack.c.bf16 %v6529, %v6524
    %v6775 = vpack.c.bf16 %v6530, %v6525
    %v6776 = vpack.c.bf16 %v6531, %v6526
    %v6777 = vpack.c.bf16 %v6532, %v6527
    %v6778 = vpack.c.bf16 %v6533, %v6528
    %v6779 = vpack.c.bf16 %v6539, %v6534
    %v6780 = vpack.c.bf16 %v6540, %v6535
    %v6781 = vpack.c.bf16 %v6541, %v6536
    %v6782 = vpack.c.bf16 %v6542, %v6537
    %v6783 = vpack.c.bf16 %v6543, %v6538
    %v6784 = vpack.c.bf16 %v6549, %v6544
    %v6785 = vpack.c.bf16 %v6550, %v6545
    %v6786 = vpack.c.bf16 %v6551, %v6546
    %v6787 = vpack.c.bf16 %v6552, %v6547
    %v6788 = vpack.c.bf16 %v6553, %v6548
    %v6789 = vpack.c.bf16 %v6559, %v6554
    %v6790 = vpack.c.bf16 %v6560, %v6555
    %v6791 = vpack.c.bf16 %v6561, %v6556
    %v6792 = vpack.c.bf16 %v6562, %v6557
    %v6793 = vpack.c.bf16 %v6563, %v6558
    %v6794 = vpack.c.bf16 %v6569, %v6564
    %v6795 = vpack.c.bf16 %v6570, %v6565
    %v6796 = vpack.c.bf16 %v6571, %v6566
    %v6797 = vpack.c.bf16 %v6572, %v6567
    %v6798 = vpack.c.bf16 %v6573, %v6568
    %v6799 = vpack.c.bf16 %v6579, %v6574
    %v6800 = vpack.c.bf16 %v6580, %v6575
    %v6801 = vpack.c.bf16 %v6581, %v6576
    %v6802 = vpack.c.bf16 %v6582, %v6577
    %v6803 = vpack.c.bf16 %v6583, %v6578
    %v6804 = vpack.c.bf16 %v6589, %v6584
    %v6805 = vpack.c.bf16 %v6590, %v6585
    %v6806 = vpack.c.bf16 %v6591, %v6586
    %v6807 = vpack.c.bf16 %v6592, %v6587
    %v6808 = vpack.c.bf16 %v6593, %v6588
    %v6809 = vpack.c.bf16 %v6599, %v6594
    %v6810 = vpack.c.bf16 %v6600, %v6595
    %v6811 = vpack.c.bf16 %v6601, %v6596
    %v6812 = vpack.c.bf16 %v6602, %v6597
    %v6813 = vpack.c.bf16 %v6603, %v6598
    %v6814 = vpack.c.bf16 %v6609, %v6604
    %v6815 = vpack.c.bf16 %v6610, %v6605
    %v6816 = vpack.c.bf16 %v6611, %v6606
    %v6817 = vpack.c.bf16 %v6612, %v6607
    %v6818 = vpack.c.bf16 %v6613, %v6608
    %v6819 = vpack.c.bf16 %v6619, %v6614
    %v6820 = vpack.c.bf16 %v6620, %v6615
    %v6821 = vpack.c.bf16 %v6621, %v6616
    %v6822 = vpack.c.bf16 %v6622, %v6617
    %v6823 = vpack.c.bf16 %v6623, %v6618
    %v6824 = vpack.c.bf16 %v6629, %v6624
    %v6825 = vpack.c.bf16 %v6630, %v6625
    %v6826 = vpack.c.bf16 %v6631, %v6626
    %v6827 = vpack.c.bf16 %v6632, %v6627
    %v6828 = vpack.c.bf16 %v6633, %v6628
    %v6829 = vpack.c.bf16 %v6639, %v6634
    %v6830 = vpack.c.bf16 %v6640, %v6635
    %v6831 = vpack.c.bf16 %v6641, %v6636
    %v6832 = vpack.c.bf16 %v6642, %v6637
    %v6833 = vpack.c.bf16 %v6643, %v6638
    %v6834 = vpack.c.bf16 %v6649, %v6644
    %v6835 = vpack.c.bf16 %v6650, %v6645
    %v6836 = vpack.c.bf16 %v6651, %v6646
    %v6837 = vpack.c.bf16 %v6652, %v6647
    %v6838 = vpack.c.bf16 %v6653, %v6648
    %v6839 = vpack.c.bf16 %v6659, %v6654
    %v6840 = vpack.c.bf16 %v6660, %v6655
    %v6841 = vpack.c.bf16 %v6661, %v6656
    %v6842 = vpack.c.bf16 %v6662, %v6657
    %v6843 = vpack.c.bf16 %v6663, %v6658
    %v6844 = vpack.c.bf16 %v6669, %v6664
    %v6845 = vpack.c.bf16 %v6670, %v6665
    %v6846 = vpack.c.bf16 %v6671, %v6666
    %v6847 = vpack.c.bf16 %v6672, %v6667
    %v6848 = vpack.c.bf16 %v6673, %v6668
    %v6849 = vpack.c.bf16 %v6679, %v6674
    %v6850 = vpack.c.bf16 %v6680, %v6675
    %v6851 = vpack.c.bf16 %v6681, %v6676
    %v6852 = vpack.c.bf16 %v6682, %v6677
    %v6853 = vpack.c.bf16 %v6683, %v6678
    %v6854 = vpack.c.bf16 %v6689, %v6684
    %v6855 = vpack.c.bf16 %v6690, %v6685
    %v6856 = vpack.c.bf16 %v6691, %v6686
    %v6857 = vpack.c.bf16 %v6692, %v6687
    %v6858 = vpack.c.bf16 %v6693, %v6688
    %v6859 = vpack.c.bf16 %v6699, %v6694
    %v6860 = vpack.c.bf16 %v6700, %v6695
    %v6861 = vpack.c.bf16 %v6701, %v6696
    %v6862 = vpack.c.bf16 %v6702, %v6697
    %v6863 = vpack.c.bf16 %v6703, %v6698
    %v6864 = vld [vmem:[%s3] sm:$0xff]
    %v6865 = vld [vmem:[%s3 + $0x8] sm:$0xf]
    %v6866 = vld [vmem:[%s3 + $0xc] sm:$0xff]
    %v6867 = vld [vmem:[%s3 + $0x14] sm:$0xf]
    %v6868 = vld [vmem:[%s3 + $0x18] sm:$0xff]
    %v6869 = vld [vmem:[%s3 + $0x20] sm:$0xf]
    %v6870 = vld [vmem:[%s3 + $0x24] sm:$0xff]
    %v6871 = vld [vmem:[%s3 + $0x2c] sm:$0xf]
    %v6872 = vld [vmem:[%s3 + $0x30] sm:$0xff]
    %v6873 = vld [vmem:[%s3 + $0x38] sm:$0xf]
    %v6874 = vld [vmem:[%s3 + $0x3c] sm:$0xff]
    %v6875 = vld [vmem:[%s3 + $0x44] sm:$0xf]
    %v6876 = vld [vmem:[%s3 + $0x48] sm:$0xff]
    %v6877 = vld [vmem:[%s3 + $0x50] sm:$0xf]
    %v6878 = vld [vmem:[%s3 + $0x54] sm:$0xff]
    %v6879 = vld [vmem:[%s3 + $0x5c] sm:$0xf]
    %v6880 = vld [vmem:[%s3 + $0x60] sm:$0xff]
    %v6881 = vld [vmem:[%s3 + $0x68] sm:$0xf]
    %v6882 = vld [vmem:[%s3 + $0x6c] sm:$0xff]
    %v6883 = vld [vmem:[%s3 + $0x74] sm:$0xf]
    %v6884 = vld [vmem:[%s3 + $0x78] sm:$0xff]
    %v6885 = vld [vmem:[%s3 + $0x80] sm:$0xf]
    %v6886 = vld [vmem:[%s3 + $0x84] sm:$0xff]
    %v6887 = vld [vmem:[%s3 + $0x8c] sm:$0xf]
    %v6888 = vld [vmem:[%s3 + $0x90] sm:$0xff]
    %v6889 = vld [vmem:[%s3 + $0x98] sm:$0xf]
    %v6890 = vld [vmem:[%s3 + $0x9c] sm:$0xff]
    %v6891 = vld [vmem:[%s3 + $0xa4] sm:$0xf]
    %v6892 = vld [vmem:[%s3 + $0xa8] sm:$0xff]
    %v6893 = vld [vmem:[%s3 + $0xb0] sm:$0xf]
    %v6894 = vld [vmem:[%s3 + $0xb4] sm:$0xff]
    %v6895 = vld [vmem:[%s3 + $0xbc] sm:$0xf]
    %v6896 = vld [vmem:[%s3 + $0xc0] sm:$0xff]
    %v6897 = vld [vmem:[%s3 + $0xc8] sm:$0xf]
    %v6898 = vld [vmem:[%s3 + $0xcc] sm:$0xff]
    %v6899 = vld [vmem:[%s3 + $0xd4] sm:$0xf]
    %v6900 = vld [vmem:[%s3 + $0xd8] sm:$0xff]
    %v6901 = vld [vmem:[%s3 + $0xe0] sm:$0xf]
    %v6902 = vld [vmem:[%s3 + $0xe4] sm:$0xff]
    %v6903 = vld [vmem:[%s3 + $0xec] sm:$0xf]
    %v6904 = vld [vmem:[%s3 + $0xf0] sm:$0xff]
    %v6905 = vld [vmem:[%s3 + $0xf8] sm:$0xf]
    %v6906 = vld [vmem:[%s3 + $0xfc] sm:$0xff]
    %v6907 = vld [vmem:[%s3 + $0x104] sm:$0xf]
    %v6908 = vld [vmem:[%s3 + $0x108] sm:$0xff]
    %v6909 = vld [vmem:[%s3 + $0x110] sm:$0xf]
    %v6910 = vld [vmem:[%s3 + $0x114] sm:$0xff]
    %v6911 = vld [vmem:[%s3 + $0x11c] sm:$0xf]
    %v6912 = vld [vmem:[%s3 + $0x120] sm:$0xff]
    %v6913 = vld [vmem:[%s3 + $0x128] sm:$0xf]
    %v6914 = vld [vmem:[%s3 + $0x12c] sm:$0xff]
    %v6915 = vld [vmem:[%s3 + $0x134] sm:$0xf]
    %v6916 = vld [vmem:[%s3 + $0x138] sm:$0xff]
    %v6917 = vld [vmem:[%s3 + $0x140] sm:$0xf]
    %v6918 = vld [vmem:[%s3 + $0x144] sm:$0xff]
    %v6919 = vld [vmem:[%s3 + $0x14c] sm:$0xf]
    %v6920 = vld [vmem:[%s3 + $0x150] sm:$0xff]
    %v6921 = vld [vmem:[%s3 + $0x158] sm:$0xf]
    %v6922 = vld [vmem:[%s3 + $0x15c] sm:$0xff]
    %v6923 = vld [vmem:[%s3 + $0x164] sm:$0xf]
    %v6924 = vld [vmem:[%s3 + $0x168] sm:$0xff]
    %v6925 = vld [vmem:[%s3 + $0x170] sm:$0xf]
    %v6926 = vld [vmem:[%s3 + $0x174] sm:$0xff]
    %v6927 = vld [vmem:[%s3 + $0x17c] sm:$0xf]
    %v6928 = vld [vmem:[%s3 + $0x180] sm:$0xff]
    %v6929 = vld [vmem:[%s3 + $0x188] sm:$0xf]
    %v6930 = vld [vmem:[%s3 + $0x18c] sm:$0xff]
    %v6931 = vld [vmem:[%s3 + $0x194] sm:$0xf]
    %v6932 = vld [vmem:[%s3 + $0x198] sm:$0xff]
    %v6933 = vld [vmem:[%s3 + $0x1a0] sm:$0xf]
    %v6934 = vld [vmem:[%s3 + $0x1a4] sm:$0xff]
    %v6935 = vld [vmem:[%s3 + $0x1ac] sm:$0xf]
    %v6936 = vld [vmem:[%s3 + $0x1b0] sm:$0xff]
    %v6937 = vld [vmem:[%s3 + $0x1b8] sm:$0xf]
    %v6938 = vld [vmem:[%s3 + $0x1bc] sm:$0xff]
    %v6939 = vld [vmem:[%s3 + $0x1c4] sm:$0xf]
    %v6940 = vld [vmem:[%s3 + $0x1c8] sm:$0xff]
    %v6941 = vld [vmem:[%s3 + $0x1d0] sm:$0xf]
    %v6942 = vld [vmem:[%s3 + $0x1d4] sm:$0xff]
    %v6943 = vld [vmem:[%s3 + $0x1dc] sm:$0xf]
    %v6944 = vld [vmem:[%s3 + $0x1e0] sm:$0xff]
    %v6945 = vld [vmem:[%s3 + $0x1e8] sm:$0xf]
    %v6946 = vld [vmem:[%s3 + $0x1ec] sm:$0xff]
    %v6947 = vld [vmem:[%s3 + $0x1f4] sm:$0xf]
    %v6948 = vld [vmem:[%s3 + $0x1f8] sm:$0xff]
    %v6949 = vld [vmem:[%s3 + $0x200] sm:$0xf]
    %v6950 = vld [vmem:[%s3 + $0x204] sm:$0xff]
    %v6951 = vld [vmem:[%s3 + $0x20c] sm:$0xf]
    %v6952 = vld [vmem:[%s3 + $0x210] sm:$0xff]
    %v6953 = vld [vmem:[%s3 + $0x218] sm:$0xf]
    %v6954 = vld [vmem:[%s3 + $0x21c] sm:$0xff]
    %v6955 = vld [vmem:[%s3 + $0x224] sm:$0xf]
    %v6956 = vld [vmem:[%s3 + $0x228] sm:$0xff]
    %v6957 = vld [vmem:[%s3 + $0x230] sm:$0xf]
    %v6958 = vld [vmem:[%s3 + $0x234] sm:$0xff]
    %v6959 = vld [vmem:[%s3 + $0x23c] sm:$0xf]
    %v6960 = vld [vmem:[%s3 + $0x240] sm:$0xff]
    %v6961 = vld [vmem:[%s3 + $0x248] sm:$0xf]
    %v6962 = vld [vmem:[%s3 + $0x24c] sm:$0xff]
    %v6963 = vld [vmem:[%s3 + $0x254] sm:$0xf]
    %v6964 = vld [vmem:[%s3 + $0x258] sm:$0xff]
    %v6965 = vld [vmem:[%s3 + $0x260] sm:$0xf]
    %v6966 = vld [vmem:[%s3 + $0x264] sm:$0xff]
    %v6967 = vld [vmem:[%s3 + $0x26c] sm:$0xf]
    %v6968 = vld [vmem:[%s3 + $0x270] sm:$0xff]
    %v6969 = vld [vmem:[%s3 + $0x278] sm:$0xf]
    %v6970 = vld [vmem:[%s3 + $0x27c] sm:$0xff]
    %v6971 = vld [vmem:[%s3 + $0x284] sm:$0xf]
    %v6972 = vld [vmem:[%s3 + $0x288] sm:$0xff]
    %v6973 = vld [vmem:[%s3 + $0x290] sm:$0xf]
    %v6974 = vld [vmem:[%s3 + $0x294] sm:$0xff]
    %v6975 = vld [vmem:[%s3 + $0x29c] sm:$0xf]
    %v6976 = vld [vmem:[%s3 + $0x2a0] sm:$0xff]
    %v6977 = vld [vmem:[%s3 + $0x2a8] sm:$0xf]
    %v6978 = vld [vmem:[%s3 + $0x2ac] sm:$0xff]
    %v6979 = vld [vmem:[%s3 + $0x2b4] sm:$0xf]
    %v6980 = vld [vmem:[%s3 + $0x2b8] sm:$0xff]
    %v6981 = vld [vmem:[%s3 + $0x2c0] sm:$0xf]
    %v6982 = vld [vmem:[%s3 + $0x2c4] sm:$0xff]
    %v6983 = vld [vmem:[%s3 + $0x2cc] sm:$0xf]
    %v6984 = vld [vmem:[%s3 + $0x2d0] sm:$0xff]
    %v6985 = vld [vmem:[%s3 + $0x2d8] sm:$0xf]
    %v6986 = vld [vmem:[%s3 + $0x2dc] sm:$0xff]
    %v6987 = vld [vmem:[%s3 + $0x2e4] sm:$0xf]
    %v6988 = vld [vmem:[%s3 + $0x2e8] sm:$0xff]
    %v6989 = vld [vmem:[%s3 + $0x2f0] sm:$0xf]
    %v6990 = vld [vmem:[%s3 + $0x2f4] sm:$0xff]
    %v6991 = vld [vmem:[%s3 + $0x2fc] sm:$0xf]
    %v6992 = vld [vmem:[%s3 + $0x300] sm:$0xff]
    %v6993 = vld [vmem:[%s3 + $0x308] sm:$0xf]
    %v6994 = vld [vmem:[%s3 + $0x30c] sm:$0xff]
    %v6995 = vld [vmem:[%s3 + $0x314] sm:$0xf]
    %v6996 = vld [vmem:[%s3 + $0x318] sm:$0xff]
    %v6997 = vld [vmem:[%s3 + $0x320] sm:$0xf]
    %v6998 = vld [vmem:[%s3 + $0x324] sm:$0xff]
    %v6999 = vld [vmem:[%s3 + $0x32c] sm:$0xf]
    %v7000 = vld [vmem:[%s3 + $0x330] sm:$0xff]
    %v7001 = vld [vmem:[%s3 + $0x338] sm:$0xf]
    %v7002 = vld [vmem:[%s3 + $0x33c] sm:$0xff]
    %v7003 = vld [vmem:[%s3 + $0x344] sm:$0xf]
    %v7004 = vld [vmem:[%s3 + $0x348] sm:$0xff]
    %v7005 = vld [vmem:[%s3 + $0x350] sm:$0xf]
    %v7006 = vld [vmem:[%s3 + $0x354] sm:$0xff]
    %v7007 = vld [vmem:[%s3 + $0x35c] sm:$0xf]
    %v7008 = vld [vmem:[%s3 + $0x360] sm:$0xff]
    %v7009 = vld [vmem:[%s3 + $0x368] sm:$0xf]
    %v7010 = vld [vmem:[%s3 + $0x36c] sm:$0xff]
    %v7011 = vld [vmem:[%s3 + $0x374] sm:$0xf]
    %v7012 = vld [vmem:[%s3 + $0x378] sm:$0xff]
    %v7013 = vld [vmem:[%s3 + $0x380] sm:$0xf]
    %v7014 = vld [vmem:[%s3 + $0x384] sm:$0xff]
    %v7015 = vld [vmem:[%s3 + $0x38c] sm:$0xf]
    %v7016 = vld [vmem:[%s3 + $0x390] sm:$0xff]
    %v7017 = vld [vmem:[%s3 + $0x398] sm:$0xf]
    %v7018 = vld [vmem:[%s3 + $0x39c] sm:$0xff]
    %v7019 = vld [vmem:[%s3 + $0x3a4] sm:$0xf]
    %v7020 = vld [vmem:[%s3 + $0x3a8] sm:$0xff]
    %v7021 = vld [vmem:[%s3 + $0x3b0] sm:$0xf]
    %v7022 = vld [vmem:[%s3 + $0x3b4] sm:$0xff]
    %v7023 = vld [vmem:[%s3 + $0x3bc] sm:$0xf]
    %v7024 = vld [vmem:[%s4] sm:$0x7]
    %v7026 = vlaneseq
    %v7027 = vshrl.u32 %v7026, 7
    %v7028 = vsub.s32 0, %v7027
    %v7029 = vrot.slane %v7024, %v7028
    %v7030 = vlaneseq
    %v7031 = vshrl.u32 %v7030, 7
    %v7032 = vsub.s32 1, %v7031
    %v7033 = vrot.slane %v7024, %v7032
    %v7034 = vlaneseq
    %v7035 = vshrl.u32 %v7034, 7
    %v7036 = vsub.s32 2, %v7035
    %v7037 = vrot.slane %v7024, %v7036
    %v7201 = vunpack.c.l.b16 %v6864
    %v7202 = vunpack.c.h.b16 %v6864
    %v7203 = vunpack.c.l.b16 %v6865
    %v7204 = vunpack.c.l.b16 %v6866
    %v7205 = vunpack.c.h.b16 %v6866
    %v7206 = vunpack.c.l.b16 %v6867
    %v7207 = vunpack.c.l.b16 %v6868
    %v7208 = vunpack.c.h.b16 %v6868
    %v7209 = vunpack.c.l.b16 %v6869
    %v7210 = vunpack.c.l.b16 %v6870
    %v7211 = vunpack.c.h.b16 %v6870
    %v7212 = vunpack.c.l.b16 %v6871
    %v7213 = vunpack.c.l.b16 %v6872
    %v7214 = vunpack.c.h.b16 %v6872
    %v7215 = vunpack.c.l.b16 %v6873
    %v7216 = vunpack.c.l.b16 %v6874
    %v7217 = vunpack.c.h.b16 %v6874
    %v7218 = vunpack.c.l.b16 %v6875
    %v7219 = vunpack.c.l.b16 %v6876
    %v7220 = vunpack.c.h.b16 %v6876
    %v7221 = vunpack.c.l.b16 %v6877
    %v7222 = vunpack.c.l.b16 %v6878
    %v7223 = vunpack.c.h.b16 %v6878
    %v7224 = vunpack.c.l.b16 %v6879
    %v7225 = vunpack.c.l.b16 %v6880
    %v7226 = vunpack.c.h.b16 %v6880
    %v7227 = vunpack.c.l.b16 %v6881
    %v7228 = vunpack.c.l.b16 %v6882
    %v7229 = vunpack.c.h.b16 %v6882
    %v7230 = vunpack.c.l.b16 %v6883
    %v7231 = vunpack.c.l.b16 %v6884
    %v7232 = vunpack.c.h.b16 %v6884
    %v7233 = vunpack.c.l.b16 %v6885
    %v7234 = vunpack.c.l.b16 %v6886
    %v7235 = vunpack.c.h.b16 %v6886
    %v7236 = vunpack.c.l.b16 %v6887
    %v7237 = vunpack.c.l.b16 %v6888
    %v7238 = vunpack.c.h.b16 %v6888
    %v7239 = vunpack.c.l.b16 %v6889
    %v7240 = vunpack.c.l.b16 %v6890
    %v7241 = vunpack.c.h.b16 %v6890
    %v7242 = vunpack.c.l.b16 %v6891
    %v7243 = vunpack.c.l.b16 %v6892
    %v7244 = vunpack.c.h.b16 %v6892
    %v7245 = vunpack.c.l.b16 %v6893
    %v7246 = vunpack.c.l.b16 %v6894
    %v7247 = vunpack.c.h.b16 %v6894
    %v7248 = vunpack.c.l.b16 %v6895
    %v7249 = vunpack.c.l.b16 %v6896
    %v7250 = vunpack.c.h.b16 %v6896
    %v7251 = vunpack.c.l.b16 %v6897
    %v7252 = vunpack.c.l.b16 %v6898
    %v7253 = vunpack.c.h.b16 %v6898
    %v7254 = vunpack.c.l.b16 %v6899
    %v7255 = vunpack.c.l.b16 %v6900
    %v7256 = vunpack.c.h.b16 %v6900
    %v7257 = vunpack.c.l.b16 %v6901
    %v7258 = vunpack.c.l.b16 %v6902
    %v7259 = vunpack.c.h.b16 %v6902
    %v7260 = vunpack.c.l.b16 %v6903
    %v7261 = vunpack.c.l.b16 %v6904
    %v7262 = vunpack.c.h.b16 %v6904
    %v7263 = vunpack.c.l.b16 %v6905
    %v7264 = vunpack.c.l.b16 %v6906
    %v7265 = vunpack.c.h.b16 %v6906
    %v7266 = vunpack.c.l.b16 %v6907
    %v7267 = vunpack.c.l.b16 %v6908
    %v7268 = vunpack.c.h.b16 %v6908
    %v7269 = vunpack.c.l.b16 %v6909
    %v7270 = vunpack.c.l.b16 %v6910
    %v7271 = vunpack.c.h.b16 %v6910
    %v7272 = vunpack.c.l.b16 %v6911
    %v7273 = vunpack.c.l.b16 %v6912
    %v7274 = vunpack.c.h.b16 %v6912
    %v7275 = vunpack.c.l.b16 %v6913
    %v7276 = vunpack.c.l.b16 %v6914
    %v7277 = vunpack.c.h.b16 %v6914
    %v7278 = vunpack.c.l.b16 %v6915
    %v7279 = vunpack.c.l.b16 %v6916
    %v7280 = vunpack.c.h.b16 %v6916
    %v7281 = vunpack.c.l.b16 %v6917
    %v7282 = vunpack.c.l.b16 %v6918
    %v7283 = vunpack.c.h.b16 %v6918
    %v7284 = vunpack.c.l.b16 %v6919
    %v7285 = vunpack.c.l.b16 %v6920
    %v7286 = vunpack.c.h.b16 %v6920
    %v7287 = vunpack.c.l.b16 %v6921
    %v7288 = vunpack.c.l.b16 %v6922
    %v7289 = vunpack.c.h.b16 %v6922
    %v7290 = vunpack.c.l.b16 %v6923
    %v7291 = vunpack.c.l.b16 %v6924
    %v7292 = vunpack.c.h.b16 %v6924
    %v7293 = vunpack.c.l.b16 %v6925
    %v7294 = vunpack.c.l.b16 %v6926
    %v7295 = vunpack.c.h.b16 %v6926
    %v7296 = vunpack.c.l.b16 %v6927
    %v7297 = vunpack.c.l.b16 %v6928
    %v7298 = vunpack.c.h.b16 %v6928
    %v7299 = vunpack.c.l.b16 %v6929
    %v7300 = vunpack.c.l.b16 %v6930
    %v7301 = vunpack.c.h.b16 %v6930
    %v7302 = vunpack.c.l.b16 %v6931
    %v7303 = vunpack.c.l.b16 %v6932
    %v7304 = vunpack.c.h.b16 %v6932
    %v7305 = vunpack.c.l.b16 %v6933
    %v7306 = vunpack.c.l.b16 %v6934
    %v7307 = vunpack.c.h.b16 %v6934
    %v7308 = vunpack.c.l.b16 %v6935
    %v7309 = vunpack.c.l.b16 %v6936
    %v7310 = vunpack.c.h.b16 %v6936
    %v7311 = vunpack.c.l.b16 %v6937
    %v7312 = vunpack.c.l.b16 %v6938
    %v7313 = vunpack.c.h.b16 %v6938
    %v7314 = vunpack.c.l.b16 %v6939
    %v7315 = vunpack.c.l.b16 %v6940
    %v7316 = vunpack.c.h.b16 %v6940
    %v7317 = vunpack.c.l.b16 %v6941
    %v7318 = vunpack.c.l.b16 %v6942
    %v7319 = vunpack.c.h.b16 %v6942
    %v7320 = vunpack.c.l.b16 %v6943
    %v7321 = vunpack.c.l.b16 %v6944
    %v7322 = vunpack.c.h.b16 %v6944
    %v7323 = vunpack.c.l.b16 %v6945
    %v7324 = vunpack.c.l.b16 %v6946
    %v7325 = vunpack.c.h.b16 %v6946
    %v7326 = vunpack.c.l.b16 %v6947
    %v7327 = vunpack.c.l.b16 %v6948
    %v7328 = vunpack.c.h.b16 %v6948
    %v7329 = vunpack.c.l.b16 %v6949
    %v7330 = vunpack.c.l.b16 %v6950
    %v7331 = vunpack.c.h.b16 %v6950
    %v7332 = vunpack.c.l.b16 %v6951
    %v7333 = vunpack.c.l.b16 %v6952
    %v7334 = vunpack.c.h.b16 %v6952
    %v7335 = vunpack.c.l.b16 %v6953
    %v7336 = vunpack.c.l.b16 %v6954
    %v7337 = vunpack.c.h.b16 %v6954
    %v7338 = vunpack.c.l.b16 %v6955
    %v7339 = vunpack.c.l.b16 %v6956
    %v7340 = vunpack.c.h.b16 %v6956
    %v7341 = vunpack.c.l.b16 %v6957
    %v7342 = vunpack.c.l.b16 %v6958
    %v7343 = vunpack.c.h.b16 %v6958
    %v7344 = vunpack.c.l.b16 %v6959
    %v7345 = vunpack.c.l.b16 %v6960
    %v7346 = vunpack.c.h.b16 %v6960
    %v7347 = vunpack.c.l.b16 %v6961
    %v7348 = vunpack.c.l.b16 %v6962
    %v7349 = vunpack.c.h.b16 %v6962
    %v7350 = vunpack.c.l.b16 %v6963
    %v7351 = vunpack.c.l.b16 %v6964
    %v7352 = vunpack.c.h.b16 %v6964
    %v7353 = vunpack.c.l.b16 %v6965
    %v7354 = vunpack.c.l.b16 %v6966
    %v7355 = vunpack.c.h.b16 %v6966
    %v7356 = vunpack.c.l.b16 %v6967
    %v7357 = vunpack.c.l.b16 %v6968
    %v7358 = vunpack.c.h.b16 %v6968
    %v7359 = vunpack.c.l.b16 %v6969
    %v7360 = vunpack.c.l.b16 %v6970
    %v7361 = vunpack.c.h.b16 %v6970
    %v7362 = vunpack.c.l.b16 %v6971
    %v7363 = vunpack.c.l.b16 %v6972
    %v7364 = vunpack.c.h.b16 %v6972
    %v7365 = vunpack.c.l.b16 %v6973
    %v7366 = vunpack.c.l.b16 %v6974
    %v7367 = vunpack.c.h.b16 %v6974
    %v7368 = vunpack.c.l.b16 %v6975
    %v7369 = vunpack.c.l.b16 %v6976
    %v7370 = vunpack.c.h.b16 %v6976
    %v7371 = vunpack.c.l.b16 %v6977
    %v7372 = vunpack.c.l.b16 %v6978
    %v7373 = vunpack.c.h.b16 %v6978
    %v7374 = vunpack.c.l.b16 %v6979
    %v7375 = vunpack.c.l.b16 %v6980
    %v7376 = vunpack.c.h.b16 %v6980
    %v7377 = vunpack.c.l.b16 %v6981
    %v7378 = vunpack.c.l.b16 %v6982
    %v7379 = vunpack.c.h.b16 %v6982
    %v7380 = vunpack.c.l.b16 %v6983
    %v7381 = vunpack.c.l.b16 %v6984
    %v7382 = vunpack.c.h.b16 %v6984
    %v7383 = vunpack.c.l.b16 %v6985
    %v7384 = vunpack.c.l.b16 %v6986
    %v7385 = vunpack.c.h.b16 %v6986
    %v7386 = vunpack.c.l.b16 %v6987
    %v7387 = vunpack.c.l.b16 %v6988
    %v7388 = vunpack.c.h.b16 %v6988
    %v7389 = vunpack.c.l.b16 %v6989
    %v7390 = vunpack.c.l.b16 %v6990
    %v7391 = vunpack.c.h.b16 %v6990
    %v7392 = vunpack.c.l.b16 %v6991
    %v7393 = vunpack.c.l.b16 %v6992
    %v7394 = vunpack.c.h.b16 %v6992
    %v7395 = vunpack.c.l.b16 %v6993
    %v7396 = vunpack.c.l.b16 %v6994
    %v7397 = vunpack.c.h.b16 %v6994
    %v7398 = vunpack.c.l.b16 %v6995
    %v7399 = vunpack.c.l.b16 %v6996
    %v7400 = vunpack.c.h.b16 %v6996
    %v7401 = vunpack.c.l.b16 %v6997
    %v7402 = vunpack.c.l.b16 %v6998
    %v7403 = vunpack.c.h.b16 %v6998
    %v7404 = vunpack.c.l.b16 %v6999
    %v7405 = vunpack.c.l.b16 %v7000
    %v7406 = vunpack.c.h.b16 %v7000
    %v7407 = vunpack.c.l.b16 %v7001
    %v7408 = vunpack.c.l.b16 %v7002
    %v7409 = vunpack.c.h.b16 %v7002
    %v7410 = vunpack.c.l.b16 %v7003
    %v7411 = vunpack.c.l.b16 %v7004
    %v7412 = vunpack.c.h.b16 %v7004
    %v7413 = vunpack.c.l.b16 %v7005
    %v7414 = vunpack.c.l.b16 %v7006
    %v7415 = vunpack.c.h.b16 %v7006
    %v7416 = vunpack.c.l.b16 %v7007
    %v7417 = vunpack.c.l.b16 %v7008
    %v7418 = vunpack.c.h.b16 %v7008
    %v7419 = vunpack.c.l.b16 %v7009
    %v7420 = vunpack.c.l.b16 %v7010
    %v7421 = vunpack.c.h.b16 %v7010
    %v7422 = vunpack.c.l.b16 %v7011
    %v7423 = vunpack.c.l.b16 %v7012
    %v7424 = vunpack.c.h.b16 %v7012
    %v7425 = vunpack.c.l.b16 %v7013
    %v7426 = vunpack.c.l.b16 %v7014
    %v7427 = vunpack.c.h.b16 %v7014
    %v7428 = vunpack.c.l.b16 %v7015
    %v7429 = vunpack.c.l.b16 %v7016
    %v7430 = vunpack.c.h.b16 %v7016
    %v7431 = vunpack.c.l.b16 %v7017
    %v7432 = vunpack.c.l.b16 %v7018
    %v7433 = vunpack.c.h.b16 %v7018
    %v7434 = vunpack.c.l.b16 %v7019
    %v7435 = vunpack.c.l.b16 %v7020
    %v7436 = vunpack.c.h.b16 %v7020
    %v7437 = vunpack.c.l.b16 %v7021
    %v7438 = vunpack.c.l.b16 %v7022
    %v7439 = vunpack.c.h.b16 %v7022
    %v7440 = vunpack.c.l.b16 %v7023
    %v7441 = vpack.c.b16 %v7204, %v7201
    %v7442 = vpack.c.b16 %v7205, %v7202
    %v7443 = vpack.c.b16 %v7206, %v7203
    %v7444 = vpack.c.b16 %v7210, %v7207
    %v7445 = vpack.c.b16 %v7211, %v7208
    %v7446 = vpack.c.b16 %v7212, %v7209
    %v7447 = vpack.c.b16 %v7216, %v7213
    %v7448 = vpack.c.b16 %v7217, %v7214
    %v7449 = vpack.c.b16 %v7218, %v7215
    %v7450 = vpack.c.b16 %v7222, %v7219
    %v7451 = vpack.c.b16 %v7223, %v7220
    %v7452 = vpack.c.b16 %v7224, %v7221
    %v7453 = vpack.c.b16 %v7228, %v7225
    %v7454 = vpack.c.b16 %v7229, %v7226
    %v7455 = vpack.c.b16 %v7230, %v7227
    %v7456 = vpack.c.b16 %v7234, %v7231
    %v7457 = vpack.c.b16 %v7235, %v7232
    %v7458 = vpack.c.b16 %v7236, %v7233
    %v7459 = vpack.c.b16 %v7240, %v7237
    %v7460 = vpack.c.b16 %v7241, %v7238
    %v7461 = vpack.c.b16 %v7242, %v7239
    %v7462 = vpack.c.b16 %v7246, %v7243
    %v7463 = vpack.c.b16 %v7247, %v7244
    %v7464 = vpack.c.b16 %v7248, %v7245
    %v7465 = vpack.c.b16 %v7252, %v7249
    %v7466 = vpack.c.b16 %v7253, %v7250
    %v7467 = vpack.c.b16 %v7254, %v7251
    %v7468 = vpack.c.b16 %v7258, %v7255
    %v7469 = vpack.c.b16 %v7259, %v7256
    %v7470 = vpack.c.b16 %v7260, %v7257
    %v7471 = vpack.c.b16 %v7264, %v7261
    %v7472 = vpack.c.b16 %v7265, %v7262
    %v7473 = vpack.c.b16 %v7266, %v7263
    %v7474 = vpack.c.b16 %v7270, %v7267
    %v7475 = vpack.c.b16 %v7271, %v7268
    %v7476 = vpack.c.b16 %v7272, %v7269
    %v7477 = vpack.c.b16 %v7276, %v7273
    %v7478 = vpack.c.b16 %v7277, %v7274
    %v7479 = vpack.c.b16 %v7278, %v7275
    %v7480 = vpack.c.b16 %v7282, %v7279
    %v7481 = vpack.c.b16 %v7283, %v7280
    %v7482 = vpack.c.b16 %v7284, %v7281
    %v7483 = vpack.c.b16 %v7288, %v7285
    %v7484 = vpack.c.b16 %v7289, %v7286
    %v7485 = vpack.c.b16 %v7290, %v7287
    %v7486 = vpack.c.b16 %v7294, %v7291
    %v7487 = vpack.c.b16 %v7295, %v7292
    %v7488 = vpack.c.b16 %v7296, %v7293
    %v7489 = vpack.c.b16 %v7300, %v7297
    %v7490 = vpack.c.b16 %v7301, %v7298
    %v7491 = vpack.c.b16 %v7302, %v7299
    %v7492 = vpack.c.b16 %v7306, %v7303
    %v7493 = vpack.c.b16 %v7307, %v7304
    %v7494 = vpack.c.b16 %v7308, %v7305
    %v7495 = vpack.c.b16 %v7312, %v7309
    %v7496 = vpack.c.b16 %v7313, %v7310
    %v7497 = vpack.c.b16 %v7314, %v7311
    %v7498 = vpack.c.b16 %v7318, %v7315
    %v7499 = vpack.c.b16 %v7319, %v7316
    %v7500 = vpack.c.b16 %v7320, %v7317
    %v7501 = vpack.c.b16 %v7324, %v7321
    %v7502 = vpack.c.b16 %v7325, %v7322
    %v7503 = vpack.c.b16 %v7326, %v7323
    %v7504 = vpack.c.b16 %v7330, %v7327
    %v7505 = vpack.c.b16 %v7331, %v7328
    %v7506 = vpack.c.b16 %v7332, %v7329
    %v7507 = vpack.c.b16 %v7336, %v7333
    %v7508 = vpack.c.b16 %v7337, %v7334
    %v7509 = vpack.c.b16 %v7338, %v7335
    %v7510 = vpack.c.b16 %v7342, %v7339
    %v7511 = vpack.c.b16 %v7343, %v7340
    %v7512 = vpack.c.b16 %v7344, %v7341
    %v7513 = vpack.c.b16 %v7348, %v7345
    %v7514 = vpack.c.b16 %v7349, %v7346
    %v7515 = vpack.c.b16 %v7350, %v7347
    %v7516 = vpack.c.b16 %v7354, %v7351
    %v7517 = vpack.c.b16 %v7355, %v7352
    %v7518 = vpack.c.b16 %v7356, %v7353
    %v7519 = vpack.c.b16 %v7360, %v7357
    %v7520 = vpack.c.b16 %v7361, %v7358
    %v7521 = vpack.c.b16 %v7362, %v7359
    %v7522 = vpack.c.b16 %v7366, %v7363
    %v7523 = vpack.c.b16 %v7367, %v7364
    %v7524 = vpack.c.b16 %v7368, %v7365
    %v7525 = vpack.c.b16 %v7372, %v7369
    %v7526 = vpack.c.b16 %v7373, %v7370
    %v7527 = vpack.c.b16 %v7374, %v7371
    %v7528 = vpack.c.b16 %v7378, %v7375
    %v7529 = vpack.c.b16 %v7379, %v7376
    %v7530 = vpack.c.b16 %v7380, %v7377
    %v7531 = vpack.c.b16 %v7384, %v7381
    %v7532 = vpack.c.b16 %v7385, %v7382
    %v7533 = vpack.c.b16 %v7386, %v7383
    %v7534 = vpack.c.b16 %v7390, %v7387
    %v7535 = vpack.c.b16 %v7391, %v7388
    %v7536 = vpack.c.b16 %v7392, %v7389
    %v7537 = vpack.c.b16 %v7396, %v7393
    %v7538 = vpack.c.b16 %v7397, %v7394
    %v7539 = vpack.c.b16 %v7398, %v7395
    %v7540 = vpack.c.b16 %v7402, %v7399
    %v7541 = vpack.c.b16 %v7403, %v7400
    %v7542 = vpack.c.b16 %v7404, %v7401
    %v7543 = vpack.c.b16 %v7408, %v7405
    %v7544 = vpack.c.b16 %v7409, %v7406
    %v7545 = vpack.c.b16 %v7410, %v7407
    %v7546 = vpack.c.b16 %v7414, %v7411
    %v7547 = vpack.c.b16 %v7415, %v7412
    %v7548 = vpack.c.b16 %v7416, %v7413
    %v7549 = vpack.c.b16 %v7420, %v7417
    %v7550 = vpack.c.b16 %v7421, %v7418
    %v7551 = vpack.c.b16 %v7422, %v7419
    %v7552 = vpack.c.b16 %v7426, %v7423
    %v7553 = vpack.c.b16 %v7427, %v7424
    %v7554 = vpack.c.b16 %v7428, %v7425
    %v7555 = vpack.c.b16 %v7432, %v7429
    %v7556 = vpack.c.b16 %v7433, %v7430
    %v7557 = vpack.c.b16 %v7434, %v7431
    %v7558 = vpack.c.b16 %v7438, %v7435
    %v7559 = vpack.c.b16 %v7439, %v7436
    %v7560 = vpack.c.b16 %v7440, %v7437
    %7681 = vmatprep.subr.bf16.mxu0 %v7463
    %7682 = vmatpush1.bf16.msra.mxu0 %v7462
    %7683 = vmatprep.subr.bf16.mxu0 %v7460
    %7684 = vmatpush1.bf16.msra.mxu0 %v7459
    %7685 = vmatprep.subr.bf16.mxu0 %v7457
    %7686 = vmatpush1.bf16.msra.mxu0 %v7456
    %7687 = vmatprep.subr.bf16.mxu0 %v7454
    %7688 = vmatpush1.bf16.msra.mxu0 %v7453
    %7689 = vmatprep.subr.bf16.mxu0 %v7451
    %7690 = vmatpush1.bf16.msra.mxu0 %v7450
    %7691 = vmatprep.subr.bf16.mxu0 %v7448
    %7692 = vmatpush1.bf16.msra.mxu0 %v7447
    %7693 = vmatprep.subr.bf16.mxu0 %v7445
    %7694 = vmatpush1.bf16.msra.mxu0 %v7444
    %7695 = vmatprep.subr.bf16.mxu0 %v7442
    %7696 = vmatpush1.bf16.msra.mxu0 %v7441
    %7697 = vmatprep.subr.bf16.mxu0 %v7487
    %7698 = vmatpush2.bf16.msra.mxu0 %v7486
    %7699 = vmatprep.subr.bf16.mxu0 %v7484
    %7700 = vmatpush2.bf16.msra.mxu0 %v7483
    %7701 = vmatprep.subr.bf16.mxu0 %v7481
    %7702 = vmatpush2.bf16.msra.mxu0 %v7480
    %7703 = vmatprep.subr.bf16.mxu0 %v7478
    %7704 = vmatpush2.bf16.msra.mxu0 %v7477
    %7705 = vmatprep.subr.bf16.mxu0 %v7475
    %7706 = vmatpush2.bf16.msra.mxu0 %v7474
    %7707 = vmatprep.subr.bf16.mxu0 %v7472
    %7708 = vmatpush2.bf16.msra.mxu0 %v7471
    %7709 = vmatprep.subr.bf16.mxu0 %v7469
    %7710 = vmatpush2.bf16.msra.mxu0 %v7468
    %7711 = vmatprep.subr.bf16.mxu0 %v7466
    %7712 = vmatpush2.bf16.msra.mxu0 %v7465
    %7713 = vmatprep.mubr.bf16.mxu0 %v6705
    %7714 = vmatmul.mubr.bf16.gmra.mxu0 %v6704
    %v7715 = vpop.f32.mrf.mxu0
    %v7716 = vadd.f32 %v7029, %v7715
    %v7717 = vpop.f32.mrf.mxu0
    %v7718 = vadd.f32 %v7033, %v7717
    %v7719 = vpop.f32.mrf.mxu0
    %v7720 = vadd.f32 %v7029, %v7719
    %v7721 = vpop.f32.mrf.mxu0
    %v7722 = vadd.f32 %v7033, %v7721
    %7723 = vmatprep.mubr.bf16.mxu0 %v6710
    %7724 = vmatmul.mubr.bf16.gmra.mxu0 %v6709
    %v7725 = vpop.f32.mrf.mxu0
    %v7726 = vadd.f32 %v7029, %v7725
    %v7727 = vpop.f32.mrf.mxu0
    %v7728 = vadd.f32 %v7033, %v7727
    %v7729 = vpop.f32.mrf.mxu0
    %v7730 = vadd.f32 %v7029, %v7729
    %v7731 = vpop.f32.mrf.mxu0
    %v7732 = vadd.f32 %v7033, %v7731
    %7733 = vmatprep.mubr.bf16.mxu0 %v6715
    %7734 = vmatmul.mubr.bf16.gmra.mxu0 %v6714
    %v7735 = vpop.f32.mrf.mxu0
    %v7736 = vadd.f32 %v7029, %v7735
    %v7737 = vpop.f32.mrf.mxu0
    %v7738 = vadd.f32 %v7033, %v7737
    %v7739 = vpop.f32.mrf.mxu0
    %v7740 = vadd.f32 %v7029, %v7739
    %v7741 = vpop.f32.mrf.mxu0
    %v7742 = vadd.f32 %v7033, %v7741
    %7743 = vmatprep.mubr.bf16.mxu0 %v6720
    %7744 = vmatmul.mubr.bf16.gmra.mxu0 %v6719
    %v7745 = vpop.f32.mrf.mxu0
    %v7746 = vadd.f32 %v7029, %v7745
    %v7747 = vpop.f32.mrf.mxu0
    %v7748 = vadd.f32 %v7033, %v7747
    %v7749 = vpop.f32.mrf.mxu0
    %v7750 = vadd.f32 %v7029, %v7749
    %v7751 = vpop.f32.mrf.mxu0
    %v7752 = vadd.f32 %v7033, %v7751
    %7753 = vmatprep.mubr.bf16.mxu0 %v6725
    %7754 = vmatmul.mubr.bf16.gmra.mxu0 %v6724
    %v7755 = vpop.f32.mrf.mxu0
    %v7756 = vadd.f32 %v7029, %v7755
    %v7757 = vpop.f32.mrf.mxu0
    %v7758 = vadd.f32 %v7033, %v7757
    %v7759 = vpop.f32.mrf.mxu0
    %v7760 = vadd.f32 %v7029, %v7759
    %v7761 = vpop.f32.mrf.mxu0
    %v7762 = vadd.f32 %v7033, %v7761
    %7763 = vmatprep.mubr.bf16.mxu0 %v6730
    %7764 = vmatmul.mubr.bf16.gmra.mxu0 %v6729
    %v7765 = vpop.f32.mrf.mxu0
    %v7766 = vadd.f32 %v7029, %v7765
    %v7767 = vpop.f32.mrf.mxu0
    %v7768 = vadd.f32 %v7033, %v7767
    %v7769 = vpop.f32.mrf.mxu0
    %v7770 = vadd.f32 %v7029, %v7769
    %v7771 = vpop.f32.mrf.mxu0
    %v7772 = vadd.f32 %v7033, %v7771
    %7773 = vmatprep.mubr.bf16.mxu0 %v6735
    %7774 = vmatmul.mubr.bf16.gmra.mxu0 %v6734
    %v7775 = vpop.f32.mrf.mxu0
    %v7776 = vadd.f32 %v7029, %v7775
    %v7777 = vpop.f32.mrf.mxu0
    %v7778 = vadd.f32 %v7033, %v7777
    %v7779 = vpop.f32.mrf.mxu0
    %v7780 = vadd.f32 %v7029, %v7779
    %v7781 = vpop.f32.mrf.mxu0
    %v7782 = vadd.f32 %v7033, %v7781
    %7783 = vmatprep.mubr.bf16.mxu0 %v6740
    %7784 = vmatmul.mubr.bf16.gmra.mxu0 %v6739
    %v7785 = vpop.f32.mrf.mxu0
    %v7786 = vadd.f32 %v7029, %v7785
    %v7787 = vpop.f32.mrf.mxu0
    %v7788 = vadd.f32 %v7033, %v7787
    %v7789 = vpop.f32.mrf.mxu0
    %v7790 = vadd.f32 %v7029, %v7789
    %v7791 = vpop.f32.mrf.mxu0
    %v7792 = vadd.f32 %v7033, %v7791
    %7793 = vmatprep.mubr.bf16.mxu0 %v6745
    %7794 = vmatmul.mubr.bf16.gmra.mxu0 %v6744
    %v7795 = vpop.f32.mrf.mxu0
    %v7796 = vadd.f32 %v7029, %v7795
    %v7797 = vpop.f32.mrf.mxu0
    %v7798 = vadd.f32 %v7033, %v7797
    %v7799 = vpop.f32.mrf.mxu0
    %v7800 = vadd.f32 %v7029, %v7799
    %v7801 = vpop.f32.mrf.mxu0
    %v7802 = vadd.f32 %v7033, %v7801
    %7803 = vmatprep.mubr.bf16.mxu0 %v6750
    %7804 = vmatmul.mubr.bf16.gmra.mxu0 %v6749
    %v7805 = vpop.f32.mrf.mxu0
    %v7806 = vadd.f32 %v7029, %v7805
    %v7807 = vpop.f32.mrf.mxu0
    %v7808 = vadd.f32 %v7033, %v7807
    %v7809 = vpop.f32.mrf.mxu0
    %v7810 = vadd.f32 %v7029, %v7809
    %v7811 = vpop.f32.mrf.mxu0
    %v7812 = vadd.f32 %v7033, %v7811
    %7813 = vmatprep.mubr.bf16.mxu0 %v6755
    %7814 = vmatmul.mubr.bf16.gmra.mxu0 %v6754
    %v7815 = vpop.f32.mrf.mxu0
    %v7816 = vadd.f32 %v7029, %v7815
    %v7817 = vpop.f32.mrf.mxu0
    %v7818 = vadd.f32 %v7033, %v7817
    %v7819 = vpop.f32.mrf.mxu0
    %v7820 = vadd.f32 %v7029, %v7819
    %v7821 = vpop.f32.mrf.mxu0
    %v7822 = vadd.f32 %v7033, %v7821
    %7823 = vmatprep.mubr.bf16.mxu0 %v6760
    %7824 = vmatmul.mubr.bf16.gmra.mxu0 %v6759
    %v7825 = vpop.f32.mrf.mxu0
    %v7826 = vadd.f32 %v7029, %v7825
    %v7827 = vpop.f32.mrf.mxu0
    %v7828 = vadd.f32 %v7033, %v7827
    %v7829 = vpop.f32.mrf.mxu0
    %v7830 = vadd.f32 %v7029, %v7829
    %v7831 = vpop.f32.mrf.mxu0
    %v7832 = vadd.f32 %v7033, %v7831
    %7833 = vmatprep.mubr.bf16.mxu0 %v6765
    %7834 = vmatmul.mubr.bf16.gmra.mxu0 %v6764
    %v7835 = vpop.f32.mrf.mxu0
    %v7836 = vadd.f32 %v7029, %v7835
    %v7837 = vpop.f32.mrf.mxu0
    %v7838 = vadd.f32 %v7033, %v7837
    %v7839 = vpop.f32.mrf.mxu0
    %v7840 = vadd.f32 %v7029, %v7839
    %v7841 = vpop.f32.mrf.mxu0
    %v7842 = vadd.f32 %v7033, %v7841
    %7843 = vmatprep.mubr.bf16.mxu0 %v6770
    %7844 = vmatmul.mubr.bf16.gmra.mxu0 %v6769
    %v7845 = vpop.f32.mrf.mxu0
    %v7846 = vadd.f32 %v7029, %v7845
    %v7847 = vpop.f32.mrf.mxu0
    %v7848 = vadd.f32 %v7033, %v7847
    %v7849 = vpop.f32.mrf.mxu0
    %v7850 = vadd.f32 %v7029, %v7849
    %v7851 = vpop.f32.mrf.mxu0
    %v7852 = vadd.f32 %v7033, %v7851
    %7853 = vmatprep.mubr.bf16.mxu0 %v6775
    %7854 = vmatmul.mubr.bf16.gmra.mxu0 %v6774
    %v7855 = vpop.f32.mrf.mxu0
    %v7856 = vadd.f32 %v7029, %v7855
    %v7857 = vpop.f32.mrf.mxu0
    %v7858 = vadd.f32 %v7033, %v7857
    %v7859 = vpop.f32.mrf.mxu0
    %v7860 = vadd.f32 %v7029, %v7859
    %v7861 = vpop.f32.mrf.mxu0
    %v7862 = vadd.f32 %v7033, %v7861
    %7863 = vmatprep.mubr.bf16.mxu0 %v6780
    %7864 = vmatmul.mubr.bf16.gmra.mxu0 %v6779
    %v7865 = vpop.f32.mrf.mxu0
    %v7866 = vadd.f32 %v7029, %v7865
    %v7867 = vpop.f32.mrf.mxu0
    %v7868 = vadd.f32 %v7033, %v7867
    %v7869 = vpop.f32.mrf.mxu0
    %v7870 = vadd.f32 %v7029, %v7869
    %v7871 = vpop.f32.mrf.mxu0
    %v7872 = vadd.f32 %v7033, %v7871
    %7873 = vmatprep.mubr.bf16.mxu0 %v6785
    %7874 = vmatmul.mubr.bf16.gmra.mxu0 %v6784
    %v7875 = vpop.f32.mrf.mxu0
    %v7876 = vadd.f32 %v7029, %v7875
    %v7877 = vpop.f32.mrf.mxu0
    %v7878 = vadd.f32 %v7033, %v7877
    %v7879 = vpop.f32.mrf.mxu0
    %v7880 = vadd.f32 %v7029, %v7879
    %v7881 = vpop.f32.mrf.mxu0
    %v7882 = vadd.f32 %v7033, %v7881
    %7883 = vmatprep.mubr.bf16.mxu0 %v6790
    %7884 = vmatmul.mubr.bf16.gmra.mxu0 %v6789
    %v7885 = vpop.f32.mrf.mxu0
    %v7886 = vadd.f32 %v7029, %v7885
    %v7887 = vpop.f32.mrf.mxu0
    %v7888 = vadd.f32 %v7033, %v7887
    %v7889 = vpop.f32.mrf.mxu0
    %v7890 = vadd.f32 %v7029, %v7889
    %v7891 = vpop.f32.mrf.mxu0
    %v7892 = vadd.f32 %v7033, %v7891
    %7893 = vmatprep.mubr.bf16.mxu0 %v6795
    %7894 = vmatmul.mubr.bf16.gmra.mxu0 %v6794
    %v7895 = vpop.f32.mrf.mxu0
    %v7896 = vadd.f32 %v7029, %v7895
    %v7897 = vpop.f32.mrf.mxu0
    %v7898 = vadd.f32 %v7033, %v7897
    %v7899 = vpop.f32.mrf.mxu0
    %v7900 = vadd.f32 %v7029, %v7899
    %v7901 = vpop.f32.mrf.mxu0
    %v7902 = vadd.f32 %v7033, %v7901
    %7903 = vmatprep.mubr.bf16.mxu0 %v6800
    %7904 = vmatmul.mubr.bf16.gmra.mxu0 %v6799
    %v7905 = vpop.f32.mrf.mxu0
    %v7906 = vadd.f32 %v7029, %v7905
    %v7907 = vpop.f32.mrf.mxu0
    %v7908 = vadd.f32 %v7033, %v7907
    %v7909 = vpop.f32.mrf.mxu0
    %v7910 = vadd.f32 %v7029, %v7909
    %v7911 = vpop.f32.mrf.mxu0
    %v7912 = vadd.f32 %v7033, %v7911
    %7913 = vmatprep.mubr.bf16.mxu0 %v6805
    %7914 = vmatmul.mubr.bf16.gmra.mxu0 %v6804
    %v7915 = vpop.f32.mrf.mxu0
    %v7916 = vadd.f32 %v7029, %v7915
    %v7917 = vpop.f32.mrf.mxu0
    %v7918 = vadd.f32 %v7033, %v7917
    %v7919 = vpop.f32.mrf.mxu0
    %v7920 = vadd.f32 %v7029, %v7919
    %v7921 = vpop.f32.mrf.mxu0
    %v7922 = vadd.f32 %v7033, %v7921
    %7923 = vmatprep.mubr.bf16.mxu0 %v6810
    %7924 = vmatmul.mubr.bf16.gmra.mxu0 %v6809
    %v7925 = vpop.f32.mrf.mxu0
    %v7926 = vadd.f32 %v7029, %v7925
    %v7927 = vpop.f32.mrf.mxu0
    %v7928 = vadd.f32 %v7033, %v7927
    %v7929 = vpop.f32.mrf.mxu0
    %v7930 = vadd.f32 %v7029, %v7929
    %v7931 = vpop.f32.mrf.mxu0
    %v7932 = vadd.f32 %v7033, %v7931
    %7933 = vmatprep.mubr.bf16.mxu0 %v6815
    %7934 = vmatmul.mubr.bf16.gmra.mxu0 %v6814
    %v7935 = vpop.f32.mrf.mxu0
    %v7936 = vadd.f32 %v7029, %v7935
    %v7937 = vpop.f32.mrf.mxu0
    %v7938 = vadd.f32 %v7033, %v7937
    %v7939 = vpop.f32.mrf.mxu0
    %v7940 = vadd.f32 %v7029, %v7939
    %v7941 = vpop.f32.mrf.mxu0
    %v7942 = vadd.f32 %v7033, %v7941
    %7943 = vmatprep.mubr.bf16.mxu0 %v6820
    %7944 = vmatmul.mubr.bf16.gmra.mxu0 %v6819
    %v7945 = vpop.f32.mrf.mxu0
    %v7946 = vadd.f32 %v7029, %v7945
    %v7947 = vpop.f32.mrf.mxu0
    %v7948 = vadd.f32 %v7033, %v7947
    %v7949 = vpop.f32.mrf.mxu0
    %v7950 = vadd.f32 %v7029, %v7949
    %v7951 = vpop.f32.mrf.mxu0
    %v7952 = vadd.f32 %v7033, %v7951
    %7953 = vmatprep.mubr.bf16.mxu0 %v6825
    %7954 = vmatmul.mubr.bf16.gmra.mxu0 %v6824
    %v7955 = vpop.f32.mrf.mxu0
    %v7956 = vadd.f32 %v7029, %v7955
    %v7957 = vpop.f32.mrf.mxu0
    %v7958 = vadd.f32 %v7033, %v7957
    %v7959 = vpop.f32.mrf.mxu0
    %v7960 = vadd.f32 %v7029, %v7959
    %v7961 = vpop.f32.mrf.mxu0
    %v7962 = vadd.f32 %v7033, %v7961
    %7963 = vmatprep.mubr.bf16.mxu0 %v6830
    %7964 = vmatmul.mubr.bf16.gmra.mxu0 %v6829
    %v7965 = vpop.f32.mrf.mxu0
    %v7966 = vadd.f32 %v7029, %v7965
    %v7967 = vpop.f32.mrf.mxu0
    %v7968 = vadd.f32 %v7033, %v7967
    %v7969 = vpop.f32.mrf.mxu0
    %v7970 = vadd.f32 %v7029, %v7969
    %v7971 = vpop.f32.mrf.mxu0
    %v7972 = vadd.f32 %v7033, %v7971
    %7973 = vmatprep.mubr.bf16.mxu0 %v6835
    %7974 = vmatmul.mubr.bf16.gmra.mxu0 %v6834
    %v7975 = vpop.f32.mrf.mxu0
    %v7976 = vadd.f32 %v7029, %v7975
    %v7977 = vpop.f32.mrf.mxu0
    %v7978 = vadd.f32 %v7033, %v7977
    %v7979 = vpop.f32.mrf.mxu0
    %v7980 = vadd.f32 %v7029, %v7979
    %v7981 = vpop.f32.mrf.mxu0
    %v7982 = vadd.f32 %v7033, %v7981
    %7983 = vmatprep.mubr.bf16.mxu0 %v6840
    %7984 = vmatmul.mubr.bf16.gmra.mxu0 %v6839
    %v7985 = vpop.f32.mrf.mxu0
    %v7986 = vadd.f32 %v7029, %v7985
    %v7987 = vpop.f32.mrf.mxu0
    %v7988 = vadd.f32 %v7033, %v7987
    %v7989 = vpop.f32.mrf.mxu0
    %v7990 = vadd.f32 %v7029, %v7989
    %v7991 = vpop.f32.mrf.mxu0
    %v7992 = vadd.f32 %v7033, %v7991
    %7993 = vmatprep.mubr.bf16.mxu0 %v6845
    %7994 = vmatmul.mubr.bf16.gmra.mxu0 %v6844
    %v7995 = vpop.f32.mrf.mxu0
    %v7996 = vadd.f32 %v7029, %v7995
    %v7997 = vpop.f32.mrf.mxu0
    %v7998 = vadd.f32 %v7033, %v7997
    %v7999 = vpop.f32.mrf.mxu0
    %v8000 = vadd.f32 %v7029, %v7999
    %v8001 = vpop.f32.mrf.mxu0
    %v8002 = vadd.f32 %v7033, %v8001
    %8003 = vmatprep.mubr.bf16.mxu0 %v6850
    %8004 = vmatmul.mubr.bf16.gmra.mxu0 %v6849
    %v8005 = vpop.f32.mrf.mxu0
    %v8006 = vadd.f32 %v7029, %v8005
    %v8007 = vpop.f32.mrf.mxu0
    %v8008 = vadd.f32 %v7033, %v8007
    %v8009 = vpop.f32.mrf.mxu0
    %v8010 = vadd.f32 %v7029, %v8009
    %v8011 = vpop.f32.mrf.mxu0
    %v8012 = vadd.f32 %v7033, %v8011
    %8013 = vmatprep.mubr.bf16.mxu0 %v6855
    %8014 = vmatmul.mubr.bf16.gmra.mxu0 %v6854
    %v8015 = vpop.f32.mrf.mxu0
    %v8016 = vadd.f32 %v7029, %v8015
    %v8017 = vpop.f32.mrf.mxu0
    %v8018 = vadd.f32 %v7033, %v8017
    %v8019 = vpop.f32.mrf.mxu0
    %v8020 = vadd.f32 %v7029, %v8019
    %v8021 = vpop.f32.mrf.mxu0
    %v8022 = vadd.f32 %v7033, %v8021
    %8023 = vmatprep.mubr.bf16.mxu0 %v6860
    %8024 = vmatmul.mubr.bf16.gmra.mxu0 %v6859
    %v8025 = vpop.f32.mrf.mxu0
    %v8026 = vadd.f32 %v7029, %v8025
    %v8027 = vpop.f32.mrf.mxu0
    %v8028 = vadd.f32 %v7033, %v8027
    %v8029 = vpop.f32.mrf.mxu0
    %v8030 = vadd.f32 %v7029, %v8029
    %v8031 = vpop.f32.mrf.mxu0
    %v8032 = vadd.f32 %v7033, %v8031
    %8033 = vdwg.mxu0
    %8034 = vmatprep.subr.bf16.mxu0 %v7511
    %8035 = vmatpush1.bf16.msra.mxu0 %v7510
    %8036 = vmatprep.subr.bf16.mxu0 %v7508
    %8037 = vmatpush1.bf16.msra.mxu0 %v7507
    %8038 = vmatprep.subr.bf16.mxu0 %v7505
    %8039 = vmatpush1.bf16.msra.mxu0 %v7504
    %8040 = vmatprep.subr.bf16.mxu0 %v7502
    %8041 = vmatpush1.bf16.msra.mxu0 %v7501
    %8042 = vmatprep.subr.bf16.mxu0 %v7499
    %8043 = vmatpush1.bf16.msra.mxu0 %v7498
    %8044 = vmatprep.subr.bf16.mxu0 %v7496
    %8045 = vmatpush1.bf16.msra.mxu0 %v7495
    %8046 = vmatprep.subr.bf16.mxu0 %v7493
    %8047 = vmatpush1.bf16.msra.mxu0 %v7492
    %8048 = vmatprep.subr.bf16.mxu0 %v7490
    %8049 = vmatpush1.bf16.msra.mxu0 %v7489
    %8050 = vmatprep.subr.bf16.mxu0 %v7535
    %8051 = vmatpush2.bf16.msra.mxu0 %v7534
    %8052 = vmatprep.subr.bf16.mxu0 %v7532
    %8053 = vmatpush2.bf16.msra.mxu0 %v7531
    %8054 = vmatprep.subr.bf16.mxu0 %v7529
    %8055 = vmatpush2.bf16.msra.mxu0 %v7528
    %8056 = vmatprep.subr.bf16.mxu0 %v7526
    %8057 = vmatpush2.bf16.msra.mxu0 %v7525
    %8058 = vmatprep.subr.bf16.mxu0 %v7523
    %8059 = vmatpush2.bf16.msra.mxu0 %v7522
    %8060 = vmatprep.subr.bf16.mxu0 %v7520
    %8061 = vmatpush2.bf16.msra.mxu0 %v7519
    %8062 = vmatprep.subr.bf16.mxu0 %v7517
    %8063 = vmatpush2.bf16.msra.mxu0 %v7516
    %8064 = vmatprep.subr.bf16.mxu0 %v7514
    %8065 = vmatpush2.bf16.msra.mxu0 %v7513
    %8066 = vmatprep.mubr.bf16.mxu0 %v6707
    %8067 = vmatmul.mubr.bf16.gmra.mxu0 %v6706
    %v8068 = vpop.f32.mrf.mxu0
    %v8069 = vadd.f32 %v7716, %v8068
    %v8070 = vpop.f32.mrf.mxu0
    %v8071 = vadd.f32 %v7718, %v8070
    %v8072 = vpop.f32.mrf.mxu0
    %v8073 = vadd.f32 %v7720, %v8072
    %v8074 = vpop.f32.mrf.mxu0
    %v8075 = vadd.f32 %v7722, %v8074
    %8076 = vmatprep.mubr.bf16.mxu0 %v6712
    %8077 = vmatmul.mubr.bf16.gmra.mxu0 %v6711
    %v8078 = vpop.f32.mrf.mxu0
    %v8079 = vadd.f32 %v7726, %v8078
    %v8080 = vpop.f32.mrf.mxu0
    %v8081 = vadd.f32 %v7728, %v8080
    %v8082 = vpop.f32.mrf.mxu0
    %v8083 = vadd.f32 %v7730, %v8082
    %v8084 = vpop.f32.mrf.mxu0
    %v8085 = vadd.f32 %v7732, %v8084
    %8086 = vmatprep.mubr.bf16.mxu0 %v6717
    %8087 = vmatmul.mubr.bf16.gmra.mxu0 %v6716
    %v8088 = vpop.f32.mrf.mxu0
    %v8089 = vadd.f32 %v7736, %v8088
    %v8090 = vpop.f32.mrf.mxu0
    %v8091 = vadd.f32 %v7738, %v8090
    %v8092 = vpop.f32.mrf.mxu0
    %v8093 = vadd.f32 %v7740, %v8092
    %v8094 = vpop.f32.mrf.mxu0
    %v8095 = vadd.f32 %v7742, %v8094
    %8096 = vmatprep.mubr.bf16.mxu0 %v6722
    %8097 = vmatmul.mubr.bf16.gmra.mxu0 %v6721
    %v8098 = vpop.f32.mrf.mxu0
    %v8099 = vadd.f32 %v7746, %v8098
    %v8100 = vpop.f32.mrf.mxu0
    %v8101 = vadd.f32 %v7748, %v8100
    %v8102 = vpop.f32.mrf.mxu0
    %v8103 = vadd.f32 %v7750, %v8102
    %v8104 = vpop.f32.mrf.mxu0
    %v8105 = vadd.f32 %v7752, %v8104
    %8106 = vmatprep.mubr.bf16.mxu0 %v6727
    %8107 = vmatmul.mubr.bf16.gmra.mxu0 %v6726
    %v8108 = vpop.f32.mrf.mxu0
    %v8109 = vadd.f32 %v7756, %v8108
    %v8110 = vpop.f32.mrf.mxu0
    %v8111 = vadd.f32 %v7758, %v8110
    %v8112 = vpop.f32.mrf.mxu0
    %v8113 = vadd.f32 %v7760, %v8112
    %v8114 = vpop.f32.mrf.mxu0
    %v8115 = vadd.f32 %v7762, %v8114
    %8116 = vmatprep.mubr.bf16.mxu0 %v6732
    %8117 = vmatmul.mubr.bf16.gmra.mxu0 %v6731
    %v8118 = vpop.f32.mrf.mxu0
    %v8119 = vadd.f32 %v7766, %v8118
    %v8120 = vpop.f32.mrf.mxu0
    %v8121 = vadd.f32 %v7768, %v8120
    %v8122 = vpop.f32.mrf.mxu0
    %v8123 = vadd.f32 %v7770, %v8122
    %v8124 = vpop.f32.mrf.mxu0
    %v8125 = vadd.f32 %v7772, %v8124
    %8126 = vmatprep.mubr.bf16.mxu0 %v6737
    %8127 = vmatmul.mubr.bf16.gmra.mxu0 %v6736
    %v8128 = vpop.f32.mrf.mxu0
    %v8129 = vadd.f32 %v7776, %v8128
    %v8130 = vpop.f32.mrf.mxu0
    %v8131 = vadd.f32 %v7778, %v8130
    %v8132 = vpop.f32.mrf.mxu0
    %v8133 = vadd.f32 %v7780, %v8132
    %v8134 = vpop.f32.mrf.mxu0
    %v8135 = vadd.f32 %v7782, %v8134
    %8136 = vmatprep.mubr.bf16.mxu0 %v6742
    %8137 = vmatmul.mubr.bf16.gmra.mxu0 %v6741
    %v8138 = vpop.f32.mrf.mxu0
    %v8139 = vadd.f32 %v7786, %v8138
    %v8140 = vpop.f32.mrf.mxu0
    %v8141 = vadd.f32 %v7788, %v8140
    %v8142 = vpop.f32.mrf.mxu0
    %v8143 = vadd.f32 %v7790, %v8142
    %v8144 = vpop.f32.mrf.mxu0
    %v8145 = vadd.f32 %v7792, %v8144
    %8146 = vmatprep.mubr.bf16.mxu0 %v6747
    %8147 = vmatmul.mubr.bf16.gmra.mxu0 %v6746
    %v8148 = vpop.f32.mrf.mxu0
    %v8149 = vadd.f32 %v7796, %v8148
    %v8150 = vpop.f32.mrf.mxu0
    %v8151 = vadd.f32 %v7798, %v8150
    %v8152 = vpop.f32.mrf.mxu0
    %v8153 = vadd.f32 %v7800, %v8152
    %v8154 = vpop.f32.mrf.mxu0
    %v8155 = vadd.f32 %v7802, %v8154
    %8156 = vmatprep.mubr.bf16.mxu0 %v6752
    %8157 = vmatmul.mubr.bf16.gmra.mxu0 %v6751
    %v8158 = vpop.f32.mrf.mxu0
    %v8159 = vadd.f32 %v7806, %v8158
    %v8160 = vpop.f32.mrf.mxu0
    %v8161 = vadd.f32 %v7808, %v8160
    %v8162 = vpop.f32.mrf.mxu0
    %v8163 = vadd.f32 %v7810, %v8162
    %v8164 = vpop.f32.mrf.mxu0
    %v8165 = vadd.f32 %v7812, %v8164
    %8166 = vmatprep.mubr.bf16.mxu0 %v6757
    %8167 = vmatmul.mubr.bf16.gmra.mxu0 %v6756
    %v8168 = vpop.f32.mrf.mxu0
    %v8169 = vadd.f32 %v7816, %v8168
    %v8170 = vpop.f32.mrf.mxu0
    %v8171 = vadd.f32 %v7818, %v8170
    %v8172 = vpop.f32.mrf.mxu0
    %v8173 = vadd.f32 %v7820, %v8172
    %v8174 = vpop.f32.mrf.mxu0
    %v8175 = vadd.f32 %v7822, %v8174
    %8176 = vmatprep.mubr.bf16.mxu0 %v6762
    %8177 = vmatmul.mubr.bf16.gmra.mxu0 %v6761
    %v8178 = vpop.f32.mrf.mxu0
    %v8179 = vadd.f32 %v7826, %v8178
    %v8180 = vpop.f32.mrf.mxu0
    %v8181 = vadd.f32 %v7828, %v8180
    %v8182 = vpop.f32.mrf.mxu0
    %v8183 = vadd.f32 %v7830, %v8182
    %v8184 = vpop.f32.mrf.mxu0
    %v8185 = vadd.f32 %v7832, %v8184
    %8186 = vmatprep.mubr.bf16.mxu0 %v6767
    %8187 = vmatmul.mubr.bf16.gmra.mxu0 %v6766
    %v8188 = vpop.f32.mrf.mxu0
    %v8189 = vadd.f32 %v7836, %v8188
    %v8190 = vpop.f32.mrf.mxu0
    %v8191 = vadd.f32 %v7838, %v8190
    %v8192 = vpop.f32.mrf.mxu0
    %v8193 = vadd.f32 %v7840, %v8192
    %v8194 = vpop.f32.mrf.mxu0
    %v8195 = vadd.f32 %v7842, %v8194
    %8196 = vmatprep.mubr.bf16.mxu0 %v6772
    %8197 = vmatmul.mubr.bf16.gmra.mxu0 %v6771
    %v8198 = vpop.f32.mrf.mxu0
    %v8199 = vadd.f32 %v7846, %v8198
    %v8200 = vpop.f32.mrf.mxu0
    %v8201 = vadd.f32 %v7848, %v8200
    %v8202 = vpop.f32.mrf.mxu0
    %v8203 = vadd.f32 %v7850, %v8202
    %v8204 = vpop.f32.mrf.mxu0
    %v8205 = vadd.f32 %v7852, %v8204
    %8206 = vmatprep.mubr.bf16.mxu0 %v6777
    %8207 = vmatmul.mubr.bf16.gmra.mxu0 %v6776
    %v8208 = vpop.f32.mrf.mxu0
    %v8209 = vadd.f32 %v7856, %v8208
    %v8210 = vpop.f32.mrf.mxu0
    %v8211 = vadd.f32 %v7858, %v8210
    %v8212 = vpop.f32.mrf.mxu0
    %v8213 = vadd.f32 %v7860, %v8212
    %v8214 = vpop.f32.mrf.mxu0
    %v8215 = vadd.f32 %v7862, %v8214
    %8216 = vmatprep.mubr.bf16.mxu0 %v6782
    %8217 = vmatmul.mubr.bf16.gmra.mxu0 %v6781
    %v8218 = vpop.f32.mrf.mxu0
    %v8219 = vadd.f32 %v7866, %v8218
    %v8220 = vpop.f32.mrf.mxu0
    %v8221 = vadd.f32 %v7868, %v8220
    %v8222 = vpop.f32.mrf.mxu0
    %v8223 = vadd.f32 %v7870, %v8222
    %v8224 = vpop.f32.mrf.mxu0
    %v8225 = vadd.f32 %v7872, %v8224
    %8226 = vmatprep.mubr.bf16.mxu0 %v6787
    %8227 = vmatmul.mubr.bf16.gmra.mxu0 %v6786
    %v8228 = vpop.f32.mrf.mxu0
    %v8229 = vadd.f32 %v7876, %v8228
    %v8230 = vpop.f32.mrf.mxu0
    %v8231 = vadd.f32 %v7878, %v8230
    %v8232 = vpop.f32.mrf.mxu0
    %v8233 = vadd.f32 %v7880, %v8232
    %v8234 = vpop.f32.mrf.mxu0
    %v8235 = vadd.f32 %v7882, %v8234
    %8236 = vmatprep.mubr.bf16.mxu0 %v6792
    %8237 = vmatmul.mubr.bf16.gmra.mxu0 %v6791
    %v8238 = vpop.f32.mrf.mxu0
    %v8239 = vadd.f32 %v7886, %v8238
    %v8240 = vpop.f32.mrf.mxu0
    %v8241 = vadd.f32 %v7888, %v8240
    %v8242 = vpop.f32.mrf.mxu0
    %v8243 = vadd.f32 %v7890, %v8242
    %v8244 = vpop.f32.mrf.mxu0
    %v8245 = vadd.f32 %v7892, %v8244
    %8246 = vmatprep.mubr.bf16.mxu0 %v6797
    %8247 = vmatmul.mubr.bf16.gmra.mxu0 %v6796
    %v8248 = vpop.f32.mrf.mxu0
    %v8249 = vadd.f32 %v7896, %v8248
    %v8250 = vpop.f32.mrf.mxu0
    %v8251 = vadd.f32 %v7898, %v8250
    %v8252 = vpop.f32.mrf.mxu0
    %v8253 = vadd.f32 %v7900, %v8252
    %v8254 = vpop.f32.mrf.mxu0
    %v8255 = vadd.f32 %v7902, %v8254
    %8256 = vmatprep.mubr.bf16.mxu0 %v6802
    %8257 = vmatmul.mubr.bf16.gmra.mxu0 %v6801
    %v8258 = vpop.f32.mrf.mxu0
    %v8259 = vadd.f32 %v7906, %v8258
    %v8260 = vpop.f32.mrf.mxu0
    %v8261 = vadd.f32 %v7908, %v8260
    %v8262 = vpop.f32.mrf.mxu0
    %v8263 = vadd.f32 %v7910, %v8262
    %v8264 = vpop.f32.mrf.mxu0
    %v8265 = vadd.f32 %v7912, %v8264
    %8266 = vmatprep.mubr.bf16.mxu0 %v6807
    %8267 = vmatmul.mubr.bf16.gmra.mxu0 %v6806
    %v8268 = vpop.f32.mrf.mxu0
    %v8269 = vadd.f32 %v7916, %v8268
    %v8270 = vpop.f32.mrf.mxu0
    %v8271 = vadd.f32 %v7918, %v8270
    %v8272 = vpop.f32.mrf.mxu0
    %v8273 = vadd.f32 %v7920, %v8272
    %v8274 = vpop.f32.mrf.mxu0
    %v8275 = vadd.f32 %v7922, %v8274
    %8276 = vmatprep.mubr.bf16.mxu0 %v6812
    %8277 = vmatmul.mubr.bf16.gmra.mxu0 %v6811
    %v8278 = vpop.f32.mrf.mxu0
    %v8279 = vadd.f32 %v7926, %v8278
    %v8280 = vpop.f32.mrf.mxu0
    %v8281 = vadd.f32 %v7928, %v8280
    %v8282 = vpop.f32.mrf.mxu0
    %v8283 = vadd.f32 %v7930, %v8282
    %v8284 = vpop.f32.mrf.mxu0
    %v8285 = vadd.f32 %v7932, %v8284
    %8286 = vmatprep.mubr.bf16.mxu0 %v6817
    %8287 = vmatmul.mubr.bf16.gmra.mxu0 %v6816
    %v8288 = vpop.f32.mrf.mxu0
    %v8289 = vadd.f32 %v7936, %v8288
    %v8290 = vpop.f32.mrf.mxu0
    %v8291 = vadd.f32 %v7938, %v8290
    %v8292 = vpop.f32.mrf.mxu0
    %v8293 = vadd.f32 %v7940, %v8292
    %v8294 = vpop.f32.mrf.mxu0
    %v8295 = vadd.f32 %v7942, %v8294
    %8296 = vmatprep.mubr.bf16.mxu0 %v6822
    %8297 = vmatmul.mubr.bf16.gmra.mxu0 %v6821
    %v8298 = vpop.f32.mrf.mxu0
    %v8299 = vadd.f32 %v7946, %v8298
    %v8300 = vpop.f32.mrf.mxu0
    %v8301 = vadd.f32 %v7948, %v8300
    %v8302 = vpop.f32.mrf.mxu0
    %v8303 = vadd.f32 %v7950, %v8302
    %v8304 = vpop.f32.mrf.mxu0
    %v8305 = vadd.f32 %v7952, %v8304
    %8306 = vmatprep.mubr.bf16.mxu0 %v6827
    %8307 = vmatmul.mubr.bf16.gmra.mxu0 %v6826
    %v8308 = vpop.f32.mrf.mxu0
    %v8309 = vadd.f32 %v7956, %v8308
    %v8310 = vpop.f32.mrf.mxu0
    %v8311 = vadd.f32 %v7958, %v8310
    %v8312 = vpop.f32.mrf.mxu0
    %v8313 = vadd.f32 %v7960, %v8312
    %v8314 = vpop.f32.mrf.mxu0
    %v8315 = vadd.f32 %v7962, %v8314
    %8316 = vmatprep.mubr.bf16.mxu0 %v6832
    %8317 = vmatmul.mubr.bf16.gmra.mxu0 %v6831
    %v8318 = vpop.f32.mrf.mxu0
    %v8319 = vadd.f32 %v7966, %v8318
    %v8320 = vpop.f32.mrf.mxu0
    %v8321 = vadd.f32 %v7968, %v8320
    %v8322 = vpop.f32.mrf.mxu0
    %v8323 = vadd.f32 %v7970, %v8322
    %v8324 = vpop.f32.mrf.mxu0
    %v8325 = vadd.f32 %v7972, %v8324
    %8326 = vmatprep.mubr.bf16.mxu0 %v6837
    %8327 = vmatmul.mubr.bf16.gmra.mxu0 %v6836
    %v8328 = vpop.f32.mrf.mxu0
    %v8329 = vadd.f32 %v7976, %v8328
    %v8330 = vpop.f32.mrf.mxu0
    %v8331 = vadd.f32 %v7978, %v8330
    %v8332 = vpop.f32.mrf.mxu0
    %v8333 = vadd.f32 %v7980, %v8332
    %v8334 = vpop.f32.mrf.mxu0
    %v8335 = vadd.f32 %v7982, %v8334
    %8336 = vmatprep.mubr.bf16.mxu0 %v6842
    %8337 = vmatmul.mubr.bf16.gmra.mxu0 %v6841
    %v8338 = vpop.f32.mrf.mxu0
    %v8339 = vadd.f32 %v7986, %v8338
    %v8340 = vpop.f32.mrf.mxu0
    %v8341 = vadd.f32 %v7988, %v8340
    %v8342 = vpop.f32.mrf.mxu0
    %v8343 = vadd.f32 %v7990, %v8342
    %v8344 = vpop.f32.mrf.mxu0
    %v8345 = vadd.f32 %v7992, %v8344
    %8346 = vmatprep.mubr.bf16.mxu0 %v6847
    %8347 = vmatmul.mubr.bf16.gmra.mxu0 %v6846
    %v8348 = vpop.f32.mrf.mxu0
    %v8349 = vadd.f32 %v7996, %v8348
    %v8350 = vpop.f32.mrf.mxu0
    %v8351 = vadd.f32 %v7998, %v8350
    %v8352 = vpop.f32.mrf.mxu0
    %v8353 = vadd.f32 %v8000, %v8352
    %v8354 = vpop.f32.mrf.mxu0
    %v8355 = vadd.f32 %v8002, %v8354
    %8356 = vmatprep.mubr.bf16.mxu0 %v6852
    %8357 = vmatmul.mubr.bf16.gmra.mxu0 %v6851
    %v8358 = vpop.f32.mrf.mxu0
    %v8359 = vadd.f32 %v8006, %v8358
    %v8360 = vpop.f32.mrf.mxu0
    %v8361 = vadd.f32 %v8008, %v8360
    %v8362 = vpop.f32.mrf.mxu0
    %v8363 = vadd.f32 %v8010, %v8362
    %v8364 = vpop.f32.mrf.mxu0
    %v8365 = vadd.f32 %v8012, %v8364
    %8366 = vmatprep.mubr.bf16.mxu0 %v6857
    %8367 = vmatmul.mubr.bf16.gmra.mxu0 %v6856
    %v8368 = vpop.f32.mrf.mxu0
    %v8369 = vadd.f32 %v8016, %v8368
    %v8370 = vpop.f32.mrf.mxu0
    %v8371 = vadd.f32 %v8018, %v8370
    %v8372 = vpop.f32.mrf.mxu0
    %v8373 = vadd.f32 %v8020, %v8372
    %v8374 = vpop.f32.mrf.mxu0
    %v8375 = vadd.f32 %v8022, %v8374
    %8376 = vmatprep.mubr.bf16.mxu0 %v6862
    %8377 = vmatmul.mubr.bf16.gmra.mxu0 %v6861
    %v8378 = vpop.f32.mrf.mxu0
    %v8379 = vadd.f32 %v8026, %v8378
    %v8380 = vpop.f32.mrf.mxu0
    %v8381 = vadd.f32 %v8028, %v8380
    %v8382 = vpop.f32.mrf.mxu0
    %v8383 = vadd.f32 %v8030, %v8382
    %v8384 = vpop.f32.mrf.mxu0
    %v8385 = vadd.f32 %v8032, %v8384
    %8386 = vdwg.mxu0
    %8387 = vmatprep.subr.bf16.mxu0 %v7559
    %8388 = vmatpush1.bf16.msra.mxu0 %v7558
    %8389 = vmatprep.subr.bf16.mxu0 %v7556
    %8390 = vmatpush1.bf16.msra.mxu0 %v7555
    %8391 = vmatprep.subr.bf16.mxu0 %v7553
    %8392 = vmatpush1.bf16.msra.mxu0 %v7552
    %8393 = vmatprep.subr.bf16.mxu0 %v7550
    %8394 = vmatpush1.bf16.msra.mxu0 %v7549
    %8395 = vmatprep.subr.bf16.mxu0 %v7547
    %8396 = vmatpush1.bf16.msra.mxu0 %v7546
    %8397 = vmatprep.subr.bf16.mxu0 %v7544
    %8398 = vmatpush1.bf16.msra.mxu0 %v7543
    %8399 = vmatprep.subr.bf16.mxu0 %v7541
    %8400 = vmatpush1.bf16.msra.mxu0 %v7540
    %8401 = vmatprep.subr.bf16.mxu0 %v7538
    %8402 = vmatpush1.bf16.msra.mxu0 %v7537
    %8403 = vmatprep.subr.bf16.mxu0 0
    %8404 = vmatpush2.bf16.msra.mxu0 0
    %8405 = vmatprep.subr.bf16.mxu0 0
    %8406 = vmatpush2.bf16.msra.mxu0 0
    %8407 = vmatprep.subr.bf16.mxu0 0
    %8408 = vmatpush2.bf16.msra.mxu0 0
    %8409 = vmatprep.subr.bf16.mxu0 0
    %8410 = vmatpush2.bf16.msra.mxu0 0
    %8411 = vmatprep.subr.bf16.mxu0 0
    %8412 = vmatpush2.bf16.msra.mxu0 0
    %8413 = vmatprep.subr.bf16.mxu0 0
    %8414 = vmatpush2.bf16.msra.mxu0 0
    %8415 = vmatprep.subr.bf16.mxu0 0
    %8416 = vmatpush2.bf16.msra.mxu0 0
    %8417 = vmatprep.subr.bf16.mxu0 0
    %8418 = vmatpush2.bf16.msra.mxu0 0
    %8419 = vmatprep.mubr.bf16.mxu0 0
    %8420 = vmatmul.mubr.bf16.gmra.mxu0 %v6708
    %v8421 = vpop.f32.mrf.mxu0
    %v8422 = vadd.f32 %v8069, %v8421
    %v8423 = vpop.f32.mrf.mxu0
    %v8424 = vadd.f32 %v8071, %v8423
    %v8425 = vpop.f32.mrf.mxu0
    %v8426 = vadd.f32 %v8073, %v8425
    %v8427 = vpop.f32.mrf.mxu0
    %v8428 = vadd.f32 %v8075, %v8427
    %8429 = vmatprep.mubr.bf16.mxu0 0
    %8430 = vmatmul.mubr.bf16.gmra.mxu0 %v6713
    %v8431 = vpop.f32.mrf.mxu0
    %v8432 = vadd.f32 %v8079, %v8431
    %v8433 = vpop.f32.mrf.mxu0
    %v8434 = vadd.f32 %v8081, %v8433
    %v8435 = vpop.f32.mrf.mxu0
    %v8436 = vadd.f32 %v8083, %v8435
    %v8437 = vpop.f32.mrf.mxu0
    %v8438 = vadd.f32 %v8085, %v8437
    %8439 = vmatprep.mubr.bf16.mxu0 0
    %8440 = vmatmul.mubr.bf16.gmra.mxu0 %v6718
    %v8441 = vpop.f32.mrf.mxu0
    %v8442 = vadd.f32 %v8089, %v8441
    %v8443 = vpop.f32.mrf.mxu0
    %v8444 = vadd.f32 %v8091, %v8443
    %v8445 = vpop.f32.mrf.mxu0
    %v8446 = vadd.f32 %v8093, %v8445
    %v8447 = vpop.f32.mrf.mxu0
    %v8448 = vadd.f32 %v8095, %v8447
    %8449 = vmatprep.mubr.bf16.mxu0 0
    %8450 = vmatmul.mubr.bf16.gmra.mxu0 %v6723
    %v8451 = vpop.f32.mrf.mxu0
    %v8452 = vadd.f32 %v8099, %v8451
    %v8453 = vpop.f32.mrf.mxu0
    %v8454 = vadd.f32 %v8101, %v8453
    %v8455 = vpop.f32.mrf.mxu0
    %v8456 = vadd.f32 %v8103, %v8455
    %v8457 = vpop.f32.mrf.mxu0
    %v8458 = vadd.f32 %v8105, %v8457
    %8459 = vmatprep.mubr.bf16.mxu0 0
    %8460 = vmatmul.mubr.bf16.gmra.mxu0 %v6728
    %v8461 = vpop.f32.mrf.mxu0
    %v8462 = vadd.f32 %v8109, %v8461
    %v8463 = vpop.f32.mrf.mxu0
    %v8464 = vadd.f32 %v8111, %v8463
    %v8465 = vpop.f32.mrf.mxu0
    %v8466 = vadd.f32 %v8113, %v8465
    %v8467 = vpop.f32.mrf.mxu0
    %v8468 = vadd.f32 %v8115, %v8467
    %8469 = vmatprep.mubr.bf16.mxu0 0
    %8470 = vmatmul.mubr.bf16.gmra.mxu0 %v6733
    %v8471 = vpop.f32.mrf.mxu0
    %v8472 = vadd.f32 %v8119, %v8471
    %v8473 = vpop.f32.mrf.mxu0
    %v8474 = vadd.f32 %v8121, %v8473
    %v8475 = vpop.f32.mrf.mxu0
    %v8476 = vadd.f32 %v8123, %v8475
    %v8477 = vpop.f32.mrf.mxu0
    %v8478 = vadd.f32 %v8125, %v8477
    %8479 = vmatprep.mubr.bf16.mxu0 0
    %8480 = vmatmul.mubr.bf16.gmra.mxu0 %v6738
    %v8481 = vpop.f32.mrf.mxu0
    %v8482 = vadd.f32 %v8129, %v8481
    %v8483 = vpop.f32.mrf.mxu0
    %v8484 = vadd.f32 %v8131, %v8483
    %v8485 = vpop.f32.mrf.mxu0
    %v8486 = vadd.f32 %v8133, %v8485
    %v8487 = vpop.f32.mrf.mxu0
    %v8488 = vadd.f32 %v8135, %v8487
    %8489 = vmatprep.mubr.bf16.mxu0 0
    %8490 = vmatmul.mubr.bf16.gmra.mxu0 %v6743
    %v8491 = vpop.f32.mrf.mxu0
    %v8492 = vadd.f32 %v8139, %v8491
    %v8493 = vpop.f32.mrf.mxu0
    %v8494 = vadd.f32 %v8141, %v8493
    %v8495 = vpop.f32.mrf.mxu0
    %v8496 = vadd.f32 %v8143, %v8495
    %v8497 = vpop.f32.mrf.mxu0
    %v8498 = vadd.f32 %v8145, %v8497
    %8499 = vmatprep.mubr.bf16.mxu0 0
    %8500 = vmatmul.mubr.bf16.gmra.mxu0 %v6748
    %v8501 = vpop.f32.mrf.mxu0
    %v8502 = vadd.f32 %v8149, %v8501
    %v8503 = vpop.f32.mrf.mxu0
    %v8504 = vadd.f32 %v8151, %v8503
    %v8505 = vpop.f32.mrf.mxu0
    %v8506 = vadd.f32 %v8153, %v8505
    %v8507 = vpop.f32.mrf.mxu0
    %v8508 = vadd.f32 %v8155, %v8507
    %8509 = vmatprep.mubr.bf16.mxu0 0
    %8510 = vmatmul.mubr.bf16.gmra.mxu0 %v6753
    %v8511 = vpop.f32.mrf.mxu0
    %v8512 = vadd.f32 %v8159, %v8511
    %v8513 = vpop.f32.mrf.mxu0
    %v8514 = vadd.f32 %v8161, %v8513
    %v8515 = vpop.f32.mrf.mxu0
    %v8516 = vadd.f32 %v8163, %v8515
    %v8517 = vpop.f32.mrf.mxu0
    %v8518 = vadd.f32 %v8165, %v8517
    %8519 = vmatprep.mubr.bf16.mxu0 0
    %8520 = vmatmul.mubr.bf16.gmra.mxu0 %v6758
    %v8521 = vpop.f32.mrf.mxu0
    %v8522 = vadd.f32 %v8169, %v8521
    %v8523 = vpop.f32.mrf.mxu0
    %v8524 = vadd.f32 %v8171, %v8523
    %v8525 = vpop.f32.mrf.mxu0
    %v8526 = vadd.f32 %v8173, %v8525
    %v8527 = vpop.f32.mrf.mxu0
    %v8528 = vadd.f32 %v8175, %v8527
    %8529 = vmatprep.mubr.bf16.mxu0 0
    %8530 = vmatmul.mubr.bf16.gmra.mxu0 %v6763
    %v8531 = vpop.f32.mrf.mxu0
    %v8532 = vadd.f32 %v8179, %v8531
    %v8533 = vpop.f32.mrf.mxu0
    %v8534 = vadd.f32 %v8181, %v8533
    %v8535 = vpop.f32.mrf.mxu0
    %v8536 = vadd.f32 %v8183, %v8535
    %v8537 = vpop.f32.mrf.mxu0
    %v8538 = vadd.f32 %v8185, %v8537
    %8539 = vmatprep.mubr.bf16.mxu0 0
    %8540 = vmatmul.mubr.bf16.gmra.mxu0 %v6768
    %v8541 = vpop.f32.mrf.mxu0
    %v8542 = vadd.f32 %v8189, %v8541
    %v8543 = vpop.f32.mrf.mxu0
    %v8544 = vadd.f32 %v8191, %v8543
    %v8545 = vpop.f32.mrf.mxu0
    %v8546 = vadd.f32 %v8193, %v8545
    %v8547 = vpop.f32.mrf.mxu0
    %v8548 = vadd.f32 %v8195, %v8547
    %8549 = vmatprep.mubr.bf16.mxu0 0
    %8550 = vmatmul.mubr.bf16.gmra.mxu0 %v6773
    %v8551 = vpop.f32.mrf.mxu0
    %v8552 = vadd.f32 %v8199, %v8551
    %v8553 = vpop.f32.mrf.mxu0
    %v8554 = vadd.f32 %v8201, %v8553
    %v8555 = vpop.f32.mrf.mxu0
    %v8556 = vadd.f32 %v8203, %v8555
    %v8557 = vpop.f32.mrf.mxu0
    %v8558 = vadd.f32 %v8205, %v8557
    %8559 = vmatprep.mubr.bf16.mxu0 0
    %8560 = vmatmul.mubr.bf16.gmra.mxu0 %v6778
    %v8561 = vpop.f32.mrf.mxu0
    %v8562 = vadd.f32 %v8209, %v8561
    %v8563 = vpop.f32.mrf.mxu0
    %v8564 = vadd.f32 %v8211, %v8563
    %v8565 = vpop.f32.mrf.mxu0
    %v8566 = vadd.f32 %v8213, %v8565
    %v8567 = vpop.f32.mrf.mxu0
    %v8568 = vadd.f32 %v8215, %v8567
    %8569 = vmatprep.mubr.bf16.mxu0 0
    %8570 = vmatmul.mubr.bf16.gmra.mxu0 %v6783
    %v8571 = vpop.f32.mrf.mxu0
    %v8572 = vadd.f32 %v8219, %v8571
    %v8573 = vpop.f32.mrf.mxu0
    %v8574 = vadd.f32 %v8221, %v8573
    %v8575 = vpop.f32.mrf.mxu0
    %v8576 = vadd.f32 %v8223, %v8575
    %v8577 = vpop.f32.mrf.mxu0
    %v8578 = vadd.f32 %v8225, %v8577
    %8579 = vmatprep.mubr.bf16.mxu0 0
    %8580 = vmatmul.mubr.bf16.gmra.mxu0 %v6788
    %v8581 = vpop.f32.mrf.mxu0
    %v8582 = vadd.f32 %v8229, %v8581
    %v8583 = vpop.f32.mrf.mxu0
    %v8584 = vadd.f32 %v8231, %v8583
    %v8585 = vpop.f32.mrf.mxu0
    %v8586 = vadd.f32 %v8233, %v8585
    %v8587 = vpop.f32.mrf.mxu0
    %v8588 = vadd.f32 %v8235, %v8587
    %8589 = vmatprep.mubr.bf16.mxu0 0
    %8590 = vmatmul.mubr.bf16.gmra.mxu0 %v6793
    %v8591 = vpop.f32.mrf.mxu0
    %v8592 = vadd.f32 %v8239, %v8591
    %v8593 = vpop.f32.mrf.mxu0
    %v8594 = vadd.f32 %v8241, %v8593
    %v8595 = vpop.f32.mrf.mxu0
    %v8596 = vadd.f32 %v8243, %v8595
    %v8597 = vpop.f32.mrf.mxu0
    %v8598 = vadd.f32 %v8245, %v8597
    %8599 = vmatprep.mubr.bf16.mxu0 0
    %8600 = vmatmul.mubr.bf16.gmra.mxu0 %v6798
    %v8601 = vpop.f32.mrf.mxu0
    %v8602 = vadd.f32 %v8249, %v8601
    %v8603 = vpop.f32.mrf.mxu0
    %v8604 = vadd.f32 %v8251, %v8603
    %v8605 = vpop.f32.mrf.mxu0
    %v8606 = vadd.f32 %v8253, %v8605
    %v8607 = vpop.f32.mrf.mxu0
    %v8608 = vadd.f32 %v8255, %v8607
    %8609 = vmatprep.mubr.bf16.mxu0 0
    %8610 = vmatmul.mubr.bf16.gmra.mxu0 %v6803
    %v8611 = vpop.f32.mrf.mxu0
    %v8612 = vadd.f32 %v8259, %v8611
    %v8613 = vpop.f32.mrf.mxu0
    %v8614 = vadd.f32 %v8261, %v8613
    %v8615 = vpop.f32.mrf.mxu0
    %v8616 = vadd.f32 %v8263, %v8615
    %v8617 = vpop.f32.mrf.mxu0
    %v8618 = vadd.f32 %v8265, %v8617
    %8619 = vmatprep.mubr.bf16.mxu0 0
    %8620 = vmatmul.mubr.bf16.gmra.mxu0 %v6808
    %v8621 = vpop.f32.mrf.mxu0
    %v8622 = vadd.f32 %v8269, %v8621
    %v8623 = vpop.f32.mrf.mxu0
    %v8624 = vadd.f32 %v8271, %v8623
    %v8625 = vpop.f32.mrf.mxu0
    %v8626 = vadd.f32 %v8273, %v8625
    %v8627 = vpop.f32.mrf.mxu0
    %v8628 = vadd.f32 %v8275, %v8627
    %8629 = vmatprep.mubr.bf16.mxu0 0
    %8630 = vmatmul.mubr.bf16.gmra.mxu0 %v6813
    %v8631 = vpop.f32.mrf.mxu0
    %v8632 = vadd.f32 %v8279, %v8631
    %v8633 = vpop.f32.mrf.mxu0
    %v8634 = vadd.f32 %v8281, %v8633
    %v8635 = vpop.f32.mrf.mxu0
    %v8636 = vadd.f32 %v8283, %v8635
    %v8637 = vpop.f32.mrf.mxu0
    %v8638 = vadd.f32 %v8285, %v8637
    %8639 = vmatprep.mubr.bf16.mxu0 0
    %8640 = vmatmul.mubr.bf16.gmra.mxu0 %v6818
    %v8641 = vpop.f32.mrf.mxu0
    %v8642 = vadd.f32 %v8289, %v8641
    %v8643 = vpop.f32.mrf.mxu0
    %v8644 = vadd.f32 %v8291, %v8643
    %v8645 = vpop.f32.mrf.mxu0
    %v8646 = vadd.f32 %v8293, %v8645
    %v8647 = vpop.f32.mrf.mxu0
    %v8648 = vadd.f32 %v8295, %v8647
    %8649 = vmatprep.mubr.bf16.mxu0 0
    %8650 = vmatmul.mubr.bf16.gmra.mxu0 %v6823
    %v8651 = vpop.f32.mrf.mxu0
    %v8652 = vadd.f32 %v8299, %v8651
    %v8653 = vpop.f32.mrf.mxu0
    %v8654 = vadd.f32 %v8301, %v8653
    %v8655 = vpop.f32.mrf.mxu0
    %v8656 = vadd.f32 %v8303, %v8655
    %v8657 = vpop.f32.mrf.mxu0
    %v8658 = vadd.f32 %v8305, %v8657
    %8659 = vmatprep.mubr.bf16.mxu0 0
    %8660 = vmatmul.mubr.bf16.gmra.mxu0 %v6828
    %v8661 = vpop.f32.mrf.mxu0
    %v8662 = vadd.f32 %v8309, %v8661
    %v8663 = vpop.f32.mrf.mxu0
    %v8664 = vadd.f32 %v8311, %v8663
    %v8665 = vpop.f32.mrf.mxu0
    %v8666 = vadd.f32 %v8313, %v8665
    %v8667 = vpop.f32.mrf.mxu0
    %v8668 = vadd.f32 %v8315, %v8667
    %8669 = vmatprep.mubr.bf16.mxu0 0
    %8670 = vmatmul.mubr.bf16.gmra.mxu0 %v6833
    %v8671 = vpop.f32.mrf.mxu0
    %v8672 = vadd.f32 %v8319, %v8671
    %v8673 = vpop.f32.mrf.mxu0
    %v8674 = vadd.f32 %v8321, %v8673
    %v8675 = vpop.f32.mrf.mxu0
    %v8676 = vadd.f32 %v8323, %v8675
    %v8677 = vpop.f32.mrf.mxu0
    %v8678 = vadd.f32 %v8325, %v8677
    %8679 = vmatprep.mubr.bf16.mxu0 0
    %8680 = vmatmul.mubr.bf16.gmra.mxu0 %v6838
    %v8681 = vpop.f32.mrf.mxu0
    %v8682 = vadd.f32 %v8329, %v8681
    %v8683 = vpop.f32.mrf.mxu0
    %v8684 = vadd.f32 %v8331, %v8683
    %v8685 = vpop.f32.mrf.mxu0
    %v8686 = vadd.f32 %v8333, %v8685
    %v8687 = vpop.f32.mrf.mxu0
    %v8688 = vadd.f32 %v8335, %v8687
    %8689 = vmatprep.mubr.bf16.mxu0 0
    %8690 = vmatmul.mubr.bf16.gmra.mxu0 %v6843
    %v8691 = vpop.f32.mrf.mxu0
    %v8692 = vadd.f32 %v8339, %v8691
    %v8693 = vpop.f32.mrf.mxu0
    %v8694 = vadd.f32 %v8341, %v8693
    %v8695 = vpop.f32.mrf.mxu0
    %v8696 = vadd.f32 %v8343, %v8695
    %v8697 = vpop.f32.mrf.mxu0
    %v8698 = vadd.f32 %v8345, %v8697
    %8699 = vmatprep.mubr.bf16.mxu0 0
    %8700 = vmatmul.mubr.bf16.gmra.mxu0 %v6848
    %v8701 = vpop.f32.mrf.mxu0
    %v8702 = vadd.f32 %v8349, %v8701
    %v8703 = vpop.f32.mrf.mxu0
    %v8704 = vadd.f32 %v8351, %v8703
    %v8705 = vpop.f32.mrf.mxu0
    %v8706 = vadd.f32 %v8353, %v8705
    %v8707 = vpop.f32.mrf.mxu0
    %v8708 = vadd.f32 %v8355, %v8707
    %8709 = vmatprep.mubr.bf16.mxu0 0
    %8710 = vmatmul.mubr.bf16.gmra.mxu0 %v6853
    %v8711 = vpop.f32.mrf.mxu0
    %v8712 = vadd.f32 %v8359, %v8711
    %v8713 = vpop.f32.mrf.mxu0
    %v8714 = vadd.f32 %v8361, %v8713
    %v8715 = vpop.f32.mrf.mxu0
    %v8716 = vadd.f32 %v8363, %v8715
    %v8717 = vpop.f32.mrf.mxu0
    %v8718 = vadd.f32 %v8365, %v8717
    %8719 = vmatprep.mubr.bf16.mxu0 0
    %8720 = vmatmul.mubr.bf16.gmra.mxu0 %v6858
    %v8721 = vpop.f32.mrf.mxu0
    %v8722 = vadd.f32 %v8369, %v8721
    %v8723 = vpop.f32.mrf.mxu0
    %v8724 = vadd.f32 %v8371, %v8723
    %v8725 = vpop.f32.mrf.mxu0
    %v8726 = vadd.f32 %v8373, %v8725
    %v8727 = vpop.f32.mrf.mxu0
    %v8728 = vadd.f32 %v8375, %v8727
    %8729 = vmatprep.mubr.bf16.mxu0 0
    %8730 = vmatmul.mubr.bf16.gmra.mxu0 %v6863
    %v8731 = vpop.f32.mrf.mxu0
    %v8732 = vadd.f32 %v8379, %v8731
    %v8733 = vpop.f32.mrf.mxu0
    %v8734 = vadd.f32 %v8381, %v8733
    %v8735 = vpop.f32.mrf.mxu0
    %v8736 = vadd.f32 %v8383, %v8735
    %v8737 = vpop.f32.mrf.mxu0
    %v8738 = vadd.f32 %v8385, %v8737
    %8739 = vdwg.mxu0
    %8740 = vmatprep.subr.bf16.mxu0 0
    %8741 = vmatpush1.bf16.msra.mxu0 %v7464
    %8742 = vmatprep.subr.bf16.mxu0 0
    %8743 = vmatpush1.bf16.msra.mxu0 %v7461
    %8744 = vmatprep.subr.bf16.mxu0 0
    %8745 = vmatpush1.bf16.msra.mxu0 %v7458
    %8746 = vmatprep.subr.bf16.mxu0 0
    %8747 = vmatpush1.bf16.msra.mxu0 %v7455
    %8748 = vmatprep.subr.bf16.mxu0 0
    %8749 = vmatpush1.bf16.msra.mxu0 %v7452
    %8750 = vmatprep.subr.bf16.mxu0 0
    %8751 = vmatpush1.bf16.msra.mxu0 %v7449
    %8752 = vmatprep.subr.bf16.mxu0 0
    %8753 = vmatpush1.bf16.msra.mxu0 %v7446
    %8754 = vmatprep.subr.bf16.mxu0 0
    %8755 = vmatpush1.bf16.msra.mxu0 %v7443
    %8756 = vmatprep.subr.bf16.mxu0 0
    %8757 = vmatpush2.bf16.msra.mxu0 %v7488
    %8758 = vmatprep.subr.bf16.mxu0 0
    %8759 = vmatpush2.bf16.msra.mxu0 %v7485
    %8760 = vmatprep.subr.bf16.mxu0 0
    %8761 = vmatpush2.bf16.msra.mxu0 %v7482
    %8762 = vmatprep.subr.bf16.mxu0 0
    %8763 = vmatpush2.bf16.msra.mxu0 %v7479
    %8764 = vmatprep.subr.bf16.mxu0 0
    %8765 = vmatpush2.bf16.msra.mxu0 %v7476
    %8766 = vmatprep.subr.bf16.mxu0 0
    %8767 = vmatpush2.bf16.msra.mxu0 %v7473
    %8768 = vmatprep.subr.bf16.mxu0 0
    %8769 = vmatpush2.bf16.msra.mxu0 %v7470
    %8770 = vmatprep.subr.bf16.mxu0 0
    %8771 = vmatpush2.bf16.msra.mxu0 %v7467
    %8772 = vmatprep.mubr.bf16.mxu0 %v6705
    %8773 = vmatmul.mubr.bf16.gmra.mxu0 %v6704
    %v8774 = vpop.f32.mrf.mxu0
    %v8775 = vadd.f32 %v7037, %v8774
    %v8776 = vpop.f32.mrf.mxu0
    %v8777 = vpop.f32.mrf.mxu0
    %v8778 = vadd.f32 %v7037, %v8777
    %v8779 = vpop.f32.mrf.mxu0
    %8780 = vmatprep.mubr.bf16.mxu0 %v6710
    %8781 = vmatmul.mubr.bf16.gmra.mxu0 %v6709
    %v8782 = vpop.f32.mrf.mxu0
    %v8783 = vadd.f32 %v7037, %v8782
    %v8784 = vpop.f32.mrf.mxu0
    %v8785 = vpop.f32.mrf.mxu0
    %v8786 = vadd.f32 %v7037, %v8785
    %v8787 = vpop.f32.mrf.mxu0
    %8788 = vmatprep.mubr.bf16.mxu0 %v6715
    %8789 = vmatmul.mubr.bf16.gmra.mxu0 %v6714
    %v8790 = vpop.f32.mrf.mxu0
    %v8791 = vadd.f32 %v7037, %v8790
    %v8792 = vpop.f32.mrf.mxu0
    %v8793 = vpop.f32.mrf.mxu0
    %v8794 = vadd.f32 %v7037, %v8793
    %v8795 = vpop.f32.mrf.mxu0
    %8796 = vmatprep.mubr.bf16.mxu0 %v6720
    %8797 = vmatmul.mubr.bf16.gmra.mxu0 %v6719
    %v8798 = vpop.f32.mrf.mxu0
    %v8799 = vadd.f32 %v7037, %v8798
    %v8800 = vpop.f32.mrf.mxu0
    %v8801 = vpop.f32.mrf.mxu0
    %v8802 = vadd.f32 %v7037, %v8801
    %v8803 = vpop.f32.mrf.mxu0
    %8804 = vmatprep.mubr.bf16.mxu0 %v6725
    %8805 = vmatmul.mubr.bf16.gmra.mxu0 %v6724
    %v8806 = vpop.f32.mrf.mxu0
    %v8807 = vadd.f32 %v7037, %v8806
    %v8808 = vpop.f32.mrf.mxu0
    %v8809 = vpop.f32.mrf.mxu0
    %v8810 = vadd.f32 %v7037, %v8809
    %v8811 = vpop.f32.mrf.mxu0
    %8812 = vmatprep.mubr.bf16.mxu0 %v6730
    %8813 = vmatmul.mubr.bf16.gmra.mxu0 %v6729
    %v8814 = vpop.f32.mrf.mxu0
    %v8815 = vadd.f32 %v7037, %v8814
    %v8816 = vpop.f32.mrf.mxu0
    %v8817 = vpop.f32.mrf.mxu0
    %v8818 = vadd.f32 %v7037, %v8817
    %v8819 = vpop.f32.mrf.mxu0
    %8820 = vmatprep.mubr.bf16.mxu0 %v6735
    %8821 = vmatmul.mubr.bf16.gmra.mxu0 %v6734
    %v8822 = vpop.f32.mrf.mxu0
    %v8823 = vadd.f32 %v7037, %v8822
    %v8824 = vpop.f32.mrf.mxu0
    %v8825 = vpop.f32.mrf.mxu0
    %v8826 = vadd.f32 %v7037, %v8825
    %v8827 = vpop.f32.mrf.mxu0
    %8828 = vmatprep.mubr.bf16.mxu0 %v6740
    %8829 = vmatmul.mubr.bf16.gmra.mxu0 %v6739
    %v8830 = vpop.f32.mrf.mxu0
    %v8831 = vadd.f32 %v7037, %v8830
    %v8832 = vpop.f32.mrf.mxu0
    %v8833 = vpop.f32.mrf.mxu0
    %v8834 = vadd.f32 %v7037, %v8833
    %v8835 = vpop.f32.mrf.mxu0
    %8836 = vmatprep.mubr.bf16.mxu0 %v6745
    %8837 = vmatmul.mubr.bf16.gmra.mxu0 %v6744
    %v8838 = vpop.f32.mrf.mxu0
    %v8839 = vadd.f32 %v7037, %v8838
    %v8840 = vpop.f32.mrf.mxu0
    %v8841 = vpop.f32.mrf.mxu0
    %v8842 = vadd.f32 %v7037, %v8841
    %v8843 = vpop.f32.mrf.mxu0
    %8844 = vmatprep.mubr.bf16.mxu0 %v6750
    %8845 = vmatmul.mubr.bf16.gmra.mxu0 %v6749
    %v8846 = vpop.f32.mrf.mxu0
    %v8847 = vadd.f32 %v7037, %v8846
    %v8848 = vpop.f32.mrf.mxu0
    %v8849 = vpop.f32.mrf.mxu0
    %v8850 = vadd.f32 %v7037, %v8849
    %v8851 = vpop.f32.mrf.mxu0
    %8852 = vmatprep.mubr.bf16.mxu0 %v6755
    %8853 = vmatmul.mubr.bf16.gmra.mxu0 %v6754
    %v8854 = vpop.f32.mrf.mxu0
    %v8855 = vadd.f32 %v7037, %v8854
    %v8856 = vpop.f32.mrf.mxu0
    %v8857 = vpop.f32.mrf.mxu0
    %v8858 = vadd.f32 %v7037, %v8857
    %v8859 = vpop.f32.mrf.mxu0
    %8860 = vmatprep.mubr.bf16.mxu0 %v6760
    %8861 = vmatmul.mubr.bf16.gmra.mxu0 %v6759
    %v8862 = vpop.f32.mrf.mxu0
    %v8863 = vadd.f32 %v7037, %v8862
    %v8864 = vpop.f32.mrf.mxu0
    %v8865 = vpop.f32.mrf.mxu0
    %v8866 = vadd.f32 %v7037, %v8865
    %v8867 = vpop.f32.mrf.mxu0
    %8868 = vmatprep.mubr.bf16.mxu0 %v6765
    %8869 = vmatmul.mubr.bf16.gmra.mxu0 %v6764
    %v8870 = vpop.f32.mrf.mxu0
    %v8871 = vadd.f32 %v7037, %v8870
    %v8872 = vpop.f32.mrf.mxu0
    %v8873 = vpop.f32.mrf.mxu0
    %v8874 = vadd.f32 %v7037, %v8873
    %v8875 = vpop.f32.mrf.mxu0
    %8876 = vmatprep.mubr.bf16.mxu0 %v6770
    %8877 = vmatmul.mubr.bf16.gmra.mxu0 %v6769
    %v8878 = vpop.f32.mrf.mxu0
    %v8879 = vadd.f32 %v7037, %v8878
    %v8880 = vpop.f32.mrf.mxu0
    %v8881 = vpop.f32.mrf.mxu0
    %v8882 = vadd.f32 %v7037, %v8881
    %v8883 = vpop.f32.mrf.mxu0
    %8884 = vmatprep.mubr.bf16.mxu0 %v6775
    %8885 = vmatmul.mubr.bf16.gmra.mxu0 %v6774
    %v8886 = vpop.f32.mrf.mxu0
    %v8887 = vadd.f32 %v7037, %v8886
    %v8888 = vpop.f32.mrf.mxu0
    %v8889 = vpop.f32.mrf.mxu0
    %v8890 = vadd.f32 %v7037, %v8889
    %v8891 = vpop.f32.mrf.mxu0
    %8892 = vmatprep.mubr.bf16.mxu0 %v6780
    %8893 = vmatmul.mubr.bf16.gmra.mxu0 %v6779
    %v8894 = vpop.f32.mrf.mxu0
    %v8895 = vadd.f32 %v7037, %v8894
    %v8896 = vpop.f32.mrf.mxu0
    %v8897 = vpop.f32.mrf.mxu0
    %v8898 = vadd.f32 %v7037, %v8897
    %v8899 = vpop.f32.mrf.mxu0
    %8900 = vmatprep.mubr.bf16.mxu0 %v6785
    %8901 = vmatmul.mubr.bf16.gmra.mxu0 %v6784
    %v8902 = vpop.f32.mrf.mxu0
    %v8903 = vadd.f32 %v7037, %v8902
    %v8904 = vpop.f32.mrf.mxu0
    %v8905 = vpop.f32.mrf.mxu0
    %v8906 = vadd.f32 %v7037, %v8905
    %v8907 = vpop.f32.mrf.mxu0
    %8908 = vmatprep.mubr.bf16.mxu0 %v6790
    %8909 = vmatmul.mubr.bf16.gmra.mxu0 %v6789
    %v8910 = vpop.f32.mrf.mxu0
    %v8911 = vadd.f32 %v7037, %v8910
    %v8912 = vpop.f32.mrf.mxu0
    %v8913 = vpop.f32.mrf.mxu0
    %v8914 = vadd.f32 %v7037, %v8913
    %v8915 = vpop.f32.mrf.mxu0
    %8916 = vmatprep.mubr.bf16.mxu0 %v6795
    %8917 = vmatmul.mubr.bf16.gmra.mxu0 %v6794
    %v8918 = vpop.f32.mrf.mxu0
    %v8919 = vadd.f32 %v7037, %v8918
    %v8920 = vpop.f32.mrf.mxu0
    %v8921 = vpop.f32.mrf.mxu0
    %v8922 = vadd.f32 %v7037, %v8921
    %v8923 = vpop.f32.mrf.mxu0
    %8924 = vmatprep.mubr.bf16.mxu0 %v6800
    %8925 = vmatmul.mubr.bf16.gmra.mxu0 %v6799
    %v8926 = vpop.f32.mrf.mxu0
    %v8927 = vadd.f32 %v7037, %v8926
    %v8928 = vpop.f32.mrf.mxu0
    %v8929 = vpop.f32.mrf.mxu0
    %v8930 = vadd.f32 %v7037, %v8929
    %v8931 = vpop.f32.mrf.mxu0
    %8932 = vmatprep.mubr.bf16.mxu0 %v6805
    %8933 = vmatmul.mubr.bf16.gmra.mxu0 %v6804
    %v8934 = vpop.f32.mrf.mxu0
    %v8935 = vadd.f32 %v7037, %v8934
    %v8936 = vpop.f32.mrf.mxu0
    %v8937 = vpop.f32.mrf.mxu0
    %v8938 = vadd.f32 %v7037, %v8937
    %v8939 = vpop.f32.mrf.mxu0
    %8940 = vmatprep.mubr.bf16.mxu0 %v6810
    %8941 = vmatmul.mubr.bf16.gmra.mxu0 %v6809
    %v8942 = vpop.f32.mrf.mxu0
    %v8943 = vadd.f32 %v7037, %v8942
    %v8944 = vpop.f32.mrf.mxu0
    %v8945 = vpop.f32.mrf.mxu0
    %v8946 = vadd.f32 %v7037, %v8945
    %v8947 = vpop.f32.mrf.mxu0
    %8948 = vmatprep.mubr.bf16.mxu0 %v6815
    %8949 = vmatmul.mubr.bf16.gmra.mxu0 %v6814
    %v8950 = vpop.f32.mrf.mxu0
    %v8951 = vadd.f32 %v7037, %v8950
    %v8952 = vpop.f32.mrf.mxu0
    %v8953 = vpop.f32.mrf.mxu0
    %v8954 = vadd.f32 %v7037, %v8953
    %v8955 = vpop.f32.mrf.mxu0
    %8956 = vmatprep.mubr.bf16.mxu0 %v6820
    %8957 = vmatmul.mubr.bf16.gmra.mxu0 %v6819
    %v8958 = vpop.f32.mrf.mxu0
    %v8959 = vadd.f32 %v7037, %v8958
    %v8960 = vpop.f32.mrf.mxu0
    %v8961 = vpop.f32.mrf.mxu0
    %v8962 = vadd.f32 %v7037, %v8961
    %v8963 = vpop.f32.mrf.mxu0
    %8964 = vmatprep.mubr.bf16.mxu0 %v6825
    %8965 = vmatmul.mubr.bf16.gmra.mxu0 %v6824
    %v8966 = vpop.f32.mrf.mxu0
    %v8967 = vadd.f32 %v7037, %v8966
    %v8968 = vpop.f32.mrf.mxu0
    %v8969 = vpop.f32.mrf.mxu0
    %v8970 = vadd.f32 %v7037, %v8969
    %v8971 = vpop.f32.mrf.mxu0
    %8972 = vmatprep.mubr.bf16.mxu0 %v6830
    %8973 = vmatmul.mubr.bf16.gmra.mxu0 %v6829
    %v8974 = vpop.f32.mrf.mxu0
    %v8975 = vadd.f32 %v7037, %v8974
    %v8976 = vpop.f32.mrf.mxu0
    %v8977 = vpop.f32.mrf.mxu0
    %v8978 = vadd.f32 %v7037, %v8977
    %v8979 = vpop.f32.mrf.mxu0
    %8980 = vmatprep.mubr.bf16.mxu0 %v6835
    %8981 = vmatmul.mubr.bf16.gmra.mxu0 %v6834
    %v8982 = vpop.f32.mrf.mxu0
    %v8983 = vadd.f32 %v7037, %v8982
    %v8984 = vpop.f32.mrf.mxu0
    %v8985 = vpop.f32.mrf.mxu0
    %v8986 = vadd.f32 %v7037, %v8985
    %v8987 = vpop.f32.mrf.mxu0
    %8988 = vmatprep.mubr.bf16.mxu0 %v6840
    %8989 = vmatmul.mubr.bf16.gmra.mxu0 %v6839
    %v8990 = vpop.f32.mrf.mxu0
    %v8991 = vadd.f32 %v7037, %v8990
    %v8992 = vpop.f32.mrf.mxu0
    %v8993 = vpop.f32.mrf.mxu0
    %v8994 = vadd.f32 %v7037, %v8993
    %v8995 = vpop.f32.mrf.mxu0
    %8996 = vmatprep.mubr.bf16.mxu0 %v6845
    %8997 = vmatmul.mubr.bf16.gmra.mxu0 %v6844
    %v8998 = vpop.f32.mrf.mxu0
    %v8999 = vadd.f32 %v7037, %v8998
    %v9000 = vpop.f32.mrf.mxu0
    %v9001 = vpop.f32.mrf.mxu0
    %v9002 = vadd.f32 %v7037, %v9001
    %v9003 = vpop.f32.mrf.mxu0
    %9004 = vmatprep.mubr.bf16.mxu0 %v6850
    %9005 = vmatmul.mubr.bf16.gmra.mxu0 %v6849
    %v9006 = vpop.f32.mrf.mxu0
    %v9007 = vadd.f32 %v7037, %v9006
    %v9008 = vpop.f32.mrf.mxu0
    %v9009 = vpop.f32.mrf.mxu0
    %v9010 = vadd.f32 %v7037, %v9009
    %v9011 = vpop.f32.mrf.mxu0
    %9012 = vmatprep.mubr.bf16.mxu0 %v6855
    %9013 = vmatmul.mubr.bf16.gmra.mxu0 %v6854
    %v9014 = vpop.f32.mrf.mxu0
    %v9015 = vadd.f32 %v7037, %v9014
    %v9016 = vpop.f32.mrf.mxu0
    %v9017 = vpop.f32.mrf.mxu0
    %v9018 = vadd.f32 %v7037, %v9017
    %v9019 = vpop.f32.mrf.mxu0
    %9020 = vmatprep.mubr.bf16.mxu0 %v6860
    %9021 = vmatmul.mubr.bf16.gmra.mxu0 %v6859
    %v9022 = vpop.f32.mrf.mxu0
    %v9023 = vadd.f32 %v7037, %v9022
    %v9024 = vpop.f32.mrf.mxu0
    %v9025 = vpop.f32.mrf.mxu0
    %v9026 = vadd.f32 %v7037, %v9025
    %v9027 = vpop.f32.mrf.mxu0
    %9028 = vdwg.mxu0
    %9029 = vmatprep.subr.bf16.mxu0 0
    %9030 = vmatpush1.bf16.msra.mxu0 %v7512
    %9031 = vmatprep.subr.bf16.mxu0 0
    %9032 = vmatpush1.bf16.msra.mxu0 %v7509
    %9033 = vmatprep.subr.bf16.mxu0 0
    %9034 = vmatpush1.bf16.msra.mxu0 %v7506
    %9035 = vmatprep.subr.bf16.mxu0 0
    %9036 = vmatpush1.bf16.msra.mxu0 %v7503
    %9037 = vmatprep.subr.bf16.mxu0 0
    %9038 = vmatpush1.bf16.msra.mxu0 %v7500
    %9039 = vmatprep.subr.bf16.mxu0 0
    %9040 = vmatpush1.bf16.msra.mxu0 %v7497
    %9041 = vmatprep.subr.bf16.mxu0 0
    %9042 = vmatpush1.bf16.msra.mxu0 %v7494
    %9043 = vmatprep.subr.bf16.mxu0 0
    %9044 = vmatpush1.bf16.msra.mxu0 %v7491
    %9045 = vmatprep.subr.bf16.mxu0 0
    %9046 = vmatpush2.bf16.msra.mxu0 %v7536
    %9047 = vmatprep.subr.bf16.mxu0 0
    %9048 = vmatpush2.bf16.msra.mxu0 %v7533
    %9049 = vmatprep.subr.bf16.mxu0 0
    %9050 = vmatpush2.bf16.msra.mxu0 %v7530
    %9051 = vmatprep.subr.bf16.mxu0 0
    %9052 = vmatpush2.bf16.msra.mxu0 %v7527
    %9053 = vmatprep.subr.bf16.mxu0 0
    %9054 = vmatpush2.bf16.msra.mxu0 %v7524
    %9055 = vmatprep.subr.bf16.mxu0 0
    %9056 = vmatpush2.bf16.msra.mxu0 %v7521
    %9057 = vmatprep.subr.bf16.mxu0 0
    %9058 = vmatpush2.bf16.msra.mxu0 %v7518
    %9059 = vmatprep.subr.bf16.mxu0 0
    %9060 = vmatpush2.bf16.msra.mxu0 %v7515
    %9061 = vmatprep.mubr.bf16.mxu0 %v6707
    %9062 = vmatmul.mubr.bf16.gmra.mxu0 %v6706
    %v9063 = vpop.f32.mrf.mxu0
    %v9064 = vadd.f32 %v8775, %v9063
    %v9065 = vpop.f32.mrf.mxu0
    %v9066 = vpop.f32.mrf.mxu0
    %v9067 = vadd.f32 %v8778, %v9066
    %v9068 = vpop.f32.mrf.mxu0
    %9069 = vmatprep.mubr.bf16.mxu0 %v6712
    %9070 = vmatmul.mubr.bf16.gmra.mxu0 %v6711
    %v9071 = vpop.f32.mrf.mxu0
    %v9072 = vadd.f32 %v8783, %v9071
    %v9073 = vpop.f32.mrf.mxu0
    %v9074 = vpop.f32.mrf.mxu0
    %v9075 = vadd.f32 %v8786, %v9074
    %v9076 = vpop.f32.mrf.mxu0
    %9077 = vmatprep.mubr.bf16.mxu0 %v6717
    %9078 = vmatmul.mubr.bf16.gmra.mxu0 %v6716
    %v9079 = vpop.f32.mrf.mxu0
    %v9080 = vadd.f32 %v8791, %v9079
    %v9081 = vpop.f32.mrf.mxu0
    %v9082 = vpop.f32.mrf.mxu0
    %v9083 = vadd.f32 %v8794, %v9082
    %v9084 = vpop.f32.mrf.mxu0
    %9085 = vmatprep.mubr.bf16.mxu0 %v6722
    %9086 = vmatmul.mubr.bf16.gmra.mxu0 %v6721
    %v9087 = vpop.f32.mrf.mxu0
    %v9088 = vadd.f32 %v8799, %v9087
    %v9089 = vpop.f32.mrf.mxu0
    %v9090 = vpop.f32.mrf.mxu0
    %v9091 = vadd.f32 %v8802, %v9090
    %v9092 = vpop.f32.mrf.mxu0
    %9093 = vmatprep.mubr.bf16.mxu0 %v6727
    %9094 = vmatmul.mubr.bf16.gmra.mxu0 %v6726
    %v9095 = vpop.f32.mrf.mxu0
    %v9096 = vadd.f32 %v8807, %v9095
    %v9097 = vpop.f32.mrf.mxu0
    %v9098 = vpop.f32.mrf.mxu0
    %v9099 = vadd.f32 %v8810, %v9098
    %v9100 = vpop.f32.mrf.mxu0
    %9101 = vmatprep.mubr.bf16.mxu0 %v6732
    %9102 = vmatmul.mubr.bf16.gmra.mxu0 %v6731
    %v9103 = vpop.f32.mrf.mxu0
    %v9104 = vadd.f32 %v8815, %v9103
    %v9105 = vpop.f32.mrf.mxu0
    %v9106 = vpop.f32.mrf.mxu0
    %v9107 = vadd.f32 %v8818, %v9106
    %v9108 = vpop.f32.mrf.mxu0
    %9109 = vmatprep.mubr.bf16.mxu0 %v6737
    %9110 = vmatmul.mubr.bf16.gmra.mxu0 %v6736
    %v9111 = vpop.f32.mrf.mxu0
    %v9112 = vadd.f32 %v8823, %v9111
    %v9113 = vpop.f32.mrf.mxu0
    %v9114 = vpop.f32.mrf.mxu0
    %v9115 = vadd.f32 %v8826, %v9114
    %v9116 = vpop.f32.mrf.mxu0
    %9117 = vmatprep.mubr.bf16.mxu0 %v6742
    %9118 = vmatmul.mubr.bf16.gmra.mxu0 %v6741
    %v9119 = vpop.f32.mrf.mxu0
    %v9120 = vadd.f32 %v8831, %v9119
    %v9121 = vpop.f32.mrf.mxu0
    %v9122 = vpop.f32.mrf.mxu0
    %v9123 = vadd.f32 %v8834, %v9122
    %v9124 = vpop.f32.mrf.mxu0
    %9125 = vmatprep.mubr.bf16.mxu0 %v6747
    %9126 = vmatmul.mubr.bf16.gmra.mxu0 %v6746
    %v9127 = vpop.f32.mrf.mxu0
    %v9128 = vadd.f32 %v8839, %v9127
    %v9129 = vpop.f32.mrf.mxu0
    %v9130 = vpop.f32.mrf.mxu0
    %v9131 = vadd.f32 %v8842, %v9130
    %v9132 = vpop.f32.mrf.mxu0
    %9133 = vmatprep.mubr.bf16.mxu0 %v6752
    %9134 = vmatmul.mubr.bf16.gmra.mxu0 %v6751
    %v9135 = vpop.f32.mrf.mxu0
    %v9136 = vadd.f32 %v8847, %v9135
    %v9137 = vpop.f32.mrf.mxu0
    %v9138 = vpop.f32.mrf.mxu0
    %v9139 = vadd.f32 %v8850, %v9138
    %v9140 = vpop.f32.mrf.mxu0
    %9141 = vmatprep.mubr.bf16.mxu0 %v6757
    %9142 = vmatmul.mubr.bf16.gmra.mxu0 %v6756
    %v9143 = vpop.f32.mrf.mxu0
    %v9144 = vadd.f32 %v8855, %v9143
    %v9145 = vpop.f32.mrf.mxu0
    %v9146 = vpop.f32.mrf.mxu0
    %v9147 = vadd.f32 %v8858, %v9146
    %v9148 = vpop.f32.mrf.mxu0
    %9149 = vmatprep.mubr.bf16.mxu0 %v6762
    %9150 = vmatmul.mubr.bf16.gmra.mxu0 %v6761
    %v9151 = vpop.f32.mrf.mxu0
    %v9152 = vadd.f32 %v8863, %v9151
    %v9153 = vpop.f32.mrf.mxu0
    %v9154 = vpop.f32.mrf.mxu0
    %v9155 = vadd.f32 %v8866, %v9154
    %v9156 = vpop.f32.mrf.mxu0
    %9157 = vmatprep.mubr.bf16.mxu0 %v6767
    %9158 = vmatmul.mubr.bf16.gmra.mxu0 %v6766
    %v9159 = vpop.f32.mrf.mxu0
    %v9160 = vadd.f32 %v8871, %v9159
    %v9161 = vpop.f32.mrf.mxu0
    %v9162 = vpop.f32.mrf.mxu0
    %v9163 = vadd.f32 %v8874, %v9162
    %v9164 = vpop.f32.mrf.mxu0
    %9165 = vmatprep.mubr.bf16.mxu0 %v6772
    %9166 = vmatmul.mubr.bf16.gmra.mxu0 %v6771
    %v9167 = vpop.f32.mrf.mxu0
    %v9168 = vadd.f32 %v8879, %v9167
    %v9169 = vpop.f32.mrf.mxu0
    %v9170 = vpop.f32.mrf.mxu0
    %v9171 = vadd.f32 %v8882, %v9170
    %v9172 = vpop.f32.mrf.mxu0
    %9173 = vmatprep.mubr.bf16.mxu0 %v6777
    %9174 = vmatmul.mubr.bf16.gmra.mxu0 %v6776
    %v9175 = vpop.f32.mrf.mxu0
    %v9176 = vadd.f32 %v8887, %v9175
    %v9177 = vpop.f32.mrf.mxu0
    %v9178 = vpop.f32.mrf.mxu0
    %v9179 = vadd.f32 %v8890, %v9178
    %v9180 = vpop.f32.mrf.mxu0
    %9181 = vmatprep.mubr.bf16.mxu0 %v6782
    %9182 = vmatmul.mubr.bf16.gmra.mxu0 %v6781
    %v9183 = vpop.f32.mrf.mxu0
    %v9184 = vadd.f32 %v8895, %v9183
    %v9185 = vpop.f32.mrf.mxu0
    %v9186 = vpop.f32.mrf.mxu0
    %v9187 = vadd.f32 %v8898, %v9186
    %v9188 = vpop.f32.mrf.mxu0
    %9189 = vmatprep.mubr.bf16.mxu0 %v6787
    %9190 = vmatmul.mubr.bf16.gmra.mxu0 %v6786
    %v9191 = vpop.f32.mrf.mxu0
    %v9192 = vadd.f32 %v8903, %v9191
    %v9193 = vpop.f32.mrf.mxu0
    %v9194 = vpop.f32.mrf.mxu0
    %v9195 = vadd.f32 %v8906, %v9194
    %v9196 = vpop.f32.mrf.mxu0
    %9197 = vmatprep.mubr.bf16.mxu0 %v6792
    %9198 = vmatmul.mubr.bf16.gmra.mxu0 %v6791
    %v9199 = vpop.f32.mrf.mxu0
    %v9200 = vadd.f32 %v8911, %v9199
    %v9201 = vpop.f32.mrf.mxu0
    %v9202 = vpop.f32.mrf.mxu0
    %v9203 = vadd.f32 %v8914, %v9202
    %v9204 = vpop.f32.mrf.mxu0
    %9205 = vmatprep.mubr.bf16.mxu0 %v6797
    %9206 = vmatmul.mubr.bf16.gmra.mxu0 %v6796
    %v9207 = vpop.f32.mrf.mxu0
    %v9208 = vadd.f32 %v8919, %v9207
    %v9209 = vpop.f32.mrf.mxu0
    %v9210 = vpop.f32.mrf.mxu0
    %v9211 = vadd.f32 %v8922, %v9210
    %v9212 = vpop.f32.mrf.mxu0
    %9213 = vmatprep.mubr.bf16.mxu0 %v6802
    %9214 = vmatmul.mubr.bf16.gmra.mxu0 %v6801
    %v9215 = vpop.f32.mrf.mxu0
    %v9216 = vadd.f32 %v8927, %v9215
    %v9217 = vpop.f32.mrf.mxu0
    %v9218 = vpop.f32.mrf.mxu0
    %v9219 = vadd.f32 %v8930, %v9218
    %v9220 = vpop.f32.mrf.mxu0
    %9221 = vmatprep.mubr.bf16.mxu0 %v6807
    %9222 = vmatmul.mubr.bf16.gmra.mxu0 %v6806
    %v9223 = vpop.f32.mrf.mxu0
    %v9224 = vadd.f32 %v8935, %v9223
    %v9225 = vpop.f32.mrf.mxu0
    %v9226 = vpop.f32.mrf.mxu0
    %v9227 = vadd.f32 %v8938, %v9226
    %v9228 = vpop.f32.mrf.mxu0
    %9229 = vmatprep.mubr.bf16.mxu0 %v6812
    %9230 = vmatmul.mubr.bf16.gmra.mxu0 %v6811
    %v9231 = vpop.f32.mrf.mxu0
    %v9232 = vadd.f32 %v8943, %v9231
    %v9233 = vpop.f32.mrf.mxu0
    %v9234 = vpop.f32.mrf.mxu0
    %v9235 = vadd.f32 %v8946, %v9234
    %v9236 = vpop.f32.mrf.mxu0
    %9237 = vmatprep.mubr.bf16.mxu0 %v6817
    %9238 = vmatmul.mubr.bf16.gmra.mxu0 %v6816
    %v9239 = vpop.f32.mrf.mxu0
    %v9240 = vadd.f32 %v8951, %v9239
    %v9241 = vpop.f32.mrf.mxu0
    %v9242 = vpop.f32.mrf.mxu0
    %v9243 = vadd.f32 %v8954, %v9242
    %v9244 = vpop.f32.mrf.mxu0
    %9245 = vmatprep.mubr.bf16.mxu0 %v6822
    %9246 = vmatmul.mubr.bf16.gmra.mxu0 %v6821
    %v9247 = vpop.f32.mrf.mxu0
    %v9248 = vadd.f32 %v8959, %v9247
    %v9249 = vpop.f32.mrf.mxu0
    %v9250 = vpop.f32.mrf.mxu0
    %v9251 = vadd.f32 %v8962, %v9250
    %v9252 = vpop.f32.mrf.mxu0
    %9253 = vmatprep.mubr.bf16.mxu0 %v6827
    %9254 = vmatmul.mubr.bf16.gmra.mxu0 %v6826
    %v9255 = vpop.f32.mrf.mxu0
    %v9256 = vadd.f32 %v8967, %v9255
    %v9257 = vpop.f32.mrf.mxu0
    %v9258 = vpop.f32.mrf.mxu0
    %v9259 = vadd.f32 %v8970, %v9258
    %v9260 = vpop.f32.mrf.mxu0
    %9261 = vmatprep.mubr.bf16.mxu0 %v6832
    %9262 = vmatmul.mubr.bf16.gmra.mxu0 %v6831
    %v9263 = vpop.f32.mrf.mxu0
    %v9264 = vadd.f32 %v8975, %v9263
    %v9265 = vpop.f32.mrf.mxu0
    %v9266 = vpop.f32.mrf.mxu0
    %v9267 = vadd.f32 %v8978, %v9266
    %v9268 = vpop.f32.mrf.mxu0
    %9269 = vmatprep.mubr.bf16.mxu0 %v6837
    %9270 = vmatmul.mubr.bf16.gmra.mxu0 %v6836
    %v9271 = vpop.f32.mrf.mxu0
    %v9272 = vadd.f32 %v8983, %v9271
    %v9273 = vpop.f32.mrf.mxu0
    %v9274 = vpop.f32.mrf.mxu0
    %v9275 = vadd.f32 %v8986, %v9274
    %v9276 = vpop.f32.mrf.mxu0
    %9277 = vmatprep.mubr.bf16.mxu0 %v6842
    %9278 = vmatmul.mubr.bf16.gmra.mxu0 %v6841
    %v9279 = vpop.f32.mrf.mxu0
    %v9280 = vadd.f32 %v8991, %v9279
    %v9281 = vpop.f32.mrf.mxu0
    %v9282 = vpop.f32.mrf.mxu0
    %v9283 = vadd.f32 %v8994, %v9282
    %v9284 = vpop.f32.mrf.mxu0
    %9285 = vmatprep.mubr.bf16.mxu0 %v6847
    %9286 = vmatmul.mubr.bf16.gmra.mxu0 %v6846
    %v9287 = vpop.f32.mrf.mxu0
    %v9288 = vadd.f32 %v8999, %v9287
    %v9289 = vpop.f32.mrf.mxu0
    %v9290 = vpop.f32.mrf.mxu0
    %v9291 = vadd.f32 %v9002, %v9290
    %v9292 = vpop.f32.mrf.mxu0
    %9293 = vmatprep.mubr.bf16.mxu0 %v6852
    %9294 = vmatmul.mubr.bf16.gmra.mxu0 %v6851
    %v9295 = vpop.f32.mrf.mxu0
    %v9296 = vadd.f32 %v9007, %v9295
    %v9297 = vpop.f32.mrf.mxu0
    %v9298 = vpop.f32.mrf.mxu0
    %v9299 = vadd.f32 %v9010, %v9298
    %v9300 = vpop.f32.mrf.mxu0
    %9301 = vmatprep.mubr.bf16.mxu0 %v6857
    %9302 = vmatmul.mubr.bf16.gmra.mxu0 %v6856
    %v9303 = vpop.f32.mrf.mxu0
    %v9304 = vadd.f32 %v9015, %v9303
    %v9305 = vpop.f32.mrf.mxu0
    %v9306 = vpop.f32.mrf.mxu0
    %v9307 = vadd.f32 %v9018, %v9306
    %v9308 = vpop.f32.mrf.mxu0
    %9309 = vmatprep.mubr.bf16.mxu0 %v6862
    %9310 = vmatmul.mubr.bf16.gmra.mxu0 %v6861
    %v9311 = vpop.f32.mrf.mxu0
    %v9312 = vadd.f32 %v9023, %v9311
    %v9313 = vpop.f32.mrf.mxu0
    %v9314 = vpop.f32.mrf.mxu0
    %v9315 = vadd.f32 %v9026, %v9314
    %v9316 = vpop.f32.mrf.mxu0
    %9317 = vdwg.mxu0
    %9318 = vmatprep.subr.bf16.mxu0 0
    %9319 = vmatpush1.bf16.msra.mxu0 %v7560
    %9320 = vmatprep.subr.bf16.mxu0 0
    %9321 = vmatpush1.bf16.msra.mxu0 %v7557
    %9322 = vmatprep.subr.bf16.mxu0 0
    %9323 = vmatpush1.bf16.msra.mxu0 %v7554
    %9324 = vmatprep.subr.bf16.mxu0 0
    %9325 = vmatpush1.bf16.msra.mxu0 %v7551
    %9326 = vmatprep.subr.bf16.mxu0 0
    %9327 = vmatpush1.bf16.msra.mxu0 %v7548
    %9328 = vmatprep.subr.bf16.mxu0 0
    %9329 = vmatpush1.bf16.msra.mxu0 %v7545
    %9330 = vmatprep.subr.bf16.mxu0 0
    %9331 = vmatpush1.bf16.msra.mxu0 %v7542
    %9332 = vmatprep.subr.bf16.mxu0 0
    %9333 = vmatpush1.bf16.msra.mxu0 %v7539
    %9334 = vmatprep.subr.bf16.mxu0 0
    %9335 = vmatpush2.bf16.msra.mxu0 0
    %9336 = vmatprep.subr.bf16.mxu0 0
    %9337 = vmatpush2.bf16.msra.mxu0 0
    %9338 = vmatprep.subr.bf16.mxu0 0
    %9339 = vmatpush2.bf16.msra.mxu0 0
    %9340 = vmatprep.subr.bf16.mxu0 0
    %9341 = vmatpush2.bf16.msra.mxu0 0
    %9342 = vmatprep.subr.bf16.mxu0 0
    %9343 = vmatpush2.bf16.msra.mxu0 0
    %9344 = vmatprep.subr.bf16.mxu0 0
    %9345 = vmatpush2.bf16.msra.mxu0 0
    %9346 = vmatprep.subr.bf16.mxu0 0
    %9347 = vmatpush2.bf16.msra.mxu0 0
    %9348 = vmatprep.subr.bf16.mxu0 0
    %9349 = vmatpush2.bf16.msra.mxu0 0
    %9350 = vmatprep.mubr.bf16.mxu0 0
    %9351 = vmatmul.mubr.bf16.gmra.mxu0 %v6708
    %v9352 = vpop.f32.mrf.mxu0
    %v9353 = vadd.f32 %v9064, %v9352
    %v9354 = vpop.f32.mrf.mxu0
    %v9355 = vpop.f32.mrf.mxu0
    %v9356 = vadd.f32 %v9067, %v9355
    %v9357 = vpop.f32.mrf.mxu0
    %9358 = vmatprep.mubr.bf16.mxu0 0
    %9359 = vmatmul.mubr.bf16.gmra.mxu0 %v6713
    %v9360 = vpop.f32.mrf.mxu0
    %v9361 = vadd.f32 %v9072, %v9360
    %v9362 = vpop.f32.mrf.mxu0
    %v9363 = vpop.f32.mrf.mxu0
    %v9364 = vadd.f32 %v9075, %v9363
    %v9365 = vpop.f32.mrf.mxu0
    %9366 = vmatprep.mubr.bf16.mxu0 0
    %9367 = vmatmul.mubr.bf16.gmra.mxu0 %v6718
    %v9368 = vpop.f32.mrf.mxu0
    %v9369 = vadd.f32 %v9080, %v9368
    %v9370 = vpop.f32.mrf.mxu0
    %v9371 = vpop.f32.mrf.mxu0
    %v9372 = vadd.f32 %v9083, %v9371
    %v9373 = vpop.f32.mrf.mxu0
    %9374 = vmatprep.mubr.bf16.mxu0 0
    %9375 = vmatmul.mubr.bf16.gmra.mxu0 %v6723
    %v9376 = vpop.f32.mrf.mxu0
    %v9377 = vadd.f32 %v9088, %v9376
    %v9378 = vpop.f32.mrf.mxu0
    %v9379 = vpop.f32.mrf.mxu0
    %v9380 = vadd.f32 %v9091, %v9379
    %v9381 = vpop.f32.mrf.mxu0
    %9382 = vmatprep.mubr.bf16.mxu0 0
    %9383 = vmatmul.mubr.bf16.gmra.mxu0 %v6728
    %v9384 = vpop.f32.mrf.mxu0
    %v9385 = vadd.f32 %v9096, %v9384
    %v9386 = vpop.f32.mrf.mxu0
    %v9387 = vpop.f32.mrf.mxu0
    %v9388 = vadd.f32 %v9099, %v9387
    %v9389 = vpop.f32.mrf.mxu0
    %9390 = vmatprep.mubr.bf16.mxu0 0
    %9391 = vmatmul.mubr.bf16.gmra.mxu0 %v6733
    %v9392 = vpop.f32.mrf.mxu0
    %v9393 = vadd.f32 %v9104, %v9392
    %v9394 = vpop.f32.mrf.mxu0
    %v9395 = vpop.f32.mrf.mxu0
    %v9396 = vadd.f32 %v9107, %v9395
    %v9397 = vpop.f32.mrf.mxu0
    %9398 = vmatprep.mubr.bf16.mxu0 0
    %9399 = vmatmul.mubr.bf16.gmra.mxu0 %v6738
    %v9400 = vpop.f32.mrf.mxu0
    %v9401 = vadd.f32 %v9112, %v9400
    %v9402 = vpop.f32.mrf.mxu0
    %v9403 = vpop.f32.mrf.mxu0
    %v9404 = vadd.f32 %v9115, %v9403
    %v9405 = vpop.f32.mrf.mxu0
    %9406 = vmatprep.mubr.bf16.mxu0 0
    %9407 = vmatmul.mubr.bf16.gmra.mxu0 %v6743
    %v9408 = vpop.f32.mrf.mxu0
    %v9409 = vadd.f32 %v9120, %v9408
    %v9410 = vpop.f32.mrf.mxu0
    %v9411 = vpop.f32.mrf.mxu0
    %v9412 = vadd.f32 %v9123, %v9411
    %v9413 = vpop.f32.mrf.mxu0
    %9414 = vmatprep.mubr.bf16.mxu0 0
    %9415 = vmatmul.mubr.bf16.gmra.mxu0 %v6748
    %v9416 = vpop.f32.mrf.mxu0
    %v9417 = vadd.f32 %v9128, %v9416
    %v9418 = vpop.f32.mrf.mxu0
    %v9419 = vpop.f32.mrf.mxu0
    %v9420 = vadd.f32 %v9131, %v9419
    %v9421 = vpop.f32.mrf.mxu0
    %9422 = vmatprep.mubr.bf16.mxu0 0
    %9423 = vmatmul.mubr.bf16.gmra.mxu0 %v6753
    %v9424 = vpop.f32.mrf.mxu0
    %v9425 = vadd.f32 %v9136, %v9424
    %v9426 = vpop.f32.mrf.mxu0
    %v9427 = vpop.f32.mrf.mxu0
    %v9428 = vadd.f32 %v9139, %v9427
    %v9429 = vpop.f32.mrf.mxu0
    %9430 = vmatprep.mubr.bf16.mxu0 0
    %9431 = vmatmul.mubr.bf16.gmra.mxu0 %v6758
    %v9432 = vpop.f32.mrf.mxu0
    %v9433 = vadd.f32 %v9144, %v9432
    %v9434 = vpop.f32.mrf.mxu0
    %v9435 = vpop.f32.mrf.mxu0
    %v9436 = vadd.f32 %v9147, %v9435
    %v9437 = vpop.f32.mrf.mxu0
    %9438 = vmatprep.mubr.bf16.mxu0 0
    %9439 = vmatmul.mubr.bf16.gmra.mxu0 %v6763
    %v9440 = vpop.f32.mrf.mxu0
    %v9441 = vadd.f32 %v9152, %v9440
    %v9442 = vpop.f32.mrf.mxu0
    %v9443 = vpop.f32.mrf.mxu0
    %v9444 = vadd.f32 %v9155, %v9443
    %v9445 = vpop.f32.mrf.mxu0
    %9446 = vmatprep.mubr.bf16.mxu0 0
    %9447 = vmatmul.mubr.bf16.gmra.mxu0 %v6768
    %v9448 = vpop.f32.mrf.mxu0
    %v9449 = vadd.f32 %v9160, %v9448
    %v9450 = vpop.f32.mrf.mxu0
    %v9451 = vpop.f32.mrf.mxu0
    %v9452 = vadd.f32 %v9163, %v9451
    %v9453 = vpop.f32.mrf.mxu0
    %9454 = vmatprep.mubr.bf16.mxu0 0
    %9455 = vmatmul.mubr.bf16.gmra.mxu0 %v6773
    %v9456 = vpop.f32.mrf.mxu0
    %v9457 = vadd.f32 %v9168, %v9456
    %v9458 = vpop.f32.mrf.mxu0
    %v9459 = vpop.f32.mrf.mxu0
    %v9460 = vadd.f32 %v9171, %v9459
    %v9461 = vpop.f32.mrf.mxu0
    %9462 = vmatprep.mubr.bf16.mxu0 0
    %9463 = vmatmul.mubr.bf16.gmra.mxu0 %v6778
    %v9464 = vpop.f32.mrf.mxu0
    %v9465 = vadd.f32 %v9176, %v9464
    %v9466 = vpop.f32.mrf.mxu0
    %v9467 = vpop.f32.mrf.mxu0
    %v9468 = vadd.f32 %v9179, %v9467
    %v9469 = vpop.f32.mrf.mxu0
    %9470 = vmatprep.mubr.bf16.mxu0 0
    %9471 = vmatmul.mubr.bf16.gmra.mxu0 %v6783
    %v9472 = vpop.f32.mrf.mxu0
    %v9473 = vadd.f32 %v9184, %v9472
    %v9474 = vpop.f32.mrf.mxu0
    %v9475 = vpop.f32.mrf.mxu0
    %v9476 = vadd.f32 %v9187, %v9475
    %v9477 = vpop.f32.mrf.mxu0
    %9478 = vmatprep.mubr.bf16.mxu0 0
    %9479 = vmatmul.mubr.bf16.gmra.mxu0 %v6788
    %v9480 = vpop.f32.mrf.mxu0
    %v9481 = vadd.f32 %v9192, %v9480
    %v9482 = vpop.f32.mrf.mxu0
    %v9483 = vpop.f32.mrf.mxu0
    %v9484 = vadd.f32 %v9195, %v9483
    %v9485 = vpop.f32.mrf.mxu0
    %9486 = vmatprep.mubr.bf16.mxu0 0
    %9487 = vmatmul.mubr.bf16.gmra.mxu0 %v6793
    %v9488 = vpop.f32.mrf.mxu0
    %v9489 = vadd.f32 %v9200, %v9488
    %v9490 = vpop.f32.mrf.mxu0
    %v9491 = vpop.f32.mrf.mxu0
    %v9492 = vadd.f32 %v9203, %v9491
    %v9493 = vpop.f32.mrf.mxu0
    %9494 = vmatprep.mubr.bf16.mxu0 0
    %9495 = vmatmul.mubr.bf16.gmra.mxu0 %v6798
    %v9496 = vpop.f32.mrf.mxu0
    %v9497 = vadd.f32 %v9208, %v9496
    %v9498 = vpop.f32.mrf.mxu0
    %v9499 = vpop.f32.mrf.mxu0
    %v9500 = vadd.f32 %v9211, %v9499
    %v9501 = vpop.f32.mrf.mxu0
    %9502 = vmatprep.mubr.bf16.mxu0 0
    %9503 = vmatmul.mubr.bf16.gmra.mxu0 %v6803
    %v9504 = vpop.f32.mrf.mxu0
    %v9505 = vadd.f32 %v9216, %v9504
    %v9506 = vpop.f32.mrf.mxu0
    %v9507 = vpop.f32.mrf.mxu0
    %v9508 = vadd.f32 %v9219, %v9507
    %v9509 = vpop.f32.mrf.mxu0
    %9510 = vmatprep.mubr.bf16.mxu0 0
    %9511 = vmatmul.mubr.bf16.gmra.mxu0 %v6808
    %v9512 = vpop.f32.mrf.mxu0
    %v9513 = vadd.f32 %v9224, %v9512
    %v9514 = vpop.f32.mrf.mxu0
    %v9515 = vpop.f32.mrf.mxu0
    %v9516 = vadd.f32 %v9227, %v9515
    %v9517 = vpop.f32.mrf.mxu0
    %9518 = vmatprep.mubr.bf16.mxu0 0
    %9519 = vmatmul.mubr.bf16.gmra.mxu0 %v6813
    %v9520 = vpop.f32.mrf.mxu0
    %v9521 = vadd.f32 %v9232, %v9520
    %v9522 = vpop.f32.mrf.mxu0
    %v9523 = vpop.f32.mrf.mxu0
    %v9524 = vadd.f32 %v9235, %v9523
    %v9525 = vpop.f32.mrf.mxu0
    %9526 = vmatprep.mubr.bf16.mxu0 0
    %9527 = vmatmul.mubr.bf16.gmra.mxu0 %v6818
    %v9528 = vpop.f32.mrf.mxu0
    %v9529 = vadd.f32 %v9240, %v9528
    %v9530 = vpop.f32.mrf.mxu0
    %v9531 = vpop.f32.mrf.mxu0
    %v9532 = vadd.f32 %v9243, %v9531
    %v9533 = vpop.f32.mrf.mxu0
    %9534 = vmatprep.mubr.bf16.mxu0 0
    %9535 = vmatmul.mubr.bf16.gmra.mxu0 %v6823
    %v9536 = vpop.f32.mrf.mxu0
    %v9537 = vadd.f32 %v9248, %v9536
    %v9538 = vpop.f32.mrf.mxu0
    %v9539 = vpop.f32.mrf.mxu0
    %v9540 = vadd.f32 %v9251, %v9539
    %v9541 = vpop.f32.mrf.mxu0
    %9542 = vmatprep.mubr.bf16.mxu0 0
    %9543 = vmatmul.mubr.bf16.gmra.mxu0 %v6828
    %v9544 = vpop.f32.mrf.mxu0
    %v9545 = vadd.f32 %v9256, %v9544
    %v9546 = vpop.f32.mrf.mxu0
    %v9547 = vpop.f32.mrf.mxu0
    %v9548 = vadd.f32 %v9259, %v9547
    %v9549 = vpop.f32.mrf.mxu0
    %9550 = vmatprep.mubr.bf16.mxu0 0
    %9551 = vmatmul.mubr.bf16.gmra.mxu0 %v6833
    %v9552 = vpop.f32.mrf.mxu0
    %v9553 = vadd.f32 %v9264, %v9552
    %v9554 = vpop.f32.mrf.mxu0
    %v9555 = vpop.f32.mrf.mxu0
    %v9556 = vadd.f32 %v9267, %v9555
    %v9557 = vpop.f32.mrf.mxu0
    %9558 = vmatprep.mubr.bf16.mxu0 0
    %9559 = vmatmul.mubr.bf16.gmra.mxu0 %v6838
    %v9560 = vpop.f32.mrf.mxu0
    %v9561 = vadd.f32 %v9272, %v9560
    %v9562 = vpop.f32.mrf.mxu0
    %v9563 = vpop.f32.mrf.mxu0
    %v9564 = vadd.f32 %v9275, %v9563
    %v9565 = vpop.f32.mrf.mxu0
    %9566 = vmatprep.mubr.bf16.mxu0 0
    %9567 = vmatmul.mubr.bf16.gmra.mxu0 %v6843
    %v9568 = vpop.f32.mrf.mxu0
    %v9569 = vadd.f32 %v9280, %v9568
    %v9570 = vpop.f32.mrf.mxu0
    %v9571 = vpop.f32.mrf.mxu0
    %v9572 = vadd.f32 %v9283, %v9571
    %v9573 = vpop.f32.mrf.mxu0
    %9574 = vmatprep.mubr.bf16.mxu0 0
    %9575 = vmatmul.mubr.bf16.gmra.mxu0 %v6848
    %v9576 = vpop.f32.mrf.mxu0
    %v9577 = vadd.f32 %v9288, %v9576
    %v9578 = vpop.f32.mrf.mxu0
    %v9579 = vpop.f32.mrf.mxu0
    %v9580 = vadd.f32 %v9291, %v9579
    %v9581 = vpop.f32.mrf.mxu0
    %9582 = vmatprep.mubr.bf16.mxu0 0
    %9583 = vmatmul.mubr.bf16.gmra.mxu0 %v6853
    %v9584 = vpop.f32.mrf.mxu0
    %v9585 = vadd.f32 %v9296, %v9584
    %v9586 = vpop.f32.mrf.mxu0
    %v9587 = vpop.f32.mrf.mxu0
    %v9588 = vadd.f32 %v9299, %v9587
    %v9589 = vpop.f32.mrf.mxu0
    %9590 = vmatprep.mubr.bf16.mxu0 0
    %9591 = vmatmul.mubr.bf16.gmra.mxu0 %v6858
    %v9592 = vpop.f32.mrf.mxu0
    %v9593 = vadd.f32 %v9304, %v9592
    %v9594 = vpop.f32.mrf.mxu0
    %v9595 = vpop.f32.mrf.mxu0
    %v9596 = vadd.f32 %v9307, %v9595
    %v9597 = vpop.f32.mrf.mxu0
    %9598 = vmatprep.mubr.bf16.mxu0 0
    %9599 = vmatmul.mubr.bf16.gmra.mxu0 %v6863
    %v9600 = vpop.f32.mrf.mxu0
    %v9601 = vadd.f32 %v9312, %v9600
    %v9602 = vpop.f32.mrf.mxu0
    %v9603 = vpop.f32.mrf.mxu0
    %v9604 = vadd.f32 %v9315, %v9603
    %v9605 = vpop.f32.mrf.mxu0
    %9606 = vdwg.mxu0
    %v9607 = vmax.f32 %v8422, 0.0
    %v9608 = vmax.f32 %v8424, 0.0
    %v9609 = vmax.f32 %v9353, 0.0
    %v9610 = vmax.f32 %v8426, 0.0
    %v9611 = vmax.f32 %v8428, 0.0
    %v9612 = vmax.f32 %v9356, 0.0
    %v9613 = vmax.f32 %v8432, 0.0
    %v9614 = vmax.f32 %v8434, 0.0
    %v9615 = vmax.f32 %v9361, 0.0
    %v9616 = vmax.f32 %v8436, 0.0
    %v9617 = vmax.f32 %v8438, 0.0
    %v9618 = vmax.f32 %v9364, 0.0
    %v9619 = vmax.f32 %v8442, 0.0
    %v9620 = vmax.f32 %v8444, 0.0
    %v9621 = vmax.f32 %v9369, 0.0
    %v9622 = vmax.f32 %v8446, 0.0
    %v9623 = vmax.f32 %v8448, 0.0
    %v9624 = vmax.f32 %v9372, 0.0
    %v9625 = vmax.f32 %v8452, 0.0
    %v9626 = vmax.f32 %v8454, 0.0
    %v9627 = vmax.f32 %v9377, 0.0
    %v9628 = vmax.f32 %v8456, 0.0
    %v9629 = vmax.f32 %v8458, 0.0
    %v9630 = vmax.f32 %v9380, 0.0
    %v9631 = vmax.f32 %v8462, 0.0
    %v9632 = vmax.f32 %v8464, 0.0
    %v9633 = vmax.f32 %v9385, 0.0
    %v9634 = vmax.f32 %v8466, 0.0
    %v9635 = vmax.f32 %v8468, 0.0
    %v9636 = vmax.f32 %v9388, 0.0
    %v9637 = vmax.f32 %v8472, 0.0
    %v9638 = vmax.f32 %v8474, 0.0
    %v9639 = vmax.f32 %v9393, 0.0
    %v9640 = vmax.f32 %v8476, 0.0
    %v9641 = vmax.f32 %v8478, 0.0
    %v9642 = vmax.f32 %v9396, 0.0
    %v9643 = vmax.f32 %v8482, 0.0
    %v9644 = vmax.f32 %v8484, 0.0
    %v9645 = vmax.f32 %v9401, 0.0
    %v9646 = vmax.f32 %v8486, 0.0
    %v9647 = vmax.f32 %v8488, 0.0
    %v9648 = vmax.f32 %v9404, 0.0
    %v9649 = vmax.f32 %v8492, 0.0
    %v9650 = vmax.f32 %v8494, 0.0
    %v9651 = vmax.f32 %v9409, 0.0
    %v9652 = vmax.f32 %v8496, 0.0
    %v9653 = vmax.f32 %v8498, 0.0
    %v9654 = vmax.f32 %v9412, 0.0
    %v9655 = vmax.f32 %v8502, 0.0
    %v9656 = vmax.f32 %v8504, 0.0
    %v9657 = vmax.f32 %v9417, 0.0
    %v9658 = vmax.f32 %v8506, 0.0
    %v9659 = vmax.f32 %v8508, 0.0
    %v9660 = vmax.f32 %v9420, 0.0
    %v9661 = vmax.f32 %v8512, 0.0
    %v9662 = vmax.f32 %v8514, 0.0
    %v9663 = vmax.f32 %v9425, 0.0
    %v9664 = vmax.f32 %v8516, 0.0
    %v9665 = vmax.f32 %v8518, 0.0
    %v9666 = vmax.f32 %v9428, 0.0
    %v9667 = vmax.f32 %v8522, 0.0
    %v9668 = vmax.f32 %v8524, 0.0
    %v9669 = vmax.f32 %v9433, 0.0
    %v9670 = vmax.f32 %v8526, 0.0
    %v9671 = vmax.f32 %v8528, 0.0
    %v9672 = vmax.f32 %v9436, 0.0
    %v9673 = vmax.f32 %v8532, 0.0
    %v9674 = vmax.f32 %v8534, 0.0
    %v9675 = vmax.f32 %v9441, 0.0
    %v9676 = vmax.f32 %v8536, 0.0
    %v9677 = vmax.f32 %v8538, 0.0
    %v9678 = vmax.f32 %v9444, 0.0
    %v9679 = vmax.f32 %v8542, 0.0
    %v9680 = vmax.f32 %v8544, 0.0
    %v9681 = vmax.f32 %v9449, 0.0
    %v9682 = vmax.f32 %v8546, 0.0
    %v9683 = vmax.f32 %v8548, 0.0
    %v9684 = vmax.f32 %v9452, 0.0
    %v9685 = vmax.f32 %v8552, 0.0
    %v9686 = vmax.f32 %v8554, 0.0
    %v9687 = vmax.f32 %v9457, 0.0
    %v9688 = vmax.f32 %v8556, 0.0
    %v9689 = vmax.f32 %v8558, 0.0
    %v9690 = vmax.f32 %v9460, 0.0
    %v9691 = vmax.f32 %v8562, 0.0
    %v9692 = vmax.f32 %v8564, 0.0
    %v9693 = vmax.f32 %v9465, 0.0
    %v9694 = vmax.f32 %v8566, 0.0
    %v9695 = vmax.f32 %v8568, 0.0
    %v9696 = vmax.f32 %v9468, 0.0
    %v9697 = vmax.f32 %v8572, 0.0
    %v9698 = vmax.f32 %v8574, 0.0
    %v9699 = vmax.f32 %v9473, 0.0
    %v9700 = vmax.f32 %v8576, 0.0
    %v9701 = vmax.f32 %v8578, 0.0
    %v9702 = vmax.f32 %v9476, 0.0
    %v9703 = vmax.f32 %v8582, 0.0
    %v9704 = vmax.f32 %v8584, 0.0
    %v9705 = vmax.f32 %v9481, 0.0
    %v9706 = vmax.f32 %v8586, 0.0
    %v9707 = vmax.f32 %v8588, 0.0
    %v9708 = vmax.f32 %v9484, 0.0
    %v9709 = vmax.f32 %v8592, 0.0
    %v9710 = vmax.f32 %v8594, 0.0
    %v9711 = vmax.f32 %v9489, 0.0
    %v9712 = vmax.f32 %v8596, 0.0
    %v9713 = vmax.f32 %v8598, 0.0
    %v9714 = vmax.f32 %v9492, 0.0
    %v9715 = vmax.f32 %v8602, 0.0
    %v9716 = vmax.f32 %v8604, 0.0
    %v9717 = vmax.f32 %v9497, 0.0
    %v9718 = vmax.f32 %v8606, 0.0
    %v9719 = vmax.f32 %v8608, 0.0
    %v9720 = vmax.f32 %v9500, 0.0
    %v9721 = vmax.f32 %v8612, 0.0
    %v9722 = vmax.f32 %v8614, 0.0
    %v9723 = vmax.f32 %v9505, 0.0
    %v9724 = vmax.f32 %v8616, 0.0
    %v9725 = vmax.f32 %v8618, 0.0
    %v9726 = vmax.f32 %v9508, 0.0
    %v9727 = vmax.f32 %v8622, 0.0
    %v9728 = vmax.f32 %v8624, 0.0
    %v9729 = vmax.f32 %v9513, 0.0
    %v9730 = vmax.f32 %v8626, 0.0
    %v9731 = vmax.f32 %v8628, 0.0
    %v9732 = vmax.f32 %v9516, 0.0
    %v9733 = vmax.f32 %v8632, 0.0
    %v9734 = vmax.f32 %v8634, 0.0
    %v9735 = vmax.f32 %v9521, 0.0
    %v9736 = vmax.f32 %v8636, 0.0
    %v9737 = vmax.f32 %v8638, 0.0
    %v9738 = vmax.f32 %v9524, 0.0
    %v9739 = vmax.f32 %v8642, 0.0
    %v9740 = vmax.f32 %v8644, 0.0
    %v9741 = vmax.f32 %v9529, 0.0
    %v9742 = vmax.f32 %v8646, 0.0
    %v9743 = vmax.f32 %v8648, 0.0
    %v9744 = vmax.f32 %v9532, 0.0
    %v9745 = vmax.f32 %v8652, 0.0
    %v9746 = vmax.f32 %v8654, 0.0
    %v9747 = vmax.f32 %v9537, 0.0
    %v9748 = vmax.f32 %v8656, 0.0
    %v9749 = vmax.f32 %v8658, 0.0
    %v9750 = vmax.f32 %v9540, 0.0
    %v9751 = vmax.f32 %v8662, 0.0
    %v9752 = vmax.f32 %v8664, 0.0
    %v9753 = vmax.f32 %v9545, 0.0
    %v9754 = vmax.f32 %v8666, 0.0
    %v9755 = vmax.f32 %v8668, 0.0
    %v9756 = vmax.f32 %v9548, 0.0
    %v9757 = vmax.f32 %v8672, 0.0
    %v9758 = vmax.f32 %v8674, 0.0
    %v9759 = vmax.f32 %v9553, 0.0
    %v9760 = vmax.f32 %v8676, 0.0
    %v9761 = vmax.f32 %v8678, 0.0
    %v9762 = vmax.f32 %v9556, 0.0
    %v9763 = vmax.f32 %v8682, 0.0
    %v9764 = vmax.f32 %v8684, 0.0
    %v9765 = vmax.f32 %v9561, 0.0
    %v9766 = vmax.f32 %v8686, 0.0
    %v9767 = vmax.f32 %v8688, 0.0
    %v9768 = vmax.f32 %v9564, 0.0
    %v9769 = vmax.f32 %v8692, 0.0
    %v9770 = vmax.f32 %v8694, 0.0
    %v9771 = vmax.f32 %v9569, 0.0
    %v9772 = vmax.f32 %v8696, 0.0
    %v9773 = vmax.f32 %v8698, 0.0
    %v9774 = vmax.f32 %v9572, 0.0
    %v9775 = vmax.f32 %v8702, 0.0
    %v9776 = vmax.f32 %v8704, 0.0
    %v9777 = vmax.f32 %v9577, 0.0
    %v9778 = vmax.f32 %v8706, 0.0
    %v9779 = vmax.f32 %v8708, 0.0
    %v9780 = vmax.f32 %v9580, 0.0
    %v9781 = vmax.f32 %v8712, 0.0
    %v9782 = vmax.f32 %v8714, 0.0
    %v9783 = vmax.f32 %v9585, 0.0
    %v9784 = vmax.f32 %v8716, 0.0
    %v9785 = vmax.f32 %v8718, 0.0
    %v9786 = vmax.f32 %v9588, 0.0
    %v9787 = vmax.f32 %v8722, 0.0
    %v9788 = vmax.f32 %v8724, 0.0
    %v9789 = vmax.f32 %v9593, 0.0
    %v9790 = vmax.f32 %v8726, 0.0
    %v9791 = vmax.f32 %v8728, 0.0
    %v9792 = vmax.f32 %v9596, 0.0
    %v9793 = vmax.f32 %v8732, 0.0
    %v9794 = vmax.f32 %v8734, 0.0
    %v9795 = vmax.f32 %v9601, 0.0
    %v9796 = vmax.f32 %v8736, 0.0
    %v9797 = vmax.f32 %v8738, 0.0
    %v9798 = vmax.f32 %v9604, 0.0
    %v9799 = vpack.c.bf16 %v9610, %v9607
    %v9800 = vpack.c.bf16 %v9611, %v9608
    %v9801 = vpack.c.bf16 %v9612, %v9609
    %v9802 = vpack.c.bf16 %v9616, %v9613
    %v9803 = vpack.c.bf16 %v9617, %v9614
    %v9804 = vpack.c.bf16 %v9618, %v9615
    %v9805 = vpack.c.bf16 %v9622, %v9619
    %v9806 = vpack.c.bf16 %v9623, %v9620
    %v9807 = vpack.c.bf16 %v9624, %v9621
    %v9808 = vpack.c.bf16 %v9628, %v9625
    %v9809 = vpack.c.bf16 %v9629, %v9626
    %v9810 = vpack.c.bf16 %v9630, %v9627
    %v9811 = vpack.c.bf16 %v9634, %v9631
    %v9812 = vpack.c.bf16 %v9635, %v9632
    %v9813 = vpack.c.bf16 %v9636, %v9633
    %v9814 = vpack.c.bf16 %v9640, %v9637
    %v9815 = vpack.c.bf16 %v9641, %v9638
    %v9816 = vpack.c.bf16 %v9642, %v9639
    %v9817 = vpack.c.bf16 %v9646, %v9643
    %v9818 = vpack.c.bf16 %v9647, %v9644
    %v9819 = vpack.c.bf16 %v9648, %v9645
    %v9820 = vpack.c.bf16 %v9652, %v9649
    %v9821 = vpack.c.bf16 %v9653, %v9650
    %v9822 = vpack.c.bf16 %v9654, %v9651
    %v9823 = vpack.c.bf16 %v9658, %v9655
    %v9824 = vpack.c.bf16 %v9659, %v9656
    %v9825 = vpack.c.bf16 %v9660, %v9657
    %v9826 = vpack.c.bf16 %v9664, %v9661
    %v9827 = vpack.c.bf16 %v9665, %v9662
    %v9828 = vpack.c.bf16 %v9666, %v9663
    %v9829 = vpack.c.bf16 %v9670, %v9667
    %v9830 = vpack.c.bf16 %v9671, %v9668
    %v9831 = vpack.c.bf16 %v9672, %v9669
    %v9832 = vpack.c.bf16 %v9676, %v9673
    %v9833 = vpack.c.bf16 %v9677, %v9674
    %v9834 = vpack.c.bf16 %v9678, %v9675
    %v9835 = vpack.c.bf16 %v9682, %v9679
    %v9836 = vpack.c.bf16 %v9683, %v9680
    %v9837 = vpack.c.bf16 %v9684, %v9681
    %v9838 = vpack.c.bf16 %v9688, %v9685
    %v9839 = vpack.c.bf16 %v9689, %v9686
    %v9840 = vpack.c.bf16 %v9690, %v9687
    %v9841 = vpack.c.bf16 %v9694, %v9691
    %v9842 = vpack.c.bf16 %v9695, %v9692
    %v9843 = vpack.c.bf16 %v9696, %v9693
    %v9844 = vpack.c.bf16 %v9700, %v9697
    %v9845 = vpack.c.bf16 %v9701, %v9698
    %v9846 = vpack.c.bf16 %v9702, %v9699
    %v9847 = vpack.c.bf16 %v9706, %v9703
    %v9848 = vpack.c.bf16 %v9707, %v9704
    %v9849 = vpack.c.bf16 %v9708, %v9705
    %v9850 = vpack.c.bf16 %v9712, %v9709
    %v9851 = vpack.c.bf16 %v9713, %v9710
    %v9852 = vpack.c.bf16 %v9714, %v9711
    %v9853 = vpack.c.bf16 %v9718, %v9715
    %v9854 = vpack.c.bf16 %v9719, %v9716
    %v9855 = vpack.c.bf16 %v9720, %v9717
    %v9856 = vpack.c.bf16 %v9724, %v9721
    %v9857 = vpack.c.bf16 %v9725, %v9722
    %v9858 = vpack.c.bf16 %v9726, %v9723
    %v9859 = vpack.c.bf16 %v9730, %v9727
    %v9860 = vpack.c.bf16 %v9731, %v9728
    %v9861 = vpack.c.bf16 %v9732, %v9729
    %v9862 = vpack.c.bf16 %v9736, %v9733
    %v9863 = vpack.c.bf16 %v9737, %v9734
    %v9864 = vpack.c.bf16 %v9738, %v9735
    %v9865 = vpack.c.bf16 %v9742, %v9739
    %v9866 = vpack.c.bf16 %v9743, %v9740
    %v9867 = vpack.c.bf16 %v9744, %v9741
    %v9868 = vpack.c.bf16 %v9748, %v9745
    %v9869 = vpack.c.bf16 %v9749, %v9746
    %v9870 = vpack.c.bf16 %v9750, %v9747
    %v9871 = vpack.c.bf16 %v9754, %v9751
    %v9872 = vpack.c.bf16 %v9755, %v9752
    %v9873 = vpack.c.bf16 %v9756, %v9753
    %v9874 = vpack.c.bf16 %v9760, %v9757
    %v9875 = vpack.c.bf16 %v9761, %v9758
    %v9876 = vpack.c.bf16 %v9762, %v9759
    %v9877 = vpack.c.bf16 %v9766, %v9763
    %v9878 = vpack.c.bf16 %v9767, %v9764
    %v9879 = vpack.c.bf16 %v9768, %v9765
    %v9880 = vpack.c.bf16 %v9772, %v9769
    %v9881 = vpack.c.bf16 %v9773, %v9770
    %v9882 = vpack.c.bf16 %v9774, %v9771
    %v9883 = vpack.c.bf16 %v9778, %v9775
    %v9884 = vpack.c.bf16 %v9779, %v9776
    %v9885 = vpack.c.bf16 %v9780, %v9777
    %v9886 = vpack.c.bf16 %v9784, %v9781
    %v9887 = vpack.c.bf16 %v9785, %v9782
    %v9888 = vpack.c.bf16 %v9786, %v9783
    %v9889 = vpack.c.bf16 %v9790, %v9787
    %v9890 = vpack.c.bf16 %v9791, %v9788
    %v9891 = vpack.c.bf16 %v9792, %v9789
    %v9892 = vpack.c.bf16 %v9796, %v9793
    %v9893 = vpack.c.bf16 %v9797, %v9794
    %v9894 = vpack.c.bf16 %v9798, %v9795
    %v9895 = vld [vmem:[%s5] sm:$0xff]
    %v9896 = vld [vmem:[%s5 + $0x8] sm:$0xff]
    %v9897 = vld [vmem:[%s5 + $0x10] sm:$0xff]
    %v9898 = vld [vmem:[%s5 + $0x18] sm:$0xff]
    %v9899 = vld [vmem:[%s5 + $0x20] sm:$0xff]
    %v9900 = vld [vmem:[%s5 + $0x28] sm:$0xff]
    %v9901 = vld [vmem:[%s5 + $0x30] sm:$0xff]
    %v9902 = vld [vmem:[%s5 + $0x38] sm:$0xff]
    %v9903 = vld [vmem:[%s5 + $0x40] sm:$0xff]
    %v9904 = vld [vmem:[%s5 + $0x48] sm:$0xff]
    %v9905 = vld [vmem:[%s5 + $0x50] sm:$0xff]
    %v9906 = vld [vmem:[%s5 + $0x58] sm:$0xff]
    %v9907 = vld [vmem:[%s5 + $0x60] sm:$0xff]
    %v9908 = vld [vmem:[%s5 + $0x68] sm:$0xff]
    %v9909 = vld [vmem:[%s5 + $0x70] sm:$0xff]
    %v9910 = vld [vmem:[%s5 + $0x78] sm:$0xff]
    %v9911 = vld [vmem:[%s5 + $0x80] sm:$0xff]
    %v9912 = vld [vmem:[%s5 + $0x88] sm:$0xff]
    %v9913 = vld [vmem:[%s5 + $0x90] sm:$0xff]
    %v9914 = vld [vmem:[%s5 + $0x98] sm:$0xff]
    %v9915 = vld [vmem:[%s5 + $0xa0] sm:$0xff]
    %v9916 = vld [vmem:[%s5 + $0xa8] sm:$0xff]
    %v9917 = vld [vmem:[%s5 + $0xb0] sm:$0xff]
    %v9918 = vld [vmem:[%s5 + $0xb8] sm:$0xff]
    %v9919 = vld [vmem:[%s5 + $0xc0] sm:$0xff]
    %v9920 = vld [vmem:[%s5 + $0xc8] sm:$0xff]
    %v9921 = vld [vmem:[%s5 + $0xd0] sm:$0xff]
    %v9922 = vld [vmem:[%s5 + $0xd8] sm:$0xff]
    %v9923 = vld [vmem:[%s5 + $0xe0] sm:$0xff]
    %v9924 = vld [vmem:[%s5 + $0xe8] sm:$0xff]
    %v9925 = vld [vmem:[%s5 + $0xf0] sm:$0xff]
    %v9926 = vld [vmem:[%s5 + $0xf8] sm:$0xff]
    %v9927 = vld [vmem:[%s5 + $0x100] sm:$0xff]
    %v9928 = vld [vmem:[%s5 + $0x108] sm:$0xff]
    %v9929 = vld [vmem:[%s5 + $0x110] sm:$0xff]
    %v9930 = vld [vmem:[%s5 + $0x118] sm:$0xff]
    %v9931 = vld [vmem:[%s5 + $0x120] sm:$0xff]
    %v9932 = vld [vmem:[%s5 + $0x128] sm:$0xff]
    %v9933 = vld [vmem:[%s5 + $0x130] sm:$0xff]
    %v9934 = vld [vmem:[%s5 + $0x138] sm:$0xff]
    %v9935 = vld [vmem:[%s5 + $0x140] sm:$0xff]
    %v9936 = vld [vmem:[%s5 + $0x148] sm:$0xff]
    %v9937 = vld [vmem:[%s5 + $0x150] sm:$0xff]
    %v9938 = vld [vmem:[%s5 + $0x158] sm:$0xff]
    %v9939 = vld [vmem:[%s5 + $0x160] sm:$0xff]
    %v9940 = vld [vmem:[%s5 + $0x168] sm:$0xff]
    %v9941 = vld [vmem:[%s5 + $0x170] sm:$0xff]
    %v9942 = vld [vmem:[%s5 + $0x178] sm:$0xff]
    %v9943 = vld [vmem:[%s6] sm:$0x3]
    %v9945 = vlaneseq
    %v9946 = vshrl.u32 %v9945, 7
    %v9947 = vsub.s32 0, %v9946
    %v9948 = vrot.slane %v9943, %v9947
    %v9949 = vlaneseq
    %v9950 = vshrl.u32 %v9949, 7
    %v9951 = vsub.s32 1, %v9950
    %v9952 = vrot.slane %v9943, %v9951
    %v10003 = vunpack.c.l.b16 %v9895
    %v10004 = vunpack.c.h.b16 %v9895
    %v10005 = vunpack.c.l.b16 %v9896
    %v10006 = vunpack.c.h.b16 %v9896
    %v10007 = vunpack.c.l.b16 %v9897
    %v10008 = vunpack.c.h.b16 %v9897
    %v10009 = vunpack.c.l.b16 %v9898
    %v10010 = vunpack.c.h.b16 %v9898
    %v10011 = vunpack.c.l.b16 %v9899
    %v10012 = vunpack.c.h.b16 %v9899
    %v10013 = vunpack.c.l.b16 %v9900
    %v10014 = vunpack.c.h.b16 %v9900
    %v10015 = vunpack.c.l.b16 %v9901
    %v10016 = vunpack.c.h.b16 %v9901
    %v10017 = vunpack.c.l.b16 %v9902
    %v10018 = vunpack.c.h.b16 %v9902
    %v10019 = vunpack.c.l.b16 %v9903
    %v10020 = vunpack.c.h.b16 %v9903
    %v10021 = vunpack.c.l.b16 %v9904
    %v10022 = vunpack.c.h.b16 %v9904
    %v10023 = vunpack.c.l.b16 %v9905
    %v10024 = vunpack.c.h.b16 %v9905
    %v10025 = vunpack.c.l.b16 %v9906
    %v10026 = vunpack.c.h.b16 %v9906
    %v10027 = vunpack.c.l.b16 %v9907
    %v10028 = vunpack.c.h.b16 %v9907
    %v10029 = vunpack.c.l.b16 %v9908
    %v10030 = vunpack.c.h.b16 %v9908
    %v10031 = vunpack.c.l.b16 %v9909
    %v10032 = vunpack.c.h.b16 %v9909
    %v10033 = vunpack.c.l.b16 %v9910
    %v10034 = vunpack.c.h.b16 %v9910
    %v10035 = vunpack.c.l.b16 %v9911
    %v10036 = vunpack.c.h.b16 %v9911
    %v10037 = vunpack.c.l.b16 %v9912
    %v10038 = vunpack.c.h.b16 %v9912
    %v10039 = vunpack.c.l.b16 %v9913
    %v10040 = vunpack.c.h.b16 %v9913
    %v10041 = vunpack.c.l.b16 %v9914
    %v10042 = vunpack.c.h.b16 %v9914
    %v10043 = vunpack.c.l.b16 %v9915
    %v10044 = vunpack.c.h.b16 %v9915
    %v10045 = vunpack.c.l.b16 %v9916
    %v10046 = vunpack.c.h.b16 %v9916
    %v10047 = vunpack.c.l.b16 %v9917
    %v10048 = vunpack.c.h.b16 %v9917
    %v10049 = vunpack.c.l.b16 %v9918
    %v10050 = vunpack.c.h.b16 %v9918
    %v10051 = vunpack.c.l.b16 %v9919
    %v10052 = vunpack.c.h.b16 %v9919
    %v10053 = vunpack.c.l.b16 %v9920
    %v10054 = vunpack.c.h.b16 %v9920
    %v10055 = vunpack.c.l.b16 %v9921
    %v10056 = vunpack.c.h.b16 %v9921
    %v10057 = vunpack.c.l.b16 %v9922
    %v10058 = vunpack.c.h.b16 %v9922
    %v10059 = vunpack.c.l.b16 %v9923
    %v10060 = vunpack.c.h.b16 %v9923
    %v10061 = vunpack.c.l.b16 %v9924
    %v10062 = vunpack.c.h.b16 %v9924
    %v10063 = vunpack.c.l.b16 %v9925
    %v10064 = vunpack.c.h.b16 %v9925
    %v10065 = vunpack.c.l.b16 %v9926
    %v10066 = vunpack.c.h.b16 %v9926
    %v10067 = vunpack.c.l.b16 %v9927
    %v10068 = vunpack.c.h.b16 %v9927
    %v10069 = vunpack.c.l.b16 %v9928
    %v10070 = vunpack.c.h.b16 %v9928
    %v10071 = vunpack.c.l.b16 %v9929
    %v10072 = vunpack.c.h.b16 %v9929
    %v10073 = vunpack.c.l.b16 %v9930
    %v10074 = vunpack.c.h.b16 %v9930
    %v10075 = vunpack.c.l.b16 %v9931
    %v10076 = vunpack.c.h.b16 %v9931
    %v10077 = vunpack.c.l.b16 %v9932
    %v10078 = vunpack.c.h.b16 %v9932
    %v10079 = vunpack.c.l.b16 %v9933
    %v10080 = vunpack.c.h.b16 %v9933
    %v10081 = vunpack.c.l.b16 %v9934
    %v10082 = vunpack.c.h.b16 %v9934
    %v10083 = vunpack.c.l.b16 %v9935
    %v10084 = vunpack.c.h.b16 %v9935
    %v10085 = vunpack.c.l.b16 %v9936
    %v10086 = vunpack.c.h.b16 %v9936
    %v10087 = vunpack.c.l.b16 %v9937
    %v10088 = vunpack.c.h.b16 %v9937
    %v10089 = vunpack.c.l.b16 %v9938
    %v10090 = vunpack.c.h.b16 %v9938
    %v10091 = vunpack.c.l.b16 %v9939
    %v10092 = vunpack.c.h.b16 %v9939
    %v10093 = vunpack.c.l.b16 %v9940
    %v10094 = vunpack.c.h.b16 %v9940
    %v10095 = vunpack.c.l.b16 %v9941
    %v10096 = vunpack.c.h.b16 %v9941
    %v10097 = vunpack.c.l.b16 %v9942
    %v10098 = vunpack.c.h.b16 %v9942
    %v10099 = vpack.c.b16 %v10005, %v10003
    %v10100 = vpack.c.b16 %v10006, %v10004
    %v10101 = vpack.c.b16 %v10009, %v10007
    %v10102 = vpack.c.b16 %v10010, %v10008
    %v10103 = vpack.c.b16 %v10013, %v10011
    %v10104 = vpack.c.b16 %v10014, %v10012
    %v10105 = vpack.c.b16 %v10017, %v10015
    %v10106 = vpack.c.b16 %v10018, %v10016
    %v10107 = vpack.c.b16 %v10021, %v10019
    %v10108 = vpack.c.b16 %v10022, %v10020
    %v10109 = vpack.c.b16 %v10025, %v10023
    %v10110 = vpack.c.b16 %v10026, %v10024
    %v10111 = vpack.c.b16 %v10029, %v10027
    %v10112 = vpack.c.b16 %v10030, %v10028
    %v10113 = vpack.c.b16 %v10033, %v10031
    %v10114 = vpack.c.b16 %v10034, %v10032
    %v10115 = vpack.c.b16 %v10037, %v10035
    %v10116 = vpack.c.b16 %v10038, %v10036
    %v10117 = vpack.c.b16 %v10041, %v10039
    %v10118 = vpack.c.b16 %v10042, %v10040
    %v10119 = vpack.c.b16 %v10045, %v10043
    %v10120 = vpack.c.b16 %v10046, %v10044
    %v10121 = vpack.c.b16 %v10049, %v10047
    %v10122 = vpack.c.b16 %v10050, %v10048
    %v10123 = vpack.c.b16 %v10053, %v10051
    %v10124 = vpack.c.b16 %v10054, %v10052
    %v10125 = vpack.c.b16 %v10057, %v10055
    %v10126 = vpack.c.b16 %v10058, %v10056
    %v10127 = vpack.c.b16 %v10061, %v10059
    %v10128 = vpack.c.b16 %v10062, %v10060
    %v10129 = vpack.c.b16 %v10065, %v10063
    %v10130 = vpack.c.b16 %v10066, %v10064
    %v10131 = vpack.c.b16 %v10069, %v10067
    %v10132 = vpack.c.b16 %v10070, %v10068
    %v10133 = vpack.c.b16 %v10073, %v10071
    %v10134 = vpack.c.b16 %v10074, %v10072
    %v10135 = vpack.c.b16 %v10077, %v10075
    %v10136 = vpack.c.b16 %v10078, %v10076
    %v10137 = vpack.c.b16 %v10081, %v10079
    %v10138 = vpack.c.b16 %v10082, %v10080
    %v10139 = vpack.c.b16 %v10085, %v10083
    %v10140 = vpack.c.b16 %v10086, %v10084
    %v10141 = vpack.c.b16 %v10089, %v10087
    %v10142 = vpack.c.b16 %v10090, %v10088
    %v10143 = vpack.c.b16 %v10093, %v10091
    %v10144 = vpack.c.b16 %v10094, %v10092
    %v10145 = vpack.c.b16 %v10097, %v10095
    %v10146 = vpack.c.b16 %v10098, %v10096
    %10195 = vmatprep.subr.bf16.mxu0 %v10114
    %10196 = vmatpush1.bf16.msra.mxu0 %v10113
    %10197 = vmatprep.subr.bf16.mxu0 %v10112
    %10198 = vmatpush1.bf16.msra.mxu0 %v10111
    %10199 = vmatprep.subr.bf16.mxu0 %v10110
    %10200 = vmatpush1.bf16.msra.mxu0 %v10109
    %10201 = vmatprep.subr.bf16.mxu0 %v10108
    %10202 = vmatpush1.bf16.msra.mxu0 %v10107
    %10203 = vmatprep.subr.bf16.mxu0 %v10106
    %10204 = vmatpush1.bf16.msra.mxu0 %v10105
    %10205 = vmatprep.subr.bf16.mxu0 %v10104
    %10206 = vmatpush1.bf16.msra.mxu0 %v10103
    %10207 = vmatprep.subr.bf16.mxu0 %v10102
    %10208 = vmatpush1.bf16.msra.mxu0 %v10101
    %10209 = vmatprep.subr.bf16.mxu0 %v10100
    %10210 = vmatpush1.bf16.msra.mxu0 %v10099
    %10211 = vmatprep.subr.bf16.mxu0 %v10130
    %10212 = vmatpush2.bf16.msra.mxu0 %v10129
    %10213 = vmatprep.subr.bf16.mxu0 %v10128
    %10214 = vmatpush2.bf16.msra.mxu0 %v10127
    %10215 = vmatprep.subr.bf16.mxu0 %v10126
    %10216 = vmatpush2.bf16.msra.mxu0 %v10125
    %10217 = vmatprep.subr.bf16.mxu0 %v10124
    %10218 = vmatpush2.bf16.msra.mxu0 %v10123
    %10219 = vmatprep.subr.bf16.mxu0 %v10122
    %10220 = vmatpush2.bf16.msra.mxu0 %v10121
    %10221 = vmatprep.subr.bf16.mxu0 %v10120
    %10222 = vmatpush2.bf16.msra.mxu0 %v10119
    %10223 = vmatprep.subr.bf16.mxu0 %v10118
    %10224 = vmatpush2.bf16.msra.mxu0 %v10117
    %10225 = vmatprep.subr.bf16.mxu0 %v10116
    %10226 = vmatpush2.bf16.msra.mxu0 %v10115
    %10227 = vmatprep.mubr.bf16.mxu0 %v9800
    %10228 = vmatmul.mubr.bf16.gmra.mxu0 %v9799
    %v10229 = vpop.f32.mrf.mxu0
    %v10230 = vadd.f32 %v9948, %v10229
    %v10231 = vpop.f32.mrf.mxu0
    %v10232 = vadd.f32 %v9952, %v10231
    %v10233 = vpop.f32.mrf.mxu0
    %v10234 = vadd.f32 %v9948, %v10233
    %v10235 = vpop.f32.mrf.mxu0
    %v10236 = vadd.f32 %v9952, %v10235
    %10237 = vmatprep.mubr.bf16.mxu0 %v9803
    %10238 = vmatmul.mubr.bf16.gmra.mxu0 %v9802
    %v10239 = vpop.f32.mrf.mxu0
    %v10240 = vadd.f32 %v9948, %v10239
    %v10241 = vpop.f32.mrf.mxu0
    %v10242 = vadd.f32 %v9952, %v10241
    %v10243 = vpop.f32.mrf.mxu0
    %v10244 = vadd.f32 %v9948, %v10243
    %v10245 = vpop.f32.mrf.mxu0
    %v10246 = vadd.f32 %v9952, %v10245
    %10247 = vmatprep.mubr.bf16.mxu0 %v9806
    %10248 = vmatmul.mubr.bf16.gmra.mxu0 %v9805
    %v10249 = vpop.f32.mrf.mxu0
    %v10250 = vadd.f32 %v9948, %v10249
    %v10251 = vpop.f32.mrf.mxu0
    %v10252 = vadd.f32 %v9952, %v10251
    %v10253 = vpop.f32.mrf.mxu0
    %v10254 = vadd.f32 %v9948, %v10253
    %v10255 = vpop.f32.mrf.mxu0
    %v10256 = vadd.f32 %v9952, %v10255
    %10257 = vmatprep.mubr.bf16.mxu0 %v9809
    %10258 = vmatmul.mubr.bf16.gmra.mxu0 %v9808
    %v10259 = vpop.f32.mrf.mxu0
    %v10260 = vadd.f32 %v9948, %v10259
    %v10261 = vpop.f32.mrf.mxu0
    %v10262 = vadd.f32 %v9952, %v10261
    %v10263 = vpop.f32.mrf.mxu0
    %v10264 = vadd.f32 %v9948, %v10263
    %v10265 = vpop.f32.mrf.mxu0
    %v10266 = vadd.f32 %v9952, %v10265
    %10267 = vmatprep.mubr.bf16.mxu0 %v9812
    %10268 = vmatmul.mubr.bf16.gmra.mxu0 %v9811
    %v10269 = vpop.f32.mrf.mxu0
    %v10270 = vadd.f32 %v9948, %v10269
    %v10271 = vpop.f32.mrf.mxu0
    %v10272 = vadd.f32 %v9952, %v10271
    %v10273 = vpop.f32.mrf.mxu0
    %v10274 = vadd.f32 %v9948, %v10273
    %v10275 = vpop.f32.mrf.mxu0
    %v10276 = vadd.f32 %v9952, %v10275
    %10277 = vmatprep.mubr.bf16.mxu0 %v9815
    %10278 = vmatmul.mubr.bf16.gmra.mxu0 %v9814
    %v10279 = vpop.f32.mrf.mxu0
    %v10280 = vadd.f32 %v9948, %v10279
    %v10281 = vpop.f32.mrf.mxu0
    %v10282 = vadd.f32 %v9952, %v10281
    %v10283 = vpop.f32.mrf.mxu0
    %v10284 = vadd.f32 %v9948, %v10283
    %v10285 = vpop.f32.mrf.mxu0
    %v10286 = vadd.f32 %v9952, %v10285
    %10287 = vmatprep.mubr.bf16.mxu0 %v9818
    %10288 = vmatmul.mubr.bf16.gmra.mxu0 %v9817
    %v10289 = vpop.f32.mrf.mxu0
    %v10290 = vadd.f32 %v9948, %v10289
    %v10291 = vpop.f32.mrf.mxu0
    %v10292 = vadd.f32 %v9952, %v10291
    %v10293 = vpop.f32.mrf.mxu0
    %v10294 = vadd.f32 %v9948, %v10293
    %v10295 = vpop.f32.mrf.mxu0
    %v10296 = vadd.f32 %v9952, %v10295
    %10297 = vmatprep.mubr.bf16.mxu0 %v9821
    %10298 = vmatmul.mubr.bf16.gmra.mxu0 %v9820
    %v10299 = vpop.f32.mrf.mxu0
    %v10300 = vadd.f32 %v9948, %v10299
    %v10301 = vpop.f32.mrf.mxu0
    %v10302 = vadd.f32 %v9952, %v10301
    %v10303 = vpop.f32.mrf.mxu0
    %v10304 = vadd.f32 %v9948, %v10303
    %v10305 = vpop.f32.mrf.mxu0
    %v10306 = vadd.f32 %v9952, %v10305
    %10307 = vmatprep.mubr.bf16.mxu0 %v9824
    %10308 = vmatmul.mubr.bf16.gmra.mxu0 %v9823
    %v10309 = vpop.f32.mrf.mxu0
    %v10310 = vadd.f32 %v9948, %v10309
    %v10311 = vpop.f32.mrf.mxu0
    %v10312 = vadd.f32 %v9952, %v10311
    %v10313 = vpop.f32.mrf.mxu0
    %v10314 = vadd.f32 %v9948, %v10313
    %v10315 = vpop.f32.mrf.mxu0
    %v10316 = vadd.f32 %v9952, %v10315
    %10317 = vmatprep.mubr.bf16.mxu0 %v9827
    %10318 = vmatmul.mubr.bf16.gmra.mxu0 %v9826
    %v10319 = vpop.f32.mrf.mxu0
    %v10320 = vadd.f32 %v9948, %v10319
    %v10321 = vpop.f32.mrf.mxu0
    %v10322 = vadd.f32 %v9952, %v10321
    %v10323 = vpop.f32.mrf.mxu0
    %v10324 = vadd.f32 %v9948, %v10323
    %v10325 = vpop.f32.mrf.mxu0
    %v10326 = vadd.f32 %v9952, %v10325
    %10327 = vmatprep.mubr.bf16.mxu0 %v9830
    %10328 = vmatmul.mubr.bf16.gmra.mxu0 %v9829
    %v10329 = vpop.f32.mrf.mxu0
    %v10330 = vadd.f32 %v9948, %v10329
    %v10331 = vpop.f32.mrf.mxu0
    %v10332 = vadd.f32 %v9952, %v10331
    %v10333 = vpop.f32.mrf.mxu0
    %v10334 = vadd.f32 %v9948, %v10333
    %v10335 = vpop.f32.mrf.mxu0
    %v10336 = vadd.f32 %v9952, %v10335
    %10337 = vmatprep.mubr.bf16.mxu0 %v9833
    %10338 = vmatmul.mubr.bf16.gmra.mxu0 %v9832
    %v10339 = vpop.f32.mrf.mxu0
    %v10340 = vadd.f32 %v9948, %v10339
    %v10341 = vpop.f32.mrf.mxu0
    %v10342 = vadd.f32 %v9952, %v10341
    %v10343 = vpop.f32.mrf.mxu0
    %v10344 = vadd.f32 %v9948, %v10343
    %v10345 = vpop.f32.mrf.mxu0
    %v10346 = vadd.f32 %v9952, %v10345
    %10347 = vmatprep.mubr.bf16.mxu0 %v9836
    %10348 = vmatmul.mubr.bf16.gmra.mxu0 %v9835
    %v10349 = vpop.f32.mrf.mxu0
    %v10350 = vadd.f32 %v9948, %v10349
    %v10351 = vpop.f32.mrf.mxu0
    %v10352 = vadd.f32 %v9952, %v10351
    %v10353 = vpop.f32.mrf.mxu0
    %v10354 = vadd.f32 %v9948, %v10353
    %v10355 = vpop.f32.mrf.mxu0
    %v10356 = vadd.f32 %v9952, %v10355
    %10357 = vmatprep.mubr.bf16.mxu0 %v9839
    %10358 = vmatmul.mubr.bf16.gmra.mxu0 %v9838
    %v10359 = vpop.f32.mrf.mxu0
    %v10360 = vadd.f32 %v9948, %v10359
    %v10361 = vpop.f32.mrf.mxu0
    %v10362 = vadd.f32 %v9952, %v10361
    %v10363 = vpop.f32.mrf.mxu0
    %v10364 = vadd.f32 %v9948, %v10363
    %v10365 = vpop.f32.mrf.mxu0
    %v10366 = vadd.f32 %v9952, %v10365
    %10367 = vmatprep.mubr.bf16.mxu0 %v9842
    %10368 = vmatmul.mubr.bf16.gmra.mxu0 %v9841
    %v10369 = vpop.f32.mrf.mxu0
    %v10370 = vadd.f32 %v9948, %v10369
    %v10371 = vpop.f32.mrf.mxu0
    %v10372 = vadd.f32 %v9952, %v10371
    %v10373 = vpop.f32.mrf.mxu0
    %v10374 = vadd.f32 %v9948, %v10373
    %v10375 = vpop.f32.mrf.mxu0
    %v10376 = vadd.f32 %v9952, %v10375
    %10377 = vmatprep.mubr.bf16.mxu0 %v9845
    %10378 = vmatmul.mubr.bf16.gmra.mxu0 %v9844
    %v10379 = vpop.f32.mrf.mxu0
    %v10380 = vadd.f32 %v9948, %v10379
    %v10381 = vpop.f32.mrf.mxu0
    %v10382 = vadd.f32 %v9952, %v10381
    %v10383 = vpop.f32.mrf.mxu0
    %v10384 = vadd.f32 %v9948, %v10383
    %v10385 = vpop.f32.mrf.mxu0
    %v10386 = vadd.f32 %v9952, %v10385
    %10387 = vmatprep.mubr.bf16.mxu0 %v9848
    %10388 = vmatmul.mubr.bf16.gmra.mxu0 %v9847
    %v10389 = vpop.f32.mrf.mxu0
    %v10390 = vadd.f32 %v9948, %v10389
    %v10391 = vpop.f32.mrf.mxu0
    %v10392 = vadd.f32 %v9952, %v10391
    %v10393 = vpop.f32.mrf.mxu0
    %v10394 = vadd.f32 %v9948, %v10393
    %v10395 = vpop.f32.mrf.mxu0
    %v10396 = vadd.f32 %v9952, %v10395
    %10397 = vmatprep.mubr.bf16.mxu0 %v9851
    %10398 = vmatmul.mubr.bf16.gmra.mxu0 %v9850
    %v10399 = vpop.f32.mrf.mxu0
    %v10400 = vadd.f32 %v9948, %v10399
    %v10401 = vpop.f32.mrf.mxu0
    %v10402 = vadd.f32 %v9952, %v10401
    %v10403 = vpop.f32.mrf.mxu0
    %v10404 = vadd.f32 %v9948, %v10403
    %v10405 = vpop.f32.mrf.mxu0
    %v10406 = vadd.f32 %v9952, %v10405
    %10407 = vmatprep.mubr.bf16.mxu0 %v9854
    %10408 = vmatmul.mubr.bf16.gmra.mxu0 %v9853
    %v10409 = vpop.f32.mrf.mxu0
    %v10410 = vadd.f32 %v9948, %v10409
    %v10411 = vpop.f32.mrf.mxu0
    %v10412 = vadd.f32 %v9952, %v10411
    %v10413 = vpop.f32.mrf.mxu0
    %v10414 = vadd.f32 %v9948, %v10413
    %v10415 = vpop.f32.mrf.mxu0
    %v10416 = vadd.f32 %v9952, %v10415
    %10417 = vmatprep.mubr.bf16.mxu0 %v9857
    %10418 = vmatmul.mubr.bf16.gmra.mxu0 %v9856
    %v10419 = vpop.f32.mrf.mxu0
    %v10420 = vadd.f32 %v9948, %v10419
    %v10421 = vpop.f32.mrf.mxu0
    %v10422 = vadd.f32 %v9952, %v10421
    %v10423 = vpop.f32.mrf.mxu0
    %v10424 = vadd.f32 %v9948, %v10423
    %v10425 = vpop.f32.mrf.mxu0
    %v10426 = vadd.f32 %v9952, %v10425
    %10427 = vmatprep.mubr.bf16.mxu0 %v9860
    %10428 = vmatmul.mubr.bf16.gmra.mxu0 %v9859
    %v10429 = vpop.f32.mrf.mxu0
    %v10430 = vadd.f32 %v9948, %v10429
    %v10431 = vpop.f32.mrf.mxu0
    %v10432 = vadd.f32 %v9952, %v10431
    %v10433 = vpop.f32.mrf.mxu0
    %v10434 = vadd.f32 %v9948, %v10433
    %v10435 = vpop.f32.mrf.mxu0
    %v10436 = vadd.f32 %v9952, %v10435
    %10437 = vmatprep.mubr.bf16.mxu0 %v9863
    %10438 = vmatmul.mubr.bf16.gmra.mxu0 %v9862
    %v10439 = vpop.f32.mrf.mxu0
    %v10440 = vadd.f32 %v9948, %v10439
    %v10441 = vpop.f32.mrf.mxu0
    %v10442 = vadd.f32 %v9952, %v10441
    %v10443 = vpop.f32.mrf.mxu0
    %v10444 = vadd.f32 %v9948, %v10443
    %v10445 = vpop.f32.mrf.mxu0
    %v10446 = vadd.f32 %v9952, %v10445
    %10447 = vmatprep.mubr.bf16.mxu0 %v9866
    %10448 = vmatmul.mubr.bf16.gmra.mxu0 %v9865
    %v10449 = vpop.f32.mrf.mxu0
    %v10450 = vadd.f32 %v9948, %v10449
    %v10451 = vpop.f32.mrf.mxu0
    %v10452 = vadd.f32 %v9952, %v10451
    %v10453 = vpop.f32.mrf.mxu0
    %v10454 = vadd.f32 %v9948, %v10453
    %v10455 = vpop.f32.mrf.mxu0
    %v10456 = vadd.f32 %v9952, %v10455
    %10457 = vmatprep.mubr.bf16.mxu0 %v9869
    %10458 = vmatmul.mubr.bf16.gmra.mxu0 %v9868
    %v10459 = vpop.f32.mrf.mxu0
    %v10460 = vadd.f32 %v9948, %v10459
    %v10461 = vpop.f32.mrf.mxu0
    %v10462 = vadd.f32 %v9952, %v10461
    %v10463 = vpop.f32.mrf.mxu0
    %v10464 = vadd.f32 %v9948, %v10463
    %v10465 = vpop.f32.mrf.mxu0
    %v10466 = vadd.f32 %v9952, %v10465
    %10467 = vmatprep.mubr.bf16.mxu0 %v9872
    %10468 = vmatmul.mubr.bf16.gmra.mxu0 %v9871
    %v10469 = vpop.f32.mrf.mxu0
    %v10470 = vadd.f32 %v9948, %v10469
    %v10471 = vpop.f32.mrf.mxu0
    %v10472 = vadd.f32 %v9952, %v10471
    %v10473 = vpop.f32.mrf.mxu0
    %v10474 = vadd.f32 %v9948, %v10473
    %v10475 = vpop.f32.mrf.mxu0
    %v10476 = vadd.f32 %v9952, %v10475
    %10477 = vmatprep.mubr.bf16.mxu0 %v9875
    %10478 = vmatmul.mubr.bf16.gmra.mxu0 %v9874
    %v10479 = vpop.f32.mrf.mxu0
    %v10480 = vadd.f32 %v9948, %v10479
    %v10481 = vpop.f32.mrf.mxu0
    %v10482 = vadd.f32 %v9952, %v10481
    %v10483 = vpop.f32.mrf.mxu0
    %v10484 = vadd.f32 %v9948, %v10483
    %v10485 = vpop.f32.mrf.mxu0
    %v10486 = vadd.f32 %v9952, %v10485
    %10487 = vmatprep.mubr.bf16.mxu0 %v9878
    %10488 = vmatmul.mubr.bf16.gmra.mxu0 %v9877
    %v10489 = vpop.f32.mrf.mxu0
    %v10490 = vadd.f32 %v9948, %v10489
    %v10491 = vpop.f32.mrf.mxu0
    %v10492 = vadd.f32 %v9952, %v10491
    %v10493 = vpop.f32.mrf.mxu0
    %v10494 = vadd.f32 %v9948, %v10493
    %v10495 = vpop.f32.mrf.mxu0
    %v10496 = vadd.f32 %v9952, %v10495
    %10497 = vmatprep.mubr.bf16.mxu0 %v9881
    %10498 = vmatmul.mubr.bf16.gmra.mxu0 %v9880
    %v10499 = vpop.f32.mrf.mxu0
    %v10500 = vadd.f32 %v9948, %v10499
    %v10501 = vpop.f32.mrf.mxu0
    %v10502 = vadd.f32 %v9952, %v10501
    %v10503 = vpop.f32.mrf.mxu0
    %v10504 = vadd.f32 %v9948, %v10503
    %v10505 = vpop.f32.mrf.mxu0
    %v10506 = vadd.f32 %v9952, %v10505
    %10507 = vmatprep.mubr.bf16.mxu0 %v9884
    %10508 = vmatmul.mubr.bf16.gmra.mxu0 %v9883
    %v10509 = vpop.f32.mrf.mxu0
    %v10510 = vadd.f32 %v9948, %v10509
    %v10511 = vpop.f32.mrf.mxu0
    %v10512 = vadd.f32 %v9952, %v10511
    %v10513 = vpop.f32.mrf.mxu0
    %v10514 = vadd.f32 %v9948, %v10513
    %v10515 = vpop.f32.mrf.mxu0
    %v10516 = vadd.f32 %v9952, %v10515
    %10517 = vmatprep.mubr.bf16.mxu0 %v9887
    %10518 = vmatmul.mubr.bf16.gmra.mxu0 %v9886
    %v10519 = vpop.f32.mrf.mxu0
    %v10520 = vadd.f32 %v9948, %v10519
    %v10521 = vpop.f32.mrf.mxu0
    %v10522 = vadd.f32 %v9952, %v10521
    %v10523 = vpop.f32.mrf.mxu0
    %v10524 = vadd.f32 %v9948, %v10523
    %v10525 = vpop.f32.mrf.mxu0
    %v10526 = vadd.f32 %v9952, %v10525
    %10527 = vmatprep.mubr.bf16.mxu0 %v9890
    %10528 = vmatmul.mubr.bf16.gmra.mxu0 %v9889
    %v10529 = vpop.f32.mrf.mxu0
    %v10530 = vadd.f32 %v9948, %v10529
    %v10531 = vpop.f32.mrf.mxu0
    %v10532 = vadd.f32 %v9952, %v10531
    %v10533 = vpop.f32.mrf.mxu0
    %v10534 = vadd.f32 %v9948, %v10533
    %v10535 = vpop.f32.mrf.mxu0
    %v10536 = vadd.f32 %v9952, %v10535
    %10537 = vmatprep.mubr.bf16.mxu0 %v9893
    %10538 = vmatmul.mubr.bf16.gmra.mxu0 %v9892
    %v10539 = vpop.f32.mrf.mxu0
    %v10540 = vadd.f32 %v9948, %v10539
    %v10541 = vpop.f32.mrf.mxu0
    %v10542 = vadd.f32 %v9952, %v10541
    %v10543 = vpop.f32.mrf.mxu0
    %v10544 = vadd.f32 %v9948, %v10543
    %v10545 = vpop.f32.mrf.mxu0
    %v10546 = vadd.f32 %v9952, %v10545
    %10547 = vdwg.mxu0
    %10548 = vmatprep.subr.bf16.mxu0 %v10146
    %10549 = vmatpush1.bf16.msra.mxu0 %v10145
    %10550 = vmatprep.subr.bf16.mxu0 %v10144
    %10551 = vmatpush1.bf16.msra.mxu0 %v10143
    %10552 = vmatprep.subr.bf16.mxu0 %v10142
    %10553 = vmatpush1.bf16.msra.mxu0 %v10141
    %10554 = vmatprep.subr.bf16.mxu0 %v10140
    %10555 = vmatpush1.bf16.msra.mxu0 %v10139
    %10556 = vmatprep.subr.bf16.mxu0 %v10138
    %10557 = vmatpush1.bf16.msra.mxu0 %v10137
    %10558 = vmatprep.subr.bf16.mxu0 %v10136
    %10559 = vmatpush1.bf16.msra.mxu0 %v10135
    %10560 = vmatprep.subr.bf16.mxu0 %v10134
    %10561 = vmatpush1.bf16.msra.mxu0 %v10133
    %10562 = vmatprep.subr.bf16.mxu0 %v10132
    %10563 = vmatpush1.bf16.msra.mxu0 %v10131
    %10564 = vmatprep.subr.bf16.mxu0 0
    %10565 = vmatpush2.bf16.msra.mxu0 0
    %10566 = vmatprep.subr.bf16.mxu0 0
    %10567 = vmatpush2.bf16.msra.mxu0 0
    %10568 = vmatprep.subr.bf16.mxu0 0
    %10569 = vmatpush2.bf16.msra.mxu0 0
    %10570 = vmatprep.subr.bf16.mxu0 0
    %10571 = vmatpush2.bf16.msra.mxu0 0
    %10572 = vmatprep.subr.bf16.mxu0 0
    %10573 = vmatpush2.bf16.msra.mxu0 0
    %10574 = vmatprep.subr.bf16.mxu0 0
    %10575 = vmatpush2.bf16.msra.mxu0 0
    %10576 = vmatprep.subr.bf16.mxu0 0
    %10577 = vmatpush2.bf16.msra.mxu0 0
    %10578 = vmatprep.subr.bf16.mxu0 0
    %10579 = vmatpush2.bf16.msra.mxu0 0
    %10580 = vmatprep.mubr.bf16.mxu0 0
    %10581 = vmatmul.mubr.bf16.gmra.mxu0 %v9801
    %v10582 = vpop.f32.mrf.mxu0
    %v10583 = vadd.f32 %v10230, %v10582
    %v10584 = vpop.f32.mrf.mxu0
    %v10585 = vadd.f32 %v10232, %v10584
    %v10586 = vpop.f32.mrf.mxu0
    %v10587 = vadd.f32 %v10234, %v10586
    %v10588 = vpop.f32.mrf.mxu0
    %v10589 = vadd.f32 %v10236, %v10588
    %10590 = vmatprep.mubr.bf16.mxu0 0
    %10591 = vmatmul.mubr.bf16.gmra.mxu0 %v9804
    %v10592 = vpop.f32.mrf.mxu0
    %v10593 = vadd.f32 %v10240, %v10592
    %v10594 = vpop.f32.mrf.mxu0
    %v10595 = vadd.f32 %v10242, %v10594
    %v10596 = vpop.f32.mrf.mxu0
    %v10597 = vadd.f32 %v10244, %v10596
    %v10598 = vpop.f32.mrf.mxu0
    %v10599 = vadd.f32 %v10246, %v10598
    %10600 = vmatprep.mubr.bf16.mxu0 0
    %10601 = vmatmul.mubr.bf16.gmra.mxu0 %v9807
    %v10602 = vpop.f32.mrf.mxu0
    %v10603 = vadd.f32 %v10250, %v10602
    %v10604 = vpop.f32.mrf.mxu0
    %v10605 = vadd.f32 %v10252, %v10604
    %v10606 = vpop.f32.mrf.mxu0
    %v10607 = vadd.f32 %v10254, %v10606
    %v10608 = vpop.f32.mrf.mxu0
    %v10609 = vadd.f32 %v10256, %v10608
    %10610 = vmatprep.mubr.bf16.mxu0 0
    %10611 = vmatmul.mubr.bf16.gmra.mxu0 %v9810
    %v10612 = vpop.f32.mrf.mxu0
    %v10613 = vadd.f32 %v10260, %v10612
    %v10614 = vpop.f32.mrf.mxu0
    %v10615 = vadd.f32 %v10262, %v10614
    %v10616 = vpop.f32.mrf.mxu0
    %v10617 = vadd.f32 %v10264, %v10616
    %v10618 = vpop.f32.mrf.mxu0
    %v10619 = vadd.f32 %v10266, %v10618
    %10620 = vmatprep.mubr.bf16.mxu0 0
    %10621 = vmatmul.mubr.bf16.gmra.mxu0 %v9813
    %v10622 = vpop.f32.mrf.mxu0
    %v10623 = vadd.f32 %v10270, %v10622
    %v10624 = vpop.f32.mrf.mxu0
    %v10625 = vadd.f32 %v10272, %v10624
    %v10626 = vpop.f32.mrf.mxu0
    %v10627 = vadd.f32 %v10274, %v10626
    %v10628 = vpop.f32.mrf.mxu0
    %v10629 = vadd.f32 %v10276, %v10628
    %10630 = vmatprep.mubr.bf16.mxu0 0
    %10631 = vmatmul.mubr.bf16.gmra.mxu0 %v9816
    %v10632 = vpop.f32.mrf.mxu0
    %v10633 = vadd.f32 %v10280, %v10632
    %v10634 = vpop.f32.mrf.mxu0
    %v10635 = vadd.f32 %v10282, %v10634
    %v10636 = vpop.f32.mrf.mxu0
    %v10637 = vadd.f32 %v10284, %v10636
    %v10638 = vpop.f32.mrf.mxu0
    %v10639 = vadd.f32 %v10286, %v10638
    %10640 = vmatprep.mubr.bf16.mxu0 0
    %10641 = vmatmul.mubr.bf16.gmra.mxu0 %v9819
    %v10642 = vpop.f32.mrf.mxu0
    %v10643 = vadd.f32 %v10290, %v10642
    %v10644 = vpop.f32.mrf.mxu0
    %v10645 = vadd.f32 %v10292, %v10644
    %v10646 = vpop.f32.mrf.mxu0
    %v10647 = vadd.f32 %v10294, %v10646
    %v10648 = vpop.f32.mrf.mxu0
    %v10649 = vadd.f32 %v10296, %v10648
    %10650 = vmatprep.mubr.bf16.mxu0 0
    %10651 = vmatmul.mubr.bf16.gmra.mxu0 %v9822
    %v10652 = vpop.f32.mrf.mxu0
    %v10653 = vadd.f32 %v10300, %v10652
    %v10654 = vpop.f32.mrf.mxu0
    %v10655 = vadd.f32 %v10302, %v10654
    %v10656 = vpop.f32.mrf.mxu0
    %v10657 = vadd.f32 %v10304, %v10656
    %v10658 = vpop.f32.mrf.mxu0
    %v10659 = vadd.f32 %v10306, %v10658
    %10660 = vmatprep.mubr.bf16.mxu0 0
    %10661 = vmatmul.mubr.bf16.gmra.mxu0 %v9825
    %v10662 = vpop.f32.mrf.mxu0
    %v10663 = vadd.f32 %v10310, %v10662
    %v10664 = vpop.f32.mrf.mxu0
    %v10665 = vadd.f32 %v10312, %v10664
    %v10666 = vpop.f32.mrf.mxu0
    %v10667 = vadd.f32 %v10314, %v10666
    %v10668 = vpop.f32.mrf.mxu0
    %v10669 = vadd.f32 %v10316, %v10668
    %10670 = vmatprep.mubr.bf16.mxu0 0
    %10671 = vmatmul.mubr.bf16.gmra.mxu0 %v9828
    %v10672 = vpop.f32.mrf.mxu0
    %v10673 = vadd.f32 %v10320, %v10672
    %v10674 = vpop.f32.mrf.mxu0
    %v10675 = vadd.f32 %v10322, %v10674
    %v10676 = vpop.f32.mrf.mxu0
    %v10677 = vadd.f32 %v10324, %v10676
    %v10678 = vpop.f32.mrf.mxu0
    %v10679 = vadd.f32 %v10326, %v10678
    %10680 = vmatprep.mubr.bf16.mxu0 0
    %10681 = vmatmul.mubr.bf16.gmra.mxu0 %v9831
    %v10682 = vpop.f32.mrf.mxu0
    %v10683 = vadd.f32 %v10330, %v10682
    %v10684 = vpop.f32.mrf.mxu0
    %v10685 = vadd.f32 %v10332, %v10684
    %v10686 = vpop.f32.mrf.mxu0
    %v10687 = vadd.f32 %v10334, %v10686
    %v10688 = vpop.f32.mrf.mxu0
    %v10689 = vadd.f32 %v10336, %v10688
    %10690 = vmatprep.mubr.bf16.mxu0 0
    %10691 = vmatmul.mubr.bf16.gmra.mxu0 %v9834
    %v10692 = vpop.f32.mrf.mxu0
    %v10693 = vadd.f32 %v10340, %v10692
    %v10694 = vpop.f32.mrf.mxu0
    %v10695 = vadd.f32 %v10342, %v10694
    %v10696 = vpop.f32.mrf.mxu0
    %v10697 = vadd.f32 %v10344, %v10696
    %v10698 = vpop.f32.mrf.mxu0
    %v10699 = vadd.f32 %v10346, %v10698
    %10700 = vmatprep.mubr.bf16.mxu0 0
    %10701 = vmatmul.mubr.bf16.gmra.mxu0 %v9837
    %v10702 = vpop.f32.mrf.mxu0
    %v10703 = vadd.f32 %v10350, %v10702
    %v10704 = vpop.f32.mrf.mxu0
    %v10705 = vadd.f32 %v10352, %v10704
    %v10706 = vpop.f32.mrf.mxu0
    %v10707 = vadd.f32 %v10354, %v10706
    %v10708 = vpop.f32.mrf.mxu0
    %v10709 = vadd.f32 %v10356, %v10708
    %10710 = vmatprep.mubr.bf16.mxu0 0
    %10711 = vmatmul.mubr.bf16.gmra.mxu0 %v9840
    %v10712 = vpop.f32.mrf.mxu0
    %v10713 = vadd.f32 %v10360, %v10712
    %v10714 = vpop.f32.mrf.mxu0
    %v10715 = vadd.f32 %v10362, %v10714
    %v10716 = vpop.f32.mrf.mxu0
    %v10717 = vadd.f32 %v10364, %v10716
    %v10718 = vpop.f32.mrf.mxu0
    %v10719 = vadd.f32 %v10366, %v10718
    %10720 = vmatprep.mubr.bf16.mxu0 0
    %10721 = vmatmul.mubr.bf16.gmra.mxu0 %v9843
    %v10722 = vpop.f32.mrf.mxu0
    %v10723 = vadd.f32 %v10370, %v10722
    %v10724 = vpop.f32.mrf.mxu0
    %v10725 = vadd.f32 %v10372, %v10724
    %v10726 = vpop.f32.mrf.mxu0
    %v10727 = vadd.f32 %v10374, %v10726
    %v10728 = vpop.f32.mrf.mxu0
    %v10729 = vadd.f32 %v10376, %v10728
    %10730 = vmatprep.mubr.bf16.mxu0 0
    %10731 = vmatmul.mubr.bf16.gmra.mxu0 %v9846
    %v10732 = vpop.f32.mrf.mxu0
    %v10733 = vadd.f32 %v10380, %v10732
    %v10734 = vpop.f32.mrf.mxu0
    %v10735 = vadd.f32 %v10382, %v10734
    %v10736 = vpop.f32.mrf.mxu0
    %v10737 = vadd.f32 %v10384, %v10736
    %v10738 = vpop.f32.mrf.mxu0
    %v10739 = vadd.f32 %v10386, %v10738
    %10740 = vmatprep.mubr.bf16.mxu0 0
    %10741 = vmatmul.mubr.bf16.gmra.mxu0 %v9849
    %v10742 = vpop.f32.mrf.mxu0
    %v10743 = vadd.f32 %v10390, %v10742
    %v10744 = vpop.f32.mrf.mxu0
    %v10745 = vadd.f32 %v10392, %v10744
    %v10746 = vpop.f32.mrf.mxu0
    %v10747 = vadd.f32 %v10394, %v10746
    %v10748 = vpop.f32.mrf.mxu0
    %v10749 = vadd.f32 %v10396, %v10748
    %10750 = vmatprep.mubr.bf16.mxu0 0
    %10751 = vmatmul.mubr.bf16.gmra.mxu0 %v9852
    %v10752 = vpop.f32.mrf.mxu0
    %v10753 = vadd.f32 %v10400, %v10752
    %v10754 = vpop.f32.mrf.mxu0
    %v10755 = vadd.f32 %v10402, %v10754
    %v10756 = vpop.f32.mrf.mxu0
    %v10757 = vadd.f32 %v10404, %v10756
    %v10758 = vpop.f32.mrf.mxu0
    %v10759 = vadd.f32 %v10406, %v10758
    %10760 = vmatprep.mubr.bf16.mxu0 0
    %10761 = vmatmul.mubr.bf16.gmra.mxu0 %v9855
    %v10762 = vpop.f32.mrf.mxu0
    %v10763 = vadd.f32 %v10410, %v10762
    %v10764 = vpop.f32.mrf.mxu0
    %v10765 = vadd.f32 %v10412, %v10764
    %v10766 = vpop.f32.mrf.mxu0
    %v10767 = vadd.f32 %v10414, %v10766
    %v10768 = vpop.f32.mrf.mxu0
    %v10769 = vadd.f32 %v10416, %v10768
    %10770 = vmatprep.mubr.bf16.mxu0 0
    %10771 = vmatmul.mubr.bf16.gmra.mxu0 %v9858
    %v10772 = vpop.f32.mrf.mxu0
    %v10773 = vadd.f32 %v10420, %v10772
    %v10774 = vpop.f32.mrf.mxu0
    %v10775 = vadd.f32 %v10422, %v10774
    %v10776 = vpop.f32.mrf.mxu0
    %v10777 = vadd.f32 %v10424, %v10776
    %v10778 = vpop.f32.mrf.mxu0
    %v10779 = vadd.f32 %v10426, %v10778
    %10780 = vmatprep.mubr.bf16.mxu0 0
    %10781 = vmatmul.mubr.bf16.gmra.mxu0 %v9861
    %v10782 = vpop.f32.mrf.mxu0
    %v10783 = vadd.f32 %v10430, %v10782
    %v10784 = vpop.f32.mrf.mxu0
    %v10785 = vadd.f32 %v10432, %v10784
    %v10786 = vpop.f32.mrf.mxu0
    %v10787 = vadd.f32 %v10434, %v10786
    %v10788 = vpop.f32.mrf.mxu0
    %v10789 = vadd.f32 %v10436, %v10788
    %10790 = vmatprep.mubr.bf16.mxu0 0
    %10791 = vmatmul.mubr.bf16.gmra.mxu0 %v9864
    %v10792 = vpop.f32.mrf.mxu0
    %v10793 = vadd.f32 %v10440, %v10792
    %v10794 = vpop.f32.mrf.mxu0
    %v10795 = vadd.f32 %v10442, %v10794
    %v10796 = vpop.f32.mrf.mxu0
    %v10797 = vadd.f32 %v10444, %v10796
    %v10798 = vpop.f32.mrf.mxu0
    %v10799 = vadd.f32 %v10446, %v10798
    %10800 = vmatprep.mubr.bf16.mxu0 0
    %10801 = vmatmul.mubr.bf16.gmra.mxu0 %v9867
    %v10802 = vpop.f32.mrf.mxu0
    %v10803 = vadd.f32 %v10450, %v10802
    %v10804 = vpop.f32.mrf.mxu0
    %v10805 = vadd.f32 %v10452, %v10804
    %v10806 = vpop.f32.mrf.mxu0
    %v10807 = vadd.f32 %v10454, %v10806
    %v10808 = vpop.f32.mrf.mxu0
    %v10809 = vadd.f32 %v10456, %v10808
    %10810 = vmatprep.mubr.bf16.mxu0 0
    %10811 = vmatmul.mubr.bf16.gmra.mxu0 %v9870
    %v10812 = vpop.f32.mrf.mxu0
    %v10813 = vadd.f32 %v10460, %v10812
    %v10814 = vpop.f32.mrf.mxu0
    %v10815 = vadd.f32 %v10462, %v10814
    %v10816 = vpop.f32.mrf.mxu0
    %v10817 = vadd.f32 %v10464, %v10816
    %v10818 = vpop.f32.mrf.mxu0
    %v10819 = vadd.f32 %v10466, %v10818
    %10820 = vmatprep.mubr.bf16.mxu0 0
    %10821 = vmatmul.mubr.bf16.gmra.mxu0 %v9873
    %v10822 = vpop.f32.mrf.mxu0
    %v10823 = vadd.f32 %v10470, %v10822
    %v10824 = vpop.f32.mrf.mxu0
    %v10825 = vadd.f32 %v10472, %v10824
    %v10826 = vpop.f32.mrf.mxu0
    %v10827 = vadd.f32 %v10474, %v10826
    %v10828 = vpop.f32.mrf.mxu0
    %v10829 = vadd.f32 %v10476, %v10828
    %10830 = vmatprep.mubr.bf16.mxu0 0
    %10831 = vmatmul.mubr.bf16.gmra.mxu0 %v9876
    %v10832 = vpop.f32.mrf.mxu0
    %v10833 = vadd.f32 %v10480, %v10832
    %v10834 = vpop.f32.mrf.mxu0
    %v10835 = vadd.f32 %v10482, %v10834
    %v10836 = vpop.f32.mrf.mxu0
    %v10837 = vadd.f32 %v10484, %v10836
    %v10838 = vpop.f32.mrf.mxu0
    %v10839 = vadd.f32 %v10486, %v10838
    %10840 = vmatprep.mubr.bf16.mxu0 0
    %10841 = vmatmul.mubr.bf16.gmra.mxu0 %v9879
    %v10842 = vpop.f32.mrf.mxu0
    %v10843 = vadd.f32 %v10490, %v10842
    %v10844 = vpop.f32.mrf.mxu0
    %v10845 = vadd.f32 %v10492, %v10844
    %v10846 = vpop.f32.mrf.mxu0
    %v10847 = vadd.f32 %v10494, %v10846
    %v10848 = vpop.f32.mrf.mxu0
    %v10849 = vadd.f32 %v10496, %v10848
    %10850 = vmatprep.mubr.bf16.mxu0 0
    %10851 = vmatmul.mubr.bf16.gmra.mxu0 %v9882
    %v10852 = vpop.f32.mrf.mxu0
    %v10853 = vadd.f32 %v10500, %v10852
    %v10854 = vpop.f32.mrf.mxu0
    %v10855 = vadd.f32 %v10502, %v10854
    %v10856 = vpop.f32.mrf.mxu0
    %v10857 = vadd.f32 %v10504, %v10856
    %v10858 = vpop.f32.mrf.mxu0
    %v10859 = vadd.f32 %v10506, %v10858
    %10860 = vmatprep.mubr.bf16.mxu0 0
    %10861 = vmatmul.mubr.bf16.gmra.mxu0 %v9885
    %v10862 = vpop.f32.mrf.mxu0
    %v10863 = vadd.f32 %v10510, %v10862
    %v10864 = vpop.f32.mrf.mxu0
    %v10865 = vadd.f32 %v10512, %v10864
    %v10866 = vpop.f32.mrf.mxu0
    %v10867 = vadd.f32 %v10514, %v10866
    %v10868 = vpop.f32.mrf.mxu0
    %v10869 = vadd.f32 %v10516, %v10868
    %10870 = vmatprep.mubr.bf16.mxu0 0
    %10871 = vmatmul.mubr.bf16.gmra.mxu0 %v9888
    %v10872 = vpop.f32.mrf.mxu0
    %v10873 = vadd.f32 %v10520, %v10872
    %v10874 = vpop.f32.mrf.mxu0
    %v10875 = vadd.f32 %v10522, %v10874
    %v10876 = vpop.f32.mrf.mxu0
    %v10877 = vadd.f32 %v10524, %v10876
    %v10878 = vpop.f32.mrf.mxu0
    %v10879 = vadd.f32 %v10526, %v10878
    %10880 = vmatprep.mubr.bf16.mxu0 0
    %10881 = vmatmul.mubr.bf16.gmra.mxu0 %v9891
    %v10882 = vpop.f32.mrf.mxu0
    %v10883 = vadd.f32 %v10530, %v10882
    %v10884 = vpop.f32.mrf.mxu0
    %v10885 = vadd.f32 %v10532, %v10884
    %v10886 = vpop.f32.mrf.mxu0
    %v10887 = vadd.f32 %v10534, %v10886
    %v10888 = vpop.f32.mrf.mxu0
    %v10889 = vadd.f32 %v10536, %v10888
    %10890 = vmatprep.mubr.bf16.mxu0 0
    %10891 = vmatmul.mubr.bf16.gmra.mxu0 %v9894
    %v10892 = vpop.f32.mrf.mxu0
    %v10893 = vadd.f32 %v10540, %v10892
    %v10894 = vpop.f32.mrf.mxu0
    %v10895 = vadd.f32 %v10542, %v10894
    %v10896 = vpop.f32.mrf.mxu0
    %v10897 = vadd.f32 %v10544, %v10896
    %v10898 = vpop.f32.mrf.mxu0
    %v10899 = vadd.f32 %v10546, %v10898
    %10900 = vdwg.mxu0
    %v10901 = vmax.f32 %v10583, 0.0
    %v10902 = vmax.f32 %v10585, 0.0
    %v10903 = vmax.f32 %v10587, 0.0
    %v10904 = vmax.f32 %v10589, 0.0
    %v10905 = vmax.f32 %v10593, 0.0
    %v10906 = vmax.f32 %v10595, 0.0
    %v10907 = vmax.f32 %v10597, 0.0
    %v10908 = vmax.f32 %v10599, 0.0
    %v10909 = vmax.f32 %v10603, 0.0
    %v10910 = vmax.f32 %v10605, 0.0
    %v10911 = vmax.f32 %v10607, 0.0
    %v10912 = vmax.f32 %v10609, 0.0
    %v10913 = vmax.f32 %v10613, 0.0
    %v10914 = vmax.f32 %v10615, 0.0
    %v10915 = vmax.f32 %v10617, 0.0
    %v10916 = vmax.f32 %v10619, 0.0
    %v10917 = vmax.f32 %v10623, 0.0
    %v10918 = vmax.f32 %v10625, 0.0
    %v10919 = vmax.f32 %v10627, 0.0
    %v10920 = vmax.f32 %v10629, 0.0
    %v10921 = vmax.f32 %v10633, 0.0
    %v10922 = vmax.f32 %v10635, 0.0
    %v10923 = vmax.f32 %v10637, 0.0
    %v10924 = vmax.f32 %v10639, 0.0
    %v10925 = vmax.f32 %v10643, 0.0
    %v10926 = vmax.f32 %v10645, 0.0
    %v10927 = vmax.f32 %v10647, 0.0
    %v10928 = vmax.f32 %v10649, 0.0
    %v10929 = vmax.f32 %v10653, 0.0
    %v10930 = vmax.f32 %v10655, 0.0
    %v10931 = vmax.f32 %v10657, 0.0
    %v10932 = vmax.f32 %v10659, 0.0
    %v10933 = vmax.f32 %v10663, 0.0
    %v10934 = vmax.f32 %v10665, 0.0
    %v10935 = vmax.f32 %v10667, 0.0
    %v10936 = vmax.f32 %v10669, 0.0
    %v10937 = vmax.f32 %v10673, 0.0
    %v10938 = vmax.f32 %v10675, 0.0
    %v10939 = vmax.f32 %v10677, 0.0
    %v10940 = vmax.f32 %v10679, 0.0
    %v10941 = vmax.f32 %v10683, 0.0
    %v10942 = vmax.f32 %v10685, 0.0
    %v10943 = vmax.f32 %v10687, 0.0
    %v10944 = vmax.f32 %v10689, 0.0
    %v10945 = vmax.f32 %v10693, 0.0
    %v10946 = vmax.f32 %v10695, 0.0
    %v10947 = vmax.f32 %v10697, 0.0
    %v10948 = vmax.f32 %v10699, 0.0
    %v10949 = vmax.f32 %v10703, 0.0
    %v10950 = vmax.f32 %v10705, 0.0
    %v10951 = vmax.f32 %v10707, 0.0
    %v10952 = vmax.f32 %v10709, 0.0
    %v10953 = vmax.f32 %v10713, 0.0
    %v10954 = vmax.f32 %v10715, 0.0
    %v10955 = vmax.f32 %v10717, 0.0
    %v10956 = vmax.f32 %v10719, 0.0
    %v10957 = vmax.f32 %v10723, 0.0
    %v10958 = vmax.f32 %v10725, 0.0
    %v10959 = vmax.f32 %v10727, 0.0
    %v10960 = vmax.f32 %v10729, 0.0
    %v10961 = vmax.f32 %v10733, 0.0
    %v10962 = vmax.f32 %v10735, 0.0
    %v10963 = vmax.f32 %v10737, 0.0
    %v10964 = vmax.f32 %v10739, 0.0
    %v10965 = vmax.f32 %v10743, 0.0
    %v10966 = vmax.f32 %v10745, 0.0
    %v10967 = vmax.f32 %v10747, 0.0
    %v10968 = vmax.f32 %v10749, 0.0
    %v10969 = vmax.f32 %v10753, 0.0
    %v10970 = vmax.f32 %v10755, 0.0
    %v10971 = vmax.f32 %v10757, 0.0
    %v10972 = vmax.f32 %v10759, 0.0
    %v10973 = vmax.f32 %v10763, 0.0
    %v10974 = vmax.f32 %v10765, 0.0
    %v10975 = vmax.f32 %v10767, 0.0
    %v10976 = vmax.f32 %v10769, 0.0
    %v10977 = vmax.f32 %v10773, 0.0
    %v10978 = vmax.f32 %v10775, 0.0
    %v10979 = vmax.f32 %v10777, 0.0
    %v10980 = vmax.f32 %v10779, 0.0
    %v10981 = vmax.f32 %v10783, 0.0
    %v10982 = vmax.f32 %v10785, 0.0
    %v10983 = vmax.f32 %v10787, 0.0
    %v10984 = vmax.f32 %v10789, 0.0
    %v10985 = vmax.f32 %v10793, 0.0
    %v10986 = vmax.f32 %v10795, 0.0
    %v10987 = vmax.f32 %v10797, 0.0
    %v10988 = vmax.f32 %v10799, 0.0
    %v10989 = vmax.f32 %v10803, 0.0
    %v10990 = vmax.f32 %v10805, 0.0
    %v10991 = vmax.f32 %v10807, 0.0
    %v10992 = vmax.f32 %v10809, 0.0
    %v10993 = vmax.f32 %v10813, 0.0
    %v10994 = vmax.f32 %v10815, 0.0
    %v10995 = vmax.f32 %v10817, 0.0
    %v10996 = vmax.f32 %v10819, 0.0
    %v10997 = vmax.f32 %v10823, 0.0
    %v10998 = vmax.f32 %v10825, 0.0
    %v10999 = vmax.f32 %v10827, 0.0
    %v11000 = vmax.f32 %v10829, 0.0
    %v11001 = vmax.f32 %v10833, 0.0
    %v11002 = vmax.f32 %v10835, 0.0
    %v11003 = vmax.f32 %v10837, 0.0
    %v11004 = vmax.f32 %v10839, 0.0
    %v11005 = vmax.f32 %v10843, 0.0
    %v11006 = vmax.f32 %v10845, 0.0
    %v11007 = vmax.f32 %v10847, 0.0
    %v11008 = vmax.f32 %v10849, 0.0
    %v11009 = vmax.f32 %v10853, 0.0
    %v11010 = vmax.f32 %v10855, 0.0
    %v11011 = vmax.f32 %v10857, 0.0
    %v11012 = vmax.f32 %v10859, 0.0
    %v11013 = vmax.f32 %v10863, 0.0
    %v11014 = vmax.f32 %v10865, 0.0
    %v11015 = vmax.f32 %v10867, 0.0
    %v11016 = vmax.f32 %v10869, 0.0
    %v11017 = vmax.f32 %v10873, 0.0
    %v11018 = vmax.f32 %v10875, 0.0
    %v11019 = vmax.f32 %v10877, 0.0
    %v11020 = vmax.f32 %v10879, 0.0
    %v11021 = vmax.f32 %v10883, 0.0
    %v11022 = vmax.f32 %v10885, 0.0
    %v11023 = vmax.f32 %v10887, 0.0
    %v11024 = vmax.f32 %v10889, 0.0
    %v11025 = vmax.f32 %v10893, 0.0
    %v11026 = vmax.f32 %v10895, 0.0
    %v11027 = vmax.f32 %v10897, 0.0
    %v11028 = vmax.f32 %v10899, 0.0
    %v11029 = vpack.c.bf16 %v10903, %v10901
    %v11030 = vpack.c.bf16 %v10904, %v10902
    %v11031 = vpack.c.bf16 %v10907, %v10905
    %v11032 = vpack.c.bf16 %v10908, %v10906
    %v11033 = vpack.c.bf16 %v10911, %v10909
    %v11034 = vpack.c.bf16 %v10912, %v10910
    %v11035 = vpack.c.bf16 %v10915, %v10913
    %v11036 = vpack.c.bf16 %v10916, %v10914
    %v11037 = vpack.c.bf16 %v10919, %v10917
    %v11038 = vpack.c.bf16 %v10920, %v10918
    %v11039 = vpack.c.bf16 %v10923, %v10921
    %v11040 = vpack.c.bf16 %v10924, %v10922
    %v11041 = vpack.c.bf16 %v10927, %v10925
    %v11042 = vpack.c.bf16 %v10928, %v10926
    %v11043 = vpack.c.bf16 %v10931, %v10929
    %v11044 = vpack.c.bf16 %v10932, %v10930
    %v11045 = vpack.c.bf16 %v10935, %v10933
    %v11046 = vpack.c.bf16 %v10936, %v10934
    %v11047 = vpack.c.bf16 %v10939, %v10937
    %v11048 = vpack.c.bf16 %v10940, %v10938
    %v11049 = vpack.c.bf16 %v10943, %v10941
    %v11050 = vpack.c.bf16 %v10944, %v10942
    %v11051 = vpack.c.bf16 %v10947, %v10945
    %v11052 = vpack.c.bf16 %v10948, %v10946
    %v11053 = vpack.c.bf16 %v10951, %v10949
    %v11054 = vpack.c.bf16 %v10952, %v10950
    %v11055 = vpack.c.bf16 %v10955, %v10953
    %v11056 = vpack.c.bf16 %v10956, %v10954
    %v11057 = vpack.c.bf16 %v10959, %v10957
    %v11058 = vpack.c.bf16 %v10960, %v10958
    %v11059 = vpack.c.bf16 %v10963, %v10961
    %v11060 = vpack.c.bf16 %v10964, %v10962
    %v11061 = vpack.c.bf16 %v10967, %v10965
    %v11062 = vpack.c.bf16 %v10968, %v10966
    %v11063 = vpack.c.bf16 %v10971, %v10969
    %v11064 = vpack.c.bf16 %v10972, %v10970
    %v11065 = vpack.c.bf16 %v10975, %v10973
    %v11066 = vpack.c.bf16 %v10976, %v10974
    %v11067 = vpack.c.bf16 %v10979, %v10977
    %v11068 = vpack.c.bf16 %v10980, %v10978
    %v11069 = vpack.c.bf16 %v10983, %v10981
    %v11070 = vpack.c.bf16 %v10984, %v10982
    %v11071 = vpack.c.bf16 %v10987, %v10985
    %v11072 = vpack.c.bf16 %v10988, %v10986
    %v11073 = vpack.c.bf16 %v10991, %v10989
    %v11074 = vpack.c.bf16 %v10992, %v10990
    %v11075 = vpack.c.bf16 %v10995, %v10993
    %v11076 = vpack.c.bf16 %v10996, %v10994
    %v11077 = vpack.c.bf16 %v10999, %v10997
    %v11078 = vpack.c.bf16 %v11000, %v10998
    %v11079 = vpack.c.bf16 %v11003, %v11001
    %v11080 = vpack.c.bf16 %v11004, %v11002
    %v11081 = vpack.c.bf16 %v11007, %v11005
    %v11082 = vpack.c.bf16 %v11008, %v11006
    %v11083 = vpack.c.bf16 %v11011, %v11009
    %v11084 = vpack.c.bf16 %v11012, %v11010
    %v11085 = vpack.c.bf16 %v11015, %v11013
    %v11086 = vpack.c.bf16 %v11016, %v11014
    %v11087 = vpack.c.bf16 %v11019, %v11017
    %v11088 = vpack.c.bf16 %v11020, %v11018
    %v11089 = vpack.c.bf16 %v11023, %v11021
    %v11090 = vpack.c.bf16 %v11024, %v11022
    %v11091 = vpack.c.bf16 %v11027, %v11025
    %v11092 = vpack.c.bf16 %v11028, %v11026
    %v11093 = vld [vmem:[%s7] sm:$0xf]
    %v11094 = vld [vmem:[%s7 + $0x4] sm:$0xf]
    %v11095 = vld [vmem:[%s7 + $0x8] sm:$0xf]
    %v11096 = vld [vmem:[%s7 + $0xc] sm:$0xf]
    %v11097 = vld [vmem:[%s7 + $0x10] sm:$0xf]
    %v11098 = vld [vmem:[%s7 + $0x14] sm:$0xf]
    %v11099 = vld [vmem:[%s7 + $0x18] sm:$0xf]
    %v11100 = vld [vmem:[%s7 + $0x1c] sm:$0xf]
    %v11101 = vld [vmem:[%s7 + $0x20] sm:$0xf]
    %v11102 = vld [vmem:[%s7 + $0x24] sm:$0xf]
    %v11103 = vld [vmem:[%s7 + $0x28] sm:$0xf]
    %v11104 = vld [vmem:[%s7 + $0x2c] sm:$0xf]
    %v11105 = vld [vmem:[%s7 + $0x30] sm:$0xf]
    %v11106 = vld [vmem:[%s7 + $0x34] sm:$0xf]
    %v11107 = vld [vmem:[%s7 + $0x38] sm:$0xf]
    %v11108 = vld [vmem:[%s7 + $0x3c] sm:$0xf]
    %v11109 = vld [vmem:[%s7 + $0x40] sm:$0xf]
    %v11110 = vld [vmem:[%s7 + $0x44] sm:$0xf]
    %v11111 = vld [vmem:[%s7 + $0x48] sm:$0xf]
    %v11112 = vld [vmem:[%s7 + $0x4c] sm:$0xf]
    %v11113 = vld [vmem:[%s7 + $0x50] sm:$0xf]
    %v11114 = vld [vmem:[%s7 + $0x54] sm:$0xf]
    %v11115 = vld [vmem:[%s7 + $0x58] sm:$0xf]
    %v11116 = vld [vmem:[%s7 + $0x5c] sm:$0xf]
    %v11117 = vld [vmem:[%s7 + $0x60] sm:$0xf]
    %v11118 = vld [vmem:[%s7 + $0x64] sm:$0xf]
    %v11119 = vld [vmem:[%s7 + $0x68] sm:$0xf]
    %v11120 = vld [vmem:[%s7 + $0x6c] sm:$0xf]
    %v11121 = vld [vmem:[%s7 + $0x70] sm:$0xf]
    %v11122 = vld [vmem:[%s7 + $0x74] sm:$0xf]
    %v11123 = vld [vmem:[%s7 + $0x78] sm:$0xf]
    %v11124 = vld [vmem:[%s7 + $0x7c] sm:$0xf]
    %v11125 = vld [vmem:[%s8] sm:$0x1]
    %v11127 = vlaneseq
    %v11128 = vshrl.u32 %v11127, 7
    %v11129 = vsub.s32 0, %v11128
    %v11130 = vrot.slane %v11125, %v11129
    %v11164 = vunpack.c.l.b16 %v11093
    %v11165 = vunpack.c.l.b16 %v11094
    %v11166 = vunpack.c.l.b16 %v11095
    %v11167 = vunpack.c.l.b16 %v11096
    %v11168 = vunpack.c.l.b16 %v11097
    %v11169 = vunpack.c.l.b16 %v11098
    %v11170 = vunpack.c.l.b16 %v11099
    %v11171 = vunpack.c.l.b16 %v11100
    %v11172 = vunpack.c.l.b16 %v11101
    %v11173 = vunpack.c.l.b16 %v11102
    %v11174 = vunpack.c.l.b16 %v11103
    %v11175 = vunpack.c.l.b16 %v11104
    %v11176 = vunpack.c.l.b16 %v11105
    %v11177 = vunpack.c.l.b16 %v11106
    %v11178 = vunpack.c.l.b16 %v11107
    %v11179 = vunpack.c.l.b16 %v11108
    %v11180 = vunpack.c.l.b16 %v11109
    %v11181 = vunpack.c.l.b16 %v11110
    %v11182 = vunpack.c.l.b16 %v11111
    %v11183 = vunpack.c.l.b16 %v11112
    %v11184 = vunpack.c.l.b16 %v11113
    %v11185 = vunpack.c.l.b16 %v11114
    %v11186 = vunpack.c.l.b16 %v11115
    %v11187 = vunpack.c.l.b16 %v11116
    %v11188 = vunpack.c.l.b16 %v11117
    %v11189 = vunpack.c.l.b16 %v11118
    %v11190 = vunpack.c.l.b16 %v11119
    %v11191 = vunpack.c.l.b16 %v11120
    %v11192 = vunpack.c.l.b16 %v11121
    %v11193 = vunpack.c.l.b16 %v11122
    %v11194 = vunpack.c.l.b16 %v11123
    %v11195 = vunpack.c.l.b16 %v11124
    %v11196 = vpack.c.b16 %v11165, %v11164
    %v11197 = vpack.c.b16 %v11167, %v11166
    %v11198 = vpack.c.b16 %v11169, %v11168
    %v11199 = vpack.c.b16 %v11171, %v11170
    %v11200 = vpack.c.b16 %v11173, %v11172
    %v11201 = vpack.c.b16 %v11175, %v11174
    %v11202 = vpack.c.b16 %v11177, %v11176
    %v11203 = vpack.c.b16 %v11179, %v11178
    %v11204 = vpack.c.b16 %v11181, %v11180
    %v11205 = vpack.c.b16 %v11183, %v11182
    %v11206 = vpack.c.b16 %v11185, %v11184
    %v11207 = vpack.c.b16 %v11187, %v11186
    %v11208 = vpack.c.b16 %v11189, %v11188
    %v11209 = vpack.c.b16 %v11191, %v11190
    %v11210 = vpack.c.b16 %v11193, %v11192
    %v11211 = vpack.c.b16 %v11195, %v11194
    %11228 = vmatprep.subr.bf16.mxu0 0
    %11229 = vmatpush1.bf16.msra.mxu0 %v11203
    %11230 = vmatprep.subr.bf16.mxu0 0
    %11231 = vmatpush1.bf16.msra.mxu0 %v11202
    %11232 = vmatprep.subr.bf16.mxu0 0
    %11233 = vmatpush1.bf16.msra.mxu0 %v11201
    %11234 = vmatprep.subr.bf16.mxu0 0
    %11235 = vmatpush1.bf16.msra.mxu0 %v11200
    %11236 = vmatprep.subr.bf16.mxu0 0
    %11237 = vmatpush1.bf16.msra.mxu0 %v11199
    %11238 = vmatprep.subr.bf16.mxu0 0
    %11239 = vmatpush1.bf16.msra.mxu0 %v11198
    %11240 = vmatprep.subr.bf16.mxu0 0
    %11241 = vmatpush1.bf16.msra.mxu0 %v11197
    %11242 = vmatprep.subr.bf16.mxu0 0
    %11243 = vmatpush1.bf16.msra.mxu0 %v11196
    %11244 = vmatprep.subr.bf16.mxu0 0
    %11245 = vmatpush2.bf16.msra.mxu0 %v11211
    %11246 = vmatprep.subr.bf16.mxu0 0
    %11247 = vmatpush2.bf16.msra.mxu0 %v11210
    %11248 = vmatprep.subr.bf16.mxu0 0
    %11249 = vmatpush2.bf16.msra.mxu0 %v11209
    %11250 = vmatprep.subr.bf16.mxu0 0
    %11251 = vmatpush2.bf16.msra.mxu0 %v11208
    %11252 = vmatprep.subr.bf16.mxu0 0
    %11253 = vmatpush2.bf16.msra.mxu0 %v11207
    %11254 = vmatprep.subr.bf16.mxu0 0
    %11255 = vmatpush2.bf16.msra.mxu0 %v11206
    %11256 = vmatprep.subr.bf16.mxu0 0
    %11257 = vmatpush2.bf16.msra.mxu0 %v11205
    %11258 = vmatprep.subr.bf16.mxu0 0
    %11259 = vmatpush2.bf16.msra.mxu0 %v11204
    %11260 = vmatprep.mubr.bf16.mxu0 %v11030
    %11261 = vmatmul.mubr.bf16.gmra.mxu0 %v11029
    %v11262 = vpop.f32.mrf.mxu0
    %v11263 = vadd.f32 %v11130, %v11262
    %v11264 = vpop.f32.mrf.mxu0
    %v11265 = vpop.f32.mrf.mxu0
    %v11266 = vadd.f32 %v11130, %v11265
    %v11267 = vpop.f32.mrf.mxu0
    %11268 = vmatprep.mubr.bf16.mxu0 %v11032
    %11269 = vmatmul.mubr.bf16.gmra.mxu0 %v11031
    %v11270 = vpop.f32.mrf.mxu0
    %v11271 = vadd.f32 %v11130, %v11270
    %v11272 = vpop.f32.mrf.mxu0
    %v11273 = vpop.f32.mrf.mxu0
    %v11274 = vadd.f32 %v11130, %v11273
    %v11275 = vpop.f32.mrf.mxu0
    %11276 = vmatprep.mubr.bf16.mxu0 %v11034
    %11277 = vmatmul.mubr.bf16.gmra.mxu0 %v11033
    %v11278 = vpop.f32.mrf.mxu0
    %v11279 = vadd.f32 %v11130, %v11278
    %v11280 = vpop.f32.mrf.mxu0
    %v11281 = vpop.f32.mrf.mxu0
    %v11282 = vadd.f32 %v11130, %v11281
    %v11283 = vpop.f32.mrf.mxu0
    %11284 = vmatprep.mubr.bf16.mxu0 %v11036
    %11285 = vmatmul.mubr.bf16.gmra.mxu0 %v11035
    %v11286 = vpop.f32.mrf.mxu0
    %v11287 = vadd.f32 %v11130, %v11286
    %v11288 = vpop.f32.mrf.mxu0
    %v11289 = vpop.f32.mrf.mxu0
    %v11290 = vadd.f32 %v11130, %v11289
    %v11291 = vpop.f32.mrf.mxu0
    %11292 = vmatprep.mubr.bf16.mxu0 %v11038
    %11293 = vmatmul.mubr.bf16.gmra.mxu0 %v11037
    %v11294 = vpop.f32.mrf.mxu0
    %v11295 = vadd.f32 %v11130, %v11294
    %v11296 = vpop.f32.mrf.mxu0
    %v11297 = vpop.f32.mrf.mxu0
    %v11298 = vadd.f32 %v11130, %v11297
    %v11299 = vpop.f32.mrf.mxu0
    %11300 = vmatprep.mubr.bf16.mxu0 %v11040
    %11301 = vmatmul.mubr.bf16.gmra.mxu0 %v11039
    %v11302 = vpop.f32.mrf.mxu0
    %v11303 = vadd.f32 %v11130, %v11302
    %v11304 = vpop.f32.mrf.mxu0
    %v11305 = vpop.f32.mrf.mxu0
    %v11306 = vadd.f32 %v11130, %v11305
    %v11307 = vpop.f32.mrf.mxu0
    %11308 = vmatprep.mubr.bf16.mxu0 %v11042
    %11309 = vmatmul.mubr.bf16.gmra.mxu0 %v11041
    %v11310 = vpop.f32.mrf.mxu0
    %v11311 = vadd.f32 %v11130, %v11310
    %v11312 = vpop.f32.mrf.mxu0
    %v11313 = vpop.f32.mrf.mxu0
    %v11314 = vadd.f32 %v11130, %v11313
    %v11315 = vpop.f32.mrf.mxu0
    %11316 = vmatprep.mubr.bf16.mxu0 %v11044
    %11317 = vmatmul.mubr.bf16.gmra.mxu0 %v11043
    %v11318 = vpop.f32.mrf.mxu0
    %v11319 = vadd.f32 %v11130, %v11318
    %v11320 = vpop.f32.mrf.mxu0
    %v11321 = vpop.f32.mrf.mxu0
    %v11322 = vadd.f32 %v11130, %v11321
    %v11323 = vpop.f32.mrf.mxu0
    %11324 = vmatprep.mubr.bf16.mxu0 %v11046
    %11325 = vmatmul.mubr.bf16.gmra.mxu0 %v11045
    %v11326 = vpop.f32.mrf.mxu0
    %v11327 = vadd.f32 %v11130, %v11326
    %v11328 = vpop.f32.mrf.mxu0
    %v11329 = vpop.f32.mrf.mxu0
    %v11330 = vadd.f32 %v11130, %v11329
    %v11331 = vpop.f32.mrf.mxu0
    %11332 = vmatprep.mubr.bf16.mxu0 %v11048
    %11333 = vmatmul.mubr.bf16.gmra.mxu0 %v11047
    %v11334 = vpop.f32.mrf.mxu0
    %v11335 = vadd.f32 %v11130, %v11334
    %v11336 = vpop.f32.mrf.mxu0
    %v11337 = vpop.f32.mrf.mxu0
    %v11338 = vadd.f32 %v11130, %v11337
    %v11339 = vpop.f32.mrf.mxu0
    %11340 = vmatprep.mubr.bf16.mxu0 %v11050
    %11341 = vmatmul.mubr.bf16.gmra.mxu0 %v11049
    %v11342 = vpop.f32.mrf.mxu0
    %v11343 = vadd.f32 %v11130, %v11342
    %v11344 = vpop.f32.mrf.mxu0
    %v11345 = vpop.f32.mrf.mxu0
    %v11346 = vadd.f32 %v11130, %v11345
    %v11347 = vpop.f32.mrf.mxu0
    %11348 = vmatprep.mubr.bf16.mxu0 %v11052
    %11349 = vmatmul.mubr.bf16.gmra.mxu0 %v11051
    %v11350 = vpop.f32.mrf.mxu0
    %v11351 = vadd.f32 %v11130, %v11350
    %v11352 = vpop.f32.mrf.mxu0
    %v11353 = vpop.f32.mrf.mxu0
    %v11354 = vadd.f32 %v11130, %v11353
    %v11355 = vpop.f32.mrf.mxu0
    %11356 = vmatprep.mubr.bf16.mxu0 %v11054
    %11357 = vmatmul.mubr.bf16.gmra.mxu0 %v11053
    %v11358 = vpop.f32.mrf.mxu0
    %v11359 = vadd.f32 %v11130, %v11358
    %v11360 = vpop.f32.mrf.mxu0
    %v11361 = vpop.f32.mrf.mxu0
    %v11362 = vadd.f32 %v11130, %v11361
    %v11363 = vpop.f32.mrf.mxu0
    %11364 = vmatprep.mubr.bf16.mxu0 %v11056
    %11365 = vmatmul.mubr.bf16.gmra.mxu0 %v11055
    %v11366 = vpop.f32.mrf.mxu0
    %v11367 = vadd.f32 %v11130, %v11366
    %v11368 = vpop.f32.mrf.mxu0
    %v11369 = vpop.f32.mrf.mxu0
    %v11370 = vadd.f32 %v11130, %v11369
    %v11371 = vpop.f32.mrf.mxu0
    %11372 = vmatprep.mubr.bf16.mxu0 %v11058
    %11373 = vmatmul.mubr.bf16.gmra.mxu0 %v11057
    %v11374 = vpop.f32.mrf.mxu0
    %v11375 = vadd.f32 %v11130, %v11374
    %v11376 = vpop.f32.mrf.mxu0
    %v11377 = vpop.f32.mrf.mxu0
    %v11378 = vadd.f32 %v11130, %v11377
    %v11379 = vpop.f32.mrf.mxu0
    %11380 = vmatprep.mubr.bf16.mxu0 %v11060
    %11381 = vmatmul.mubr.bf16.gmra.mxu0 %v11059
    %v11382 = vpop.f32.mrf.mxu0
    %v11383 = vadd.f32 %v11130, %v11382
    %v11384 = vpop.f32.mrf.mxu0
    %v11385 = vpop.f32.mrf.mxu0
    %v11386 = vadd.f32 %v11130, %v11385
    %v11387 = vpop.f32.mrf.mxu0
    %11388 = vmatprep.mubr.bf16.mxu0 %v11062
    %11389 = vmatmul.mubr.bf16.gmra.mxu0 %v11061
    %v11390 = vpop.f32.mrf.mxu0
    %v11391 = vadd.f32 %v11130, %v11390
    %v11392 = vpop.f32.mrf.mxu0
    %v11393 = vpop.f32.mrf.mxu0
    %v11394 = vadd.f32 %v11130, %v11393
    %v11395 = vpop.f32.mrf.mxu0
    %11396 = vmatprep.mubr.bf16.mxu0 %v11064
    %11397 = vmatmul.mubr.bf16.gmra.mxu0 %v11063
    %v11398 = vpop.f32.mrf.mxu0
    %v11399 = vadd.f32 %v11130, %v11398
    %v11400 = vpop.f32.mrf.mxu0
    %v11401 = vpop.f32.mrf.mxu0
    %v11402 = vadd.f32 %v11130, %v11401
    %v11403 = vpop.f32.mrf.mxu0
    %11404 = vmatprep.mubr.bf16.mxu0 %v11066
    %11405 = vmatmul.mubr.bf16.gmra.mxu0 %v11065
    %v11406 = vpop.f32.mrf.mxu0
    %v11407 = vadd.f32 %v11130, %v11406
    %v11408 = vpop.f32.mrf.mxu0
    %v11409 = vpop.f32.mrf.mxu0
    %v11410 = vadd.f32 %v11130, %v11409
    %v11411 = vpop.f32.mrf.mxu0
    %11412 = vmatprep.mubr.bf16.mxu0 %v11068
    %11413 = vmatmul.mubr.bf16.gmra.mxu0 %v11067
    %v11414 = vpop.f32.mrf.mxu0
    %v11415 = vadd.f32 %v11130, %v11414
    %v11416 = vpop.f32.mrf.mxu0
    %v11417 = vpop.f32.mrf.mxu0
    %v11418 = vadd.f32 %v11130, %v11417
    %v11419 = vpop.f32.mrf.mxu0
    %11420 = vmatprep.mubr.bf16.mxu0 %v11070
    %11421 = vmatmul.mubr.bf16.gmra.mxu0 %v11069
    %v11422 = vpop.f32.mrf.mxu0
    %v11423 = vadd.f32 %v11130, %v11422
    %v11424 = vpop.f32.mrf.mxu0
    %v11425 = vpop.f32.mrf.mxu0
    %v11426 = vadd.f32 %v11130, %v11425
    %v11427 = vpop.f32.mrf.mxu0
    %11428 = vmatprep.mubr.bf16.mxu0 %v11072
    %11429 = vmatmul.mubr.bf16.gmra.mxu0 %v11071
    %v11430 = vpop.f32.mrf.mxu0
    %v11431 = vadd.f32 %v11130, %v11430
    %v11432 = vpop.f32.mrf.mxu0
    %v11433 = vpop.f32.mrf.mxu0
    %v11434 = vadd.f32 %v11130, %v11433
    %v11435 = vpop.f32.mrf.mxu0
    %11436 = vmatprep.mubr.bf16.mxu0 %v11074
    %11437 = vmatmul.mubr.bf16.gmra.mxu0 %v11073
    %v11438 = vpop.f32.mrf.mxu0
    %v11439 = vadd.f32 %v11130, %v11438
    %v11440 = vpop.f32.mrf.mxu0
    %v11441 = vpop.f32.mrf.mxu0
    %v11442 = vadd.f32 %v11130, %v11441
    %v11443 = vpop.f32.mrf.mxu0
    %11444 = vmatprep.mubr.bf16.mxu0 %v11076
    %11445 = vmatmul.mubr.bf16.gmra.mxu0 %v11075
    %v11446 = vpop.f32.mrf.mxu0
    %v11447 = vadd.f32 %v11130, %v11446
    %v11448 = vpop.f32.mrf.mxu0
    %v11449 = vpop.f32.mrf.mxu0
    %v11450 = vadd.f32 %v11130, %v11449
    %v11451 = vpop.f32.mrf.mxu0
    %11452 = vmatprep.mubr.bf16.mxu0 %v11078
    %11453 = vmatmul.mubr.bf16.gmra.mxu0 %v11077
    %v11454 = vpop.f32.mrf.mxu0
    %v11455 = vadd.f32 %v11130, %v11454
    %v11456 = vpop.f32.mrf.mxu0
    %v11457 = vpop.f32.mrf.mxu0
    %v11458 = vadd.f32 %v11130, %v11457
    %v11459 = vpop.f32.mrf.mxu0
    %11460 = vmatprep.mubr.bf16.mxu0 %v11080
    %11461 = vmatmul.mubr.bf16.gmra.mxu0 %v11079
    %v11462 = vpop.f32.mrf.mxu0
    %v11463 = vadd.f32 %v11130, %v11462
    %v11464 = vpop.f32.mrf.mxu0
    %v11465 = vpop.f32.mrf.mxu0
    %v11466 = vadd.f32 %v11130, %v11465
    %v11467 = vpop.f32.mrf.mxu0
    %11468 = vmatprep.mubr.bf16.mxu0 %v11082
    %11469 = vmatmul.mubr.bf16.gmra.mxu0 %v11081
    %v11470 = vpop.f32.mrf.mxu0
    %v11471 = vadd.f32 %v11130, %v11470
    %v11472 = vpop.f32.mrf.mxu0
    %v11473 = vpop.f32.mrf.mxu0
    %v11474 = vadd.f32 %v11130, %v11473
    %v11475 = vpop.f32.mrf.mxu0
    %11476 = vmatprep.mubr.bf16.mxu0 %v11084
    %11477 = vmatmul.mubr.bf16.gmra.mxu0 %v11083
    %v11478 = vpop.f32.mrf.mxu0
    %v11479 = vadd.f32 %v11130, %v11478
    %v11480 = vpop.f32.mrf.mxu0
    %v11481 = vpop.f32.mrf.mxu0
    %v11482 = vadd.f32 %v11130, %v11481
    %v11483 = vpop.f32.mrf.mxu0
    %11484 = vmatprep.mubr.bf16.mxu0 %v11086
    %11485 = vmatmul.mubr.bf16.gmra.mxu0 %v11085
    %v11486 = vpop.f32.mrf.mxu0
    %v11487 = vadd.f32 %v11130, %v11486
    %v11488 = vpop.f32.mrf.mxu0
    %v11489 = vpop.f32.mrf.mxu0
    %v11490 = vadd.f32 %v11130, %v11489
    %v11491 = vpop.f32.mrf.mxu0
    %11492 = vmatprep.mubr.bf16.mxu0 %v11088
    %11493 = vmatmul.mubr.bf16.gmra.mxu0 %v11087
    %v11494 = vpop.f32.mrf.mxu0
    %v11495 = vadd.f32 %v11130, %v11494
    %v11496 = vpop.f32.mrf.mxu0
    %v11497 = vpop.f32.mrf.mxu0
    %v11498 = vadd.f32 %v11130, %v11497
    %v11499 = vpop.f32.mrf.mxu0
    %11500 = vmatprep.mubr.bf16.mxu0 %v11090
    %11501 = vmatmul.mubr.bf16.gmra.mxu0 %v11089
    %v11502 = vpop.f32.mrf.mxu0
    %v11503 = vadd.f32 %v11130, %v11502
    %v11504 = vpop.f32.mrf.mxu0
    %v11505 = vpop.f32.mrf.mxu0
    %v11506 = vadd.f32 %v11130, %v11505
    %v11507 = vpop.f32.mrf.mxu0
    %11508 = vmatprep.mubr.bf16.mxu0 %v11092
    %11509 = vmatmul.mubr.bf16.gmra.mxu0 %v11091
    %v11510 = vpop.f32.mrf.mxu0
    %v11511 = vadd.f32 %v11130, %v11510
    %v11512 = vpop.f32.mrf.mxu0
    %v11513 = vpop.f32.mrf.mxu0
    %v11514 = vadd.f32 %v11130, %v11513
    %v11515 = vpop.f32.mrf.mxu0
    %11516 = vdwg.mxu0
    %v11517 = vmax.f32 %v11263, 0.0
    %v11518 = vmax.f32 %v11266, 0.0
    %v11519 = vmax.f32 %v11271, 0.0
    %v11520 = vmax.f32 %v11274, 0.0
    %v11521 = vmax.f32 %v11279, 0.0
    %v11522 = vmax.f32 %v11282, 0.0
    %v11523 = vmax.f32 %v11287, 0.0
    %v11524 = vmax.f32 %v11290, 0.0
    %v11525 = vmax.f32 %v11295, 0.0
    %v11526 = vmax.f32 %v11298, 0.0
    %v11527 = vmax.f32 %v11303, 0.0
    %v11528 = vmax.f32 %v11306, 0.0
    %v11529 = vmax.f32 %v11311, 0.0
    %v11530 = vmax.f32 %v11314, 0.0
    %v11531 = vmax.f32 %v11319, 0.0
    %v11532 = vmax.f32 %v11322, 0.0
    %v11533 = vmax.f32 %v11327, 0.0
    %v11534 = vmax.f32 %v11330, 0.0
    %v11535 = vmax.f32 %v11335, 0.0
    %v11536 = vmax.f32 %v11338, 0.0
    %v11537 = vmax.f32 %v11343, 0.0
    %v11538 = vmax.f32 %v11346, 0.0
    %v11539 = vmax.f32 %v11351, 0.0
    %v11540 = vmax.f32 %v11354, 0.0
    %v11541 = vmax.f32 %v11359, 0.0
    %v11542 = vmax.f32 %v11362, 0.0
    %v11543 = vmax.f32 %v11367, 0.0
    %v11544 = vmax.f32 %v11370, 0.0
    %v11545 = vmax.f32 %v11375, 0.0
    %v11546 = vmax.f32 %v11378, 0.0
    %v11547 = vmax.f32 %v11383, 0.0
    %v11548 = vmax.f32 %v11386, 0.0
    %v11549 = vmax.f32 %v11391, 0.0
    %v11550 = vmax.f32 %v11394, 0.0
    %v11551 = vmax.f32 %v11399, 0.0
    %v11552 = vmax.f32 %v11402, 0.0
    %v11553 = vmax.f32 %v11407, 0.0
    %v11554 = vmax.f32 %v11410, 0.0
    %v11555 = vmax.f32 %v11415, 0.0
    %v11556 = vmax.f32 %v11418, 0.0
    %v11557 = vmax.f32 %v11423, 0.0
    %v11558 = vmax.f32 %v11426, 0.0
    %v11559 = vmax.f32 %v11431, 0.0
    %v11560 = vmax.f32 %v11434, 0.0
    %v11561 = vmax.f32 %v11439, 0.0
    %v11562 = vmax.f32 %v11442, 0.0
    %v11563 = vmax.f32 %v11447, 0.0
    %v11564 = vmax.f32 %v11450, 0.0
    %v11565 = vmax.f32 %v11455, 0.0
    %v11566 = vmax.f32 %v11458, 0.0
    %v11567 = vmax.f32 %v11463, 0.0
    %v11568 = vmax.f32 %v11466, 0.0
    %v11569 = vmax.f32 %v11471, 0.0
    %v11570 = vmax.f32 %v11474, 0.0
    %v11571 = vmax.f32 %v11479, 0.0
    %v11572 = vmax.f32 %v11482, 0.0
    %v11573 = vmax.f32 %v11487, 0.0
    %v11574 = vmax.f32 %v11490, 0.0
    %v11575 = vmax.f32 %v11495, 0.0
    %v11576 = vmax.f32 %v11498, 0.0
    %v11577 = vmax.f32 %v11503, 0.0
    %v11578 = vmax.f32 %v11506, 0.0
    %v11579 = vmax.f32 %v11511, 0.0
    %v11580 = vmax.f32 %v11514, 0.0
    %v11581 = vpack.c.bf16 %v11518, %v11517
    %v11582 = vpack.c.bf16 %v11520, %v11519
    %v11583 = vpack.c.bf16 %v11522, %v11521
    %v11584 = vpack.c.bf16 %v11524, %v11523
    %v11585 = vpack.c.bf16 %v11526, %v11525
    %v11586 = vpack.c.bf16 %v11528, %v11527
    %v11587 = vpack.c.bf16 %v11530, %v11529
    %v11588 = vpack.c.bf16 %v11532, %v11531
    %v11589 = vpack.c.bf16 %v11534, %v11533
    %v11590 = vpack.c.bf16 %v11536, %v11535
    %v11591 = vpack.c.bf16 %v11538, %v11537
    %v11592 = vpack.c.bf16 %v11540, %v11539
    %v11593 = vpack.c.bf16 %v11542, %v11541
    %v11594 = vpack.c.bf16 %v11544, %v11543
    %v11595 = vpack.c.bf16 %v11546, %v11545
    %v11596 = vpack.c.bf16 %v11548, %v11547
    %v11597 = vpack.c.bf16 %v11550, %v11549
    %v11598 = vpack.c.bf16 %v11552, %v11551
    %v11599 = vpack.c.bf16 %v11554, %v11553
    %v11600 = vpack.c.bf16 %v11556, %v11555
    %v11601 = vpack.c.bf16 %v11558, %v11557
    %v11602 = vpack.c.bf16 %v11560, %v11559
    %v11603 = vpack.c.bf16 %v11562, %v11561
    %v11604 = vpack.c.bf16 %v11564, %v11563
    %v11605 = vpack.c.bf16 %v11566, %v11565
    %v11606 = vpack.c.bf16 %v11568, %v11567
    %v11607 = vpack.c.bf16 %v11570, %v11569
    %v11608 = vpack.c.bf16 %v11572, %v11571
    %v11609 = vpack.c.bf16 %v11574, %v11573
    %v11610 = vpack.c.bf16 %v11576, %v11575
    %v11611 = vpack.c.bf16 %v11578, %v11577
    %v11612 = vpack.c.bf16 %v11580, %v11579
    %v11613 = vld [vmem:[%s9] sm:$0xf]
    %v11614 = vld [vmem:[%s9 + $0x4] sm:$0xf]
    %v11615 = vld [vmem:[%s9 + $0x8] sm:$0xf]
    %v11616 = vld [vmem:[%s9 + $0xc] sm:$0xf]
    %v11617 = vld [vmem:[%s9 + $0x10] sm:$0xf]
    %v11618 = vld [vmem:[%s9 + $0x14] sm:$0xf]
    %v11619 = vld [vmem:[%s9 + $0x18] sm:$0xf]
    %v11620 = vld [vmem:[%s9 + $0x1c] sm:$0xf]
    %v11621 = vld [vmem:[%s9 + $0x20] sm:$0xf]
    %v11622 = vld [vmem:[%s9 + $0x24] sm:$0xf]
    %v11623 = vld [vmem:[%s9 + $0x28] sm:$0xf]
    %v11624 = vld [vmem:[%s9 + $0x2c] sm:$0xf]
    %v11625 = vld [vmem:[%s9 + $0x30] sm:$0xf]
    %v11626 = vld [vmem:[%s9 + $0x34] sm:$0xf]
    %v11627 = vld [vmem:[%s9 + $0x38] sm:$0xf]
    %v11628 = vld [vmem:[%s9 + $0x3c] sm:$0xf]
    %v11629 = vld [vmem:[%s10] sm:$0x1]
    %v11631 = vlaneseq
    %v11632 = vshrl.u32 %v11631, 7
    %v11633 = vsub.s32 0, %v11632
    %v11634 = vrot.slane %v11629, %v11633
    %v11652 = vunpack.c.l.b16 %v11613
    %v11653 = vunpack.c.l.b16 %v11614
    %v11654 = vunpack.c.l.b16 %v11615
    %v11655 = vunpack.c.l.b16 %v11616
    %v11656 = vunpack.c.l.b16 %v11617
    %v11657 = vunpack.c.l.b16 %v11618
    %v11658 = vunpack.c.l.b16 %v11619
    %v11659 = vunpack.c.l.b16 %v11620
    %v11660 = vunpack.c.l.b16 %v11621
    %v11661 = vunpack.c.l.b16 %v11622
    %v11662 = vunpack.c.l.b16 %v11623
    %v11663 = vunpack.c.l.b16 %v11624
    %v11664 = vunpack.c.l.b16 %v11625
    %v11665 = vunpack.c.l.b16 %v11626
    %v11666 = vunpack.c.l.b16 %v11627
    %v11667 = vunpack.c.l.b16 %v11628
    %v11668 = vpack.c.b16 %v11653, %v11652
    %v11669 = vpack.c.b16 %v11655, %v11654
    %v11670 = vpack.c.b16 %v11657, %v11656
    %v11671 = vpack.c.b16 %v11659, %v11658
    %v11672 = vpack.c.b16 %v11661, %v11660
    %v11673 = vpack.c.b16 %v11663, %v11662
    %v11674 = vpack.c.b16 %v11665, %v11664
    %v11675 = vpack.c.b16 %v11667, %v11666
    %11684 = vmatprep.subr.bf16.mxu0 0
    %11685 = vmatpush1.bf16.msra.mxu0 %v11675
    %11686 = vmatprep.subr.bf16.mxu0 0
    %11687 = vmatpush1.bf16.msra.mxu0 %v11674
    %11688 = vmatprep.subr.bf16.mxu0 0
    %11689 = vmatpush1.bf16.msra.mxu0 %v11673
    %11690 = vmatprep.subr.bf16.mxu0 0
    %11691 = vmatpush1.bf16.msra.mxu0 %v11672
    %11692 = vmatprep.subr.bf16.mxu0 0
    %11693 = vmatpush1.bf16.msra.mxu0 %v11671
    %11694 = vmatprep.subr.bf16.mxu0 0
    %11695 = vmatpush1.bf16.msra.mxu0 %v11670
    %11696 = vmatprep.subr.bf16.mxu0 0
    %11697 = vmatpush1.bf16.msra.mxu0 %v11669
    %11698 = vmatprep.subr.bf16.mxu0 0
    %11699 = vmatpush1.bf16.msra.mxu0 %v11668
    %11700 = vmatprep.subr.bf16.mxu0 0
    %11701 = vmatpush2.bf16.msra.mxu0 0
    %11702 = vmatprep.subr.bf16.mxu0 0
    %11703 = vmatpush2.bf16.msra.mxu0 0
    %11704 = vmatprep.subr.bf16.mxu0 0
    %11705 = vmatpush2.bf16.msra.mxu0 0
    %11706 = vmatprep.subr.bf16.mxu0 0
    %11707 = vmatpush2.bf16.msra.mxu0 0
    %11708 = vmatprep.subr.bf16.mxu0 0
    %11709 = vmatpush2.bf16.msra.mxu0 0
    %11710 = vmatprep.subr.bf16.mxu0 0
    %11711 = vmatpush2.bf16.msra.mxu0 0
    %11712 = vmatprep.subr.bf16.mxu0 0
    %11713 = vmatpush2.bf16.msra.mxu0 0
    %11714 = vmatprep.subr.bf16.mxu0 0
    %11715 = vmatpush2.bf16.msra.mxu0 0
    %11716 = vmatprep.mubr.bf16.mxu0 0
    %11717 = vmatmul.mubr.bf16.gmra.mxu0 %v11581
    %v11718 = vpop.f32.mrf.mxu0
    %v11719 = vadd.f32 %v11634, %v11718
    %v11720 = vpop.f32.mrf.mxu0
    %v11721 = vpop.f32.mrf.mxu0
    %v11722 = vadd.f32 %v11634, %v11721
    %v11723 = vpop.f32.mrf.mxu0
    %11724 = vmatprep.mubr.bf16.mxu0 0
    %11725 = vmatmul.mubr.bf16.gmra.mxu0 %v11582
    %v11726 = vpop.f32.mrf.mxu0
    %v11727 = vadd.f32 %v11634, %v11726
    %v11728 = vpop.f32.mrf.mxu0
    %v11729 = vpop.f32.mrf.mxu0
    %v11730 = vadd.f32 %v11634, %v11729
    %v11731 = vpop.f32.mrf.mxu0
    %11732 = vmatprep.mubr.bf16.mxu0 0
    %11733 = vmatmul.mubr.bf16.gmra.mxu0 %v11583
    %v11734 = vpop.f32.mrf.mxu0
    %v11735 = vadd.f32 %v11634, %v11734
    %v11736 = vpop.f32.mrf.mxu0
    %v11737 = vpop.f32.mrf.mxu0
    %v11738 = vadd.f32 %v11634, %v11737
    %v11739 = vpop.f32.mrf.mxu0
    %11740 = vmatprep.mubr.bf16.mxu0 0
    %11741 = vmatmul.mubr.bf16.gmra.mxu0 %v11584
    %v11742 = vpop.f32.mrf.mxu0
    %v11743 = vadd.f32 %v11634, %v11742
    %v11744 = vpop.f32.mrf.mxu0
    %v11745 = vpop.f32.mrf.mxu0
    %v11746 = vadd.f32 %v11634, %v11745
    %v11747 = vpop.f32.mrf.mxu0
    %11748 = vmatprep.mubr.bf16.mxu0 0
    %11749 = vmatmul.mubr.bf16.gmra.mxu0 %v11585
    %v11750 = vpop.f32.mrf.mxu0
    %v11751 = vadd.f32 %v11634, %v11750
    %v11752 = vpop.f32.mrf.mxu0
    %v11753 = vpop.f32.mrf.mxu0
    %v11754 = vadd.f32 %v11634, %v11753
    %v11755 = vpop.f32.mrf.mxu0
    %11756 = vmatprep.mubr.bf16.mxu0 0
    %11757 = vmatmul.mubr.bf16.gmra.mxu0 %v11586
    %v11758 = vpop.f32.mrf.mxu0
    %v11759 = vadd.f32 %v11634, %v11758
    %v11760 = vpop.f32.mrf.mxu0
    %v11761 = vpop.f32.mrf.mxu0
    %v11762 = vadd.f32 %v11634, %v11761
    %v11763 = vpop.f32.mrf.mxu0
    %11764 = vmatprep.mubr.bf16.mxu0 0
    %11765 = vmatmul.mubr.bf16.gmra.mxu0 %v11587
    %v11766 = vpop.f32.mrf.mxu0
    %v11767 = vadd.f32 %v11634, %v11766
    %v11768 = vpop.f32.mrf.mxu0
    %v11769 = vpop.f32.mrf.mxu0
    %v11770 = vadd.f32 %v11634, %v11769
    %v11771 = vpop.f32.mrf.mxu0
    %11772 = vmatprep.mubr.bf16.mxu0 0
    %11773 = vmatmul.mubr.bf16.gmra.mxu0 %v11588
    %v11774 = vpop.f32.mrf.mxu0
    %v11775 = vadd.f32 %v11634, %v11774
    %v11776 = vpop.f32.mrf.mxu0
    %v11777 = vpop.f32.mrf.mxu0
    %v11778 = vadd.f32 %v11634, %v11777
    %v11779 = vpop.f32.mrf.mxu0
    %11780 = vmatprep.mubr.bf16.mxu0 0
    %11781 = vmatmul.mubr.bf16.gmra.mxu0 %v11589
    %v11782 = vpop.f32.mrf.mxu0
    %v11783 = vadd.f32 %v11634, %v11782
    %v11784 = vpop.f32.mrf.mxu0
    %v11785 = vpop.f32.mrf.mxu0
    %v11786 = vadd.f32 %v11634, %v11785
    %v11787 = vpop.f32.mrf.mxu0
    %11788 = vmatprep.mubr.bf16.mxu0 0
    %11789 = vmatmul.mubr.bf16.gmra.mxu0 %v11590
    %v11790 = vpop.f32.mrf.mxu0
    %v11791 = vadd.f32 %v11634, %v11790
    %v11792 = vpop.f32.mrf.mxu0
    %v11793 = vpop.f32.mrf.mxu0
    %v11794 = vadd.f32 %v11634, %v11793
    %v11795 = vpop.f32.mrf.mxu0
    %11796 = vmatprep.mubr.bf16.mxu0 0
    %11797 = vmatmul.mubr.bf16.gmra.mxu0 %v11591
    %v11798 = vpop.f32.mrf.mxu0
    %v11799 = vadd.f32 %v11634, %v11798
    %v11800 = vpop.f32.mrf.mxu0
    %v11801 = vpop.f32.mrf.mxu0
    %v11802 = vadd.f32 %v11634, %v11801
    %v11803 = vpop.f32.mrf.mxu0
    %11804 = vmatprep.mubr.bf16.mxu0 0
    %11805 = vmatmul.mubr.bf16.gmra.mxu0 %v11592
    %v11806 = vpop.f32.mrf.mxu0
    %v11807 = vadd.f32 %v11634, %v11806
    %v11808 = vpop.f32.mrf.mxu0
    %v11809 = vpop.f32.mrf.mxu0
    %v11810 = vadd.f32 %v11634, %v11809
    %v11811 = vpop.f32.mrf.mxu0
    %11812 = vmatprep.mubr.bf16.mxu0 0
    %11813 = vmatmul.mubr.bf16.gmra.mxu0 %v11593
    %v11814 = vpop.f32.mrf.mxu0
    %v11815 = vadd.f32 %v11634, %v11814
    %v11816 = vpop.f32.mrf.mxu0
    %v11817 = vpop.f32.mrf.mxu0
    %v11818 = vadd.f32 %v11634, %v11817
    %v11819 = vpop.f32.mrf.mxu0
    %11820 = vmatprep.mubr.bf16.mxu0 0
    %11821 = vmatmul.mubr.bf16.gmra.mxu0 %v11594
    %v11822 = vpop.f32.mrf.mxu0
    %v11823 = vadd.f32 %v11634, %v11822
    %v11824 = vpop.f32.mrf.mxu0
    %v11825 = vpop.f32.mrf.mxu0
    %v11826 = vadd.f32 %v11634, %v11825
    %v11827 = vpop.f32.mrf.mxu0
    %11828 = vmatprep.mubr.bf16.mxu0 0
    %11829 = vmatmul.mubr.bf16.gmra.mxu0 %v11595
    %v11830 = vpop.f32.mrf.mxu0
    %v11831 = vadd.f32 %v11634, %v11830
    %v11832 = vpop.f32.mrf.mxu0
    %v11833 = vpop.f32.mrf.mxu0
    %v11834 = vadd.f32 %v11634, %v11833
    %v11835 = vpop.f32.mrf.mxu0
    %11836 = vmatprep.mubr.bf16.mxu0 0
    %11837 = vmatmul.mubr.bf16.gmra.mxu0 %v11596
    %v11838 = vpop.f32.mrf.mxu0
    %v11839 = vadd.f32 %v11634, %v11838
    %v11840 = vpop.f32.mrf.mxu0
    %v11841 = vpop.f32.mrf.mxu0
    %v11842 = vadd.f32 %v11634, %v11841
    %v11843 = vpop.f32.mrf.mxu0
    %11844 = vmatprep.mubr.bf16.mxu0 0
    %11845 = vmatmul.mubr.bf16.gmra.mxu0 %v11597
    %v11846 = vpop.f32.mrf.mxu0
    %v11847 = vadd.f32 %v11634, %v11846
    %v11848 = vpop.f32.mrf.mxu0
    %v11849 = vpop.f32.mrf.mxu0
    %v11850 = vadd.f32 %v11634, %v11849
    %v11851 = vpop.f32.mrf.mxu0
    %11852 = vmatprep.mubr.bf16.mxu0 0
    %11853 = vmatmul.mubr.bf16.gmra.mxu0 %v11598
    %v11854 = vpop.f32.mrf.mxu0
    %v11855 = vadd.f32 %v11634, %v11854
    %v11856 = vpop.f32.mrf.mxu0
    %v11857 = vpop.f32.mrf.mxu0
    %v11858 = vadd.f32 %v11634, %v11857
    %v11859 = vpop.f32.mrf.mxu0
    %11860 = vmatprep.mubr.bf16.mxu0 0
    %11861 = vmatmul.mubr.bf16.gmra.mxu0 %v11599
    %v11862 = vpop.f32.mrf.mxu0
    %v11863 = vadd.f32 %v11634, %v11862
    %v11864 = vpop.f32.mrf.mxu0
    %v11865 = vpop.f32.mrf.mxu0
    %v11866 = vadd.f32 %v11634, %v11865
    %v11867 = vpop.f32.mrf.mxu0
    %11868 = vmatprep.mubr.bf16.mxu0 0
    %11869 = vmatmul.mubr.bf16.gmra.mxu0 %v11600
    %v11870 = vpop.f32.mrf.mxu0
    %v11871 = vadd.f32 %v11634, %v11870
    %v11872 = vpop.f32.mrf.mxu0
    %v11873 = vpop.f32.mrf.mxu0
    %v11874 = vadd.f32 %v11634, %v11873
    %v11875 = vpop.f32.mrf.mxu0
    %11876 = vmatprep.mubr.bf16.mxu0 0
    %11877 = vmatmul.mubr.bf16.gmra.mxu0 %v11601
    %v11878 = vpop.f32.mrf.mxu0
    %v11879 = vadd.f32 %v11634, %v11878
    %v11880 = vpop.f32.mrf.mxu0
    %v11881 = vpop.f32.mrf.mxu0
    %v11882 = vadd.f32 %v11634, %v11881
    %v11883 = vpop.f32.mrf.mxu0
    %11884 = vmatprep.mubr.bf16.mxu0 0
    %11885 = vmatmul.mubr.bf16.gmra.mxu0 %v11602
    %v11886 = vpop.f32.mrf.mxu0
    %v11887 = vadd.f32 %v11634, %v11886
    %v11888 = vpop.f32.mrf.mxu0
    %v11889 = vpop.f32.mrf.mxu0
    %v11890 = vadd.f32 %v11634, %v11889
    %v11891 = vpop.f32.mrf.mxu0
    %11892 = vmatprep.mubr.bf16.mxu0 0
    %11893 = vmatmul.mubr.bf16.gmra.mxu0 %v11603
    %v11894 = vpop.f32.mrf.mxu0
    %v11895 = vadd.f32 %v11634, %v11894
    %v11896 = vpop.f32.mrf.mxu0
    %v11897 = vpop.f32.mrf.mxu0
    %v11898 = vadd.f32 %v11634, %v11897
    %v11899 = vpop.f32.mrf.mxu0
    %11900 = vmatprep.mubr.bf16.mxu0 0
    %11901 = vmatmul.mubr.bf16.gmra.mxu0 %v11604
    %v11902 = vpop.f32.mrf.mxu0
    %v11903 = vadd.f32 %v11634, %v11902
    %v11904 = vpop.f32.mrf.mxu0
    %v11905 = vpop.f32.mrf.mxu0
    %v11906 = vadd.f32 %v11634, %v11905
    %v11907 = vpop.f32.mrf.mxu0
    %11908 = vmatprep.mubr.bf16.mxu0 0
    %11909 = vmatmul.mubr.bf16.gmra.mxu0 %v11605
    %v11910 = vpop.f32.mrf.mxu0
    %v11911 = vadd.f32 %v11634, %v11910
    %v11912 = vpop.f32.mrf.mxu0
    %v11913 = vpop.f32.mrf.mxu0
    %v11914 = vadd.f32 %v11634, %v11913
    %v11915 = vpop.f32.mrf.mxu0
    %11916 = vmatprep.mubr.bf16.mxu0 0
    %11917 = vmatmul.mubr.bf16.gmra.mxu0 %v11606
    %v11918 = vpop.f32.mrf.mxu0
    %v11919 = vadd.f32 %v11634, %v11918
    %v11920 = vpop.f32.mrf.mxu0
    %v11921 = vpop.f32.mrf.mxu0
    %v11922 = vadd.f32 %v11634, %v11921
    %v11923 = vpop.f32.mrf.mxu0
    %11924 = vmatprep.mubr.bf16.mxu0 0
    %11925 = vmatmul.mubr.bf16.gmra.mxu0 %v11607
    %v11926 = vpop.f32.mrf.mxu0
    %v11927 = vadd.f32 %v11634, %v11926
    %v11928 = vpop.f32.mrf.mxu0
    %v11929 = vpop.f32.mrf.mxu0
    %v11930 = vadd.f32 %v11634, %v11929
    %v11931 = vpop.f32.mrf.mxu0
    %11932 = vmatprep.mubr.bf16.mxu0 0
    %11933 = vmatmul.mubr.bf16.gmra.mxu0 %v11608
    %v11934 = vpop.f32.mrf.mxu0
    %v11935 = vadd.f32 %v11634, %v11934
    %v11936 = vpop.f32.mrf.mxu0
    %v11937 = vpop.f32.mrf.mxu0
    %v11938 = vadd.f32 %v11634, %v11937
    %v11939 = vpop.f32.mrf.mxu0
    %11940 = vmatprep.mubr.bf16.mxu0 0
    %11941 = vmatmul.mubr.bf16.gmra.mxu0 %v11609
    %v11942 = vpop.f32.mrf.mxu0
    %v11943 = vadd.f32 %v11634, %v11942
    %v11944 = vpop.f32.mrf.mxu0
    %v11945 = vpop.f32.mrf.mxu0
    %v11946 = vadd.f32 %v11634, %v11945
    %v11947 = vpop.f32.mrf.mxu0
    %11948 = vmatprep.mubr.bf16.mxu0 0
    %11949 = vmatmul.mubr.bf16.gmra.mxu0 %v11610
    %v11950 = vpop.f32.mrf.mxu0
    %v11951 = vadd.f32 %v11634, %v11950
    %v11952 = vpop.f32.mrf.mxu0
    %v11953 = vpop.f32.mrf.mxu0
    %v11954 = vadd.f32 %v11634, %v11953
    %v11955 = vpop.f32.mrf.mxu0
    %11956 = vmatprep.mubr.bf16.mxu0 0
    %11957 = vmatmul.mubr.bf16.gmra.mxu0 %v11611
    %v11958 = vpop.f32.mrf.mxu0
    %v11959 = vadd.f32 %v11634, %v11958
    %v11960 = vpop.f32.mrf.mxu0
    %v11961 = vpop.f32.mrf.mxu0
    %v11962 = vadd.f32 %v11634, %v11961
    %v11963 = vpop.f32.mrf.mxu0
    %11964 = vmatprep.mubr.bf16.mxu0 0
    %11965 = vmatmul.mubr.bf16.gmra.mxu0 %v11612
    %v11966 = vpop.f32.mrf.mxu0
    %v11967 = vadd.f32 %v11634, %v11966
    %v11968 = vpop.f32.mrf.mxu0
    %v11969 = vpop.f32.mrf.mxu0
    %v11970 = vadd.f32 %v11634, %v11969
    %v11971 = vpop.f32.mrf.mxu0
    %11972 = vdwg.mxu0
    %11973 = vst [vmem:[#allocation2] sm:$0xff] %v11719
    %11974 = vst [vmem:[#allocation2 + $0x8] sm:$0xff] %v11722
    %11975 = vst [vmem:[#allocation2 + $0x10] sm:$0xff] %v11727
    %11976 = vst [vmem:[#allocation2 + $0x18] sm:$0xff] %v11730
    %11977 = vst [vmem:[#allocation2 + $0x20] sm:$0xff] %v11735
    %11978 = vst [vmem:[#allocation2 + $0x28] sm:$0xff] %v11738
    %11979 = vst [vmem:[#allocation2 + $0x30] sm:$0xff] %v11743
    %11980 = vst [vmem:[#allocation2 + $0x38] sm:$0xff] %v11746
    %11981 = vst [vmem:[#allocation2 + $0x40] sm:$0xff] %v11751
    %11982 = vst [vmem:[#allocation2 + $0x48] sm:$0xff] %v11754
    %11983 = vst [vmem:[#allocation2 + $0x50] sm:$0xff] %v11759
    %11984 = vst [vmem:[#allocation2 + $0x58] sm:$0xff] %v11762
    %11985 = vst [vmem:[#allocation2 + $0x60] sm:$0xff] %v11767
    %11986 = vst [vmem:[#allocation2 + $0x68] sm:$0xff] %v11770
    %11987 = vst [vmem:[#allocation2 + $0x70] sm:$0xff] %v11775
    %11988 = vst [vmem:[#allocation2 + $0x78] sm:$0xff] %v11778
    %11989 = vst [vmem:[#allocation2 + $0x80] sm:$0xff] %v11783
    %11990 = vst [vmem:[#allocation2 + $0x88] sm:$0xff] %v11786
    %11991 = vst [vmem:[#allocation2 + $0x90] sm:$0xff] %v11791
    %11992 = vst [vmem:[#allocation2 + $0x98] sm:$0xff] %v11794
    %11993 = vst [vmem:[#allocation2 + $0xa0] sm:$0xff] %v11799
    %11994 = vst [vmem:[#allocation2 + $0xa8] sm:$0xff] %v11802
    %11995 = vst [vmem:[#allocation2 + $0xb0] sm:$0xff] %v11807
    %11996 = vst [vmem:[#allocation2 + $0xb8] sm:$0xff] %v11810
    %11997 = vst [vmem:[#allocation2 + $0xc0] sm:$0xff] %v11815
    %11998 = vst [vmem:[#allocation2 + $0xc8] sm:$0xff] %v11818
    %11999 = vst [vmem:[#allocation2 + $0xd0] sm:$0xff] %v11823
    %12000 = vst [vmem:[#allocation2 + $0xd8] sm:$0xff] %v11826
    %12001 = vst [vmem:[#allocation2 + $0xe0] sm:$0xff] %v11831
    %12002 = vst [vmem:[#allocation2 + $0xe8] sm:$0xff] %v11834
    %12003 = vst [vmem:[#allocation2 + $0xf0] sm:$0xff] %v11839
    %12004 = vst [vmem:[#allocation2 + $0xf8] sm:$0xff] %v11842
    %12005 = vst [vmem:[#allocation2 + $0x100] sm:$0xff] %v11847
    %12006 = vst [vmem:[#allocation2 + $0x108] sm:$0xff] %v11850
    %12007 = vst [vmem:[#allocation2 + $0x110] sm:$0xff] %v11855
    %12008 = vst [vmem:[#allocation2 + $0x118] sm:$0xff] %v11858
    %12009 = vst [vmem:[#allocation2 + $0x120] sm:$0xff] %v11863
    %12010 = vst [vmem:[#allocation2 + $0x128] sm:$0xff] %v11866
    %12011 = vst [vmem:[#allocation2 + $0x130] sm:$0xff] %v11871
    %12012 = vst [vmem:[#allocation2 + $0x138] sm:$0xff] %v11874
    %12013 = vst [vmem:[#allocation2 + $0x140] sm:$0xff] %v11879
    %12014 = vst [vmem:[#allocation2 + $0x148] sm:$0xff] %v11882
    %12015 = vst [vmem:[#allocation2 + $0x150] sm:$0xff] %v11887
    %12016 = vst [vmem:[#allocation2 + $0x158] sm:$0xff] %v11890
    %12017 = vst [vmem:[#allocation2 + $0x160] sm:$0xff] %v11895
    %12018 = vst [vmem:[#allocation2 + $0x168] sm:$0xff] %v11898
    %12019 = vst [vmem:[#allocation2 + $0x170] sm:$0xff] %v11903
    %12020 = vst [vmem:[#allocation2 + $0x178] sm:$0xff] %v11906
    %12021 = vst [vmem:[#allocation2 + $0x180] sm:$0xff] %v11911
    %12022 = vst [vmem:[#allocation2 + $0x188] sm:$0xff] %v11914
    %12023 = vst [vmem:[#allocation2 + $0x190] sm:$0xff] %v11919
    %12024 = vst [vmem:[#allocation2 + $0x198] sm:$0xff] %v11922
    %12025 = vst [vmem:[#allocation2 + $0x1a0] sm:$0xff] %v11927
    %12026 = vst [vmem:[#allocation2 + $0x1a8] sm:$0xff] %v11930
    %12027 = vst [vmem:[#allocation2 + $0x1b0] sm:$0xff] %v11935
    %12028 = vst [vmem:[#allocation2 + $0x1b8] sm:$0xff] %v11938
    %12029 = vst [vmem:[#allocation2 + $0x1c0] sm:$0xff] %v11943
    %12030 = vst [vmem:[#allocation2 + $0x1c8] sm:$0xff] %v11946
    %12031 = vst [vmem:[#allocation2 + $0x1d0] sm:$0xff] %v11951
    %12032 = vst [vmem:[#allocation2 + $0x1d8] sm:$0xff] %v11954
    %12033 = vst [vmem:[#allocation2 + $0x1e0] sm:$0xff] %v11959
    %12034 = vst [vmem:[#allocation2 + $0x1e8] sm:$0xff] %v11962
    %12035 = vst [vmem:[#allocation2 + $0x1f0] sm:$0xff] %v11967
    %12036 = vst [vmem:[#allocation2 + $0x1f8] sm:$0xff] %v11970
    // Predicated region
    $region46: #{_padded_forward.1} parent=1 // pred_check
      _
    $region47: #{_padded_forward.1} parent=1 // pred_check_branch
      %12038 = sbr.rel (0) target = $region49
    $region48: #{_padded_forward.1} parent=1 // pred_region
      %s12040 = ssub.s32 8192, 8192
      %12041 = vsyncadd [#allocation3], %s12040
      %s12042 = sshll.u32 [#allocation2], 4
      %s12043 = int_to_ptr.vmem [resolvable:$true] %s12042
      %12048 = dma.vmem_to_hbm [thread:$0]  %s12043, 8192, %s11, [#allocation3], 128, 128, 8
    $region49: #{_padded_forward.1} parent=1 // pred_fallthru
      _
    // Predicated region
    $region50: #{_padded_forward.1} parent=1 // pred_check
      _
    $region51: #{_padded_forward.1} parent=1 // pred_check_branch
      %12050 = sbr.rel (0) target = $region53
    $region52: #{_padded_forward.1} parent=1 // pred_region
      %12051 = dma.done [#allocation3], 8192
    $region53: #{_padded_forward.1} parent=1 // pred_fallthru
      _
    %12052 = vsyncpa [#allocation3], 1

</llo_original>
